<compile_context>
chip_gen: v7x
topology: tpu7x:2x2x1
jax: 0.10.0
libtpu: 0.0.40
codegen_flags: <defaults>
</compile_context>

<pallas_src>
import jax
import jax.numpy as jnp
from jax import lax
from jax.experimental import pallas as pl
from jax.experimental.pallas import tpu as pltpu

_EPS = 1e-5
_NEG_SLOPE = 0.2


def _disc_block_kernel(xq_ref, w_ref, gamma_ref, beta_ref, o_ref):
    """One batch element: conv(4x4, stride 2, reflect pad) + InstanceNorm + LeakyReLU.

    xq_ref : VMEM [1, 4, Cin, Hout+1, Wout+1], parity-split reflect-padded input
             xq[q, ci, i, j] = xpad[ci, 2*i + r, 2*j + s] with q = 2*r + s
    w_ref  : SMEM [Cout*Cin*16], C-order flatten of the [Cout, Cin, 4, 4] weight
    gamma_ref, beta_ref : SMEM [Cout] InstanceNorm affine parameters
    o_ref  : VMEM [1, Cout, Hout, Wout]
    """
    _, _, cin, _, _ = xq_ref.shape
    _, cout, hout, wout = o_ref.shape

    xall = xq_ref[0]                                     # [4, Cin, Hp, Wp]

    # 16 shifted patches (one per kernel tap); each is a list of Cin
    # [Hout, Wout] tiles with W in the lane dimension (lane-dense spatial).
    patches = []
    for r in range(2):
        for s in range(2):
            xrs = xall[2 * r + s]                        # [Cin, Hp, Wp]
            for a in range(2):
                for b in range(2):
                    kh, kw = 2 * a + r, 2 * b + s
                    blk = xrs[:, a:a + hout, b:b + wout]  # [Cin, Hout, Wout]
                    patches.append((kh, kw, [blk[ci] for ci in range(cin)]))

    inv_n = 1.0 / float(hout * wout)
    for co in range(cout):
        # Channel contraction on the VPU: SMEM-scalar x spatial-tile MACs.
        acc = jnp.zeros((hout, wout), jnp.float32)
        for kh, kw, chans in patches:
            for ci in range(cin):
                wv = w_ref[((co * cin + ci) * 4 + kh) * 4 + kw]
                acc = acc + wv * chans[ci]

        # InstanceNorm2d: biased variance, eps inside rsqrt, then affine.
        mean = jnp.sum(acc, axis=(0, 1), keepdims=True) * inv_n
        centered = acc - mean
        var = jnp.sum(centered * centered, axis=(0, 1), keepdims=True) * inv_n
        y = centered * (lax.rsqrt(var + _EPS) * gamma_ref[co]) + beta_ref[co]

        # LeakyReLU(0.2)
        o_ref[0, co] = jnp.where(y > 0, y, _NEG_SLOPE * y)


def disc_block_forward(x, w_conv, gamma, beta):
    """x: [N, Cin, H, W] (H, W even); w_conv: [Cout, Cin, 4, 4] (PyTorch OIHW);
    gamma/beta: [Cout]. Returns [N, Cout, H//2, W//2] (stride=2 path)."""
    N, Cin, H, W = x.shape
    Cout = w_conv.shape[0]
    assert H % 2 == 0 and W % 2 == 0, "k=4, s=2, p=1 path assumes even H, W"
    Hout, Wout = H // 2, W // 2
    Hp, Wp = Hout + 1, Wout + 1

    # Reflect pad by 1, then de-interleave into the 4 stride-2 parity planes so
    # the kernel only needs contiguous (non-strided) slices.  This is ~2x the
    # input bytes of wrapper-side data movement (vs 16x for host-side im2col).
    xp = jnp.pad(x, ((0, 0), (0, 0), (1, 1), (1, 1)), mode="reflect")
    xq = xp.reshape(N, Cin, Hp, 2, Wp, 2).transpose(0, 3, 5, 1, 2, 4)
    xq = xq.reshape(N, 4, Cin, Hp, Wp).astype(jnp.float32)

    w_flat = w_conv.reshape(-1).astype(jnp.float32)       # SMEM scalar weights
    gamma = gamma.astype(jnp.float32)
    beta = beta.astype(jnp.float32)

    # TODO(synk): for very large C*H*W per batch, additionally tile the spatial
    # dims (two-pass stats) to keep the per-step block inside v7x's 64 MiB VMEM.
    return pl.pallas_call(
        _disc_block_kernel,
        out_shape=jax.ShapeDtypeStruct((N, Cout, Hout, Wout), jnp.float32),
        grid=(N,),
        in_specs=[
            pl.BlockSpec((1, 4, Cin, Hp, Wp), lambda n: (n, 0, 0, 0, 0)),
            pl.BlockSpec(memory_space=pltpu.MemorySpace.SMEM),
            pl.BlockSpec(memory_space=pltpu.MemorySpace.SMEM),
            pl.BlockSpec(memory_space=pltpu.MemorySpace.SMEM),
        ],
        out_specs=pl.BlockSpec((1, Cout, Hout, Wout), lambda n: (n, 0, 0, 0)),
        compiler_params=pltpu.CompilerParams(
            dimension_semantics=("parallel",)),
    )(xq, w_flat, gamma, beta)


def _reference(x, w_conv, gamma, beta):
    """Pure-JAX reference for the DISCBlock forward (for correctness check)."""
    xp = jnp.pad(x, ((0, 0), (0, 0), (1, 1), (1, 1)), mode="reflect")
    y = lax.conv_general_dilated(
        xp, w_conv, window_strides=(2, 2), padding="VALID",
        dimension_numbers=("NCHW", "OIHW", "NCHW"),
        precision=lax.Precision.HIGHEST)
    mean = jnp.mean(y, axis=(2, 3), keepdims=True)
    var = jnp.mean((y - mean) ** 2, axis=(2, 3), keepdims=True)
    yn = (y - mean) * lax.rsqrt(var + _EPS)
    yn = yn * gamma[None, :, None, None] + beta[None, :, None, None]
    return jnp.where(yn > 0, yn, _NEG_SLOPE * yn)


if __name__ == "__main__":
    # DISCBlock(in_channels=4, out_channels=8, stride=2) on a [2, 4, 16, 16] input.
    N, Cin, H, W = 2, 4, 16, 16
    Cout = 8

    key = jax.random.PRNGKey(0)
    k1, k2, k3, k4 = jax.random.split(key, 4)
    x = jax.random.normal(k1, (N, Cin, H, W), dtype=jnp.float32)
    w_conv = 0.1 * jax.random.normal(k2, (Cout, Cin, 4, 4), dtype=jnp.float32)
    gamma = 1.0 + 0.1 * jax.random.normal(k3, (Cout,), dtype=jnp.float32)
    beta = 0.1 * jax.random.normal(k4, (Cout,), dtype=jnp.float32)

    fwd = jax.jit(disc_block_forward)
    out = fwd(x, w_conv, gamma, beta)
    jax.block_until_ready(out)

    assert out.shape == (N, Cout, H // 2, W // 2)
    ref = _reference(x, w_conv, gamma, beta)
    max_err = float(jnp.max(jnp.abs(out - ref)))
    assert max_err < 1e-3, f"mismatch vs reference: {max_err}"
    print("KERNEL_OK")
</pallas_src>

<mosaic_0001>
module attributes {stable_mosaic.version = 11 : i64} {
  func.func @_disc_block_kernel(%arg0: i32, %arg1: memref<1x4x4x9x9xf32, #tpu.memory_space<vmem>>, %arg2: memref<512xf32, #tpu.memory_space<smem>>, %arg3: memref<8xf32, #tpu.memory_space<smem>>, %arg4: memref<8xf32, #tpu.memory_space<smem>>, %arg5: memref<1x8x8x8xf32, #tpu.memory_space<vmem>>) attributes {dimension_semantics = [#tpu.dimension_semantics<parallel>], iteration_bounds = array<i64: 2>, scalar_prefetch = 0 : i64, scratch_operands = 0 : i64, tpu.core_type = #tpu.core_type<tc>, window_params = [{transform_indices = @transform_0, window_bounds = array<i64: 1, 4, 4, 9, 9>}, {transform_indices = @transform_1, window_bounds = array<i64: 512>}, {transform_indices = @transform_2, window_bounds = array<i64: 8>}, {transform_indices = @transform_3, window_bounds = array<i64: 8>}, {transform_indices = @transform_4, window_bounds = array<i64: 1, 8, 8, 8>}]} {
    %c0 = arith.constant 0 : index
    %c0_0 = arith.constant 0 : index
    %c0_1 = arith.constant 0 : index
    %c0_2 = arith.constant 0 : index
    %c0_3 = arith.constant 0 : index
    %0 = vector.load %arg1[%c0, %c0_0, %c0_1, %c0_2, %c0_3] : memref<1x4x4x9x9xf32, #tpu.memory_space<vmem>>, vector<1x4x4x9x9xf32>
    %1 = vector.shape_cast %0 : vector<1x4x4x9x9xf32> to vector<4x4x9x9xf32>
    %2 = vector.extract_strided_slice %1 {offsets = [0, 0, 0, 0], sizes = [1, 4, 9, 9], strides = [1, 1, 1, 1]} : vector<4x4x9x9xf32> to vector<1x4x9x9xf32>
    %3 = vector.shape_cast %2 : vector<1x4x9x9xf32> to vector<4x9x9xf32>
    %4 = vector.extract_strided_slice %3 {offsets = [0, 0, 0], sizes = [4, 8, 8], strides = [1, 1, 1]} : vector<4x9x9xf32> to vector<4x8x8xf32>
    %5 = vector.extract_strided_slice %4 {offsets = [0, 0, 0], sizes = [1, 8, 8], strides = [1, 1, 1]} : vector<4x8x8xf32> to vector<1x8x8xf32>
    %6 = vector.shape_cast %5 : vector<1x8x8xf32> to vector<8x8xf32>
    %7 = vector.extract_strided_slice %4 {offsets = [1, 0, 0], sizes = [1, 8, 8], strides = [1, 1, 1]} : vector<4x8x8xf32> to vector<1x8x8xf32>
    %8 = vector.shape_cast %7 : vector<1x8x8xf32> to vector<8x8xf32>
    %9 = vector.extract_strided_slice %4 {offsets = [2, 0, 0], sizes = [1, 8, 8], strides = [1, 1, 1]} : vector<4x8x8xf32> to vector<1x8x8xf32>
    %10 = vector.shape_cast %9 : vector<1x8x8xf32> to vector<8x8xf32>
    %11 = vector.extract_strided_slice %4 {offsets = [3, 0, 0], sizes = [1, 8, 8], strides = [1, 1, 1]} : vector<4x8x8xf32> to vector<1x8x8xf32>
    %12 = vector.shape_cast %11 : vector<1x8x8xf32> to vector<8x8xf32>
    %13 = vector.extract_strided_slice %3 {offsets = [0, 0, 1], sizes = [4, 8, 8], strides = [1, 1, 1]} : vector<4x9x9xf32> to vector<4x8x8xf32>
    %14 = vector.extract_strided_slice %13 {offsets = [0, 0, 0], sizes = [1, 8, 8], strides = [1, 1, 1]} : vector<4x8x8xf32> to vector<1x8x8xf32>
    %15 = vector.shape_cast %14 : vector<1x8x8xf32> to vector<8x8xf32>
    %16 = vector.extract_strided_slice %13 {offsets = [1, 0, 0], sizes = [1, 8, 8], strides = [1, 1, 1]} : vector<4x8x8xf32> to vector<1x8x8xf32>
    %17 = vector.shape_cast %16 : vector<1x8x8xf32> to vector<8x8xf32>
    %18 = vector.extract_strided_slice %13 {offsets = [2, 0, 0], sizes = [1, 8, 8], strides = [1, 1, 1]} : vector<4x8x8xf32> to vector<1x8x8xf32>
    %19 = vector.shape_cast %18 : vector<1x8x8xf32> to vector<8x8xf32>
    %20 = vector.extract_strided_slice %13 {offsets = [3, 0, 0], sizes = [1, 8, 8], strides = [1, 1, 1]} : vector<4x8x8xf32> to vector<1x8x8xf32>
    %21 = vector.shape_cast %20 : vector<1x8x8xf32> to vector<8x8xf32>
    %22 = vector.extract_strided_slice %3 {offsets = [0, 1, 0], sizes = [4, 8, 8], strides = [1, 1, 1]} : vector<4x9x9xf32> to vector<4x8x8xf32>
    %23 = vector.extract_strided_slice %22 {offsets = [0, 0, 0], sizes = [1, 8, 8], strides = [1, 1, 1]} : vector<4x8x8xf32> to vector<1x8x8xf32>
    %24 = vector.shape_cast %23 : vector<1x8x8xf32> to vector<8x8xf32>
    %25 = vector.extract_strided_slice %22 {offsets = [1, 0, 0], sizes = [1, 8, 8], strides = [1, 1, 1]} : vector<4x8x8xf32> to vector<1x8x8xf32>
    %26 = vector.shape_cast %25 : vector<1x8x8xf32> to vector<8x8xf32>
    %27 = vector.extract_strided_slice %22 {offsets = [2, 0, 0], sizes = [1, 8, 8], strides = [1, 1, 1]} : vector<4x8x8xf32> to vector<1x8x8xf32>
    %28 = vector.shape_cast %27 : vector<1x8x8xf32> to vector<8x8xf32>
    %29 = vector.extract_strided_slice %22 {offsets = [3, 0, 0], sizes = [1, 8, 8], strides = [1, 1, 1]} : vector<4x8x8xf32> to vector<1x8x8xf32>
    %30 = vector.shape_cast %29 : vector<1x8x8xf32> to vector<8x8xf32>
    %31 = vector.extract_strided_slice %3 {offsets = [0, 1, 1], sizes = [4, 8, 8], strides = [1, 1, 1]} : vector<4x9x9xf32> to vector<4x8x8xf32>
    %32 = vector.extract_strided_slice %31 {offsets = [0, 0, 0], sizes = [1, 8, 8], strides = [1, 1, 1]} : vector<4x8x8xf32> to vector<1x8x8xf32>
    %33 = vector.shape_cast %32 : vector<1x8x8xf32> to vector<8x8xf32>
    %34 = vector.extract_strided_slice %31 {offsets = [1, 0, 0], sizes = [1, 8, 8], strides = [1, 1, 1]} : vector<4x8x8xf32> to vector<1x8x8xf32>
    %35 = vector.shape_cast %34 : vector<1x8x8xf32> to vector<8x8xf32>
    %36 = vector.extract_strided_slice %31 {offsets = [2, 0, 0], sizes = [1, 8, 8], strides = [1, 1, 1]} : vector<4x8x8xf32> to vector<1x8x8xf32>
    %37 = vector.shape_cast %36 : vector<1x8x8xf32> to vector<8x8xf32>
    %38 = vector.extract_strided_slice %31 {offsets = [3, 0, 0], sizes = [1, 8, 8], strides = [1, 1, 1]} : vector<4x8x8xf32> to vector<1x8x8xf32>
    %39 = vector.shape_cast %38 : vector<1x8x8xf32> to vector<8x8xf32>
    %40 = vector.extract_strided_slice %1 {offsets = [1, 0, 0, 0], sizes = [1, 4, 9, 9], strides = [1, 1, 1, 1]} : vector<4x4x9x9xf32> to vector<1x4x9x9xf32>
    %41 = vector.shape_cast %40 : vector<1x4x9x9xf32> to vector<4x9x9xf32>
    %42 = vector.extract_strided_slice %41 {offsets = [0, 0, 0], sizes = [4, 8, 8], strides = [1, 1, 1]} : vector<4x9x9xf32> to vector<4x8x8xf32>
    %43 = vector.extract_strided_slice %42 {offsets = [0, 0, 0], sizes = [1, 8, 8], strides = [1, 1, 1]} : vector<4x8x8xf32> to vector<1x8x8xf32>
    %44 = vector.shape_cast %43 : vector<1x8x8xf32> to vector<8x8xf32>
    %45 = vector.extract_strided_slice %42 {offsets = [1, 0, 0], sizes = [1, 8, 8], strides = [1, 1, 1]} : vector<4x8x8xf32> to vector<1x8x8xf32>
    %46 = vector.shape_cast %45 : vector<1x8x8xf32> to vector<8x8xf32>
    %47 = vector.extract_strided_slice %42 {offsets = [2, 0, 0], sizes = [1, 8, 8], strides = [1, 1, 1]} : vector<4x8x8xf32> to vector<1x8x8xf32>
    %48 = vector.shape_cast %47 : vector<1x8x8xf32> to vector<8x8xf32>
    %49 = vector.extract_strided_slice %42 {offsets = [3, 0, 0], sizes = [1, 8, 8], strides = [1, 1, 1]} : vector<4x8x8xf32> to vector<1x8x8xf32>
    %50 = vector.shape_cast %49 : vector<1x8x8xf32> to vector<8x8xf32>
    %51 = vector.extract_strided_slice %41 {offsets = [0, 0, 1], sizes = [4, 8, 8], strides = [1, 1, 1]} : vector<4x9x9xf32> to vector<4x8x8xf32>
    %52 = vector.extract_strided_slice %51 {offsets = [0, 0, 0], sizes = [1, 8, 8], strides = [1, 1, 1]} : vector<4x8x8xf32> to vector<1x8x8xf32>
    %53 = vector.shape_cast %52 : vector<1x8x8xf32> to vector<8x8xf32>
    %54 = vector.extract_strided_slice %51 {offsets = [1, 0, 0], sizes = [1, 8, 8], strides = [1, 1, 1]} : vector<4x8x8xf32> to vector<1x8x8xf32>
    %55 = vector.shape_cast %54 : vector<1x8x8xf32> to vector<8x8xf32>
    %56 = vector.extract_strided_slice %51 {offsets = [2, 0, 0], sizes = [1, 8, 8], strides = [1, 1, 1]} : vector<4x8x8xf32> to vector<1x8x8xf32>
    %57 = vector.shape_cast %56 : vector<1x8x8xf32> to vector<8x8xf32>
    %58 = vector.extract_strided_slice %51 {offsets = [3, 0, 0], sizes = [1, 8, 8], strides = [1, 1, 1]} : vector<4x8x8xf32> to vector<1x8x8xf32>
    %59 = vector.shape_cast %58 : vector<1x8x8xf32> to vector<8x8xf32>
    %60 = vector.extract_strided_slice %41 {offsets = [0, 1, 0], sizes = [4, 8, 8], strides = [1, 1, 1]} : vector<4x9x9xf32> to vector<4x8x8xf32>
    %61 = vector.extract_strided_slice %60 {offsets = [0, 0, 0], sizes = [1, 8, 8], strides = [1, 1, 1]} : vector<4x8x8xf32> to vector<1x8x8xf32>
    %62 = vector.shape_cast %61 : vector<1x8x8xf32> to vector<8x8xf32>
    %63 = vector.extract_strided_slice %60 {offsets = [1, 0, 0], sizes = [1, 8, 8], strides = [1, 1, 1]} : vector<4x8x8xf32> to vector<1x8x8xf32>
    %64 = vector.shape_cast %63 : vector<1x8x8xf32> to vector<8x8xf32>
    %65 = vector.extract_strided_slice %60 {offsets = [2, 0, 0], sizes = [1, 8, 8], strides = [1, 1, 1]} : vector<4x8x8xf32> to vector<1x8x8xf32>
    %66 = vector.shape_cast %65 : vector<1x8x8xf32> to vector<8x8xf32>
    %67 = vector.extract_strided_slice %60 {offsets = [3, 0, 0], sizes = [1, 8, 8], strides = [1, 1, 1]} : vector<4x8x8xf32> to vector<1x8x8xf32>
    %68 = vector.shape_cast %67 : vector<1x8x8xf32> to vector<8x8xf32>
    %69 = vector.extract_strided_slice %41 {offsets = [0, 1, 1], sizes = [4, 8, 8], strides = [1, 1, 1]} : vector<4x9x9xf32> to vector<4x8x8xf32>
    %70 = vector.extract_strided_slice %69 {offsets = [0, 0, 0], sizes = [1, 8, 8], strides = [1, 1, 1]} : vector<4x8x8xf32> to vector<1x8x8xf32>
    %71 = vector.shape_cast %70 : vector<1x8x8xf32> to vector<8x8xf32>
    %72 = vector.extract_strided_slice %69 {offsets = [1, 0, 0], sizes = [1, 8, 8], strides = [1, 1, 1]} : vector<4x8x8xf32> to vector<1x8x8xf32>
    %73 = vector.shape_cast %72 : vector<1x8x8xf32> to vector<8x8xf32>
    %74 = vector.extract_strided_slice %69 {offsets = [2, 0, 0], sizes = [1, 8, 8], strides = [1, 1, 1]} : vector<4x8x8xf32> to vector<1x8x8xf32>
    %75 = vector.shape_cast %74 : vector<1x8x8xf32> to vector<8x8xf32>
    %76 = vector.extract_strided_slice %69 {offsets = [3, 0, 0], sizes = [1, 8, 8], strides = [1, 1, 1]} : vector<4x8x8xf32> to vector<1x8x8xf32>
    %77 = vector.shape_cast %76 : vector<1x8x8xf32> to vector<8x8xf32>
    %78 = vector.extract_strided_slice %1 {offsets = [2, 0, 0, 0], sizes = [1, 4, 9, 9], strides = [1, 1, 1, 1]} : vector<4x4x9x9xf32> to vector<1x4x9x9xf32>
    %79 = vector.shape_cast %78 : vector<1x4x9x9xf32> to vector<4x9x9xf32>
    %80 = vector.extract_strided_slice %79 {offsets = [0, 0, 0], sizes = [4, 8, 8], strides = [1, 1, 1]} : vector<4x9x9xf32> to vector<4x8x8xf32>
    %81 = vector.extract_strided_slice %80 {offsets = [0, 0, 0], sizes = [1, 8, 8], strides = [1, 1, 1]} : vector<4x8x8xf32> to vector<1x8x8xf32>
    %82 = vector.shape_cast %81 : vector<1x8x8xf32> to vector<8x8xf32>
    %83 = vector.extract_strided_slice %80 {offsets = [1, 0, 0], sizes = [1, 8, 8], strides = [1, 1, 1]} : vector<4x8x8xf32> to vector<1x8x8xf32>
    %84 = vector.shape_cast %83 : vector<1x8x8xf32> to vector<8x8xf32>
    %85 = vector.extract_strided_slice %80 {offsets = [2, 0, 0], sizes = [1, 8, 8], strides = [1, 1, 1]} : vector<4x8x8xf32> to vector<1x8x8xf32>
    %86 = vector.shape_cast %85 : vector<1x8x8xf32> to vector<8x8xf32>
    %87 = vector.extract_strided_slice %80 {offsets = [3, 0, 0], sizes = [1, 8, 8], strides = [1, 1, 1]} : vector<4x8x8xf32> to vector<1x8x8xf32>
    %88 = vector.shape_cast %87 : vector<1x8x8xf32> to vector<8x8xf32>
    %89 = vector.extract_strided_slice %79 {offsets = [0, 0, 1], sizes = [4, 8, 8], strides = [1, 1, 1]} : vector<4x9x9xf32> to vector<4x8x8xf32>
    %90 = vector.extract_strided_slice %89 {offsets = [0, 0, 0], sizes = [1, 8, 8], strides = [1, 1, 1]} : vector<4x8x8xf32> to vector<1x8x8xf32>
    %91 = vector.shape_cast %90 : vector<1x8x8xf32> to vector<8x8xf32>
    %92 = vector.extract_strided_slice %89 {offsets = [1, 0, 0], sizes = [1, 8, 8], strides = [1, 1, 1]} : vector<4x8x8xf32> to vector<1x8x8xf32>
    %93 = vector.shape_cast %92 : vector<1x8x8xf32> to vector<8x8xf32>
    %94 = vector.extract_strided_slice %89 {offsets = [2, 0, 0], sizes = [1, 8, 8], strides = [1, 1, 1]} : vector<4x8x8xf32> to vector<1x8x8xf32>
    %95 = vector.shape_cast %94 : vector<1x8x8xf32> to vector<8x8xf32>
    %96 = vector.extract_strided_slice %89 {offsets = [3, 0, 0], sizes = [1, 8, 8], strides = [1, 1, 1]} : vector<4x8x8xf32> to vector<1x8x8xf32>
    %97 = vector.shape_cast %96 : vector<1x8x8xf32> to vector<8x8xf32>
    %98 = vector.extract_strided_slice %79 {offsets = [0, 1, 0], sizes = [4, 8, 8], strides = [1, 1, 1]} : vector<4x9x9xf32> to vector<4x8x8xf32>
    %99 = vector.extract_strided_slice %98 {offsets = [0, 0, 0], sizes = [1, 8, 8], strides = [1, 1, 1]} : vector<4x8x8xf32> to vector<1x8x8xf32>
    %100 = vector.shape_cast %99 : vector<1x8x8xf32> to vector<8x8xf32>
    %101 = vector.extract_strided_slice %98 {offsets = [1, 0, 0], sizes = [1, 8, 8], strides = [1, 1, 1]} : vector<4x8x8xf32> to vector<1x8x8xf32>
    %102 = vector.shape_cast %101 : vector<1x8x8xf32> to vector<8x8xf32>
    %103 = vector.extract_strided_slice %98 {offsets = [2, 0, 0], sizes = [1, 8, 8], strides = [1, 1, 1]} : vector<4x8x8xf32> to vector<1x8x8xf32>
    %104 = vector.shape_cast %103 : vector<1x8x8xf32> to vector<8x8xf32>
    %105 = vector.extract_strided_slice %98 {offsets = [3, 0, 0], sizes = [1, 8, 8], strides = [1, 1, 1]} : vector<4x8x8xf32> to vector<1x8x8xf32>
    %106 = vector.shape_cast %105 : vector<1x8x8xf32> to vector<8x8xf32>
    %107 = vector.extract_strided_slice %79 {offsets = [0, 1, 1], sizes = [4, 8, 8], strides = [1, 1, 1]} : vector<4x9x9xf32> to vector<4x8x8xf32>
    %108 = vector.extract_strided_slice %107 {offsets = [0, 0, 0], sizes = [1, 8, 8], strides = [1, 1, 1]} : vector<4x8x8xf32> to vector<1x8x8xf32>
    %109 = vector.shape_cast %108 : vector<1x8x8xf32> to vector<8x8xf32>
    %110 = vector.extract_strided_slice %107 {offsets = [1, 0, 0], sizes = [1, 8, 8], strides = [1, 1, 1]} : vector<4x8x8xf32> to vector<1x8x8xf32>
    %111 = vector.shape_cast %110 : vector<1x8x8xf32> to vector<8x8xf32>
    %112 = vector.extract_strided_slice %107 {offsets = [2, 0, 0], sizes = [1, 8, 8], strides = [1, 1, 1]} : vector<4x8x8xf32> to vector<1x8x8xf32>
    %113 = vector.shape_cast %112 : vector<1x8x8xf32> to vector<8x8xf32>
    %114 = vector.extract_strided_slice %107 {offsets = [3, 0, 0], sizes = [1, 8, 8], strides = [1, 1, 1]} : vector<4x8x8xf32> to vector<1x8x8xf32>
    %115 = vector.shape_cast %114 : vector<1x8x8xf32> to vector<8x8xf32>
    %116 = vector.extract_strided_slice %1 {offsets = [3, 0, 0, 0], sizes = [1, 4, 9, 9], strides = [1, 1, 1, 1]} : vector<4x4x9x9xf32> to vector<1x4x9x9xf32>
    %117 = vector.shape_cast %116 : vector<1x4x9x9xf32> to vector<4x9x9xf32>
    %118 = vector.extract_strided_slice %117 {offsets = [0, 0, 0], sizes = [4, 8, 8], strides = [1, 1, 1]} : vector<4x9x9xf32> to vector<4x8x8xf32>
    %119 = vector.extract_strided_slice %118 {offsets = [0, 0, 0], sizes = [1, 8, 8], strides = [1, 1, 1]} : vector<4x8x8xf32> to vector<1x8x8xf32>
    %120 = vector.shape_cast %119 : vector<1x8x8xf32> to vector<8x8xf32>
    %121 = vector.extract_strided_slice %118 {offsets = [1, 0, 0], sizes = [1, 8, 8], strides = [1, 1, 1]} : vector<4x8x8xf32> to vector<1x8x8xf32>
    %122 = vector.shape_cast %121 : vector<1x8x8xf32> to vector<8x8xf32>
    %123 = vector.extract_strided_slice %118 {offsets = [2, 0, 0], sizes = [1, 8, 8], strides = [1, 1, 1]} : vector<4x8x8xf32> to vector<1x8x8xf32>
    %124 = vector.shape_cast %123 : vector<1x8x8xf32> to vector<8x8xf32>
    %125 = vector.extract_strided_slice %118 {offsets = [3, 0, 0], sizes = [1, 8, 8], strides = [1, 1, 1]} : vector<4x8x8xf32> to vector<1x8x8xf32>
    %126 = vector.shape_cast %125 : vector<1x8x8xf32> to vector<8x8xf32>
    %127 = vector.extract_strided_slice %117 {offsets = [0, 0, 1], sizes = [4, 8, 8], strides = [1, 1, 1]} : vector<4x9x9xf32> to vector<4x8x8xf32>
    %128 = vector.extract_strided_slice %127 {offsets = [0, 0, 0], sizes = [1, 8, 8], strides = [1, 1, 1]} : vector<4x8x8xf32> to vector<1x8x8xf32>
    %129 = vector.shape_cast %128 : vector<1x8x8xf32> to vector<8x8xf32>
    %130 = vector.extract_strided_slice %127 {offsets = [1, 0, 0], sizes = [1, 8, 8], strides = [1, 1, 1]} : vector<4x8x8xf32> to vector<1x8x8xf32>
    %131 = vector.shape_cast %130 : vector<1x8x8xf32> to vector<8x8xf32>
    %132 = vector.extract_strided_slice %127 {offsets = [2, 0, 0], sizes = [1, 8, 8], strides = [1, 1, 1]} : vector<4x8x8xf32> to vector<1x8x8xf32>
    %133 = vector.shape_cast %132 : vector<1x8x8xf32> to vector<8x8xf32>
    %134 = vector.extract_strided_slice %127 {offsets = [3, 0, 0], sizes = [1, 8, 8], strides = [1, 1, 1]} : vector<4x8x8xf32> to vector<1x8x8xf32>
    %135 = vector.shape_cast %134 : vector<1x8x8xf32> to vector<8x8xf32>
    %136 = vector.extract_strided_slice %117 {offsets = [0, 1, 0], sizes = [4, 8, 8], strides = [1, 1, 1]} : vector<4x9x9xf32> to vector<4x8x8xf32>
    %137 = vector.extract_strided_slice %136 {offsets = [0, 0, 0], sizes = [1, 8, 8], strides = [1, 1, 1]} : vector<4x8x8xf32> to vector<1x8x8xf32>
    %138 = vector.shape_cast %137 : vector<1x8x8xf32> to vector<8x8xf32>
    %139 = vector.extract_strided_slice %136 {offsets = [1, 0, 0], sizes = [1, 8, 8], strides = [1, 1, 1]} : vector<4x8x8xf32> to vector<1x8x8xf32>
    %140 = vector.shape_cast %139 : vector<1x8x8xf32> to vector<8x8xf32>
    %141 = vector.extract_strided_slice %136 {offsets = [2, 0, 0], sizes = [1, 8, 8], strides = [1, 1, 1]} : vector<4x8x8xf32> to vector<1x8x8xf32>
    %142 = vector.shape_cast %141 : vector<1x8x8xf32> to vector<8x8xf32>
    %143 = vector.extract_strided_slice %136 {offsets = [3, 0, 0], sizes = [1, 8, 8], strides = [1, 1, 1]} : vector<4x8x8xf32> to vector<1x8x8xf32>
    %144 = vector.shape_cast %143 : vector<1x8x8xf32> to vector<8x8xf32>
    %145 = vector.extract_strided_slice %117 {offsets = [0, 1, 1], sizes = [4, 8, 8], strides = [1, 1, 1]} : vector<4x9x9xf32> to vector<4x8x8xf32>
    %146 = vector.extract_strided_slice %145 {offsets = [0, 0, 0], sizes = [1, 8, 8], strides = [1, 1, 1]} : vector<4x8x8xf32> to vector<1x8x8xf32>
    %147 = vector.shape_cast %146 : vector<1x8x8xf32> to vector<8x8xf32>
    %148 = vector.extract_strided_slice %145 {offsets = [1, 0, 0], sizes = [1, 8, 8], strides = [1, 1, 1]} : vector<4x8x8xf32> to vector<1x8x8xf32>
    %149 = vector.shape_cast %148 : vector<1x8x8xf32> to vector<8x8xf32>
    %150 = vector.extract_strided_slice %145 {offsets = [2, 0, 0], sizes = [1, 8, 8], strides = [1, 1, 1]} : vector<4x8x8xf32> to vector<1x8x8xf32>
    %151 = vector.shape_cast %150 : vector<1x8x8xf32> to vector<8x8xf32>
    %152 = vector.extract_strided_slice %145 {offsets = [3, 0, 0], sizes = [1, 8, 8], strides = [1, 1, 1]} : vector<4x8x8xf32> to vector<1x8x8xf32>
    %153 = vector.shape_cast %152 : vector<1x8x8xf32> to vector<8x8xf32>
    %cst = arith.constant 0.000000e+00 : f32
    %154 = vector.broadcast %cst : f32 to vector<8x8xf32>
    %c0_4 = arith.constant 0 : index
    %155 = memref.load %arg2[%c0_4] : memref<512xf32, #tpu.memory_space<smem>>
    %156 = vector.broadcast %155 : f32 to vector<8x8xf32>
    %157 = arith.mulf %156, %6 : vector<8x8xf32>
    %158 = arith.addf %154, %157 : vector<8x8xf32>
    %c16 = arith.constant 16 : index
    %159 = memref.load %arg2[%c16] : memref<512xf32, #tpu.memory_space<smem>>
    %160 = vector.broadcast %159 : f32 to vector<8x8xf32>
    %161 = arith.mulf %160, %8 : vector<8x8xf32>
    %162 = arith.addf %158, %161 : vector<8x8xf32>
    %c32 = arith.constant 32 : index
    %163 = memref.load %arg2[%c32] : memref<512xf32, #tpu.memory_space<smem>>
    %164 = vector.broadcast %163 : f32 to vector<8x8xf32>
    %165 = arith.mulf %164, %10 : vector<8x8xf32>
    %166 = arith.addf %162, %165 : vector<8x8xf32>
    %c48 = arith.constant 48 : index
    %167 = memref.load %arg2[%c48] : memref<512xf32, #tpu.memory_space<smem>>
    %168 = vector.broadcast %167 : f32 to vector<8x8xf32>
    %169 = arith.mulf %168, %12 : vector<8x8xf32>
    %170 = arith.addf %166, %169 : vector<8x8xf32>
    %c2 = arith.constant 2 : index
    %171 = memref.load %arg2[%c2] : memref<512xf32, #tpu.memory_space<smem>>
    %172 = vector.broadcast %171 : f32 to vector<8x8xf32>
    %173 = arith.mulf %172, %15 : vector<8x8xf32>
    %174 = arith.addf %170, %173 : vector<8x8xf32>
    %c18 = arith.constant 18 : index
    %175 = memref.load %arg2[%c18] : memref<512xf32, #tpu.memory_space<smem>>
    %176 = vector.broadcast %175 : f32 to vector<8x8xf32>
    %177 = arith.mulf %176, %17 : vector<8x8xf32>
    %178 = arith.addf %174, %177 : vector<8x8xf32>
    %c34 = arith.constant 34 : index
    %179 = memref.load %arg2[%c34] : memref<512xf32, #tpu.memory_space<smem>>
    %180 = vector.broadcast %179 : f32 to vector<8x8xf32>
    %181 = arith.mulf %180, %19 : vector<8x8xf32>
    %182 = arith.addf %178, %181 : vector<8x8xf32>
    %c50 = arith.constant 50 : index
    %183 = memref.load %arg2[%c50] : memref<512xf32, #tpu.memory_space<smem>>
    %184 = vector.broadcast %183 : f32 to vector<8x8xf32>
    %185 = arith.mulf %184, %21 : vector<8x8xf32>
    %186 = arith.addf %182, %185 : vector<8x8xf32>
    %c8 = arith.constant 8 : index
    %187 = memref.load %arg2[%c8] : memref<512xf32, #tpu.memory_space<smem>>
    %188 = vector.broadcast %187 : f32 to vector<8x8xf32>
    %189 = arith.mulf %188, %24 : vector<8x8xf32>
    %190 = arith.addf %186, %189 : vector<8x8xf32>
    %c24 = arith.constant 24 : index
    %191 = memref.load %arg2[%c24] : memref<512xf32, #tpu.memory_space<smem>>
    %192 = vector.broadcast %191 : f32 to vector<8x8xf32>
    %193 = arith.mulf %192, %26 : vector<8x8xf32>
    %194 = arith.addf %190, %193 : vector<8x8xf32>
    %c40 = arith.constant 40 : index
    %195 = memref.load %arg2[%c40] : memref<512xf32, #tpu.memory_space<smem>>
    %196 = vector.broadcast %195 : f32 to vector<8x8xf32>
    %197 = arith.mulf %196, %28 : vector<8x8xf32>
    %198 = arith.addf %194, %197 : vector<8x8xf32>
    %c56 = arith.constant 56 : index
    %199 = memref.load %arg2[%c56] : memref<512xf32, #tpu.memory_space<smem>>
    %200 = vector.broadcast %199 : f32 to vector<8x8xf32>
    %201 = arith.mulf %200, %30 : vector<8x8xf32>
    %202 = arith.addf %198, %201 : vector<8x8xf32>
    %c10 = arith.constant 10 : index
    %203 = memref.load %arg2[%c10] : memref<512xf32, #tpu.memory_space<smem>>
    %204 = vector.broadcast %203 : f32 to vector<8x8xf32>
    %205 = arith.mulf %204, %33 : vector<8x8xf32>
    %206 = arith.addf %202, %205 : vector<8x8xf32>
    %c26 = arith.constant 26 : index
    %207 = memref.load %arg2[%c26] : memref<512xf32, #tpu.memory_space<smem>>
    %208 = vector.broadcast %207 : f32 to vector<8x8xf32>
    %209 = arith.mulf %208, %35 : vector<8x8xf32>
    %210 = arith.addf %206, %209 : vector<8x8xf32>
    %c42 = arith.constant 42 : index
    %211 = memref.load %arg2[%c42] : memref<512xf32, #tpu.memory_space<smem>>
    %212 = vector.broadcast %211 : f32 to vector<8x8xf32>
    %213 = arith.mulf %212, %37 : vector<8x8xf32>
    %214 = arith.addf %210, %213 : vector<8x8xf32>
    %c58 = arith.constant 58 : index
    %215 = memref.load %arg2[%c58] : memref<512xf32, #tpu.memory_space<smem>>
    %216 = vector.broadcast %215 : f32 to vector<8x8xf32>
    %217 = arith.mulf %216, %39 : vector<8x8xf32>
    %218 = arith.addf %214, %217 : vector<8x8xf32>
    %c1 = arith.constant 1 : index
    %219 = memref.load %arg2[%c1] : memref<512xf32, #tpu.memory_space<smem>>
    %220 = vector.broadcast %219 : f32 to vector<8x8xf32>
    %221 = arith.mulf %220, %44 : vector<8x8xf32>
    %222 = arith.addf %218, %221 : vector<8x8xf32>
    %c17 = arith.constant 17 : index
    %223 = memref.load %arg2[%c17] : memref<512xf32, #tpu.memory_space<smem>>
    %224 = vector.broadcast %223 : f32 to vector<8x8xf32>
    %225 = arith.mulf %224, %46 : vector<8x8xf32>
    %226 = arith.addf %222, %225 : vector<8x8xf32>
    %c33 = arith.constant 33 : index
    %227 = memref.load %arg2[%c33] : memref<512xf32, #tpu.memory_space<smem>>
    %228 = vector.broadcast %227 : f32 to vector<8x8xf32>
    %229 = arith.mulf %228, %48 : vector<8x8xf32>
    %230 = arith.addf %226, %229 : vector<8x8xf32>
    %c49 = arith.constant 49 : index
    %231 = memref.load %arg2[%c49] : memref<512xf32, #tpu.memory_space<smem>>
    %232 = vector.broadcast %231 : f32 to vector<8x8xf32>
    %233 = arith.mulf %232, %50 : vector<8x8xf32>
    %234 = arith.addf %230, %233 : vector<8x8xf32>
    %c3 = arith.constant 3 : index
    %235 = memref.load %arg2[%c3] : memref<512xf32, #tpu.memory_space<smem>>
    %236 = vector.broadcast %235 : f32 to vector<8x8xf32>
    %237 = arith.mulf %236, %53 : vector<8x8xf32>
    %238 = arith.addf %234, %237 : vector<8x8xf32>
    %c19 = arith.constant 19 : index
    %239 = memref.load %arg2[%c19] : memref<512xf32, #tpu.memory_space<smem>>
    %240 = vector.broadcast %239 : f32 to vector<8x8xf32>
    %241 = arith.mulf %240, %55 : vector<8x8xf32>
    %242 = arith.addf %238, %241 : vector<8x8xf32>
    %c35 = arith.constant 35 : index
    %243 = memref.load %arg2[%c35] : memref<512xf32, #tpu.memory_space<smem>>
    %244 = vector.broadcast %243 : f32 to vector<8x8xf32>
    %245 = arith.mulf %244, %57 : vector<8x8xf32>
    %246 = arith.addf %242, %245 : vector<8x8xf32>
    %c51 = arith.constant 51 : index
    %247 = memref.load %arg2[%c51] : memref<512xf32, #tpu.memory_space<smem>>
    %248 = vector.broadcast %247 : f32 to vector<8x8xf32>
    %249 = arith.mulf %248, %59 : vector<8x8xf32>
    %250 = arith.addf %246, %249 : vector<8x8xf32>
    %c9 = arith.constant 9 : index
    %251 = memref.load %arg2[%c9] : memref<512xf32, #tpu.memory_space<smem>>
    %252 = vector.broadcast %251 : f32 to vector<8x8xf32>
    %253 = arith.mulf %252, %62 : vector<8x8xf32>
    %254 = arith.addf %250, %253 : vector<8x8xf32>
    %c25 = arith.constant 25 : index
    %255 = memref.load %arg2[%c25] : memref<512xf32, #tpu.memory_space<smem>>
    %256 = vector.broadcast %255 : f32 to vector<8x8xf32>
    %257 = arith.mulf %256, %64 : vector<8x8xf32>
    %258 = arith.addf %254, %257 : vector<8x8xf32>
    %c41 = arith.constant 41 : index
    %259 = memref.load %arg2[%c41] : memref<512xf32, #tpu.memory_space<smem>>
    %260 = vector.broadcast %259 : f32 to vector<8x8xf32>
    %261 = arith.mulf %260, %66 : vector<8x8xf32>
    %262 = arith.addf %258, %261 : vector<8x8xf32>
    %c57 = arith.constant 57 : index
    %263 = memref.load %arg2[%c57] : memref<512xf32, #tpu.memory_space<smem>>
    %264 = vector.broadcast %263 : f32 to vector<8x8xf32>
    %265 = arith.mulf %264, %68 : vector<8x8xf32>
    %266 = arith.addf %262, %265 : vector<8x8xf32>
    %c11 = arith.constant 11 : index
    %267 = memref.load %arg2[%c11] : memref<512xf32, #tpu.memory_space<smem>>
    %268 = vector.broadcast %267 : f32 to vector<8x8xf32>
    %269 = arith.mulf %268, %71 : vector<8x8xf32>
    %270 = arith.addf %266, %269 : vector<8x8xf32>
    %c27 = arith.constant 27 : index
    %271 = memref.load %arg2[%c27] : memref<512xf32, #tpu.memory_space<smem>>
    %272 = vector.broadcast %271 : f32 to vector<8x8xf32>
    %273 = arith.mulf %272, %73 : vector<8x8xf32>
    %274 = arith.addf %270, %273 : vector<8x8xf32>
    %c43 = arith.constant 43 : index
    %275 = memref.load %arg2[%c43] : memref<512xf32, #tpu.memory_space<smem>>
    %276 = vector.broadcast %275 : f32 to vector<8x8xf32>
    %277 = arith.mulf %276, %75 : vector<8x8xf32>
    %278 = arith.addf %274, %277 : vector<8x8xf32>
    %c59 = arith.constant 59 : index
    %279 = memref.load %arg2[%c59] : memref<512xf32, #tpu.memory_space<smem>>
    %280 = vector.broadcast %279 : f32 to vector<8x8xf32>
    %281 = arith.mulf %280, %77 : vector<8x8xf32>
    %282 = arith.addf %278, %281 : vector<8x8xf32>
    %c4 = arith.constant 4 : index
    %283 = memref.load %arg2[%c4] : memref<512xf32, #tpu.memory_space<smem>>
    %284 = vector.broadcast %283 : f32 to vector<8x8xf32>
    %285 = arith.mulf %284, %82 : vector<8x8xf32>
    %286 = arith.addf %282, %285 : vector<8x8xf32>
    %c20 = arith.constant 20 : index
    %287 = memref.load %arg2[%c20] : memref<512xf32, #tpu.memory_space<smem>>
    %288 = vector.broadcast %287 : f32 to vector<8x8xf32>
    %289 = arith.mulf %288, %84 : vector<8x8xf32>
    %290 = arith.addf %286, %289 : vector<8x8xf32>
    %c36 = arith.constant 36 : index
    %291 = memref.load %arg2[%c36] : memref<512xf32, #tpu.memory_space<smem>>
    %292 = vector.broadcast %291 : f32 to vector<8x8xf32>
    %293 = arith.mulf %292, %86 : vector<8x8xf32>
    %294 = arith.addf %290, %293 : vector<8x8xf32>
    %c52 = arith.constant 52 : index
    %295 = memref.load %arg2[%c52] : memref<512xf32, #tpu.memory_space<smem>>
    %296 = vector.broadcast %295 : f32 to vector<8x8xf32>
    %297 = arith.mulf %296, %88 : vector<8x8xf32>
    %298 = arith.addf %294, %297 : vector<8x8xf32>
    %c6 = arith.constant 6 : index
    %299 = memref.load %arg2[%c6] : memref<512xf32, #tpu.memory_space<smem>>
    %300 = vector.broadcast %299 : f32 to vector<8x8xf32>
    %301 = arith.mulf %300, %91 : vector<8x8xf32>
    %302 = arith.addf %298, %301 : vector<8x8xf32>
    %c22 = arith.constant 22 : index
    %303 = memref.load %arg2[%c22] : memref<512xf32, #tpu.memory_space<smem>>
    %304 = vector.broadcast %303 : f32 to vector<8x8xf32>
    %305 = arith.mulf %304, %93 : vector<8x8xf32>
    %306 = arith.addf %302, %305 : vector<8x8xf32>
    %c38 = arith.constant 38 : index
    %307 = memref.load %arg2[%c38] : memref<512xf32, #tpu.memory_space<smem>>
    %308 = vector.broadcast %307 : f32 to vector<8x8xf32>
    %309 = arith.mulf %308, %95 : vector<8x8xf32>
    %310 = arith.addf %306, %309 : vector<8x8xf32>
    %c54 = arith.constant 54 : index
    %311 = memref.load %arg2[%c54] : memref<512xf32, #tpu.memory_space<smem>>
    %312 = vector.broadcast %311 : f32 to vector<8x8xf32>
    %313 = arith.mulf %312, %97 : vector<8x8xf32>
    %314 = arith.addf %310, %313 : vector<8x8xf32>
    %c12 = arith.constant 12 : index
    %315 = memref.load %arg2[%c12] : memref<512xf32, #tpu.memory_space<smem>>
    %316 = vector.broadcast %315 : f32 to vector<8x8xf32>
    %317 = arith.mulf %316, %100 : vector<8x8xf32>
    %318 = arith.addf %314, %317 : vector<8x8xf32>
    %c28 = arith.constant 28 : index
    %319 = memref.load %arg2[%c28] : memref<512xf32, #tpu.memory_space<smem>>
    %320 = vector.broadcast %319 : f32 to vector<8x8xf32>
    %321 = arith.mulf %320, %102 : vector<8x8xf32>
    %322 = arith.addf %318, %321 : vector<8x8xf32>
    %c44 = arith.constant 44 : index
    %323 = memref.load %arg2[%c44] : memref<512xf32, #tpu.memory_space<smem>>
    %324 = vector.broadcast %323 : f32 to vector<8x8xf32>
    %325 = arith.mulf %324, %104 : vector<8x8xf32>
    %326 = arith.addf %322, %325 : vector<8x8xf32>
    %c60 = arith.constant 60 : index
    %327 = memref.load %arg2[%c60] : memref<512xf32, #tpu.memory_space<smem>>
    %328 = vector.broadcast %327 : f32 to vector<8x8xf32>
    %329 = arith.mulf %328, %106 : vector<8x8xf32>
    %330 = arith.addf %326, %329 : vector<8x8xf32>
    %c14 = arith.constant 14 : index
    %331 = memref.load %arg2[%c14] : memref<512xf32, #tpu.memory_space<smem>>
    %332 = vector.broadcast %331 : f32 to vector<8x8xf32>
    %333 = arith.mulf %332, %109 : vector<8x8xf32>
    %334 = arith.addf %330, %333 : vector<8x8xf32>
    %c30 = arith.constant 30 : index
    %335 = memref.load %arg2[%c30] : memref<512xf32, #tpu.memory_space<smem>>
    %336 = vector.broadcast %335 : f32 to vector<8x8xf32>
    %337 = arith.mulf %336, %111 : vector<8x8xf32>
    %338 = arith.addf %334, %337 : vector<8x8xf32>
    %c46 = arith.constant 46 : index
    %339 = memref.load %arg2[%c46] : memref<512xf32, #tpu.memory_space<smem>>
    %340 = vector.broadcast %339 : f32 to vector<8x8xf32>
    %341 = arith.mulf %340, %113 : vector<8x8xf32>
    %342 = arith.addf %338, %341 : vector<8x8xf32>
    %c62 = arith.constant 62 : index
    %343 = memref.load %arg2[%c62] : memref<512xf32, #tpu.memory_space<smem>>
    %344 = vector.broadcast %343 : f32 to vector<8x8xf32>
    %345 = arith.mulf %344, %115 : vector<8x8xf32>
    %346 = arith.addf %342, %345 : vector<8x8xf32>
    %c5 = arith.constant 5 : index
    %347 = memref.load %arg2[%c5] : memref<512xf32, #tpu.memory_space<smem>>
    %348 = vector.broadcast %347 : f32 to vector<8x8xf32>
    %349 = arith.mulf %348, %120 : vector<8x8xf32>
    %350 = arith.addf %346, %349 : vector<8x8xf32>
    %c21 = arith.constant 21 : index
    %351 = memref.load %arg2[%c21] : memref<512xf32, #tpu.memory_space<smem>>
    %352 = vector.broadcast %351 : f32 to vector<8x8xf32>
    %353 = arith.mulf %352, %122 : vector<8x8xf32>
    %354 = arith.addf %350, %353 : vector<8x8xf32>
    %c37 = arith.constant 37 : index
    %355 = memref.load %arg2[%c37] : memref<512xf32, #tpu.memory_space<smem>>
    %356 = vector.broadcast %355 : f32 to vector<8x8xf32>
    %357 = arith.mulf %356, %124 : vector<8x8xf32>
    %358 = arith.addf %354, %357 : vector<8x8xf32>
    %c53 = arith.constant 53 : index
    %359 = memref.load %arg2[%c53] : memref<512xf32, #tpu.memory_space<smem>>
    %360 = vector.broadcast %359 : f32 to vector<8x8xf32>
    %361 = arith.mulf %360, %126 : vector<8x8xf32>
    %362 = arith.addf %358, %361 : vector<8x8xf32>
    %c7 = arith.constant 7 : index
    %363 = memref.load %arg2[%c7] : memref<512xf32, #tpu.memory_space<smem>>
    %364 = vector.broadcast %363 : f32 to vector<8x8xf32>
    %365 = arith.mulf %364, %129 : vector<8x8xf32>
    %366 = arith.addf %362, %365 : vector<8x8xf32>
    %c23 = arith.constant 23 : index
    %367 = memref.load %arg2[%c23] : memref<512xf32, #tpu.memory_space<smem>>
    %368 = vector.broadcast %367 : f32 to vector<8x8xf32>
    %369 = arith.mulf %368, %131 : vector<8x8xf32>
    %370 = arith.addf %366, %369 : vector<8x8xf32>
    %c39 = arith.constant 39 : index
    %371 = memref.load %arg2[%c39] : memref<512xf32, #tpu.memory_space<smem>>
    %372 = vector.broadcast %371 : f32 to vector<8x8xf32>
    %373 = arith.mulf %372, %133 : vector<8x8xf32>
    %374 = arith.addf %370, %373 : vector<8x8xf32>
    %c55 = arith.constant 55 : index
    %375 = memref.load %arg2[%c55] : memref<512xf32, #tpu.memory_space<smem>>
    %376 = vector.broadcast %375 : f32 to vector<8x8xf32>
    %377 = arith.mulf %376, %135 : vector<8x8xf32>
    %378 = arith.addf %374, %377 : vector<8x8xf32>
    %c13 = arith.constant 13 : index
    %379 = memref.load %arg2[%c13] : memref<512xf32, #tpu.memory_space<smem>>
    %380 = vector.broadcast %379 : f32 to vector<8x8xf32>
    %381 = arith.mulf %380, %138 : vector<8x8xf32>
    %382 = arith.addf %378, %381 : vector<8x8xf32>
    %c29 = arith.constant 29 : index
    %383 = memref.load %arg2[%c29] : memref<512xf32, #tpu.memory_space<smem>>
    %384 = vector.broadcast %383 : f32 to vector<8x8xf32>
    %385 = arith.mulf %384, %140 : vector<8x8xf32>
    %386 = arith.addf %382, %385 : vector<8x8xf32>
    %c45 = arith.constant 45 : index
    %387 = memref.load %arg2[%c45] : memref<512xf32, #tpu.memory_space<smem>>
    %388 = vector.broadcast %387 : f32 to vector<8x8xf32>
    %389 = arith.mulf %388, %142 : vector<8x8xf32>
    %390 = arith.addf %386, %389 : vector<8x8xf32>
    %c61 = arith.constant 61 : index
    %391 = memref.load %arg2[%c61] : memref<512xf32, #tpu.memory_space<smem>>
    %392 = vector.broadcast %391 : f32 to vector<8x8xf32>
    %393 = arith.mulf %392, %144 : vector<8x8xf32>
    %394 = arith.addf %390, %393 : vector<8x8xf32>
    %c15 = arith.constant 15 : index
    %395 = memref.load %arg2[%c15] : memref<512xf32, #tpu.memory_space<smem>>
    %396 = vector.broadcast %395 : f32 to vector<8x8xf32>
    %397 = arith.mulf %396, %147 : vector<8x8xf32>
    %398 = arith.addf %394, %397 : vector<8x8xf32>
    %c31 = arith.constant 31 : index
    %399 = memref.load %arg2[%c31] : memref<512xf32, #tpu.memory_space<smem>>
    %400 = vector.broadcast %399 : f32 to vector<8x8xf32>
    %401 = arith.mulf %400, %149 : vector<8x8xf32>
    %402 = arith.addf %398, %401 : vector<8x8xf32>
    %c47 = arith.constant 47 : index
    %403 = memref.load %arg2[%c47] : memref<512xf32, #tpu.memory_space<smem>>
    %404 = vector.broadcast %403 : f32 to vector<8x8xf32>
    %405 = arith.mulf %404, %151 : vector<8x8xf32>
    %406 = arith.addf %402, %405 : vector<8x8xf32>
    %c63 = arith.constant 63 : index
    %407 = memref.load %arg2[%c63] : memref<512xf32, #tpu.memory_space<smem>>
    %408 = vector.broadcast %407 : f32 to vector<8x8xf32>
    %409 = arith.mulf %408, %153 : vector<8x8xf32>
    %410 = arith.addf %406, %409 : vector<8x8xf32>
    %411 = vector.shape_cast %410 : vector<8x8xf32> to vector<1x8x8xf32>
    %cst_5 = arith.constant dense<0.000000e+00> : vector<1xf32>
    %412 = vector.multi_reduction <add>, %411, %cst_5 [1, 2] : vector<1x8x8xf32> to vector<1xf32>
    %413 = vector.shape_cast %412 : vector<1xf32> to vector<1x1x1xf32>
    %414 = vector.extract %413[0, 0, 0] : f32 from vector<1x1x1xf32>
    %415 = vector.broadcast %414 : f32 to vector<1x1xf32>
    %cst_6 = arith.constant 1.562500e-02 : f32
    %416 = vector.broadcast %cst_6 : f32 to vector<1x1xf32>
    %417 = arith.mulf %415, %416 : vector<1x1xf32>
    %418 = vector.broadcast %417 : vector<1x1xf32> to vector<8x8xf32>
    %419 = arith.subf %410, %418 : vector<8x8xf32>
    %420 = arith.mulf %419, %419 : vector<8x8xf32>
    %421 = vector.shape_cast %420 : vector<8x8xf32> to vector<1x8x8xf32>
    %cst_7 = arith.constant dense<0.000000e+00> : vector<1xf32>
    %422 = vector.multi_reduction <add>, %421, %cst_7 [1, 2] : vector<1x8x8xf32> to vector<1xf32>
    %423 = vector.shape_cast %422 : vector<1xf32> to vector<1x1x1xf32>
    %424 = vector.extract %423[0, 0, 0] : f32 from vector<1x1x1xf32>
    %425 = vector.broadcast %424 : f32 to vector<1x1xf32>
    %cst_8 = arith.constant 1.562500e-02 : f32
    %426 = vector.broadcast %cst_8 : f32 to vector<1x1xf32>
    %427 = arith.mulf %425, %426 : vector<1x1xf32>
    %cst_9 = arith.constant 9.99999974E-6 : f32
    %428 = vector.broadcast %cst_9 : f32 to vector<1x1xf32>
    %429 = arith.addf %427, %428 : vector<1x1xf32>
    %430 = math.rsqrt %429 : vector<1x1xf32>
    %c0_10 = arith.constant 0 : index
    %431 = memref.load %arg3[%c0_10] : memref<8xf32, #tpu.memory_space<smem>>
    %432 = vector.broadcast %431 : f32 to vector<1x1xf32>
    %433 = arith.mulf %430, %432 : vector<1x1xf32>
    %434 = vector.broadcast %433 : vector<1x1xf32> to vector<8x8xf32>
    %435 = arith.mulf %419, %434 : vector<8x8xf32>
    %c0_11 = arith.constant 0 : index
    %436 = memref.load %arg4[%c0_11] : memref<8xf32, #tpu.memory_space<smem>>
    %437 = vector.broadcast %436 : f32 to vector<8x8xf32>
    %438 = arith.addf %435, %437 : vector<8x8xf32>
    %cst_12 = arith.constant 0.000000e+00 : f32
    %439 = vector.broadcast %cst_12 : f32 to vector<8x8xf32>
    %440 = arith.cmpf ogt, %438, %439 : vector<8x8xf32>
    %cst_13 = arith.constant 2.000000e-01 : f32
    %441 = vector.broadcast %cst_13 : f32 to vector<8x8xf32>
    %442 = arith.mulf %441, %438 : vector<8x8xf32>
    %443 = arith.select %440, %438, %442 : vector<8x8xi1>, vector<8x8xf32>
    %c0_14 = arith.constant 0 : index
    %c0_15 = arith.constant 0 : index
    %c0_16 = arith.constant 0 : index
    %c0_17 = arith.constant 0 : index
    %444 = vector.load %arg5[%c0_14, %c0_15, %c0_16, %c0_17] : memref<1x8x8x8xf32, #tpu.memory_space<vmem>>, vector<1x1x8x8xf32>
    %445 = vector.shape_cast %444 : vector<1x1x8x8xf32> to vector<8x8xf32>
    %446 = vector.shape_cast %443 : vector<8x8xf32> to vector<1x1x8x8xf32>
    tpu.vector_store %arg5[%c0_14, %c0_15, %c0_16, %c0_17], %446 {strides = array<i32>} : memref<1x8x8x8xf32, #tpu.memory_space<vmem>>, vector<1x1x8x8xf32>,
    %cst_18 = arith.constant 0.000000e+00 : f32
    %447 = vector.broadcast %cst_18 : f32 to vector<8x8xf32>
    %c64 = arith.constant 64 : index
    %448 = memref.load %arg2[%c64] : memref<512xf32, #tpu.memory_space<smem>>
    %449 = vector.broadcast %448 : f32 to vector<8x8xf32>
    %450 = arith.mulf %449, %6 : vector<8x8xf32>
    %451 = arith.addf %447, %450 : vector<8x8xf32>
    %c80 = arith.constant 80 : index
    %452 = memref.load %arg2[%c80] : memref<512xf32, #tpu.memory_space<smem>>
    %453 = vector.broadcast %452 : f32 to vector<8x8xf32>
    %454 = arith.mulf %453, %8 : vector<8x8xf32>
    %455 = arith.addf %451, %454 : vector<8x8xf32>
    %c96 = arith.constant 96 : index
    %456 = memref.load %arg2[%c96] : memref<512xf32, #tpu.memory_space<smem>>
    %457 = vector.broadcast %456 : f32 to vector<8x8xf32>
    %458 = arith.mulf %457, %10 : vector<8x8xf32>
    %459 = arith.addf %455, %458 : vector<8x8xf32>
    %c112 = arith.constant 112 : index
    %460 = memref.load %arg2[%c112] : memref<512xf32, #tpu.memory_space<smem>>
    %461 = vector.broadcast %460 : f32 to vector<8x8xf32>
    %462 = arith.mulf %461, %12 : vector<8x8xf32>
    %463 = arith.addf %459, %462 : vector<8x8xf32>
    %c66 = arith.constant 66 : index
    %464 = memref.load %arg2[%c66] : memref<512xf32, #tpu.memory_space<smem>>
    %465 = vector.broadcast %464 : f32 to vector<8x8xf32>
    %466 = arith.mulf %465, %15 : vector<8x8xf32>
    %467 = arith.addf %463, %466 : vector<8x8xf32>
    %c82 = arith.constant 82 : index
    %468 = memref.load %arg2[%c82] : memref<512xf32, #tpu.memory_space<smem>>
    %469 = vector.broadcast %468 : f32 to vector<8x8xf32>
    %470 = arith.mulf %469, %17 : vector<8x8xf32>
    %471 = arith.addf %467, %470 : vector<8x8xf32>
    %c98 = arith.constant 98 : index
    %472 = memref.load %arg2[%c98] : memref<512xf32, #tpu.memory_space<smem>>
    %473 = vector.broadcast %472 : f32 to vector<8x8xf32>
    %474 = arith.mulf %473, %19 : vector<8x8xf32>
    %475 = arith.addf %471, %474 : vector<8x8xf32>
    %c114 = arith.constant 114 : index
    %476 = memref.load %arg2[%c114] : memref<512xf32, #tpu.memory_space<smem>>
    %477 = vector.broadcast %476 : f32 to vector<8x8xf32>
    %478 = arith.mulf %477, %21 : vector<8x8xf32>
    %479 = arith.addf %475, %478 : vector<8x8xf32>
    %c72 = arith.constant 72 : index
    %480 = memref.load %arg2[%c72] : memref<512xf32, #tpu.memory_space<smem>>
    %481 = vector.broadcast %480 : f32 to vector<8x8xf32>
    %482 = arith.mulf %481, %24 : vector<8x8xf32>
    %483 = arith.addf %479, %482 : vector<8x8xf32>
    %c88 = arith.constant 88 : index
    %484 = memref.load %arg2[%c88] : memref<512xf32, #tpu.memory_space<smem>>
    %485 = vector.broadcast %484 : f32 to vector<8x8xf32>
    %486 = arith.mulf %485, %26 : vector<8x8xf32>
    %487 = arith.addf %483, %486 : vector<8x8xf32>
    %c104 = arith.constant 104 : index
    %488 = memref.load %arg2[%c104] : memref<512xf32, #tpu.memory_space<smem>>
    %489 = vector.broadcast %488 : f32 to vector<8x8xf32>
    %490 = arith.mulf %489, %28 : vector<8x8xf32>
    %491 = arith.addf %487, %490 : vector<8x8xf32>
    %c120 = arith.constant 120 : index
    %492 = memref.load %arg2[%c120] : memref<512xf32, #tpu.memory_space<smem>>
    %493 = vector.broadcast %492 : f32 to vector<8x8xf32>
    %494 = arith.mulf %493, %30 : vector<8x8xf32>
    %495 = arith.addf %491, %494 : vector<8x8xf32>
    %c74 = arith.constant 74 : index
    %496 = memref.load %arg2[%c74] : memref<512xf32, #tpu.memory_space<smem>>
    %497 = vector.broadcast %496 : f32 to vector<8x8xf32>
    %498 = arith.mulf %497, %33 : vector<8x8xf32>
    %499 = arith.addf %495, %498 : vector<8x8xf32>
    %c90 = arith.constant 90 : index
    %500 = memref.load %arg2[%c90] : memref<512xf32, #tpu.memory_space<smem>>
    %501 = vector.broadcast %500 : f32 to vector<8x8xf32>
    %502 = arith.mulf %501, %35 : vector<8x8xf32>
    %503 = arith.addf %499, %502 : vector<8x8xf32>
    %c106 = arith.constant 106 : index
    %504 = memref.load %arg2[%c106] : memref<512xf32, #tpu.memory_space<smem>>
    %505 = vector.broadcast %504 : f32 to vector<8x8xf32>
    %506 = arith.mulf %505, %37 : vector<8x8xf32>
    %507 = arith.addf %503, %506 : vector<8x8xf32>
    %c122 = arith.constant 122 : index
    %508 = memref.load %arg2[%c122] : memref<512xf32, #tpu.memory_space<smem>>
    %509 = vector.broadcast %508 : f32 to vector<8x8xf32>
    %510 = arith.mulf %509, %39 : vector<8x8xf32>
    %511 = arith.addf %507, %510 : vector<8x8xf32>
    %c65 = arith.constant 65 : index
    %512 = memref.load %arg2[%c65] : memref<512xf32, #tpu.memory_space<smem>>
    %513 = vector.broadcast %512 : f32 to vector<8x8xf32>
    %514 = arith.mulf %513, %44 : vector<8x8xf32>
    %515 = arith.addf %511, %514 : vector<8x8xf32>
    %c81 = arith.constant 81 : index
    %516 = memref.load %arg2[%c81] : memref<512xf32, #tpu.memory_space<smem>>
    %517 = vector.broadcast %516 : f32 to vector<8x8xf32>
    %518 = arith.mulf %517, %46 : vector<8x8xf32>
    %519 = arith.addf %515, %518 : vector<8x8xf32>
    %c97 = arith.constant 97 : index
    %520 = memref.load %arg2[%c97] : memref<512xf32, #tpu.memory_space<smem>>
    %521 = vector.broadcast %520 : f32 to vector<8x8xf32>
    %522 = arith.mulf %521, %48 : vector<8x8xf32>
    %523 = arith.addf %519, %522 : vector<8x8xf32>
    %c113 = arith.constant 113 : index
    %524 = memref.load %arg2[%c113] : memref<512xf32, #tpu.memory_space<smem>>
    %525 = vector.broadcast %524 : f32 to vector<8x8xf32>
    %526 = arith.mulf %525, %50 : vector<8x8xf32>
    %527 = arith.addf %523, %526 : vector<8x8xf32>
    %c67 = arith.constant 67 : index
    %528 = memref.load %arg2[%c67] : memref<512xf32, #tpu.memory_space<smem>>
    %529 = vector.broadcast %528 : f32 to vector<8x8xf32>
    %530 = arith.mulf %529, %53 : vector<8x8xf32>
    %531 = arith.addf %527, %530 : vector<8x8xf32>
    %c83 = arith.constant 83 : index
    %532 = memref.load %arg2[%c83] : memref<512xf32, #tpu.memory_space<smem>>
    %533 = vector.broadcast %532 : f32 to vector<8x8xf32>
    %534 = arith.mulf %533, %55 : vector<8x8xf32>
    %535 = arith.addf %531, %534 : vector<8x8xf32>
    %c99 = arith.constant 99 : index
    %536 = memref.load %arg2[%c99] : memref<512xf32, #tpu.memory_space<smem>>
    %537 = vector.broadcast %536 : f32 to vector<8x8xf32>
    %538 = arith.mulf %537, %57 : vector<8x8xf32>
    %539 = arith.addf %535, %538 : vector<8x8xf32>
    %c115 = arith.constant 115 : index
    %540 = memref.load %arg2[%c115] : memref<512xf32, #tpu.memory_space<smem>>
    %541 = vector.broadcast %540 : f32 to vector<8x8xf32>
    %542 = arith.mulf %541, %59 : vector<8x8xf32>
    %543 = arith.addf %539, %542 : vector<8x8xf32>
    %c73 = arith.constant 73 : index
    %544 = memref.load %arg2[%c73] : memref<512xf32, #tpu.memory_space<smem>>
    %545 = vector.broadcast %544 : f32 to vector<8x8xf32>
    %546 = arith.mulf %545, %62 : vector<8x8xf32>
    %547 = arith.addf %543, %546 : vector<8x8xf32>
    %c89 = arith.constant 89 : index
    %548 = memref.load %arg2[%c89] : memref<512xf32, #tpu.memory_space<smem>>
    %549 = vector.broadcast %548 : f32 to vector<8x8xf32>
    %550 = arith.mulf %549, %64 : vector<8x8xf32>
    %551 = arith.addf %547, %550 : vector<8x8xf32>
    %c105 = arith.constant 105 : index
    %552 = memref.load %arg2[%c105] : memref<512xf32, #tpu.memory_space<smem>>
    %553 = vector.broadcast %552 : f32 to vector<8x8xf32>
    %554 = arith.mulf %553, %66 : vector<8x8xf32>
    %555 = arith.addf %551, %554 : vector<8x8xf32>
    %c121 = arith.constant 121 : index
    %556 = memref.load %arg2[%c121] : memref<512xf32, #tpu.memory_space<smem>>
    %557 = vector.broadcast %556 : f32 to vector<8x8xf32>
    %558 = arith.mulf %557, %68 : vector<8x8xf32>
    %559 = arith.addf %555, %558 : vector<8x8xf32>
    %c75 = arith.constant 75 : index
    %560 = memref.load %arg2[%c75] : memref<512xf32, #tpu.memory_space<smem>>
    %561 = vector.broadcast %560 : f32 to vector<8x8xf32>
    %562 = arith.mulf %561, %71 : vector<8x8xf32>
    %563 = arith.addf %559, %562 : vector<8x8xf32>
    %c91 = arith.constant 91 : index
    %564 = memref.load %arg2[%c91] : memref<512xf32, #tpu.memory_space<smem>>
    %565 = vector.broadcast %564 : f32 to vector<8x8xf32>
    %566 = arith.mulf %565, %73 : vector<8x8xf32>
    %567 = arith.addf %563, %566 : vector<8x8xf32>
    %c107 = arith.constant 107 : index
    %568 = memref.load %arg2[%c107] : memref<512xf32, #tpu.memory_space<smem>>
    %569 = vector.broadcast %568 : f32 to vector<8x8xf32>
    %570 = arith.mulf %569, %75 : vector<8x8xf32>
    %571 = arith.addf %567, %570 : vector<8x8xf32>
    %c123 = arith.constant 123 : index
    %572 = memref.load %arg2[%c123] : memref<512xf32, #tpu.memory_space<smem>>
    %573 = vector.broadcast %572 : f32 to vector<8x8xf32>
    %574 = arith.mulf %573, %77 : vector<8x8xf32>
    %575 = arith.addf %571, %574 : vector<8x8xf32>
    %c68 = arith.constant 68 : index
    %576 = memref.load %arg2[%c68] : memref<512xf32, #tpu.memory_space<smem>>
    %577 = vector.broadcast %576 : f32 to vector<8x8xf32>
    %578 = arith.mulf %577, %82 : vector<8x8xf32>
    %579 = arith.addf %575, %578 : vector<8x8xf32>
    %c84 = arith.constant 84 : index
    %580 = memref.load %arg2[%c84] : memref<512xf32, #tpu.memory_space<smem>>
    %581 = vector.broadcast %580 : f32 to vector<8x8xf32>
    %582 = arith.mulf %581, %84 : vector<8x8xf32>
    %583 = arith.addf %579, %582 : vector<8x8xf32>
    %c100 = arith.constant 100 : index
    %584 = memref.load %arg2[%c100] : memref<512xf32, #tpu.memory_space<smem>>
    %585 = vector.broadcast %584 : f32 to vector<8x8xf32>
    %586 = arith.mulf %585, %86 : vector<8x8xf32>
    %587 = arith.addf %583, %586 : vector<8x8xf32>
    %c116 = arith.constant 116 : index
    %588 = memref.load %arg2[%c116] : memref<512xf32, #tpu.memory_space<smem>>
    %589 = vector.broadcast %588 : f32 to vector<8x8xf32>
    %590 = arith.mulf %589, %88 : vector<8x8xf32>
    %591 = arith.addf %587, %590 : vector<8x8xf32>
    %c70 = arith.constant 70 : index
    %592 = memref.load %arg2[%c70] : memref<512xf32, #tpu.memory_space<smem>>
    %593 = vector.broadcast %592 : f32 to vector<8x8xf32>
    %594 = arith.mulf %593, %91 : vector<8x8xf32>
    %595 = arith.addf %591, %594 : vector<8x8xf32>
    %c86 = arith.constant 86 : index
    %596 = memref.load %arg2[%c86] : memref<512xf32, #tpu.memory_space<smem>>
    %597 = vector.broadcast %596 : f32 to vector<8x8xf32>
    %598 = arith.mulf %597, %93 : vector<8x8xf32>
    %599 = arith.addf %595, %598 : vector<8x8xf32>
    %c102 = arith.constant 102 : index
    %600 = memref.load %arg2[%c102] : memref<512xf32, #tpu.memory_space<smem>>
    %601 = vector.broadcast %600 : f32 to vector<8x8xf32>
    %602 = arith.mulf %601, %95 : vector<8x8xf32>
    %603 = arith.addf %599, %602 : vector<8x8xf32>
    %c118 = arith.constant 118 : index
    %604 = memref.load %arg2[%c118] : memref<512xf32, #tpu.memory_space<smem>>
    %605 = vector.broadcast %604 : f32 to vector<8x8xf32>
    %606 = arith.mulf %605, %97 : vector<8x8xf32>
    %607 = arith.addf %603, %606 : vector<8x8xf32>
    %c76 = arith.constant 76 : index
    %608 = memref.load %arg2[%c76] : memref<512xf32, #tpu.memory_space<smem>>
    %609 = vector.broadcast %608 : f32 to vector<8x8xf32>
    %610 = arith.mulf %609, %100 : vector<8x8xf32>
    %611 = arith.addf %607, %610 : vector<8x8xf32>
    %c92 = arith.constant 92 : index
    %612 = memref.load %arg2[%c92] : memref<512xf32, #tpu.memory_space<smem>>
    %613 = vector.broadcast %612 : f32 to vector<8x8xf32>
    %614 = arith.mulf %613, %102 : vector<8x8xf32>
    %615 = arith.addf %611, %614 : vector<8x8xf32>
    %c108 = arith.constant 108 : index
    %616 = memref.load %arg2[%c108] : memref<512xf32, #tpu.memory_space<smem>>
    %617 = vector.broadcast %616 : f32 to vector<8x8xf32>
    %618 = arith.mulf %617, %104 : vector<8x8xf32>
    %619 = arith.addf %615, %618 : vector<8x8xf32>
    %c124 = arith.constant 124 : index
    %620 = memref.load %arg2[%c124] : memref<512xf32, #tpu.memory_space<smem>>
    %621 = vector.broadcast %620 : f32 to vector<8x8xf32>
    %622 = arith.mulf %621, %106 : vector<8x8xf32>
    %623 = arith.addf %619, %622 : vector<8x8xf32>
    %c78 = arith.constant 78 : index
    %624 = memref.load %arg2[%c78] : memref<512xf32, #tpu.memory_space<smem>>
    %625 = vector.broadcast %624 : f32 to vector<8x8xf32>
    %626 = arith.mulf %625, %109 : vector<8x8xf32>
    %627 = arith.addf %623, %626 : vector<8x8xf32>
    %c94 = arith.constant 94 : index
    %628 = memref.load %arg2[%c94] : memref<512xf32, #tpu.memory_space<smem>>
    %629 = vector.broadcast %628 : f32 to vector<8x8xf32>
    %630 = arith.mulf %629, %111 : vector<8x8xf32>
    %631 = arith.addf %627, %630 : vector<8x8xf32>
    %c110 = arith.constant 110 : index
    %632 = memref.load %arg2[%c110] : memref<512xf32, #tpu.memory_space<smem>>
    %633 = vector.broadcast %632 : f32 to vector<8x8xf32>
    %634 = arith.mulf %633, %113 : vector<8x8xf32>
    %635 = arith.addf %631, %634 : vector<8x8xf32>
    %c126 = arith.constant 126 : index
    %636 = memref.load %arg2[%c126] : memref<512xf32, #tpu.memory_space<smem>>
    %637 = vector.broadcast %636 : f32 to vector<8x8xf32>
    %638 = arith.mulf %637, %115 : vector<8x8xf32>
    %639 = arith.addf %635, %638 : vector<8x8xf32>
    %c69 = arith.constant 69 : index
    %640 = memref.load %arg2[%c69] : memref<512xf32, #tpu.memory_space<smem>>
    %641 = vector.broadcast %640 : f32 to vector<8x8xf32>
    %642 = arith.mulf %641, %120 : vector<8x8xf32>
    %643 = arith.addf %639, %642 : vector<8x8xf32>
    %c85 = arith.constant 85 : index
    %644 = memref.load %arg2[%c85] : memref<512xf32, #tpu.memory_space<smem>>
    %645 = vector.broadcast %644 : f32 to vector<8x8xf32>
    %646 = arith.mulf %645, %122 : vector<8x8xf32>
    %647 = arith.addf %643, %646 : vector<8x8xf32>
    %c101 = arith.constant 101 : index
    %648 = memref.load %arg2[%c101] : memref<512xf32, #tpu.memory_space<smem>>
    %649 = vector.broadcast %648 : f32 to vector<8x8xf32>
    %650 = arith.mulf %649, %124 : vector<8x8xf32>
    %651 = arith.addf %647, %650 : vector<8x8xf32>
    %c117 = arith.constant 117 : index
    %652 = memref.load %arg2[%c117] : memref<512xf32, #tpu.memory_space<smem>>
    %653 = vector.broadcast %652 : f32 to vector<8x8xf32>
    %654 = arith.mulf %653, %126 : vector<8x8xf32>
    %655 = arith.addf %651, %654 : vector<8x8xf32>
    %c71 = arith.constant 71 : index
    %656 = memref.load %arg2[%c71] : memref<512xf32, #tpu.memory_space<smem>>
    %657 = vector.broadcast %656 : f32 to vector<8x8xf32>
    %658 = arith.mulf %657, %129 : vector<8x8xf32>
    %659 = arith.addf %655, %658 : vector<8x8xf32>
    %c87 = arith.constant 87 : index
    %660 = memref.load %arg2[%c87] : memref<512xf32, #tpu.memory_space<smem>>
    %661 = vector.broadcast %660 : f32 to vector<8x8xf32>
    %662 = arith.mulf %661, %131 : vector<8x8xf32>
    %663 = arith.addf %659, %662 : vector<8x8xf32>
    %c103 = arith.constant 103 : index
    %664 = memref.load %arg2[%c103] : memref<512xf32, #tpu.memory_space<smem>>
    %665 = vector.broadcast %664 : f32 to vector<8x8xf32>
    %666 = arith.mulf %665, %133 : vector<8x8xf32>
    %667 = arith.addf %663, %666 : vector<8x8xf32>
    %c119 = arith.constant 119 : index
    %668 = memref.load %arg2[%c119] : memref<512xf32, #tpu.memory_space<smem>>
    %669 = vector.broadcast %668 : f32 to vector<8x8xf32>
    %670 = arith.mulf %669, %135 : vector<8x8xf32>
    %671 = arith.addf %667, %670 : vector<8x8xf32>
    %c77 = arith.constant 77 : index
    %672 = memref.load %arg2[%c77] : memref<512xf32, #tpu.memory_space<smem>>
    %673 = vector.broadcast %672 : f32 to vector<8x8xf32>
    %674 = arith.mulf %673, %138 : vector<8x8xf32>
    %675 = arith.addf %671, %674 : vector<8x8xf32>
    %c93 = arith.constant 93 : index
    %676 = memref.load %arg2[%c93] : memref<512xf32, #tpu.memory_space<smem>>
    %677 = vector.broadcast %676 : f32 to vector<8x8xf32>
    %678 = arith.mulf %677, %140 : vector<8x8xf32>
    %679 = arith.addf %675, %678 : vector<8x8xf32>
    %c109 = arith.constant 109 : index
    %680 = memref.load %arg2[%c109] : memref<512xf32, #tpu.memory_space<smem>>
    %681 = vector.broadcast %680 : f32 to vector<8x8xf32>
    %682 = arith.mulf %681, %142 : vector<8x8xf32>
    %683 = arith.addf %679, %682 : vector<8x8xf32>
    %c125 = arith.constant 125 : index
    %684 = memref.load %arg2[%c125] : memref<512xf32, #tpu.memory_space<smem>>
    %685 = vector.broadcast %684 : f32 to vector<8x8xf32>
    %686 = arith.mulf %685, %144 : vector<8x8xf32>
    %687 = arith.addf %683, %686 : vector<8x8xf32>
    %c79 = arith.constant 79 : index
    %688 = memref.load %arg2[%c79] : memref<512xf32, #tpu.memory_space<smem>>
    %689 = vector.broadcast %688 : f32 to vector<8x8xf32>
    %690 = arith.mulf %689, %147 : vector<8x8xf32>
    %691 = arith.addf %687, %690 : vector<8x8xf32>
    %c95 = arith.constant 95 : index
    %692 = memref.load %arg2[%c95] : memref<512xf32, #tpu.memory_space<smem>>
    %693 = vector.broadcast %692 : f32 to vector<8x8xf32>
    %694 = arith.mulf %693, %149 : vector<8x8xf32>
    %695 = arith.addf %691, %694 : vector<8x8xf32>
    %c111 = arith.constant 111 : index
    %696 = memref.load %arg2[%c111] : memref<512xf32, #tpu.memory_space<smem>>
    %697 = vector.broadcast %696 : f32 to vector<8x8xf32>
    %698 = arith.mulf %697, %151 : vector<8x8xf32>
    %699 = arith.addf %695, %698 : vector<8x8xf32>
    %c127 = arith.constant 127 : index
    %700 = memref.load %arg2[%c127] : memref<512xf32, #tpu.memory_space<smem>>
    %701 = vector.broadcast %700 : f32 to vector<8x8xf32>
    %702 = arith.mulf %701, %153 : vector<8x8xf32>
    %703 = arith.addf %699, %702 : vector<8x8xf32>
    %704 = vector.shape_cast %703 : vector<8x8xf32> to vector<1x8x8xf32>
    %cst_19 = arith.constant dense<0.000000e+00> : vector<1xf32>
    %705 = vector.multi_reduction <add>, %704, %cst_19 [1, 2] : vector<1x8x8xf32> to vector<1xf32>
    %706 = vector.shape_cast %705 : vector<1xf32> to vector<1x1x1xf32>
    %707 = vector.extract %706[0, 0, 0] : f32 from vector<1x1x1xf32>
    %708 = vector.broadcast %707 : f32 to vector<1x1xf32>
    %cst_20 = arith.constant 1.562500e-02 : f32
    %709 = vector.broadcast %cst_20 : f32 to vector<1x1xf32>
    %710 = arith.mulf %708, %709 : vector<1x1xf32>
    %711 = vector.broadcast %710 : vector<1x1xf32> to vector<8x8xf32>
    %712 = arith.subf %703, %711 : vector<8x8xf32>
    %713 = arith.mulf %712, %712 : vector<8x8xf32>
    %714 = vector.shape_cast %713 : vector<8x8xf32> to vector<1x8x8xf32>
    %cst_21 = arith.constant dense<0.000000e+00> : vector<1xf32>
    %715 = vector.multi_reduction <add>, %714, %cst_21 [1, 2] : vector<1x8x8xf32> to vector<1xf32>
    %716 = vector.shape_cast %715 : vector<1xf32> to vector<1x1x1xf32>
    %717 = vector.extract %716[0, 0, 0] : f32 from vector<1x1x1xf32>
    %718 = vector.broadcast %717 : f32 to vector<1x1xf32>
    %cst_22 = arith.constant 1.562500e-02 : f32
    %719 = vector.broadcast %cst_22 : f32 to vector<1x1xf32>
    %720 = arith.mulf %718, %719 : vector<1x1xf32>
    %cst_23 = arith.constant 9.99999974E-6 : f32
    %721 = vector.broadcast %cst_23 : f32 to vector<1x1xf32>
    %722 = arith.addf %720, %721 : vector<1x1xf32>
    %723 = math.rsqrt %722 : vector<1x1xf32>
    %c1_24 = arith.constant 1 : index
    %724 = memref.load %arg3[%c1_24] : memref<8xf32, #tpu.memory_space<smem>>
    %725 = vector.broadcast %724 : f32 to vector<1x1xf32>
    %726 = arith.mulf %723, %725 : vector<1x1xf32>
    %727 = vector.broadcast %726 : vector<1x1xf32> to vector<8x8xf32>
    %728 = arith.mulf %712, %727 : vector<8x8xf32>
    %c1_25 = arith.constant 1 : index
    %729 = memref.load %arg4[%c1_25] : memref<8xf32, #tpu.memory_space<smem>>
    %730 = vector.broadcast %729 : f32 to vector<8x8xf32>
    %731 = arith.addf %728, %730 : vector<8x8xf32>
    %cst_26 = arith.constant 0.000000e+00 : f32
    %732 = vector.broadcast %cst_26 : f32 to vector<8x8xf32>
    %733 = arith.cmpf ogt, %731, %732 : vector<8x8xf32>
    %cst_27 = arith.constant 2.000000e-01 : f32
    %734 = vector.broadcast %cst_27 : f32 to vector<8x8xf32>
    %735 = arith.mulf %734, %731 : vector<8x8xf32>
    %736 = arith.select %733, %731, %735 : vector<8x8xi1>, vector<8x8xf32>
    %c0_28 = arith.constant 0 : index
    %c1_29 = arith.constant 1 : index
    %c0_30 = arith.constant 0 : index
    %c0_31 = arith.constant 0 : index
    %737 = vector.load %arg5[%c0_28, %c1_29, %c0_30, %c0_31] : memref<1x8x8x8xf32, #tpu.memory_space<vmem>>, vector<1x1x8x8xf32>
    %738 = vector.shape_cast %737 : vector<1x1x8x8xf32> to vector<8x8xf32>
    %739 = vector.shape_cast %736 : vector<8x8xf32> to vector<1x1x8x8xf32>
    tpu.vector_store %arg5[%c0_28, %c1_29, %c0_30, %c0_31], %739 {strides = array<i32>} : memref<1x8x8x8xf32, #tpu.memory_space<vmem>>, vector<1x1x8x8xf32>,
    %cst_32 = arith.constant 0.000000e+00 : f32
    %740 = vector.broadcast %cst_32 : f32 to vector<8x8xf32>
    %c128 = arith.constant 128 : index
    %741 = memref.load %arg2[%c128] : memref<512xf32, #tpu.memory_space<smem>>
    %742 = vector.broadcast %741 : f32 to vector<8x8xf32>
    %743 = arith.mulf %742, %6 : vector<8x8xf32>
    %744 = arith.addf %740, %743 : vector<8x8xf32>
    %c144 = arith.constant 144 : index
    %745 = memref.load %arg2[%c144] : memref<512xf32, #tpu.memory_space<smem>>
    %746 = vector.broadcast %745 : f32 to vector<8x8xf32>
    %747 = arith.mulf %746, %8 : vector<8x8xf32>
    %748 = arith.addf %744, %747 : vector<8x8xf32>
    %c160 = arith.constant 160 : index
    %749 = memref.load %arg2[%c160] : memref<512xf32, #tpu.memory_space<smem>>
    %750 = vector.broadcast %749 : f32 to vector<8x8xf32>
    %751 = arith.mulf %750, %10 : vector<8x8xf32>
    %752 = arith.addf %748, %751 : vector<8x8xf32>
    %c176 = arith.constant 176 : index
    %753 = memref.load %arg2[%c176] : memref<512xf32, #tpu.memory_space<smem>>
    %754 = vector.broadcast %753 : f32 to vector<8x8xf32>
    %755 = arith.mulf %754, %12 : vector<8x8xf32>
    %756 = arith.addf %752, %755 : vector<8x8xf32>
    %c130 = arith.constant 130 : index
    %757 = memref.load %arg2[%c130] : memref<512xf32, #tpu.memory_space<smem>>
    %758 = vector.broadcast %757 : f32 to vector<8x8xf32>
    %759 = arith.mulf %758, %15 : vector<8x8xf32>
    %760 = arith.addf %756, %759 : vector<8x8xf32>
    %c146 = arith.constant 146 : index
    %761 = memref.load %arg2[%c146] : memref<512xf32, #tpu.memory_space<smem>>
    %762 = vector.broadcast %761 : f32 to vector<8x8xf32>
    %763 = arith.mulf %762, %17 : vector<8x8xf32>
    %764 = arith.addf %760, %763 : vector<8x8xf32>
    %c162 = arith.constant 162 : index
    %765 = memref.load %arg2[%c162] : memref<512xf32, #tpu.memory_space<smem>>
    %766 = vector.broadcast %765 : f32 to vector<8x8xf32>
    %767 = arith.mulf %766, %19 : vector<8x8xf32>
    %768 = arith.addf %764, %767 : vector<8x8xf32>
    %c178 = arith.constant 178 : index
    %769 = memref.load %arg2[%c178] : memref<512xf32, #tpu.memory_space<smem>>
    %770 = vector.broadcast %769 : f32 to vector<8x8xf32>
    %771 = arith.mulf %770, %21 : vector<8x8xf32>
    %772 = arith.addf %768, %771 : vector<8x8xf32>
    %c136 = arith.constant 136 : index
    %773 = memref.load %arg2[%c136] : memref<512xf32, #tpu.memory_space<smem>>
    %774 = vector.broadcast %773 : f32 to vector<8x8xf32>
    %775 = arith.mulf %774, %24 : vector<8x8xf32>
    %776 = arith.addf %772, %775 : vector<8x8xf32>
    %c152 = arith.constant 152 : index
    %777 = memref.load %arg2[%c152] : memref<512xf32, #tpu.memory_space<smem>>
    %778 = vector.broadcast %777 : f32 to vector<8x8xf32>
    %779 = arith.mulf %778, %26 : vector<8x8xf32>
    %780 = arith.addf %776, %779 : vector<8x8xf32>
    %c168 = arith.constant 168 : index
    %781 = memref.load %arg2[%c168] : memref<512xf32, #tpu.memory_space<smem>>
    %782 = vector.broadcast %781 : f32 to vector<8x8xf32>
    %783 = arith.mulf %782, %28 : vector<8x8xf32>
    %784 = arith.addf %780, %783 : vector<8x8xf32>
    %c184 = arith.constant 184 : index
    %785 = memref.load %arg2[%c184] : memref<512xf32, #tpu.memory_space<smem>>
    %786 = vector.broadcast %785 : f32 to vector<8x8xf32>
    %787 = arith.mulf %786, %30 : vector<8x8xf32>
    %788 = arith.addf %784, %787 : vector<8x8xf32>
    %c138 = arith.constant 138 : index
    %789 = memref.load %arg2[%c138] : memref<512xf32, #tpu.memory_space<smem>>
    %790 = vector.broadcast %789 : f32 to vector<8x8xf32>
    %791 = arith.mulf %790, %33 : vector<8x8xf32>
    %792 = arith.addf %788, %791 : vector<8x8xf32>
    %c154 = arith.constant 154 : index
    %793 = memref.load %arg2[%c154] : memref<512xf32, #tpu.memory_space<smem>>
    %794 = vector.broadcast %793 : f32 to vector<8x8xf32>
    %795 = arith.mulf %794, %35 : vector<8x8xf32>
    %796 = arith.addf %792, %795 : vector<8x8xf32>
    %c170 = arith.constant 170 : index
    %797 = memref.load %arg2[%c170] : memref<512xf32, #tpu.memory_space<smem>>
    %798 = vector.broadcast %797 : f32 to vector<8x8xf32>
    %799 = arith.mulf %798, %37 : vector<8x8xf32>
    %800 = arith.addf %796, %799 : vector<8x8xf32>
    %c186 = arith.constant 186 : index
    %801 = memref.load %arg2[%c186] : memref<512xf32, #tpu.memory_space<smem>>
    %802 = vector.broadcast %801 : f32 to vector<8x8xf32>
    %803 = arith.mulf %802, %39 : vector<8x8xf32>
    %804 = arith.addf %800, %803 : vector<8x8xf32>
    %c129 = arith.constant 129 : index
    %805 = memref.load %arg2[%c129] : memref<512xf32, #tpu.memory_space<smem>>
    %806 = vector.broadcast %805 : f32 to vector<8x8xf32>
    %807 = arith.mulf %806, %44 : vector<8x8xf32>
    %808 = arith.addf %804, %807 : vector<8x8xf32>
    %c145 = arith.constant 145 : index
    %809 = memref.load %arg2[%c145] : memref<512xf32, #tpu.memory_space<smem>>
    %810 = vector.broadcast %809 : f32 to vector<8x8xf32>
    %811 = arith.mulf %810, %46 : vector<8x8xf32>
    %812 = arith.addf %808, %811 : vector<8x8xf32>
    %c161 = arith.constant 161 : index
    %813 = memref.load %arg2[%c161] : memref<512xf32, #tpu.memory_space<smem>>
    %814 = vector.broadcast %813 : f32 to vector<8x8xf32>
    %815 = arith.mulf %814, %48 : vector<8x8xf32>
    %816 = arith.addf %812, %815 : vector<8x8xf32>
    %c177 = arith.constant 177 : index
    %817 = memref.load %arg2[%c177] : memref<512xf32, #tpu.memory_space<smem>>
    %818 = vector.broadcast %817 : f32 to vector<8x8xf32>
    %819 = arith.mulf %818, %50 : vector<8x8xf32>
    %820 = arith.addf %816, %819 : vector<8x8xf32>
    %c131 = arith.constant 131 : index
    %821 = memref.load %arg2[%c131] : memref<512xf32, #tpu.memory_space<smem>>
    %822 = vector.broadcast %821 : f32 to vector<8x8xf32>
    %823 = arith.mulf %822, %53 : vector<8x8xf32>
    %824 = arith.addf %820, %823 : vector<8x8xf32>
    %c147 = arith.constant 147 : index
    %825 = memref.load %arg2[%c147] : memref<512xf32, #tpu.memory_space<smem>>
    %826 = vector.broadcast %825 : f32 to vector<8x8xf32>
    %827 = arith.mulf %826, %55 : vector<8x8xf32>
    %828 = arith.addf %824, %827 : vector<8x8xf32>
    %c163 = arith.constant 163 : index
    %829 = memref.load %arg2[%c163] : memref<512xf32, #tpu.memory_space<smem>>
    %830 = vector.broadcast %829 : f32 to vector<8x8xf32>
    %831 = arith.mulf %830, %57 : vector<8x8xf32>
    %832 = arith.addf %828, %831 : vector<8x8xf32>
    %c179 = arith.constant 179 : index
    %833 = memref.load %arg2[%c179] : memref<512xf32, #tpu.memory_space<smem>>
    %834 = vector.broadcast %833 : f32 to vector<8x8xf32>
    %835 = arith.mulf %834, %59 : vector<8x8xf32>
    %836 = arith.addf %832, %835 : vector<8x8xf32>
    %c137 = arith.constant 137 : index
    %837 = memref.load %arg2[%c137] : memref<512xf32, #tpu.memory_space<smem>>
    %838 = vector.broadcast %837 : f32 to vector<8x8xf32>
    %839 = arith.mulf %838, %62 : vector<8x8xf32>
    %840 = arith.addf %836, %839 : vector<8x8xf32>
    %c153 = arith.constant 153 : index
    %841 = memref.load %arg2[%c153] : memref<512xf32, #tpu.memory_space<smem>>
    %842 = vector.broadcast %841 : f32 to vector<8x8xf32>
    %843 = arith.mulf %842, %64 : vector<8x8xf32>
    %844 = arith.addf %840, %843 : vector<8x8xf32>
    %c169 = arith.constant 169 : index
    %845 = memref.load %arg2[%c169] : memref<512xf32, #tpu.memory_space<smem>>
    %846 = vector.broadcast %845 : f32 to vector<8x8xf32>
    %847 = arith.mulf %846, %66 : vector<8x8xf32>
    %848 = arith.addf %844, %847 : vector<8x8xf32>
    %c185 = arith.constant 185 : index
    %849 = memref.load %arg2[%c185] : memref<512xf32, #tpu.memory_space<smem>>
    %850 = vector.broadcast %849 : f32 to vector<8x8xf32>
    %851 = arith.mulf %850, %68 : vector<8x8xf32>
    %852 = arith.addf %848, %851 : vector<8x8xf32>
    %c139 = arith.constant 139 : index
    %853 = memref.load %arg2[%c139] : memref<512xf32, #tpu.memory_space<smem>>
    %854 = vector.broadcast %853 : f32 to vector<8x8xf32>
    %855 = arith.mulf %854, %71 : vector<8x8xf32>
    %856 = arith.addf %852, %855 : vector<8x8xf32>
    %c155 = arith.constant 155 : index
    %857 = memref.load %arg2[%c155] : memref<512xf32, #tpu.memory_space<smem>>
    %858 = vector.broadcast %857 : f32 to vector<8x8xf32>
    %859 = arith.mulf %858, %73 : vector<8x8xf32>
    %860 = arith.addf %856, %859 : vector<8x8xf32>
    %c171 = arith.constant 171 : index
    %861 = memref.load %arg2[%c171] : memref<512xf32, #tpu.memory_space<smem>>
    %862 = vector.broadcast %861 : f32 to vector<8x8xf32>
    %863 = arith.mulf %862, %75 : vector<8x8xf32>
    %864 = arith.addf %860, %863 : vector<8x8xf32>
    %c187 = arith.constant 187 : index
    %865 = memref.load %arg2[%c187] : memref<512xf32, #tpu.memory_space<smem>>
    %866 = vector.broadcast %865 : f32 to vector<8x8xf32>
    %867 = arith.mulf %866, %77 : vector<8x8xf32>
    %868 = arith.addf %864, %867 : vector<8x8xf32>
    %c132 = arith.constant 132 : index
    %869 = memref.load %arg2[%c132] : memref<512xf32, #tpu.memory_space<smem>>
    %870 = vector.broadcast %869 : f32 to vector<8x8xf32>
    %871 = arith.mulf %870, %82 : vector<8x8xf32>
    %872 = arith.addf %868, %871 : vector<8x8xf32>
    %c148 = arith.constant 148 : index
    %873 = memref.load %arg2[%c148] : memref<512xf32, #tpu.memory_space<smem>>
    %874 = vector.broadcast %873 : f32 to vector<8x8xf32>
    %875 = arith.mulf %874, %84 : vector<8x8xf32>
    %876 = arith.addf %872, %875 : vector<8x8xf32>
    %c164 = arith.constant 164 : index
    %877 = memref.load %arg2[%c164] : memref<512xf32, #tpu.memory_space<smem>>
    %878 = vector.broadcast %877 : f32 to vector<8x8xf32>
    %879 = arith.mulf %878, %86 : vector<8x8xf32>
    %880 = arith.addf %876, %879 : vector<8x8xf32>
    %c180 = arith.constant 180 : index
    %881 = memref.load %arg2[%c180] : memref<512xf32, #tpu.memory_space<smem>>
    %882 = vector.broadcast %881 : f32 to vector<8x8xf32>
    %883 = arith.mulf %882, %88 : vector<8x8xf32>
    %884 = arith.addf %880, %883 : vector<8x8xf32>
    %c134 = arith.constant 134 : index
    %885 = memref.load %arg2[%c134] : memref<512xf32, #tpu.memory_space<smem>>
    %886 = vector.broadcast %885 : f32 to vector<8x8xf32>
    %887 = arith.mulf %886, %91 : vector<8x8xf32>
    %888 = arith.addf %884, %887 : vector<8x8xf32>
    %c150 = arith.constant 150 : index
    %889 = memref.load %arg2[%c150] : memref<512xf32, #tpu.memory_space<smem>>
    %890 = vector.broadcast %889 : f32 to vector<8x8xf32>
    %891 = arith.mulf %890, %93 : vector<8x8xf32>
    %892 = arith.addf %888, %891 : vector<8x8xf32>
    %c166 = arith.constant 166 : index
    %893 = memref.load %arg2[%c166] : memref<512xf32, #tpu.memory_space<smem>>
    %894 = vector.broadcast %893 : f32 to vector<8x8xf32>
    %895 = arith.mulf %894, %95 : vector<8x8xf32>
    %896 = arith.addf %892, %895 : vector<8x8xf32>
    %c182 = arith.constant 182 : index
    %897 = memref.load %arg2[%c182] : memref<512xf32, #tpu.memory_space<smem>>
    %898 = vector.broadcast %897 : f32 to vector<8x8xf32>
    %899 = arith.mulf %898, %97 : vector<8x8xf32>
    %900 = arith.addf %896, %899 : vector<8x8xf32>
    %c140 = arith.constant 140 : index
    %901 = memref.load %arg2[%c140] : memref<512xf32, #tpu.memory_space<smem>>
    %902 = vector.broadcast %901 : f32 to vector<8x8xf32>
    %903 = arith.mulf %902, %100 : vector<8x8xf32>
    %904 = arith.addf %900, %903 : vector<8x8xf32>
    %c156 = arith.constant 156 : index
    %905 = memref.load %arg2[%c156] : memref<512xf32, #tpu.memory_space<smem>>
    %906 = vector.broadcast %905 : f32 to vector<8x8xf32>
    %907 = arith.mulf %906, %102 : vector<8x8xf32>
    %908 = arith.addf %904, %907 : vector<8x8xf32>
    %c172 = arith.constant 172 : index
    %909 = memref.load %arg2[%c172] : memref<512xf32, #tpu.memory_space<smem>>
    %910 = vector.broadcast %909 : f32 to vector<8x8xf32>
    %911 = arith.mulf %910, %104 : vector<8x8xf32>
    %912 = arith.addf %908, %911 : vector<8x8xf32>
    %c188 = arith.constant 188 : index
    %913 = memref.load %arg2[%c188] : memref<512xf32, #tpu.memory_space<smem>>
    %914 = vector.broadcast %913 : f32 to vector<8x8xf32>
    %915 = arith.mulf %914, %106 : vector<8x8xf32>
    %916 = arith.addf %912, %915 : vector<8x8xf32>
    %c142 = arith.constant 142 : index
    %917 = memref.load %arg2[%c142] : memref<512xf32, #tpu.memory_space<smem>>
    %918 = vector.broadcast %917 : f32 to vector<8x8xf32>
    %919 = arith.mulf %918, %109 : vector<8x8xf32>
    %920 = arith.addf %916, %919 : vector<8x8xf32>
    %c158 = arith.constant 158 : index
    %921 = memref.load %arg2[%c158] : memref<512xf32, #tpu.memory_space<smem>>
    %922 = vector.broadcast %921 : f32 to vector<8x8xf32>
    %923 = arith.mulf %922, %111 : vector<8x8xf32>
    %924 = arith.addf %920, %923 : vector<8x8xf32>
    %c174 = arith.constant 174 : index
    %925 = memref.load %arg2[%c174] : memref<512xf32, #tpu.memory_space<smem>>
    %926 = vector.broadcast %925 : f32 to vector<8x8xf32>
    %927 = arith.mulf %926, %113 : vector<8x8xf32>
    %928 = arith.addf %924, %927 : vector<8x8xf32>
    %c190 = arith.constant 190 : index
    %929 = memref.load %arg2[%c190] : memref<512xf32, #tpu.memory_space<smem>>
    %930 = vector.broadcast %929 : f32 to vector<8x8xf32>
    %931 = arith.mulf %930, %115 : vector<8x8xf32>
    %932 = arith.addf %928, %931 : vector<8x8xf32>
    %c133 = arith.constant 133 : index
    %933 = memref.load %arg2[%c133] : memref<512xf32, #tpu.memory_space<smem>>
    %934 = vector.broadcast %933 : f32 to vector<8x8xf32>
    %935 = arith.mulf %934, %120 : vector<8x8xf32>
    %936 = arith.addf %932, %935 : vector<8x8xf32>
    %c149 = arith.constant 149 : index
    %937 = memref.load %arg2[%c149] : memref<512xf32, #tpu.memory_space<smem>>
    %938 = vector.broadcast %937 : f32 to vector<8x8xf32>
    %939 = arith.mulf %938, %122 : vector<8x8xf32>
    %940 = arith.addf %936, %939 : vector<8x8xf32>
    %c165 = arith.constant 165 : index
    %941 = memref.load %arg2[%c165] : memref<512xf32, #tpu.memory_space<smem>>
    %942 = vector.broadcast %941 : f32 to vector<8x8xf32>
    %943 = arith.mulf %942, %124 : vector<8x8xf32>
    %944 = arith.addf %940, %943 : vector<8x8xf32>
    %c181 = arith.constant 181 : index
    %945 = memref.load %arg2[%c181] : memref<512xf32, #tpu.memory_space<smem>>
    %946 = vector.broadcast %945 : f32 to vector<8x8xf32>
    %947 = arith.mulf %946, %126 : vector<8x8xf32>
    %948 = arith.addf %944, %947 : vector<8x8xf32>
    %c135 = arith.constant 135 : index
    %949 = memref.load %arg2[%c135] : memref<512xf32, #tpu.memory_space<smem>>
    %950 = vector.broadcast %949 : f32 to vector<8x8xf32>
    %951 = arith.mulf %950, %129 : vector<8x8xf32>
    %952 = arith.addf %948, %951 : vector<8x8xf32>
    %c151 = arith.constant 151 : index
    %953 = memref.load %arg2[%c151] : memref<512xf32, #tpu.memory_space<smem>>
    %954 = vector.broadcast %953 : f32 to vector<8x8xf32>
    %955 = arith.mulf %954, %131 : vector<8x8xf32>
    %956 = arith.addf %952, %955 : vector<8x8xf32>
    %c167 = arith.constant 167 : index
    %957 = memref.load %arg2[%c167] : memref<512xf32, #tpu.memory_space<smem>>
    %958 = vector.broadcast %957 : f32 to vector<8x8xf32>
    %959 = arith.mulf %958, %133 : vector<8x8xf32>
    %960 = arith.addf %956, %959 : vector<8x8xf32>
    %c183 = arith.constant 183 : index
    %961 = memref.load %arg2[%c183] : memref<512xf32, #tpu.memory_space<smem>>
    %962 = vector.broadcast %961 : f32 to vector<8x8xf32>
    %963 = arith.mulf %962, %135 : vector<8x8xf32>
    %964 = arith.addf %960, %963 : vector<8x8xf32>
    %c141 = arith.constant 141 : index
    %965 = memref.load %arg2[%c141] : memref<512xf32, #tpu.memory_space<smem>>
    %966 = vector.broadcast %965 : f32 to vector<8x8xf32>
    %967 = arith.mulf %966, %138 : vector<8x8xf32>
    %968 = arith.addf %964, %967 : vector<8x8xf32>
    %c157 = arith.constant 157 : index
    %969 = memref.load %arg2[%c157] : memref<512xf32, #tpu.memory_space<smem>>
    %970 = vector.broadcast %969 : f32 to vector<8x8xf32>
    %971 = arith.mulf %970, %140 : vector<8x8xf32>
    %972 = arith.addf %968, %971 : vector<8x8xf32>
    %c173 = arith.constant 173 : index
    %973 = memref.load %arg2[%c173] : memref<512xf32, #tpu.memory_space<smem>>
    %974 = vector.broadcast %973 : f32 to vector<8x8xf32>
    %975 = arith.mulf %974, %142 : vector<8x8xf32>
    %976 = arith.addf %972, %975 : vector<8x8xf32>
    %c189 = arith.constant 189 : index
    %977 = memref.load %arg2[%c189] : memref<512xf32, #tpu.memory_space<smem>>
    %978 = vector.broadcast %977 : f32 to vector<8x8xf32>
    %979 = arith.mulf %978, %144 : vector<8x8xf32>
    %980 = arith.addf %976, %979 : vector<8x8xf32>
    %c143 = arith.constant 143 : index
    %981 = memref.load %arg2[%c143] : memref<512xf32, #tpu.memory_space<smem>>
    %982 = vector.broadcast %981 : f32 to vector<8x8xf32>
    %983 = arith.mulf %982, %147 : vector<8x8xf32>
    %984 = arith.addf %980, %983 : vector<8x8xf32>
    %c159 = arith.constant 159 : index
    %985 = memref.load %arg2[%c159] : memref<512xf32, #tpu.memory_space<smem>>
    %986 = vector.broadcast %985 : f32 to vector<8x8xf32>
    %987 = arith.mulf %986, %149 : vector<8x8xf32>
    %988 = arith.addf %984, %987 : vector<8x8xf32>
    %c175 = arith.constant 175 : index
    %989 = memref.load %arg2[%c175] : memref<512xf32, #tpu.memory_space<smem>>
    %990 = vector.broadcast %989 : f32 to vector<8x8xf32>
    %991 = arith.mulf %990, %151 : vector<8x8xf32>
    %992 = arith.addf %988, %991 : vector<8x8xf32>
    %c191 = arith.constant 191 : index
    %993 = memref.load %arg2[%c191] : memref<512xf32, #tpu.memory_space<smem>>
    %994 = vector.broadcast %993 : f32 to vector<8x8xf32>
    %995 = arith.mulf %994, %153 : vector<8x8xf32>
    %996 = arith.addf %992, %995 : vector<8x8xf32>
    %997 = vector.shape_cast %996 : vector<8x8xf32> to vector<1x8x8xf32>
    %cst_33 = arith.constant dense<0.000000e+00> : vector<1xf32>
    %998 = vector.multi_reduction <add>, %997, %cst_33 [1, 2] : vector<1x8x8xf32> to vector<1xf32>
    %999 = vector.shape_cast %998 : vector<1xf32> to vector<1x1x1xf32>
    %1000 = vector.extract %999[0, 0, 0] : f32 from vector<1x1x1xf32>
    %1001 = vector.broadcast %1000 : f32 to vector<1x1xf32>
    %cst_34 = arith.constant 1.562500e-02 : f32
    %1002 = vector.broadcast %cst_34 : f32 to vector<1x1xf32>
    %1003 = arith.mulf %1001, %1002 : vector<1x1xf32>
    %1004 = vector.broadcast %1003 : vector<1x1xf32> to vector<8x8xf32>
    %1005 = arith.subf %996, %1004 : vector<8x8xf32>
    %1006 = arith.mulf %1005, %1005 : vector<8x8xf32>
    %1007 = vector.shape_cast %1006 : vector<8x8xf32> to vector<1x8x8xf32>
    %cst_35 = arith.constant dense<0.000000e+00> : vector<1xf32>
    %1008 = vector.multi_reduction <add>, %1007, %cst_35 [1, 2] : vector<1x8x8xf32> to vector<1xf32>
    %1009 = vector.shape_cast %1008 : vector<1xf32> to vector<1x1x1xf32>
    %1010 = vector.extract %1009[0, 0, 0] : f32 from vector<1x1x1xf32>
    %1011 = vector.broadcast %1010 : f32 to vector<1x1xf32>
    %cst_36 = arith.constant 1.562500e-02 : f32
    %1012 = vector.broadcast %cst_36 : f32 to vector<1x1xf32>
    %1013 = arith.mulf %1011, %1012 : vector<1x1xf32>
    %cst_37 = arith.constant 9.99999974E-6 : f32
    %1014 = vector.broadcast %cst_37 : f32 to vector<1x1xf32>
    %1015 = arith.addf %1013, %1014 : vector<1x1xf32>
    %1016 = math.rsqrt %1015 : vector<1x1xf32>
    %c2_38 = arith.constant 2 : index
    %1017 = memref.load %arg3[%c2_38] : memref<8xf32, #tpu.memory_space<smem>>
    %1018 = vector.broadcast %1017 : f32 to vector<1x1xf32>
    %1019 = arith.mulf %1016, %1018 : vector<1x1xf32>
    %1020 = vector.broadcast %1019 : vector<1x1xf32> to vector<8x8xf32>
    %1021 = arith.mulf %1005, %1020 : vector<8x8xf32>
    %c2_39 = arith.constant 2 : index
    %1022 = memref.load %arg4[%c2_39] : memref<8xf32, #tpu.memory_space<smem>>
    %1023 = vector.broadcast %1022 : f32 to vector<8x8xf32>
    %1024 = arith.addf %1021, %1023 : vector<8x8xf32>
    %cst_40 = arith.constant 0.000000e+00 : f32
    %1025 = vector.broadcast %cst_40 : f32 to vector<8x8xf32>
    %1026 = arith.cmpf ogt, %1024, %1025 : vector<8x8xf32>
    %cst_41 = arith.constant 2.000000e-01 : f32
    %1027 = vector.broadcast %cst_41 : f32 to vector<8x8xf32>
    %1028 = arith.mulf %1027, %1024 : vector<8x8xf32>
    %1029 = arith.select %1026, %1024, %1028 : vector<8x8xi1>, vector<8x8xf32>
    %c0_42 = arith.constant 0 : index
    %c2_43 = arith.constant 2 : index
    %c0_44 = arith.constant 0 : index
    %c0_45 = arith.constant 0 : index
    %1030 = vector.load %arg5[%c0_42, %c2_43, %c0_44, %c0_45] : memref<1x8x8x8xf32, #tpu.memory_space<vmem>>, vector<1x1x8x8xf32>
    %1031 = vector.shape_cast %1030 : vector<1x1x8x8xf32> to vector<8x8xf32>
    %1032 = vector.shape_cast %1029 : vector<8x8xf32> to vector<1x1x8x8xf32>
    tpu.vector_store %arg5[%c0_42, %c2_43, %c0_44, %c0_45], %1032 {strides = array<i32>} : memref<1x8x8x8xf32, #tpu.memory_space<vmem>>, vector<1x1x8x8xf32>,
    %cst_46 = arith.constant 0.000000e+00 : f32
    %1033 = vector.broadcast %cst_46 : f32 to vector<8x8xf32>
    %c192 = arith.constant 192 : index
    %1034 = memref.load %arg2[%c192] : memref<512xf32, #tpu.memory_space<smem>>
    %1035 = vector.broadcast %1034 : f32 to vector<8x8xf32>
    %1036 = arith.mulf %1035, %6 : vector<8x8xf32>
    %1037 = arith.addf %1033, %1036 : vector<8x8xf32>
    %c208 = arith.constant 208 : index
    %1038 = memref.load %arg2[%c208] : memref<512xf32, #tpu.memory_space<smem>>
    %1039 = vector.broadcast %1038 : f32 to vector<8x8xf32>
    %1040 = arith.mulf %1039, %8 : vector<8x8xf32>
    %1041 = arith.addf %1037, %1040 : vector<8x8xf32>
    %c224 = arith.constant 224 : index
    %1042 = memref.load %arg2[%c224] : memref<512xf32, #tpu.memory_space<smem>>
    %1043 = vector.broadcast %1042 : f32 to vector<8x8xf32>
    %1044 = arith.mulf %1043, %10 : vector<8x8xf32>
    %1045 = arith.addf %1041, %1044 : vector<8x8xf32>
    %c240 = arith.constant 240 : index
    %1046 = memref.load %arg2[%c240] : memref<512xf32, #tpu.memory_space<smem>>
    %1047 = vector.broadcast %1046 : f32 to vector<8x8xf32>
    %1048 = arith.mulf %1047, %12 : vector<8x8xf32>
    %1049 = arith.addf %1045, %1048 : vector<8x8xf32>
    %c194 = arith.constant 194 : index
    %1050 = memref.load %arg2[%c194] : memref<512xf32, #tpu.memory_space<smem>>
    %1051 = vector.broadcast %1050 : f32 to vector<8x8xf32>
    %1052 = arith.mulf %1051, %15 : vector<8x8xf32>
    %1053 = arith.addf %1049, %1052 : vector<8x8xf32>
    %c210 = arith.constant 210 : index
    %1054 = memref.load %arg2[%c210] : memref<512xf32, #tpu.memory_space<smem>>
    %1055 = vector.broadcast %1054 : f32 to vector<8x8xf32>
    %1056 = arith.mulf %1055, %17 : vector<8x8xf32>
    %1057 = arith.addf %1053, %1056 : vector<8x8xf32>
    %c226 = arith.constant 226 : index
    %1058 = memref.load %arg2[%c226] : memref<512xf32, #tpu.memory_space<smem>>
    %1059 = vector.broadcast %1058 : f32 to vector<8x8xf32>
    %1060 = arith.mulf %1059, %19 : vector<8x8xf32>
    %1061 = arith.addf %1057, %1060 : vector<8x8xf32>
    %c242 = arith.constant 242 : index
    %1062 = memref.load %arg2[%c242] : memref<512xf32, #tpu.memory_space<smem>>
    %1063 = vector.broadcast %1062 : f32 to vector<8x8xf32>
    %1064 = arith.mulf %1063, %21 : vector<8x8xf32>
    %1065 = arith.addf %1061, %1064 : vector<8x8xf32>
    %c200 = arith.constant 200 : index
    %1066 = memref.load %arg2[%c200] : memref<512xf32, #tpu.memory_space<smem>>
    %1067 = vector.broadcast %1066 : f32 to vector<8x8xf32>
    %1068 = arith.mulf %1067, %24 : vector<8x8xf32>
    %1069 = arith.addf %1065, %1068 : vector<8x8xf32>
    %c216 = arith.constant 216 : index
    %1070 = memref.load %arg2[%c216] : memref<512xf32, #tpu.memory_space<smem>>
    %1071 = vector.broadcast %1070 : f32 to vector<8x8xf32>
    %1072 = arith.mulf %1071, %26 : vector<8x8xf32>
    %1073 = arith.addf %1069, %1072 : vector<8x8xf32>
    %c232 = arith.constant 232 : index
    %1074 = memref.load %arg2[%c232] : memref<512xf32, #tpu.memory_space<smem>>
    %1075 = vector.broadcast %1074 : f32 to vector<8x8xf32>
    %1076 = arith.mulf %1075, %28 : vector<8x8xf32>
    %1077 = arith.addf %1073, %1076 : vector<8x8xf32>
    %c248 = arith.constant 248 : index
    %1078 = memref.load %arg2[%c248] : memref<512xf32, #tpu.memory_space<smem>>
    %1079 = vector.broadcast %1078 : f32 to vector<8x8xf32>
    %1080 = arith.mulf %1079, %30 : vector<8x8xf32>
    %1081 = arith.addf %1077, %1080 : vector<8x8xf32>
    %c202 = arith.constant 202 : index
    %1082 = memref.load %arg2[%c202] : memref<512xf32, #tpu.memory_space<smem>>
    %1083 = vector.broadcast %1082 : f32 to vector<8x8xf32>
    %1084 = arith.mulf %1083, %33 : vector<8x8xf32>
    %1085 = arith.addf %1081, %1084 : vector<8x8xf32>
    %c218 = arith.constant 218 : index
    %1086 = memref.load %arg2[%c218] : memref<512xf32, #tpu.memory_space<smem>>
    %1087 = vector.broadcast %1086 : f32 to vector<8x8xf32>
    %1088 = arith.mulf %1087, %35 : vector<8x8xf32>
    %1089 = arith.addf %1085, %1088 : vector<8x8xf32>
    %c234 = arith.constant 234 : index
    %1090 = memref.load %arg2[%c234] : memref<512xf32, #tpu.memory_space<smem>>
    %1091 = vector.broadcast %1090 : f32 to vector<8x8xf32>
    %1092 = arith.mulf %1091, %37 : vector<8x8xf32>
    %1093 = arith.addf %1089, %1092 : vector<8x8xf32>
    %c250 = arith.constant 250 : index
    %1094 = memref.load %arg2[%c250] : memref<512xf32, #tpu.memory_space<smem>>
    %1095 = vector.broadcast %1094 : f32 to vector<8x8xf32>
    %1096 = arith.mulf %1095, %39 : vector<8x8xf32>
    %1097 = arith.addf %1093, %1096 : vector<8x8xf32>
    %c193 = arith.constant 193 : index
    %1098 = memref.load %arg2[%c193] : memref<512xf32, #tpu.memory_space<smem>>
    %1099 = vector.broadcast %1098 : f32 to vector<8x8xf32>
    %1100 = arith.mulf %1099, %44 : vector<8x8xf32>
    %1101 = arith.addf %1097, %1100 : vector<8x8xf32>
    %c209 = arith.constant 209 : index
    %1102 = memref.load %arg2[%c209] : memref<512xf32, #tpu.memory_space<smem>>
    %1103 = vector.broadcast %1102 : f32 to vector<8x8xf32>
    %1104 = arith.mulf %1103, %46 : vector<8x8xf32>
    %1105 = arith.addf %1101, %1104 : vector<8x8xf32>
    %c225 = arith.constant 225 : index
    %1106 = memref.load %arg2[%c225] : memref<512xf32, #tpu.memory_space<smem>>
    %1107 = vector.broadcast %1106 : f32 to vector<8x8xf32>
    %1108 = arith.mulf %1107, %48 : vector<8x8xf32>
    %1109 = arith.addf %1105, %1108 : vector<8x8xf32>
    %c241 = arith.constant 241 : index
    %1110 = memref.load %arg2[%c241] : memref<512xf32, #tpu.memory_space<smem>>
    %1111 = vector.broadcast %1110 : f32 to vector<8x8xf32>
    %1112 = arith.mulf %1111, %50 : vector<8x8xf32>
    %1113 = arith.addf %1109, %1112 : vector<8x8xf32>
    %c195 = arith.constant 195 : index
    %1114 = memref.load %arg2[%c195] : memref<512xf32, #tpu.memory_space<smem>>
    %1115 = vector.broadcast %1114 : f32 to vector<8x8xf32>
    %1116 = arith.mulf %1115, %53 : vector<8x8xf32>
    %1117 = arith.addf %1113, %1116 : vector<8x8xf32>
    %c211 = arith.constant 211 : index
    %1118 = memref.load %arg2[%c211] : memref<512xf32, #tpu.memory_space<smem>>
    %1119 = vector.broadcast %1118 : f32 to vector<8x8xf32>
    %1120 = arith.mulf %1119, %55 : vector<8x8xf32>
    %1121 = arith.addf %1117, %1120 : vector<8x8xf32>
    %c227 = arith.constant 227 : index
    %1122 = memref.load %arg2[%c227] : memref<512xf32, #tpu.memory_space<smem>>
    %1123 = vector.broadcast %1122 : f32 to vector<8x8xf32>
    %1124 = arith.mulf %1123, %57 : vector<8x8xf32>
    %1125 = arith.addf %1121, %1124 : vector<8x8xf32>
    %c243 = arith.constant 243 : index
    %1126 = memref.load %arg2[%c243] : memref<512xf32, #tpu.memory_space<smem>>
    %1127 = vector.broadcast %1126 : f32 to vector<8x8xf32>
    %1128 = arith.mulf %1127, %59 : vector<8x8xf32>
    %1129 = arith.addf %1125, %1128 : vector<8x8xf32>
    %c201 = arith.constant 201 : index
    %1130 = memref.load %arg2[%c201] : memref<512xf32, #tpu.memory_space<smem>>
    %1131 = vector.broadcast %1130 : f32 to vector<8x8xf32>
    %1132 = arith.mulf %1131, %62 : vector<8x8xf32>
    %1133 = arith.addf %1129, %1132 : vector<8x8xf32>
    %c217 = arith.constant 217 : index
    %1134 = memref.load %arg2[%c217] : memref<512xf32, #tpu.memory_space<smem>>
    %1135 = vector.broadcast %1134 : f32 to vector<8x8xf32>
    %1136 = arith.mulf %1135, %64 : vector<8x8xf32>
    %1137 = arith.addf %1133, %1136 : vector<8x8xf32>
    %c233 = arith.constant 233 : index
    %1138 = memref.load %arg2[%c233] : memref<512xf32, #tpu.memory_space<smem>>
    %1139 = vector.broadcast %1138 : f32 to vector<8x8xf32>
    %1140 = arith.mulf %1139, %66 : vector<8x8xf32>
    %1141 = arith.addf %1137, %1140 : vector<8x8xf32>
    %c249 = arith.constant 249 : index
    %1142 = memref.load %arg2[%c249] : memref<512xf32, #tpu.memory_space<smem>>
    %1143 = vector.broadcast %1142 : f32 to vector<8x8xf32>
    %1144 = arith.mulf %1143, %68 : vector<8x8xf32>
    %1145 = arith.addf %1141, %1144 : vector<8x8xf32>
    %c203 = arith.constant 203 : index
    %1146 = memref.load %arg2[%c203] : memref<512xf32, #tpu.memory_space<smem>>
    %1147 = vector.broadcast %1146 : f32 to vector<8x8xf32>
    %1148 = arith.mulf %1147, %71 : vector<8x8xf32>
    %1149 = arith.addf %1145, %1148 : vector<8x8xf32>
    %c219 = arith.constant 219 : index
    %1150 = memref.load %arg2[%c219] : memref<512xf32, #tpu.memory_space<smem>>
    %1151 = vector.broadcast %1150 : f32 to vector<8x8xf32>
    %1152 = arith.mulf %1151, %73 : vector<8x8xf32>
    %1153 = arith.addf %1149, %1152 : vector<8x8xf32>
    %c235 = arith.constant 235 : index
    %1154 = memref.load %arg2[%c235] : memref<512xf32, #tpu.memory_space<smem>>
    %1155 = vector.broadcast %1154 : f32 to vector<8x8xf32>
    %1156 = arith.mulf %1155, %75 : vector<8x8xf32>
    %1157 = arith.addf %1153, %1156 : vector<8x8xf32>
    %c251 = arith.constant 251 : index
    %1158 = memref.load %arg2[%c251] : memref<512xf32, #tpu.memory_space<smem>>
    %1159 = vector.broadcast %1158 : f32 to vector<8x8xf32>
    %1160 = arith.mulf %1159, %77 : vector<8x8xf32>
    %1161 = arith.addf %1157, %1160 : vector<8x8xf32>
    %c196 = arith.constant 196 : index
    %1162 = memref.load %arg2[%c196] : memref<512xf32, #tpu.memory_space<smem>>
    %1163 = vector.broadcast %1162 : f32 to vector<8x8xf32>
    %1164 = arith.mulf %1163, %82 : vector<8x8xf32>
    %1165 = arith.addf %1161, %1164 : vector<8x8xf32>
    %c212 = arith.constant 212 : index
    %1166 = memref.load %arg2[%c212] : memref<512xf32, #tpu.memory_space<smem>>
    %1167 = vector.broadcast %1166 : f32 to vector<8x8xf32>
    %1168 = arith.mulf %1167, %84 : vector<8x8xf32>
    %1169 = arith.addf %1165, %1168 : vector<8x8xf32>
    %c228 = arith.constant 228 : index
    %1170 = memref.load %arg2[%c228] : memref<512xf32, #tpu.memory_space<smem>>
    %1171 = vector.broadcast %1170 : f32 to vector<8x8xf32>
    %1172 = arith.mulf %1171, %86 : vector<8x8xf32>
    %1173 = arith.addf %1169, %1172 : vector<8x8xf32>
    %c244 = arith.constant 244 : index
    %1174 = memref.load %arg2[%c244] : memref<512xf32, #tpu.memory_space<smem>>
    %1175 = vector.broadcast %1174 : f32 to vector<8x8xf32>
    %1176 = arith.mulf %1175, %88 : vector<8x8xf32>
    %1177 = arith.addf %1173, %1176 : vector<8x8xf32>
    %c198 = arith.constant 198 : index
    %1178 = memref.load %arg2[%c198] : memref<512xf32, #tpu.memory_space<smem>>
    %1179 = vector.broadcast %1178 : f32 to vector<8x8xf32>
    %1180 = arith.mulf %1179, %91 : vector<8x8xf32>
    %1181 = arith.addf %1177, %1180 : vector<8x8xf32>
    %c214 = arith.constant 214 : index
    %1182 = memref.load %arg2[%c214] : memref<512xf32, #tpu.memory_space<smem>>
    %1183 = vector.broadcast %1182 : f32 to vector<8x8xf32>
    %1184 = arith.mulf %1183, %93 : vector<8x8xf32>
    %1185 = arith.addf %1181, %1184 : vector<8x8xf32>
    %c230 = arith.constant 230 : index
    %1186 = memref.load %arg2[%c230] : memref<512xf32, #tpu.memory_space<smem>>
    %1187 = vector.broadcast %1186 : f32 to vector<8x8xf32>
    %1188 = arith.mulf %1187, %95 : vector<8x8xf32>
    %1189 = arith.addf %1185, %1188 : vector<8x8xf32>
    %c246 = arith.constant 246 : index
    %1190 = memref.load %arg2[%c246] : memref<512xf32, #tpu.memory_space<smem>>
    %1191 = vector.broadcast %1190 : f32 to vector<8x8xf32>
    %1192 = arith.mulf %1191, %97 : vector<8x8xf32>
    %1193 = arith.addf %1189, %1192 : vector<8x8xf32>
    %c204 = arith.constant 204 : index
    %1194 = memref.load %arg2[%c204] : memref<512xf32, #tpu.memory_space<smem>>
    %1195 = vector.broadcast %1194 : f32 to vector<8x8xf32>
    %1196 = arith.mulf %1195, %100 : vector<8x8xf32>
    %1197 = arith.addf %1193, %1196 : vector<8x8xf32>
    %c220 = arith.constant 220 : index
    %1198 = memref.load %arg2[%c220] : memref<512xf32, #tpu.memory_space<smem>>
    %1199 = vector.broadcast %1198 : f32 to vector<8x8xf32>
    %1200 = arith.mulf %1199, %102 : vector<8x8xf32>
    %1201 = arith.addf %1197, %1200 : vector<8x8xf32>
    %c236 = arith.constant 236 : index
    %1202 = memref.load %arg2[%c236] : memref<512xf32, #tpu.memory_space<smem>>
    %1203 = vector.broadcast %1202 : f32 to vector<8x8xf32>
    %1204 = arith.mulf %1203, %104 : vector<8x8xf32>
    %1205 = arith.addf %1201, %1204 : vector<8x8xf32>
    %c252 = arith.constant 252 : index
    %1206 = memref.load %arg2[%c252] : memref<512xf32, #tpu.memory_space<smem>>
    %1207 = vector.broadcast %1206 : f32 to vector<8x8xf32>
    %1208 = arith.mulf %1207, %106 : vector<8x8xf32>
    %1209 = arith.addf %1205, %1208 : vector<8x8xf32>
    %c206 = arith.constant 206 : index
    %1210 = memref.load %arg2[%c206] : memref<512xf32, #tpu.memory_space<smem>>
    %1211 = vector.broadcast %1210 : f32 to vector<8x8xf32>
    %1212 = arith.mulf %1211, %109 : vector<8x8xf32>
    %1213 = arith.addf %1209, %1212 : vector<8x8xf32>
    %c222 = arith.constant 222 : index
    %1214 = memref.load %arg2[%c222] : memref<512xf32, #tpu.memory_space<smem>>
    %1215 = vector.broadcast %1214 : f32 to vector<8x8xf32>
    %1216 = arith.mulf %1215, %111 : vector<8x8xf32>
    %1217 = arith.addf %1213, %1216 : vector<8x8xf32>
    %c238 = arith.constant 238 : index
    %1218 = memref.load %arg2[%c238] : memref<512xf32, #tpu.memory_space<smem>>
    %1219 = vector.broadcast %1218 : f32 to vector<8x8xf32>
    %1220 = arith.mulf %1219, %113 : vector<8x8xf32>
    %1221 = arith.addf %1217, %1220 : vector<8x8xf32>
    %c254 = arith.constant 254 : index
    %1222 = memref.load %arg2[%c254] : memref<512xf32, #tpu.memory_space<smem>>
    %1223 = vector.broadcast %1222 : f32 to vector<8x8xf32>
    %1224 = arith.mulf %1223, %115 : vector<8x8xf32>
    %1225 = arith.addf %1221, %1224 : vector<8x8xf32>
    %c197 = arith.constant 197 : index
    %1226 = memref.load %arg2[%c197] : memref<512xf32, #tpu.memory_space<smem>>
    %1227 = vector.broadcast %1226 : f32 to vector<8x8xf32>
    %1228 = arith.mulf %1227, %120 : vector<8x8xf32>
    %1229 = arith.addf %1225, %1228 : vector<8x8xf32>
    %c213 = arith.constant 213 : index
    %1230 = memref.load %arg2[%c213] : memref<512xf32, #tpu.memory_space<smem>>
    %1231 = vector.broadcast %1230 : f32 to vector<8x8xf32>
    %1232 = arith.mulf %1231, %122 : vector<8x8xf32>
    %1233 = arith.addf %1229, %1232 : vector<8x8xf32>
    %c229 = arith.constant 229 : index
    %1234 = memref.load %arg2[%c229] : memref<512xf32, #tpu.memory_space<smem>>
    %1235 = vector.broadcast %1234 : f32 to vector<8x8xf32>
    %1236 = arith.mulf %1235, %124 : vector<8x8xf32>
    %1237 = arith.addf %1233, %1236 : vector<8x8xf32>
    %c245 = arith.constant 245 : index
    %1238 = memref.load %arg2[%c245] : memref<512xf32, #tpu.memory_space<smem>>
    %1239 = vector.broadcast %1238 : f32 to vector<8x8xf32>
    %1240 = arith.mulf %1239, %126 : vector<8x8xf32>
    %1241 = arith.addf %1237, %1240 : vector<8x8xf32>
    %c199 = arith.constant 199 : index
    %1242 = memref.load %arg2[%c199] : memref<512xf32, #tpu.memory_space<smem>>
    %1243 = vector.broadcast %1242 : f32 to vector<8x8xf32>
    %1244 = arith.mulf %1243, %129 : vector<8x8xf32>
    %1245 = arith.addf %1241, %1244 : vector<8x8xf32>
    %c215 = arith.constant 215 : index
    %1246 = memref.load %arg2[%c215] : memref<512xf32, #tpu.memory_space<smem>>
    %1247 = vector.broadcast %1246 : f32 to vector<8x8xf32>
    %1248 = arith.mulf %1247, %131 : vector<8x8xf32>
    %1249 = arith.addf %1245, %1248 : vector<8x8xf32>
    %c231 = arith.constant 231 : index
    %1250 = memref.load %arg2[%c231] : memref<512xf32, #tpu.memory_space<smem>>
    %1251 = vector.broadcast %1250 : f32 to vector<8x8xf32>
    %1252 = arith.mulf %1251, %133 : vector<8x8xf32>
    %1253 = arith.addf %1249, %1252 : vector<8x8xf32>
    %c247 = arith.constant 247 : index
    %1254 = memref.load %arg2[%c247] : memref<512xf32, #tpu.memory_space<smem>>
    %1255 = vector.broadcast %1254 : f32 to vector<8x8xf32>
    %1256 = arith.mulf %1255, %135 : vector<8x8xf32>
    %1257 = arith.addf %1253, %1256 : vector<8x8xf32>
    %c205 = arith.constant 205 : index
    %1258 = memref.load %arg2[%c205] : memref<512xf32, #tpu.memory_space<smem>>
    %1259 = vector.broadcast %1258 : f32 to vector<8x8xf32>
    %1260 = arith.mulf %1259, %138 : vector<8x8xf32>
    %1261 = arith.addf %1257, %1260 : vector<8x8xf32>
    %c221 = arith.constant 221 : index
    %1262 = memref.load %arg2[%c221] : memref<512xf32, #tpu.memory_space<smem>>
    %1263 = vector.broadcast %1262 : f32 to vector<8x8xf32>
    %1264 = arith.mulf %1263, %140 : vector<8x8xf32>
    %1265 = arith.addf %1261, %1264 : vector<8x8xf32>
    %c237 = arith.constant 237 : index
    %1266 = memref.load %arg2[%c237] : memref<512xf32, #tpu.memory_space<smem>>
    %1267 = vector.broadcast %1266 : f32 to vector<8x8xf32>
    %1268 = arith.mulf %1267, %142 : vector<8x8xf32>
    %1269 = arith.addf %1265, %1268 : vector<8x8xf32>
    %c253 = arith.constant 253 : index
    %1270 = memref.load %arg2[%c253] : memref<512xf32, #tpu.memory_space<smem>>
    %1271 = vector.broadcast %1270 : f32 to vector<8x8xf32>
    %1272 = arith.mulf %1271, %144 : vector<8x8xf32>
    %1273 = arith.addf %1269, %1272 : vector<8x8xf32>
    %c207 = arith.constant 207 : index
    %1274 = memref.load %arg2[%c207] : memref<512xf32, #tpu.memory_space<smem>>
    %1275 = vector.broadcast %1274 : f32 to vector<8x8xf32>
    %1276 = arith.mulf %1275, %147 : vector<8x8xf32>
    %1277 = arith.addf %1273, %1276 : vector<8x8xf32>
    %c223 = arith.constant 223 : index
    %1278 = memref.load %arg2[%c223] : memref<512xf32, #tpu.memory_space<smem>>
    %1279 = vector.broadcast %1278 : f32 to vector<8x8xf32>
    %1280 = arith.mulf %1279, %149 : vector<8x8xf32>
    %1281 = arith.addf %1277, %1280 : vector<8x8xf32>
    %c239 = arith.constant 239 : index
    %1282 = memref.load %arg2[%c239] : memref<512xf32, #tpu.memory_space<smem>>
    %1283 = vector.broadcast %1282 : f32 to vector<8x8xf32>
    %1284 = arith.mulf %1283, %151 : vector<8x8xf32>
    %1285 = arith.addf %1281, %1284 : vector<8x8xf32>
    %c255 = arith.constant 255 : index
    %1286 = memref.load %arg2[%c255] : memref<512xf32, #tpu.memory_space<smem>>
    %1287 = vector.broadcast %1286 : f32 to vector<8x8xf32>
    %1288 = arith.mulf %1287, %153 : vector<8x8xf32>
    %1289 = arith.addf %1285, %1288 : vector<8x8xf32>
    %1290 = vector.shape_cast %1289 : vector<8x8xf32> to vector<1x8x8xf32>
    %cst_47 = arith.constant dense<0.000000e+00> : vector<1xf32>
    %1291 = vector.multi_reduction <add>, %1290, %cst_47 [1, 2] : vector<1x8x8xf32> to vector<1xf32>
    %1292 = vector.shape_cast %1291 : vector<1xf32> to vector<1x1x1xf32>
    %1293 = vector.extract %1292[0, 0, 0] : f32 from vector<1x1x1xf32>
    %1294 = vector.broadcast %1293 : f32 to vector<1x1xf32>
    %cst_48 = arith.constant 1.562500e-02 : f32
    %1295 = vector.broadcast %cst_48 : f32 to vector<1x1xf32>
    %1296 = arith.mulf %1294, %1295 : vector<1x1xf32>
    %1297 = vector.broadcast %1296 : vector<1x1xf32> to vector<8x8xf32>
    %1298 = arith.subf %1289, %1297 : vector<8x8xf32>
    %1299 = arith.mulf %1298, %1298 : vector<8x8xf32>
    %1300 = vector.shape_cast %1299 : vector<8x8xf32> to vector<1x8x8xf32>
    %cst_49 = arith.constant dense<0.000000e+00> : vector<1xf32>
    %1301 = vector.multi_reduction <add>, %1300, %cst_49 [1, 2] : vector<1x8x8xf32> to vector<1xf32>
    %1302 = vector.shape_cast %1301 : vector<1xf32> to vector<1x1x1xf32>
    %1303 = vector.extract %1302[0, 0, 0] : f32 from vector<1x1x1xf32>
    %1304 = vector.broadcast %1303 : f32 to vector<1x1xf32>
    %cst_50 = arith.constant 1.562500e-02 : f32
    %1305 = vector.broadcast %cst_50 : f32 to vector<1x1xf32>
    %1306 = arith.mulf %1304, %1305 : vector<1x1xf32>
    %cst_51 = arith.constant 9.99999974E-6 : f32
    %1307 = vector.broadcast %cst_51 : f32 to vector<1x1xf32>
    %1308 = arith.addf %1306, %1307 : vector<1x1xf32>
    %1309 = math.rsqrt %1308 : vector<1x1xf32>
    %c3_52 = arith.constant 3 : index
    %1310 = memref.load %arg3[%c3_52] : memref<8xf32, #tpu.memory_space<smem>>
    %1311 = vector.broadcast %1310 : f32 to vector<1x1xf32>
    %1312 = arith.mulf %1309, %1311 : vector<1x1xf32>
    %1313 = vector.broadcast %1312 : vector<1x1xf32> to vector<8x8xf32>
    %1314 = arith.mulf %1298, %1313 : vector<8x8xf32>
    %c3_53 = arith.constant 3 : index
    %1315 = memref.load %arg4[%c3_53] : memref<8xf32, #tpu.memory_space<smem>>
    %1316 = vector.broadcast %1315 : f32 to vector<8x8xf32>
    %1317 = arith.addf %1314, %1316 : vector<8x8xf32>
    %cst_54 = arith.constant 0.000000e+00 : f32
    %1318 = vector.broadcast %cst_54 : f32 to vector<8x8xf32>
    %1319 = arith.cmpf ogt, %1317, %1318 : vector<8x8xf32>
    %cst_55 = arith.constant 2.000000e-01 : f32
    %1320 = vector.broadcast %cst_55 : f32 to vector<8x8xf32>
    %1321 = arith.mulf %1320, %1317 : vector<8x8xf32>
    %1322 = arith.select %1319, %1317, %1321 : vector<8x8xi1>, vector<8x8xf32>
    %c0_56 = arith.constant 0 : index
    %c3_57 = arith.constant 3 : index
    %c0_58 = arith.constant 0 : index
    %c0_59 = arith.constant 0 : index
    %1323 = vector.load %arg5[%c0_56, %c3_57, %c0_58, %c0_59] : memref<1x8x8x8xf32, #tpu.memory_space<vmem>>, vector<1x1x8x8xf32>
    %1324 = vector.shape_cast %1323 : vector<1x1x8x8xf32> to vector<8x8xf32>
    %1325 = vector.shape_cast %1322 : vector<8x8xf32> to vector<1x1x8x8xf32>
    tpu.vector_store %arg5[%c0_56, %c3_57, %c0_58, %c0_59], %1325 {strides = array<i32>} : memref<1x8x8x8xf32, #tpu.memory_space<vmem>>, vector<1x1x8x8xf32>,
    %cst_60 = arith.constant 0.000000e+00 : f32
    %1326 = vector.broadcast %cst_60 : f32 to vector<8x8xf32>
    %c256 = arith.constant 256 : index
    %1327 = memref.load %arg2[%c256] : memref<512xf32, #tpu.memory_space<smem>>
    %1328 = vector.broadcast %1327 : f32 to vector<8x8xf32>
    %1329 = arith.mulf %1328, %6 : vector<8x8xf32>
    %1330 = arith.addf %1326, %1329 : vector<8x8xf32>
    %c272 = arith.constant 272 : index
    %1331 = memref.load %arg2[%c272] : memref<512xf32, #tpu.memory_space<smem>>
    %1332 = vector.broadcast %1331 : f32 to vector<8x8xf32>
    %1333 = arith.mulf %1332, %8 : vector<8x8xf32>
    %1334 = arith.addf %1330, %1333 : vector<8x8xf32>
    %c288 = arith.constant 288 : index
    %1335 = memref.load %arg2[%c288] : memref<512xf32, #tpu.memory_space<smem>>
    %1336 = vector.broadcast %1335 : f32 to vector<8x8xf32>
    %1337 = arith.mulf %1336, %10 : vector<8x8xf32>
    %1338 = arith.addf %1334, %1337 : vector<8x8xf32>
    %c304 = arith.constant 304 : index
    %1339 = memref.load %arg2[%c304] : memref<512xf32, #tpu.memory_space<smem>>
    %1340 = vector.broadcast %1339 : f32 to vector<8x8xf32>
    %1341 = arith.mulf %1340, %12 : vector<8x8xf32>
    %1342 = arith.addf %1338, %1341 : vector<8x8xf32>
    %c258 = arith.constant 258 : index
    %1343 = memref.load %arg2[%c258] : memref<512xf32, #tpu.memory_space<smem>>
    %1344 = vector.broadcast %1343 : f32 to vector<8x8xf32>
    %1345 = arith.mulf %1344, %15 : vector<8x8xf32>
    %1346 = arith.addf %1342, %1345 : vector<8x8xf32>
    %c274 = arith.constant 274 : index
    %1347 = memref.load %arg2[%c274] : memref<512xf32, #tpu.memory_space<smem>>
    %1348 = vector.broadcast %1347 : f32 to vector<8x8xf32>
    %1349 = arith.mulf %1348, %17 : vector<8x8xf32>
    %1350 = arith.addf %1346, %1349 : vector<8x8xf32>
    %c290 = arith.constant 290 : index
    %1351 = memref.load %arg2[%c290] : memref<512xf32, #tpu.memory_space<smem>>
    %1352 = vector.broadcast %1351 : f32 to vector<8x8xf32>
    %1353 = arith.mulf %1352, %19 : vector<8x8xf32>
    %1354 = arith.addf %1350, %1353 : vector<8x8xf32>
    %c306 = arith.constant 306 : index
    %1355 = memref.load %arg2[%c306] : memref<512xf32, #tpu.memory_space<smem>>
    %1356 = vector.broadcast %1355 : f32 to vector<8x8xf32>
    %1357 = arith.mulf %1356, %21 : vector<8x8xf32>
    %1358 = arith.addf %1354, %1357 : vector<8x8xf32>
    %c264 = arith.constant 264 : index
    %1359 = memref.load %arg2[%c264] : memref<512xf32, #tpu.memory_space<smem>>
    %1360 = vector.broadcast %1359 : f32 to vector<8x8xf32>
    %1361 = arith.mulf %1360, %24 : vector<8x8xf32>
    %1362 = arith.addf %1358, %1361 : vector<8x8xf32>
    %c280 = arith.constant 280 : index
    %1363 = memref.load %arg2[%c280] : memref<512xf32, #tpu.memory_space<smem>>
    %1364 = vector.broadcast %1363 : f32 to vector<8x8xf32>
    %1365 = arith.mulf %1364, %26 : vector<8x8xf32>
    %1366 = arith.addf %1362, %1365 : vector<8x8xf32>
    %c296 = arith.constant 296 : index
    %1367 = memref.load %arg2[%c296] : memref<512xf32, #tpu.memory_space<smem>>
    %1368 = vector.broadcast %1367 : f32 to vector<8x8xf32>
    %1369 = arith.mulf %1368, %28 : vector<8x8xf32>
    %1370 = arith.addf %1366, %1369 : vector<8x8xf32>
    %c312 = arith.constant 312 : index
    %1371 = memref.load %arg2[%c312] : memref<512xf32, #tpu.memory_space<smem>>
    %1372 = vector.broadcast %1371 : f32 to vector<8x8xf32>
    %1373 = arith.mulf %1372, %30 : vector<8x8xf32>
    %1374 = arith.addf %1370, %1373 : vector<8x8xf32>
    %c266 = arith.constant 266 : index
    %1375 = memref.load %arg2[%c266] : memref<512xf32, #tpu.memory_space<smem>>
    %1376 = vector.broadcast %1375 : f32 to vector<8x8xf32>
    %1377 = arith.mulf %1376, %33 : vector<8x8xf32>
    %1378 = arith.addf %1374, %1377 : vector<8x8xf32>
    %c282 = arith.constant 282 : index
    %1379 = memref.load %arg2[%c282] : memref<512xf32, #tpu.memory_space<smem>>
    %1380 = vector.broadcast %1379 : f32 to vector<8x8xf32>
    %1381 = arith.mulf %1380, %35 : vector<8x8xf32>
    %1382 = arith.addf %1378, %1381 : vector<8x8xf32>
    %c298 = arith.constant 298 : index
    %1383 = memref.load %arg2[%c298] : memref<512xf32, #tpu.memory_space<smem>>
    %1384 = vector.broadcast %1383 : f32 to vector<8x8xf32>
    %1385 = arith.mulf %1384, %37 : vector<8x8xf32>
    %1386 = arith.addf %1382, %1385 : vector<8x8xf32>
    %c314 = arith.constant 314 : index
    %1387 = memref.load %arg2[%c314] : memref<512xf32, #tpu.memory_space<smem>>
    %1388 = vector.broadcast %1387 : f32 to vector<8x8xf32>
    %1389 = arith.mulf %1388, %39 : vector<8x8xf32>
    %1390 = arith.addf %1386, %1389 : vector<8x8xf32>
    %c257 = arith.constant 257 : index
    %1391 = memref.load %arg2[%c257] : memref<512xf32, #tpu.memory_space<smem>>
    %1392 = vector.broadcast %1391 : f32 to vector<8x8xf32>
    %1393 = arith.mulf %1392, %44 : vector<8x8xf32>
    %1394 = arith.addf %1390, %1393 : vector<8x8xf32>
    %c273 = arith.constant 273 : index
    %1395 = memref.load %arg2[%c273] : memref<512xf32, #tpu.memory_space<smem>>
    %1396 = vector.broadcast %1395 : f32 to vector<8x8xf32>
    %1397 = arith.mulf %1396, %46 : vector<8x8xf32>
    %1398 = arith.addf %1394, %1397 : vector<8x8xf32>
    %c289 = arith.constant 289 : index
    %1399 = memref.load %arg2[%c289] : memref<512xf32, #tpu.memory_space<smem>>
    %1400 = vector.broadcast %1399 : f32 to vector<8x8xf32>
    %1401 = arith.mulf %1400, %48 : vector<8x8xf32>
    %1402 = arith.addf %1398, %1401 : vector<8x8xf32>
    %c305 = arith.constant 305 : index
    %1403 = memref.load %arg2[%c305] : memref<512xf32, #tpu.memory_space<smem>>
    %1404 = vector.broadcast %1403 : f32 to vector<8x8xf32>
    %1405 = arith.mulf %1404, %50 : vector<8x8xf32>
    %1406 = arith.addf %1402, %1405 : vector<8x8xf32>
    %c259 = arith.constant 259 : index
    %1407 = memref.load %arg2[%c259] : memref<512xf32, #tpu.memory_space<smem>>
    %1408 = vector.broadcast %1407 : f32 to vector<8x8xf32>
    %1409 = arith.mulf %1408, %53 : vector<8x8xf32>
    %1410 = arith.addf %1406, %1409 : vector<8x8xf32>
    %c275 = arith.constant 275 : index
    %1411 = memref.load %arg2[%c275] : memref<512xf32, #tpu.memory_space<smem>>
    %1412 = vector.broadcast %1411 : f32 to vector<8x8xf32>
    %1413 = arith.mulf %1412, %55 : vector<8x8xf32>
    %1414 = arith.addf %1410, %1413 : vector<8x8xf32>
    %c291 = arith.constant 291 : index
    %1415 = memref.load %arg2[%c291] : memref<512xf32, #tpu.memory_space<smem>>
    %1416 = vector.broadcast %1415 : f32 to vector<8x8xf32>
    %1417 = arith.mulf %1416, %57 : vector<8x8xf32>
    %1418 = arith.addf %1414, %1417 : vector<8x8xf32>
    %c307 = arith.constant 307 : index
    %1419 = memref.load %arg2[%c307] : memref<512xf32, #tpu.memory_space<smem>>
    %1420 = vector.broadcast %1419 : f32 to vector<8x8xf32>
    %1421 = arith.mulf %1420, %59 : vector<8x8xf32>
    %1422 = arith.addf %1418, %1421 : vector<8x8xf32>
    %c265 = arith.constant 265 : index
    %1423 = memref.load %arg2[%c265] : memref<512xf32, #tpu.memory_space<smem>>
    %1424 = vector.broadcast %1423 : f32 to vector<8x8xf32>
    %1425 = arith.mulf %1424, %62 : vector<8x8xf32>
    %1426 = arith.addf %1422, %1425 : vector<8x8xf32>
    %c281 = arith.constant 281 : index
    %1427 = memref.load %arg2[%c281] : memref<512xf32, #tpu.memory_space<smem>>
    %1428 = vector.broadcast %1427 : f32 to vector<8x8xf32>
    %1429 = arith.mulf %1428, %64 : vector<8x8xf32>
    %1430 = arith.addf %1426, %1429 : vector<8x8xf32>
    %c297 = arith.constant 297 : index
    %1431 = memref.load %arg2[%c297] : memref<512xf32, #tpu.memory_space<smem>>
    %1432 = vector.broadcast %1431 : f32 to vector<8x8xf32>
    %1433 = arith.mulf %1432, %66 : vector<8x8xf32>
    %1434 = arith.addf %1430, %1433 : vector<8x8xf32>
    %c313 = arith.constant 313 : index
    %1435 = memref.load %arg2[%c313] : memref<512xf32, #tpu.memory_space<smem>>
    %1436 = vector.broadcast %1435 : f32 to vector<8x8xf32>
    %1437 = arith.mulf %1436, %68 : vector<8x8xf32>
    %1438 = arith.addf %1434, %1437 : vector<8x8xf32>
    %c267 = arith.constant 267 : index
    %1439 = memref.load %arg2[%c267] : memref<512xf32, #tpu.memory_space<smem>>
    %1440 = vector.broadcast %1439 : f32 to vector<8x8xf32>
    %1441 = arith.mulf %1440, %71 : vector<8x8xf32>
    %1442 = arith.addf %1438, %1441 : vector<8x8xf32>
    %c283 = arith.constant 283 : index
    %1443 = memref.load %arg2[%c283] : memref<512xf32, #tpu.memory_space<smem>>
    %1444 = vector.broadcast %1443 : f32 to vector<8x8xf32>
    %1445 = arith.mulf %1444, %73 : vector<8x8xf32>
    %1446 = arith.addf %1442, %1445 : vector<8x8xf32>
    %c299 = arith.constant 299 : index
    %1447 = memref.load %arg2[%c299] : memref<512xf32, #tpu.memory_space<smem>>
    %1448 = vector.broadcast %1447 : f32 to vector<8x8xf32>
    %1449 = arith.mulf %1448, %75 : vector<8x8xf32>
    %1450 = arith.addf %1446, %1449 : vector<8x8xf32>
    %c315 = arith.constant 315 : index
    %1451 = memref.load %arg2[%c315] : memref<512xf32, #tpu.memory_space<smem>>
    %1452 = vector.broadcast %1451 : f32 to vector<8x8xf32>
    %1453 = arith.mulf %1452, %77 : vector<8x8xf32>
    %1454 = arith.addf %1450, %1453 : vector<8x8xf32>
    %c260 = arith.constant 260 : index
    %1455 = memref.load %arg2[%c260] : memref<512xf32, #tpu.memory_space<smem>>
    %1456 = vector.broadcast %1455 : f32 to vector<8x8xf32>
    %1457 = arith.mulf %1456, %82 : vector<8x8xf32>
    %1458 = arith.addf %1454, %1457 : vector<8x8xf32>
    %c276 = arith.constant 276 : index
    %1459 = memref.load %arg2[%c276] : memref<512xf32, #tpu.memory_space<smem>>
    %1460 = vector.broadcast %1459 : f32 to vector<8x8xf32>
    %1461 = arith.mulf %1460, %84 : vector<8x8xf32>
    %1462 = arith.addf %1458, %1461 : vector<8x8xf32>
    %c292 = arith.constant 292 : index
    %1463 = memref.load %arg2[%c292] : memref<512xf32, #tpu.memory_space<smem>>
    %1464 = vector.broadcast %1463 : f32 to vector<8x8xf32>
    %1465 = arith.mulf %1464, %86 : vector<8x8xf32>
    %1466 = arith.addf %1462, %1465 : vector<8x8xf32>
    %c308 = arith.constant 308 : index
    %1467 = memref.load %arg2[%c308] : memref<512xf32, #tpu.memory_space<smem>>
    %1468 = vector.broadcast %1467 : f32 to vector<8x8xf32>
    %1469 = arith.mulf %1468, %88 : vector<8x8xf32>
    %1470 = arith.addf %1466, %1469 : vector<8x8xf32>
    %c262 = arith.constant 262 : index
    %1471 = memref.load %arg2[%c262] : memref<512xf32, #tpu.memory_space<smem>>
    %1472 = vector.broadcast %1471 : f32 to vector<8x8xf32>
    %1473 = arith.mulf %1472, %91 : vector<8x8xf32>
    %1474 = arith.addf %1470, %1473 : vector<8x8xf32>
    %c278 = arith.constant 278 : index
    %1475 = memref.load %arg2[%c278] : memref<512xf32, #tpu.memory_space<smem>>
    %1476 = vector.broadcast %1475 : f32 to vector<8x8xf32>
    %1477 = arith.mulf %1476, %93 : vector<8x8xf32>
    %1478 = arith.addf %1474, %1477 : vector<8x8xf32>
    %c294 = arith.constant 294 : index
    %1479 = memref.load %arg2[%c294] : memref<512xf32, #tpu.memory_space<smem>>
    %1480 = vector.broadcast %1479 : f32 to vector<8x8xf32>
    %1481 = arith.mulf %1480, %95 : vector<8x8xf32>
    %1482 = arith.addf %1478, %1481 : vector<8x8xf32>
    %c310 = arith.constant 310 : index
    %1483 = memref.load %arg2[%c310] : memref<512xf32, #tpu.memory_space<smem>>
    %1484 = vector.broadcast %1483 : f32 to vector<8x8xf32>
    %1485 = arith.mulf %1484, %97 : vector<8x8xf32>
    %1486 = arith.addf %1482, %1485 : vector<8x8xf32>
    %c268 = arith.constant 268 : index
    %1487 = memref.load %arg2[%c268] : memref<512xf32, #tpu.memory_space<smem>>
    %1488 = vector.broadcast %1487 : f32 to vector<8x8xf32>
    %1489 = arith.mulf %1488, %100 : vector<8x8xf32>
    %1490 = arith.addf %1486, %1489 : vector<8x8xf32>
    %c284 = arith.constant 284 : index
    %1491 = memref.load %arg2[%c284] : memref<512xf32, #tpu.memory_space<smem>>
    %1492 = vector.broadcast %1491 : f32 to vector<8x8xf32>
    %1493 = arith.mulf %1492, %102 : vector<8x8xf32>
    %1494 = arith.addf %1490, %1493 : vector<8x8xf32>
    %c300 = arith.constant 300 : index
    %1495 = memref.load %arg2[%c300] : memref<512xf32, #tpu.memory_space<smem>>
    %1496 = vector.broadcast %1495 : f32 to vector<8x8xf32>
    %1497 = arith.mulf %1496, %104 : vector<8x8xf32>
    %1498 = arith.addf %1494, %1497 : vector<8x8xf32>
    %c316 = arith.constant 316 : index
    %1499 = memref.load %arg2[%c316] : memref<512xf32, #tpu.memory_space<smem>>
    %1500 = vector.broadcast %1499 : f32 to vector<8x8xf32>
    %1501 = arith.mulf %1500, %106 : vector<8x8xf32>
    %1502 = arith.addf %1498, %1501 : vector<8x8xf32>
    %c270 = arith.constant 270 : index
    %1503 = memref.load %arg2[%c270] : memref<512xf32, #tpu.memory_space<smem>>
    %1504 = vector.broadcast %1503 : f32 to vector<8x8xf32>
    %1505 = arith.mulf %1504, %109 : vector<8x8xf32>
    %1506 = arith.addf %1502, %1505 : vector<8x8xf32>
    %c286 = arith.constant 286 : index
    %1507 = memref.load %arg2[%c286] : memref<512xf32, #tpu.memory_space<smem>>
    %1508 = vector.broadcast %1507 : f32 to vector<8x8xf32>
    %1509 = arith.mulf %1508, %111 : vector<8x8xf32>
    %1510 = arith.addf %1506, %1509 : vector<8x8xf32>
    %c302 = arith.constant 302 : index
    %1511 = memref.load %arg2[%c302] : memref<512xf32, #tpu.memory_space<smem>>
    %1512 = vector.broadcast %1511 : f32 to vector<8x8xf32>
    %1513 = arith.mulf %1512, %113 : vector<8x8xf32>
    %1514 = arith.addf %1510, %1513 : vector<8x8xf32>
    %c318 = arith.constant 318 : index
    %1515 = memref.load %arg2[%c318] : memref<512xf32, #tpu.memory_space<smem>>
    %1516 = vector.broadcast %1515 : f32 to vector<8x8xf32>
    %1517 = arith.mulf %1516, %115 : vector<8x8xf32>
    %1518 = arith.addf %1514, %1517 : vector<8x8xf32>
    %c261 = arith.constant 261 : index
    %1519 = memref.load %arg2[%c261] : memref<512xf32, #tpu.memory_space<smem>>
    %1520 = vector.broadcast %1519 : f32 to vector<8x8xf32>
    %1521 = arith.mulf %1520, %120 : vector<8x8xf32>
    %1522 = arith.addf %1518, %1521 : vector<8x8xf32>
    %c277 = arith.constant 277 : index
    %1523 = memref.load %arg2[%c277] : memref<512xf32, #tpu.memory_space<smem>>
    %1524 = vector.broadcast %1523 : f32 to vector<8x8xf32>
    %1525 = arith.mulf %1524, %122 : vector<8x8xf32>
    %1526 = arith.addf %1522, %1525 : vector<8x8xf32>
    %c293 = arith.constant 293 : index
    %1527 = memref.load %arg2[%c293] : memref<512xf32, #tpu.memory_space<smem>>
    %1528 = vector.broadcast %1527 : f32 to vector<8x8xf32>
    %1529 = arith.mulf %1528, %124 : vector<8x8xf32>
    %1530 = arith.addf %1526, %1529 : vector<8x8xf32>
    %c309 = arith.constant 309 : index
    %1531 = memref.load %arg2[%c309] : memref<512xf32, #tpu.memory_space<smem>>
    %1532 = vector.broadcast %1531 : f32 to vector<8x8xf32>
    %1533 = arith.mulf %1532, %126 : vector<8x8xf32>
    %1534 = arith.addf %1530, %1533 : vector<8x8xf32>
    %c263 = arith.constant 263 : index
    %1535 = memref.load %arg2[%c263] : memref<512xf32, #tpu.memory_space<smem>>
    %1536 = vector.broadcast %1535 : f32 to vector<8x8xf32>
    %1537 = arith.mulf %1536, %129 : vector<8x8xf32>
    %1538 = arith.addf %1534, %1537 : vector<8x8xf32>
    %c279 = arith.constant 279 : index
    %1539 = memref.load %arg2[%c279] : memref<512xf32, #tpu.memory_space<smem>>
    %1540 = vector.broadcast %1539 : f32 to vector<8x8xf32>
    %1541 = arith.mulf %1540, %131 : vector<8x8xf32>
    %1542 = arith.addf %1538, %1541 : vector<8x8xf32>
    %c295 = arith.constant 295 : index
    %1543 = memref.load %arg2[%c295] : memref<512xf32, #tpu.memory_space<smem>>
    %1544 = vector.broadcast %1543 : f32 to vector<8x8xf32>
    %1545 = arith.mulf %1544, %133 : vector<8x8xf32>
    %1546 = arith.addf %1542, %1545 : vector<8x8xf32>
    %c311 = arith.constant 311 : index
    %1547 = memref.load %arg2[%c311] : memref<512xf32, #tpu.memory_space<smem>>
    %1548 = vector.broadcast %1547 : f32 to vector<8x8xf32>
    %1549 = arith.mulf %1548, %135 : vector<8x8xf32>
    %1550 = arith.addf %1546, %1549 : vector<8x8xf32>
    %c269 = arith.constant 269 : index
    %1551 = memref.load %arg2[%c269] : memref<512xf32, #tpu.memory_space<smem>>
    %1552 = vector.broadcast %1551 : f32 to vector<8x8xf32>
    %1553 = arith.mulf %1552, %138 : vector<8x8xf32>
    %1554 = arith.addf %1550, %1553 : vector<8x8xf32>
    %c285 = arith.constant 285 : index
    %1555 = memref.load %arg2[%c285] : memref<512xf32, #tpu.memory_space<smem>>
    %1556 = vector.broadcast %1555 : f32 to vector<8x8xf32>
    %1557 = arith.mulf %1556, %140 : vector<8x8xf32>
    %1558 = arith.addf %1554, %1557 : vector<8x8xf32>
    %c301 = arith.constant 301 : index
    %1559 = memref.load %arg2[%c301] : memref<512xf32, #tpu.memory_space<smem>>
    %1560 = vector.broadcast %1559 : f32 to vector<8x8xf32>
    %1561 = arith.mulf %1560, %142 : vector<8x8xf32>
    %1562 = arith.addf %1558, %1561 : vector<8x8xf32>
    %c317 = arith.constant 317 : index
    %1563 = memref.load %arg2[%c317] : memref<512xf32, #tpu.memory_space<smem>>
    %1564 = vector.broadcast %1563 : f32 to vector<8x8xf32>
    %1565 = arith.mulf %1564, %144 : vector<8x8xf32>
    %1566 = arith.addf %1562, %1565 : vector<8x8xf32>
    %c271 = arith.constant 271 : index
    %1567 = memref.load %arg2[%c271] : memref<512xf32, #tpu.memory_space<smem>>
    %1568 = vector.broadcast %1567 : f32 to vector<8x8xf32>
    %1569 = arith.mulf %1568, %147 : vector<8x8xf32>
    %1570 = arith.addf %1566, %1569 : vector<8x8xf32>
    %c287 = arith.constant 287 : index
    %1571 = memref.load %arg2[%c287] : memref<512xf32, #tpu.memory_space<smem>>
    %1572 = vector.broadcast %1571 : f32 to vector<8x8xf32>
    %1573 = arith.mulf %1572, %149 : vector<8x8xf32>
    %1574 = arith.addf %1570, %1573 : vector<8x8xf32>
    %c303 = arith.constant 303 : index
    %1575 = memref.load %arg2[%c303] : memref<512xf32, #tpu.memory_space<smem>>
    %1576 = vector.broadcast %1575 : f32 to vector<8x8xf32>
    %1577 = arith.mulf %1576, %151 : vector<8x8xf32>
    %1578 = arith.addf %1574, %1577 : vector<8x8xf32>
    %c319 = arith.constant 319 : index
    %1579 = memref.load %arg2[%c319] : memref<512xf32, #tpu.memory_space<smem>>
    %1580 = vector.broadcast %1579 : f32 to vector<8x8xf32>
    %1581 = arith.mulf %1580, %153 : vector<8x8xf32>
    %1582 = arith.addf %1578, %1581 : vector<8x8xf32>
    %1583 = vector.shape_cast %1582 : vector<8x8xf32> to vector<1x8x8xf32>
    %cst_61 = arith.constant dense<0.000000e+00> : vector<1xf32>
    %1584 = vector.multi_reduction <add>, %1583, %cst_61 [1, 2] : vector<1x8x8xf32> to vector<1xf32>
    %1585 = vector.shape_cast %1584 : vector<1xf32> to vector<1x1x1xf32>
    %1586 = vector.extract %1585[0, 0, 0] : f32 from vector<1x1x1xf32>
    %1587 = vector.broadcast %1586 : f32 to vector<1x1xf32>
    %cst_62 = arith.constant 1.562500e-02 : f32
    %1588 = vector.broadcast %cst_62 : f32 to vector<1x1xf32>
    %1589 = arith.mulf %1587, %1588 : vector<1x1xf32>
    %1590 = vector.broadcast %1589 : vector<1x1xf32> to vector<8x8xf32>
    %1591 = arith.subf %1582, %1590 : vector<8x8xf32>
    %1592 = arith.mulf %1591, %1591 : vector<8x8xf32>
    %1593 = vector.shape_cast %1592 : vector<8x8xf32> to vector<1x8x8xf32>
    %cst_63 = arith.constant dense<0.000000e+00> : vector<1xf32>
    %1594 = vector.multi_reduction <add>, %1593, %cst_63 [1, 2] : vector<1x8x8xf32> to vector<1xf32>
    %1595 = vector.shape_cast %1594 : vector<1xf32> to vector<1x1x1xf32>
    %1596 = vector.extract %1595[0, 0, 0] : f32 from vector<1x1x1xf32>
    %1597 = vector.broadcast %1596 : f32 to vector<1x1xf32>
    %cst_64 = arith.constant 1.562500e-02 : f32
    %1598 = vector.broadcast %cst_64 : f32 to vector<1x1xf32>
    %1599 = arith.mulf %1597, %1598 : vector<1x1xf32>
    %cst_65 = arith.constant 9.99999974E-6 : f32
    %1600 = vector.broadcast %cst_65 : f32 to vector<1x1xf32>
    %1601 = arith.addf %1599, %1600 : vector<1x1xf32>
    %1602 = math.rsqrt %1601 : vector<1x1xf32>
    %c4_66 = arith.constant 4 : index
    %1603 = memref.load %arg3[%c4_66] : memref<8xf32, #tpu.memory_space<smem>>
    %1604 = vector.broadcast %1603 : f32 to vector<1x1xf32>
    %1605 = arith.mulf %1602, %1604 : vector<1x1xf32>
    %1606 = vector.broadcast %1605 : vector<1x1xf32> to vector<8x8xf32>
    %1607 = arith.mulf %1591, %1606 : vector<8x8xf32>
    %c4_67 = arith.constant 4 : index
    %1608 = memref.load %arg4[%c4_67] : memref<8xf32, #tpu.memory_space<smem>>
    %1609 = vector.broadcast %1608 : f32 to vector<8x8xf32>
    %1610 = arith.addf %1607, %1609 : vector<8x8xf32>
    %cst_68 = arith.constant 0.000000e+00 : f32
    %1611 = vector.broadcast %cst_68 : f32 to vector<8x8xf32>
    %1612 = arith.cmpf ogt, %1610, %1611 : vector<8x8xf32>
    %cst_69 = arith.constant 2.000000e-01 : f32
    %1613 = vector.broadcast %cst_69 : f32 to vector<8x8xf32>
    %1614 = arith.mulf %1613, %1610 : vector<8x8xf32>
    %1615 = arith.select %1612, %1610, %1614 : vector<8x8xi1>, vector<8x8xf32>
    %c0_70 = arith.constant 0 : index
    %c4_71 = arith.constant 4 : index
    %c0_72 = arith.constant 0 : index
    %c0_73 = arith.constant 0 : index
    %1616 = vector.load %arg5[%c0_70, %c4_71, %c0_72, %c0_73] : memref<1x8x8x8xf32, #tpu.memory_space<vmem>>, vector<1x1x8x8xf32>
    %1617 = vector.shape_cast %1616 : vector<1x1x8x8xf32> to vector<8x8xf32>
    %1618 = vector.shape_cast %1615 : vector<8x8xf32> to vector<1x1x8x8xf32>
    tpu.vector_store %arg5[%c0_70, %c4_71, %c0_72, %c0_73], %1618 {strides = array<i32>} : memref<1x8x8x8xf32, #tpu.memory_space<vmem>>, vector<1x1x8x8xf32>,
    %cst_74 = arith.constant 0.000000e+00 : f32
    %1619 = vector.broadcast %cst_74 : f32 to vector<8x8xf32>
    %c320 = arith.constant 320 : index
    %1620 = memref.load %arg2[%c320] : memref<512xf32, #tpu.memory_space<smem>>
    %1621 = vector.broadcast %1620 : f32 to vector<8x8xf32>
    %1622 = arith.mulf %1621, %6 : vector<8x8xf32>
    %1623 = arith.addf %1619, %1622 : vector<8x8xf32>
    %c336 = arith.constant 336 : index
    %1624 = memref.load %arg2[%c336] : memref<512xf32, #tpu.memory_space<smem>>
    %1625 = vector.broadcast %1624 : f32 to vector<8x8xf32>
    %1626 = arith.mulf %1625, %8 : vector<8x8xf32>
    %1627 = arith.addf %1623, %1626 : vector<8x8xf32>
    %c352 = arith.constant 352 : index
    %1628 = memref.load %arg2[%c352] : memref<512xf32, #tpu.memory_space<smem>>
    %1629 = vector.broadcast %1628 : f32 to vector<8x8xf32>
    %1630 = arith.mulf %1629, %10 : vector<8x8xf32>
    %1631 = arith.addf %1627, %1630 : vector<8x8xf32>
    %c368 = arith.constant 368 : index
    %1632 = memref.load %arg2[%c368] : memref<512xf32, #tpu.memory_space<smem>>
    %1633 = vector.broadcast %1632 : f32 to vector<8x8xf32>
    %1634 = arith.mulf %1633, %12 : vector<8x8xf32>
    %1635 = arith.addf %1631, %1634 : vector<8x8xf32>
    %c322 = arith.constant 322 : index
    %1636 = memref.load %arg2[%c322] : memref<512xf32, #tpu.memory_space<smem>>
    %1637 = vector.broadcast %1636 : f32 to vector<8x8xf32>
    %1638 = arith.mulf %1637, %15 : vector<8x8xf32>
    %1639 = arith.addf %1635, %1638 : vector<8x8xf32>
    %c338 = arith.constant 338 : index
    %1640 = memref.load %arg2[%c338] : memref<512xf32, #tpu.memory_space<smem>>
    %1641 = vector.broadcast %1640 : f32 to vector<8x8xf32>
    %1642 = arith.mulf %1641, %17 : vector<8x8xf32>
    %1643 = arith.addf %1639, %1642 : vector<8x8xf32>
    %c354 = arith.constant 354 : index
    %1644 = memref.load %arg2[%c354] : memref<512xf32, #tpu.memory_space<smem>>
    %1645 = vector.broadcast %1644 : f32 to vector<8x8xf32>
    %1646 = arith.mulf %1645, %19 : vector<8x8xf32>
    %1647 = arith.addf %1643, %1646 : vector<8x8xf32>
    %c370 = arith.constant 370 : index
    %1648 = memref.load %arg2[%c370] : memref<512xf32, #tpu.memory_space<smem>>
    %1649 = vector.broadcast %1648 : f32 to vector<8x8xf32>
    %1650 = arith.mulf %1649, %21 : vector<8x8xf32>
    %1651 = arith.addf %1647, %1650 : vector<8x8xf32>
    %c328 = arith.constant 328 : index
    %1652 = memref.load %arg2[%c328] : memref<512xf32, #tpu.memory_space<smem>>
    %1653 = vector.broadcast %1652 : f32 to vector<8x8xf32>
    %1654 = arith.mulf %1653, %24 : vector<8x8xf32>
    %1655 = arith.addf %1651, %1654 : vector<8x8xf32>
    %c344 = arith.constant 344 : index
    %1656 = memref.load %arg2[%c344] : memref<512xf32, #tpu.memory_space<smem>>
    %1657 = vector.broadcast %1656 : f32 to vector<8x8xf32>
    %1658 = arith.mulf %1657, %26 : vector<8x8xf32>
    %1659 = arith.addf %1655, %1658 : vector<8x8xf32>
    %c360 = arith.constant 360 : index
    %1660 = memref.load %arg2[%c360] : memref<512xf32, #tpu.memory_space<smem>>
    %1661 = vector.broadcast %1660 : f32 to vector<8x8xf32>
    %1662 = arith.mulf %1661, %28 : vector<8x8xf32>
    %1663 = arith.addf %1659, %1662 : vector<8x8xf32>
    %c376 = arith.constant 376 : index
    %1664 = memref.load %arg2[%c376] : memref<512xf32, #tpu.memory_space<smem>>
    %1665 = vector.broadcast %1664 : f32 to vector<8x8xf32>
    %1666 = arith.mulf %1665, %30 : vector<8x8xf32>
    %1667 = arith.addf %1663, %1666 : vector<8x8xf32>
    %c330 = arith.constant 330 : index
    %1668 = memref.load %arg2[%c330] : memref<512xf32, #tpu.memory_space<smem>>
    %1669 = vector.broadcast %1668 : f32 to vector<8x8xf32>
    %1670 = arith.mulf %1669, %33 : vector<8x8xf32>
    %1671 = arith.addf %1667, %1670 : vector<8x8xf32>
    %c346 = arith.constant 346 : index
    %1672 = memref.load %arg2[%c346] : memref<512xf32, #tpu.memory_space<smem>>
    %1673 = vector.broadcast %1672 : f32 to vector<8x8xf32>
    %1674 = arith.mulf %1673, %35 : vector<8x8xf32>
    %1675 = arith.addf %1671, %1674 : vector<8x8xf32>
    %c362 = arith.constant 362 : index
    %1676 = memref.load %arg2[%c362] : memref<512xf32, #tpu.memory_space<smem>>
    %1677 = vector.broadcast %1676 : f32 to vector<8x8xf32>
    %1678 = arith.mulf %1677, %37 : vector<8x8xf32>
    %1679 = arith.addf %1675, %1678 : vector<8x8xf32>
    %c378 = arith.constant 378 : index
    %1680 = memref.load %arg2[%c378] : memref<512xf32, #tpu.memory_space<smem>>
    %1681 = vector.broadcast %1680 : f32 to vector<8x8xf32>
    %1682 = arith.mulf %1681, %39 : vector<8x8xf32>
    %1683 = arith.addf %1679, %1682 : vector<8x8xf32>
    %c321 = arith.constant 321 : index
    %1684 = memref.load %arg2[%c321] : memref<512xf32, #tpu.memory_space<smem>>
    %1685 = vector.broadcast %1684 : f32 to vector<8x8xf32>
    %1686 = arith.mulf %1685, %44 : vector<8x8xf32>
    %1687 = arith.addf %1683, %1686 : vector<8x8xf32>
    %c337 = arith.constant 337 : index
    %1688 = memref.load %arg2[%c337] : memref<512xf32, #tpu.memory_space<smem>>
    %1689 = vector.broadcast %1688 : f32 to vector<8x8xf32>
    %1690 = arith.mulf %1689, %46 : vector<8x8xf32>
    %1691 = arith.addf %1687, %1690 : vector<8x8xf32>
    %c353 = arith.constant 353 : index
    %1692 = memref.load %arg2[%c353] : memref<512xf32, #tpu.memory_space<smem>>
    %1693 = vector.broadcast %1692 : f32 to vector<8x8xf32>
    %1694 = arith.mulf %1693, %48 : vector<8x8xf32>
    %1695 = arith.addf %1691, %1694 : vector<8x8xf32>
    %c369 = arith.constant 369 : index
    %1696 = memref.load %arg2[%c369] : memref<512xf32, #tpu.memory_space<smem>>
    %1697 = vector.broadcast %1696 : f32 to vector<8x8xf32>
    %1698 = arith.mulf %1697, %50 : vector<8x8xf32>
    %1699 = arith.addf %1695, %1698 : vector<8x8xf32>
    %c323 = arith.constant 323 : index
    %1700 = memref.load %arg2[%c323] : memref<512xf32, #tpu.memory_space<smem>>
    %1701 = vector.broadcast %1700 : f32 to vector<8x8xf32>
    %1702 = arith.mulf %1701, %53 : vector<8x8xf32>
    %1703 = arith.addf %1699, %1702 : vector<8x8xf32>
    %c339 = arith.constant 339 : index
    %1704 = memref.load %arg2[%c339] : memref<512xf32, #tpu.memory_space<smem>>
    %1705 = vector.broadcast %1704 : f32 to vector<8x8xf32>
    %1706 = arith.mulf %1705, %55 : vector<8x8xf32>
    %1707 = arith.addf %1703, %1706 : vector<8x8xf32>
    %c355 = arith.constant 355 : index
    %1708 = memref.load %arg2[%c355] : memref<512xf32, #tpu.memory_space<smem>>
    %1709 = vector.broadcast %1708 : f32 to vector<8x8xf32>
    %1710 = arith.mulf %1709, %57 : vector<8x8xf32>
    %1711 = arith.addf %1707, %1710 : vector<8x8xf32>
    %c371 = arith.constant 371 : index
    %1712 = memref.load %arg2[%c371] : memref<512xf32, #tpu.memory_space<smem>>
    %1713 = vector.broadcast %1712 : f32 to vector<8x8xf32>
    %1714 = arith.mulf %1713, %59 : vector<8x8xf32>
    %1715 = arith.addf %1711, %1714 : vector<8x8xf32>
    %c329 = arith.constant 329 : index
    %1716 = memref.load %arg2[%c329] : memref<512xf32, #tpu.memory_space<smem>>
    %1717 = vector.broadcast %1716 : f32 to vector<8x8xf32>
    %1718 = arith.mulf %1717, %62 : vector<8x8xf32>
    %1719 = arith.addf %1715, %1718 : vector<8x8xf32>
    %c345 = arith.constant 345 : index
    %1720 = memref.load %arg2[%c345] : memref<512xf32, #tpu.memory_space<smem>>
    %1721 = vector.broadcast %1720 : f32 to vector<8x8xf32>
    %1722 = arith.mulf %1721, %64 : vector<8x8xf32>
    %1723 = arith.addf %1719, %1722 : vector<8x8xf32>
    %c361 = arith.constant 361 : index
    %1724 = memref.load %arg2[%c361] : memref<512xf32, #tpu.memory_space<smem>>
    %1725 = vector.broadcast %1724 : f32 to vector<8x8xf32>
    %1726 = arith.mulf %1725, %66 : vector<8x8xf32>
    %1727 = arith.addf %1723, %1726 : vector<8x8xf32>
    %c377 = arith.constant 377 : index
    %1728 = memref.load %arg2[%c377] : memref<512xf32, #tpu.memory_space<smem>>
    %1729 = vector.broadcast %1728 : f32 to vector<8x8xf32>
    %1730 = arith.mulf %1729, %68 : vector<8x8xf32>
    %1731 = arith.addf %1727, %1730 : vector<8x8xf32>
    %c331 = arith.constant 331 : index
    %1732 = memref.load %arg2[%c331] : memref<512xf32, #tpu.memory_space<smem>>
    %1733 = vector.broadcast %1732 : f32 to vector<8x8xf32>
    %1734 = arith.mulf %1733, %71 : vector<8x8xf32>
    %1735 = arith.addf %1731, %1734 : vector<8x8xf32>
    %c347 = arith.constant 347 : index
    %1736 = memref.load %arg2[%c347] : memref<512xf32, #tpu.memory_space<smem>>
    %1737 = vector.broadcast %1736 : f32 to vector<8x8xf32>
    %1738 = arith.mulf %1737, %73 : vector<8x8xf32>
    %1739 = arith.addf %1735, %1738 : vector<8x8xf32>
    %c363 = arith.constant 363 : index
    %1740 = memref.load %arg2[%c363] : memref<512xf32, #tpu.memory_space<smem>>
    %1741 = vector.broadcast %1740 : f32 to vector<8x8xf32>
    %1742 = arith.mulf %1741, %75 : vector<8x8xf32>
    %1743 = arith.addf %1739, %1742 : vector<8x8xf32>
    %c379 = arith.constant 379 : index
    %1744 = memref.load %arg2[%c379] : memref<512xf32, #tpu.memory_space<smem>>
    %1745 = vector.broadcast %1744 : f32 to vector<8x8xf32>
    %1746 = arith.mulf %1745, %77 : vector<8x8xf32>
    %1747 = arith.addf %1743, %1746 : vector<8x8xf32>
    %c324 = arith.constant 324 : index
    %1748 = memref.load %arg2[%c324] : memref<512xf32, #tpu.memory_space<smem>>
    %1749 = vector.broadcast %1748 : f32 to vector<8x8xf32>
    %1750 = arith.mulf %1749, %82 : vector<8x8xf32>
    %1751 = arith.addf %1747, %1750 : vector<8x8xf32>
    %c340 = arith.constant 340 : index
    %1752 = memref.load %arg2[%c340] : memref<512xf32, #tpu.memory_space<smem>>
    %1753 = vector.broadcast %1752 : f32 to vector<8x8xf32>
    %1754 = arith.mulf %1753, %84 : vector<8x8xf32>
    %1755 = arith.addf %1751, %1754 : vector<8x8xf32>
    %c356 = arith.constant 356 : index
    %1756 = memref.load %arg2[%c356] : memref<512xf32, #tpu.memory_space<smem>>
    %1757 = vector.broadcast %1756 : f32 to vector<8x8xf32>
    %1758 = arith.mulf %1757, %86 : vector<8x8xf32>
    %1759 = arith.addf %1755, %1758 : vector<8x8xf32>
    %c372 = arith.constant 372 : index
    %1760 = memref.load %arg2[%c372] : memref<512xf32, #tpu.memory_space<smem>>
    %1761 = vector.broadcast %1760 : f32 to vector<8x8xf32>
    %1762 = arith.mulf %1761, %88 : vector<8x8xf32>
    %1763 = arith.addf %1759, %1762 : vector<8x8xf32>
    %c326 = arith.constant 326 : index
    %1764 = memref.load %arg2[%c326] : memref<512xf32, #tpu.memory_space<smem>>
    %1765 = vector.broadcast %1764 : f32 to vector<8x8xf32>
    %1766 = arith.mulf %1765, %91 : vector<8x8xf32>
    %1767 = arith.addf %1763, %1766 : vector<8x8xf32>
    %c342 = arith.constant 342 : index
    %1768 = memref.load %arg2[%c342] : memref<512xf32, #tpu.memory_space<smem>>
    %1769 = vector.broadcast %1768 : f32 to vector<8x8xf32>
    %1770 = arith.mulf %1769, %93 : vector<8x8xf32>
    %1771 = arith.addf %1767, %1770 : vector<8x8xf32>
    %c358 = arith.constant 358 : index
    %1772 = memref.load %arg2[%c358] : memref<512xf32, #tpu.memory_space<smem>>
    %1773 = vector.broadcast %1772 : f32 to vector<8x8xf32>
    %1774 = arith.mulf %1773, %95 : vector<8x8xf32>
    %1775 = arith.addf %1771, %1774 : vector<8x8xf32>
    %c374 = arith.constant 374 : index
    %1776 = memref.load %arg2[%c374] : memref<512xf32, #tpu.memory_space<smem>>
    %1777 = vector.broadcast %1776 : f32 to vector<8x8xf32>
    %1778 = arith.mulf %1777, %97 : vector<8x8xf32>
    %1779 = arith.addf %1775, %1778 : vector<8x8xf32>
    %c332 = arith.constant 332 : index
    %1780 = memref.load %arg2[%c332] : memref<512xf32, #tpu.memory_space<smem>>
    %1781 = vector.broadcast %1780 : f32 to vector<8x8xf32>
    %1782 = arith.mulf %1781, %100 : vector<8x8xf32>
    %1783 = arith.addf %1779, %1782 : vector<8x8xf32>
    %c348 = arith.constant 348 : index
    %1784 = memref.load %arg2[%c348] : memref<512xf32, #tpu.memory_space<smem>>
    %1785 = vector.broadcast %1784 : f32 to vector<8x8xf32>
    %1786 = arith.mulf %1785, %102 : vector<8x8xf32>
    %1787 = arith.addf %1783, %1786 : vector<8x8xf32>
    %c364 = arith.constant 364 : index
    %1788 = memref.load %arg2[%c364] : memref<512xf32, #tpu.memory_space<smem>>
    %1789 = vector.broadcast %1788 : f32 to vector<8x8xf32>
    %1790 = arith.mulf %1789, %104 : vector<8x8xf32>
    %1791 = arith.addf %1787, %1790 : vector<8x8xf32>
    %c380 = arith.constant 380 : index
    %1792 = memref.load %arg2[%c380] : memref<512xf32, #tpu.memory_space<smem>>
    %1793 = vector.broadcast %1792 : f32 to vector<8x8xf32>
    %1794 = arith.mulf %1793, %106 : vector<8x8xf32>
    %1795 = arith.addf %1791, %1794 : vector<8x8xf32>
    %c334 = arith.constant 334 : index
    %1796 = memref.load %arg2[%c334] : memref<512xf32, #tpu.memory_space<smem>>
    %1797 = vector.broadcast %1796 : f32 to vector<8x8xf32>
    %1798 = arith.mulf %1797, %109 : vector<8x8xf32>
    %1799 = arith.addf %1795, %1798 : vector<8x8xf32>
    %c350 = arith.constant 350 : index
    %1800 = memref.load %arg2[%c350] : memref<512xf32, #tpu.memory_space<smem>>
    %1801 = vector.broadcast %1800 : f32 to vector<8x8xf32>
    %1802 = arith.mulf %1801, %111 : vector<8x8xf32>
    %1803 = arith.addf %1799, %1802 : vector<8x8xf32>
    %c366 = arith.constant 366 : index
    %1804 = memref.load %arg2[%c366] : memref<512xf32, #tpu.memory_space<smem>>
    %1805 = vector.broadcast %1804 : f32 to vector<8x8xf32>
    %1806 = arith.mulf %1805, %113 : vector<8x8xf32>
    %1807 = arith.addf %1803, %1806 : vector<8x8xf32>
    %c382 = arith.constant 382 : index
    %1808 = memref.load %arg2[%c382] : memref<512xf32, #tpu.memory_space<smem>>
    %1809 = vector.broadcast %1808 : f32 to vector<8x8xf32>
    %1810 = arith.mulf %1809, %115 : vector<8x8xf32>
    %1811 = arith.addf %1807, %1810 : vector<8x8xf32>
    %c325 = arith.constant 325 : index
    %1812 = memref.load %arg2[%c325] : memref<512xf32, #tpu.memory_space<smem>>
    %1813 = vector.broadcast %1812 : f32 to vector<8x8xf32>
    %1814 = arith.mulf %1813, %120 : vector<8x8xf32>
    %1815 = arith.addf %1811, %1814 : vector<8x8xf32>
    %c341 = arith.constant 341 : index
    %1816 = memref.load %arg2[%c341] : memref<512xf32, #tpu.memory_space<smem>>
    %1817 = vector.broadcast %1816 : f32 to vector<8x8xf32>
    %1818 = arith.mulf %1817, %122 : vector<8x8xf32>
    %1819 = arith.addf %1815, %1818 : vector<8x8xf32>
    %c357 = arith.constant 357 : index
    %1820 = memref.load %arg2[%c357] : memref<512xf32, #tpu.memory_space<smem>>
    %1821 = vector.broadcast %1820 : f32 to vector<8x8xf32>
    %1822 = arith.mulf %1821, %124 : vector<8x8xf32>
    %1823 = arith.addf %1819, %1822 : vector<8x8xf32>
    %c373 = arith.constant 373 : index
    %1824 = memref.load %arg2[%c373] : memref<512xf32, #tpu.memory_space<smem>>
    %1825 = vector.broadcast %1824 : f32 to vector<8x8xf32>
    %1826 = arith.mulf %1825, %126 : vector<8x8xf32>
    %1827 = arith.addf %1823, %1826 : vector<8x8xf32>
    %c327 = arith.constant 327 : index
    %1828 = memref.load %arg2[%c327] : memref<512xf32, #tpu.memory_space<smem>>
    %1829 = vector.broadcast %1828 : f32 to vector<8x8xf32>
    %1830 = arith.mulf %1829, %129 : vector<8x8xf32>
    %1831 = arith.addf %1827, %1830 : vector<8x8xf32>
    %c343 = arith.constant 343 : index
    %1832 = memref.load %arg2[%c343] : memref<512xf32, #tpu.memory_space<smem>>
    %1833 = vector.broadcast %1832 : f32 to vector<8x8xf32>
    %1834 = arith.mulf %1833, %131 : vector<8x8xf32>
    %1835 = arith.addf %1831, %1834 : vector<8x8xf32>
    %c359 = arith.constant 359 : index
    %1836 = memref.load %arg2[%c359] : memref<512xf32, #tpu.memory_space<smem>>
    %1837 = vector.broadcast %1836 : f32 to vector<8x8xf32>
    %1838 = arith.mulf %1837, %133 : vector<8x8xf32>
    %1839 = arith.addf %1835, %1838 : vector<8x8xf32>
    %c375 = arith.constant 375 : index
    %1840 = memref.load %arg2[%c375] : memref<512xf32, #tpu.memory_space<smem>>
    %1841 = vector.broadcast %1840 : f32 to vector<8x8xf32>
    %1842 = arith.mulf %1841, %135 : vector<8x8xf32>
    %1843 = arith.addf %1839, %1842 : vector<8x8xf32>
    %c333 = arith.constant 333 : index
    %1844 = memref.load %arg2[%c333] : memref<512xf32, #tpu.memory_space<smem>>
    %1845 = vector.broadcast %1844 : f32 to vector<8x8xf32>
    %1846 = arith.mulf %1845, %138 : vector<8x8xf32>
    %1847 = arith.addf %1843, %1846 : vector<8x8xf32>
    %c349 = arith.constant 349 : index
    %1848 = memref.load %arg2[%c349] : memref<512xf32, #tpu.memory_space<smem>>
    %1849 = vector.broadcast %1848 : f32 to vector<8x8xf32>
    %1850 = arith.mulf %1849, %140 : vector<8x8xf32>
    %1851 = arith.addf %1847, %1850 : vector<8x8xf32>
    %c365 = arith.constant 365 : index
    %1852 = memref.load %arg2[%c365] : memref<512xf32, #tpu.memory_space<smem>>
    %1853 = vector.broadcast %1852 : f32 to vector<8x8xf32>
    %1854 = arith.mulf %1853, %142 : vector<8x8xf32>
    %1855 = arith.addf %1851, %1854 : vector<8x8xf32>
    %c381 = arith.constant 381 : index
    %1856 = memref.load %arg2[%c381] : memref<512xf32, #tpu.memory_space<smem>>
    %1857 = vector.broadcast %1856 : f32 to vector<8x8xf32>
    %1858 = arith.mulf %1857, %144 : vector<8x8xf32>
    %1859 = arith.addf %1855, %1858 : vector<8x8xf32>
    %c335 = arith.constant 335 : index
    %1860 = memref.load %arg2[%c335] : memref<512xf32, #tpu.memory_space<smem>>
    %1861 = vector.broadcast %1860 : f32 to vector<8x8xf32>
    %1862 = arith.mulf %1861, %147 : vector<8x8xf32>
    %1863 = arith.addf %1859, %1862 : vector<8x8xf32>
    %c351 = arith.constant 351 : index
    %1864 = memref.load %arg2[%c351] : memref<512xf32, #tpu.memory_space<smem>>
    %1865 = vector.broadcast %1864 : f32 to vector<8x8xf32>
    %1866 = arith.mulf %1865, %149 : vector<8x8xf32>
    %1867 = arith.addf %1863, %1866 : vector<8x8xf32>
    %c367 = arith.constant 367 : index
    %1868 = memref.load %arg2[%c367] : memref<512xf32, #tpu.memory_space<smem>>
    %1869 = vector.broadcast %1868 : f32 to vector<8x8xf32>
    %1870 = arith.mulf %1869, %151 : vector<8x8xf32>
    %1871 = arith.addf %1867, %1870 : vector<8x8xf32>
    %c383 = arith.constant 383 : index
    %1872 = memref.load %arg2[%c383] : memref<512xf32, #tpu.memory_space<smem>>
    %1873 = vector.broadcast %1872 : f32 to vector<8x8xf32>
    %1874 = arith.mulf %1873, %153 : vector<8x8xf32>
    %1875 = arith.addf %1871, %1874 : vector<8x8xf32>
    %1876 = vector.shape_cast %1875 : vector<8x8xf32> to vector<1x8x8xf32>
    %cst_75 = arith.constant dense<0.000000e+00> : vector<1xf32>
    %1877 = vector.multi_reduction <add>, %1876, %cst_75 [1, 2] : vector<1x8x8xf32> to vector<1xf32>
    %1878 = vector.shape_cast %1877 : vector<1xf32> to vector<1x1x1xf32>
    %1879 = vector.extract %1878[0, 0, 0] : f32 from vector<1x1x1xf32>
    %1880 = vector.broadcast %1879 : f32 to vector<1x1xf32>
    %cst_76 = arith.constant 1.562500e-02 : f32
    %1881 = vector.broadcast %cst_76 : f32 to vector<1x1xf32>
    %1882 = arith.mulf %1880, %1881 : vector<1x1xf32>
    %1883 = vector.broadcast %1882 : vector<1x1xf32> to vector<8x8xf32>
    %1884 = arith.subf %1875, %1883 : vector<8x8xf32>
    %1885 = arith.mulf %1884, %1884 : vector<8x8xf32>
    %1886 = vector.shape_cast %1885 : vector<8x8xf32> to vector<1x8x8xf32>
    %cst_77 = arith.constant dense<0.000000e+00> : vector<1xf32>
    %1887 = vector.multi_reduction <add>, %1886, %cst_77 [1, 2] : vector<1x8x8xf32> to vector<1xf32>
    %1888 = vector.shape_cast %1887 : vector<1xf32> to vector<1x1x1xf32>
    %1889 = vector.extract %1888[0, 0, 0] : f32 from vector<1x1x1xf32>
    %1890 = vector.broadcast %1889 : f32 to vector<1x1xf32>
    %cst_78 = arith.constant 1.562500e-02 : f32
    %1891 = vector.broadcast %cst_78 : f32 to vector<1x1xf32>
    %1892 = arith.mulf %1890, %1891 : vector<1x1xf32>
    %cst_79 = arith.constant 9.99999974E-6 : f32
    %1893 = vector.broadcast %cst_79 : f32 to vector<1x1xf32>
    %1894 = arith.addf %1892, %1893 : vector<1x1xf32>
    %1895 = math.rsqrt %1894 : vector<1x1xf32>
    %c5_80 = arith.constant 5 : index
    %1896 = memref.load %arg3[%c5_80] : memref<8xf32, #tpu.memory_space<smem>>
    %1897 = vector.broadcast %1896 : f32 to vector<1x1xf32>
    %1898 = arith.mulf %1895, %1897 : vector<1x1xf32>
    %1899 = vector.broadcast %1898 : vector<1x1xf32> to vector<8x8xf32>
    %1900 = arith.mulf %1884, %1899 : vector<8x8xf32>
    %c5_81 = arith.constant 5 : index
    %1901 = memref.load %arg4[%c5_81] : memref<8xf32, #tpu.memory_space<smem>>
    %1902 = vector.broadcast %1901 : f32 to vector<8x8xf32>
    %1903 = arith.addf %1900, %1902 : vector<8x8xf32>
    %cst_82 = arith.constant 0.000000e+00 : f32
    %1904 = vector.broadcast %cst_82 : f32 to vector<8x8xf32>
    %1905 = arith.cmpf ogt, %1903, %1904 : vector<8x8xf32>
    %cst_83 = arith.constant 2.000000e-01 : f32
    %1906 = vector.broadcast %cst_83 : f32 to vector<8x8xf32>
    %1907 = arith.mulf %1906, %1903 : vector<8x8xf32>
    %1908 = arith.select %1905, %1903, %1907 : vector<8x8xi1>, vector<8x8xf32>
    %c0_84 = arith.constant 0 : index
    %c5_85 = arith.constant 5 : index
    %c0_86 = arith.constant 0 : index
    %c0_87 = arith.constant 0 : index
    %1909 = vector.load %arg5[%c0_84, %c5_85, %c0_86, %c0_87] : memref<1x8x8x8xf32, #tpu.memory_space<vmem>>, vector<1x1x8x8xf32>
    %1910 = vector.shape_cast %1909 : vector<1x1x8x8xf32> to vector<8x8xf32>
    %1911 = vector.shape_cast %1908 : vector<8x8xf32> to vector<1x1x8x8xf32>
    tpu.vector_store %arg5[%c0_84, %c5_85, %c0_86, %c0_87], %1911 {strides = array<i32>} : memref<1x8x8x8xf32, #tpu.memory_space<vmem>>, vector<1x1x8x8xf32>,
    %cst_88 = arith.constant 0.000000e+00 : f32
    %1912 = vector.broadcast %cst_88 : f32 to vector<8x8xf32>
    %c384 = arith.constant 384 : index
    %1913 = memref.load %arg2[%c384] : memref<512xf32, #tpu.memory_space<smem>>
    %1914 = vector.broadcast %1913 : f32 to vector<8x8xf32>
    %1915 = arith.mulf %1914, %6 : vector<8x8xf32>
    %1916 = arith.addf %1912, %1915 : vector<8x8xf32>
    %c400 = arith.constant 400 : index
    %1917 = memref.load %arg2[%c400] : memref<512xf32, #tpu.memory_space<smem>>
    %1918 = vector.broadcast %1917 : f32 to vector<8x8xf32>
    %1919 = arith.mulf %1918, %8 : vector<8x8xf32>
    %1920 = arith.addf %1916, %1919 : vector<8x8xf32>
    %c416 = arith.constant 416 : index
    %1921 = memref.load %arg2[%c416] : memref<512xf32, #tpu.memory_space<smem>>
    %1922 = vector.broadcast %1921 : f32 to vector<8x8xf32>
    %1923 = arith.mulf %1922, %10 : vector<8x8xf32>
    %1924 = arith.addf %1920, %1923 : vector<8x8xf32>
    %c432 = arith.constant 432 : index
    %1925 = memref.load %arg2[%c432] : memref<512xf32, #tpu.memory_space<smem>>
    %1926 = vector.broadcast %1925 : f32 to vector<8x8xf32>
    %1927 = arith.mulf %1926, %12 : vector<8x8xf32>
    %1928 = arith.addf %1924, %1927 : vector<8x8xf32>
    %c386 = arith.constant 386 : index
    %1929 = memref.load %arg2[%c386] : memref<512xf32, #tpu.memory_space<smem>>
    %1930 = vector.broadcast %1929 : f32 to vector<8x8xf32>
    %1931 = arith.mulf %1930, %15 : vector<8x8xf32>
    %1932 = arith.addf %1928, %1931 : vector<8x8xf32>
    %c402 = arith.constant 402 : index
    %1933 = memref.load %arg2[%c402] : memref<512xf32, #tpu.memory_space<smem>>
    %1934 = vector.broadcast %1933 : f32 to vector<8x8xf32>
    %1935 = arith.mulf %1934, %17 : vector<8x8xf32>
    %1936 = arith.addf %1932, %1935 : vector<8x8xf32>
    %c418 = arith.constant 418 : index
    %1937 = memref.load %arg2[%c418] : memref<512xf32, #tpu.memory_space<smem>>
    %1938 = vector.broadcast %1937 : f32 to vector<8x8xf32>
    %1939 = arith.mulf %1938, %19 : vector<8x8xf32>
    %1940 = arith.addf %1936, %1939 : vector<8x8xf32>
    %c434 = arith.constant 434 : index
    %1941 = memref.load %arg2[%c434] : memref<512xf32, #tpu.memory_space<smem>>
    %1942 = vector.broadcast %1941 : f32 to vector<8x8xf32>
    %1943 = arith.mulf %1942, %21 : vector<8x8xf32>
    %1944 = arith.addf %1940, %1943 : vector<8x8xf32>
    %c392 = arith.constant 392 : index
    %1945 = memref.load %arg2[%c392] : memref<512xf32, #tpu.memory_space<smem>>
    %1946 = vector.broadcast %1945 : f32 to vector<8x8xf32>
    %1947 = arith.mulf %1946, %24 : vector<8x8xf32>
    %1948 = arith.addf %1944, %1947 : vector<8x8xf32>
    %c408 = arith.constant 408 : index
    %1949 = memref.load %arg2[%c408] : memref<512xf32, #tpu.memory_space<smem>>
    %1950 = vector.broadcast %1949 : f32 to vector<8x8xf32>
    %1951 = arith.mulf %1950, %26 : vector<8x8xf32>
    %1952 = arith.addf %1948, %1951 : vector<8x8xf32>
    %c424 = arith.constant 424 : index
    %1953 = memref.load %arg2[%c424] : memref<512xf32, #tpu.memory_space<smem>>
    %1954 = vector.broadcast %1953 : f32 to vector<8x8xf32>
    %1955 = arith.mulf %1954, %28 : vector<8x8xf32>
    %1956 = arith.addf %1952, %1955 : vector<8x8xf32>
    %c440 = arith.constant 440 : index
    %1957 = memref.load %arg2[%c440] : memref<512xf32, #tpu.memory_space<smem>>
    %1958 = vector.broadcast %1957 : f32 to vector<8x8xf32>
    %1959 = arith.mulf %1958, %30 : vector<8x8xf32>
    %1960 = arith.addf %1956, %1959 : vector<8x8xf32>
    %c394 = arith.constant 394 : index
    %1961 = memref.load %arg2[%c394] : memref<512xf32, #tpu.memory_space<smem>>
    %1962 = vector.broadcast %1961 : f32 to vector<8x8xf32>
    %1963 = arith.mulf %1962, %33 : vector<8x8xf32>
    %1964 = arith.addf %1960, %1963 : vector<8x8xf32>
    %c410 = arith.constant 410 : index
    %1965 = memref.load %arg2[%c410] : memref<512xf32, #tpu.memory_space<smem>>
    %1966 = vector.broadcast %1965 : f32 to vector<8x8xf32>
    %1967 = arith.mulf %1966, %35 : vector<8x8xf32>
    %1968 = arith.addf %1964, %1967 : vector<8x8xf32>
    %c426 = arith.constant 426 : index
    %1969 = memref.load %arg2[%c426] : memref<512xf32, #tpu.memory_space<smem>>
    %1970 = vector.broadcast %1969 : f32 to vector<8x8xf32>
    %1971 = arith.mulf %1970, %37 : vector<8x8xf32>
    %1972 = arith.addf %1968, %1971 : vector<8x8xf32>
    %c442 = arith.constant 442 : index
    %1973 = memref.load %arg2[%c442] : memref<512xf32, #tpu.memory_space<smem>>
    %1974 = vector.broadcast %1973 : f32 to vector<8x8xf32>
    %1975 = arith.mulf %1974, %39 : vector<8x8xf32>
    %1976 = arith.addf %1972, %1975 : vector<8x8xf32>
    %c385 = arith.constant 385 : index
    %1977 = memref.load %arg2[%c385] : memref<512xf32, #tpu.memory_space<smem>>
    %1978 = vector.broadcast %1977 : f32 to vector<8x8xf32>
    %1979 = arith.mulf %1978, %44 : vector<8x8xf32>
    %1980 = arith.addf %1976, %1979 : vector<8x8xf32>
    %c401 = arith.constant 401 : index
    %1981 = memref.load %arg2[%c401] : memref<512xf32, #tpu.memory_space<smem>>
    %1982 = vector.broadcast %1981 : f32 to vector<8x8xf32>
    %1983 = arith.mulf %1982, %46 : vector<8x8xf32>
    %1984 = arith.addf %1980, %1983 : vector<8x8xf32>
    %c417 = arith.constant 417 : index
    %1985 = memref.load %arg2[%c417] : memref<512xf32, #tpu.memory_space<smem>>
    %1986 = vector.broadcast %1985 : f32 to vector<8x8xf32>
    %1987 = arith.mulf %1986, %48 : vector<8x8xf32>
    %1988 = arith.addf %1984, %1987 : vector<8x8xf32>
    %c433 = arith.constant 433 : index
    %1989 = memref.load %arg2[%c433] : memref<512xf32, #tpu.memory_space<smem>>
    %1990 = vector.broadcast %1989 : f32 to vector<8x8xf32>
    %1991 = arith.mulf %1990, %50 : vector<8x8xf32>
    %1992 = arith.addf %1988, %1991 : vector<8x8xf32>
    %c387 = arith.constant 387 : index
    %1993 = memref.load %arg2[%c387] : memref<512xf32, #tpu.memory_space<smem>>
    %1994 = vector.broadcast %1993 : f32 to vector<8x8xf32>
    %1995 = arith.mulf %1994, %53 : vector<8x8xf32>
    %1996 = arith.addf %1992, %1995 : vector<8x8xf32>
    %c403 = arith.constant 403 : index
    %1997 = memref.load %arg2[%c403] : memref<512xf32, #tpu.memory_space<smem>>
    %1998 = vector.broadcast %1997 : f32 to vector<8x8xf32>
    %1999 = arith.mulf %1998, %55 : vector<8x8xf32>
    %2000 = arith.addf %1996, %1999 : vector<8x8xf32>
    %c419 = arith.constant 419 : index
    %2001 = memref.load %arg2[%c419] : memref<512xf32, #tpu.memory_space<smem>>
    %2002 = vector.broadcast %2001 : f32 to vector<8x8xf32>
    %2003 = arith.mulf %2002, %57 : vector<8x8xf32>
    %2004 = arith.addf %2000, %2003 : vector<8x8xf32>
    %c435 = arith.constant 435 : index
    %2005 = memref.load %arg2[%c435] : memref<512xf32, #tpu.memory_space<smem>>
    %2006 = vector.broadcast %2005 : f32 to vector<8x8xf32>
    %2007 = arith.mulf %2006, %59 : vector<8x8xf32>
    %2008 = arith.addf %2004, %2007 : vector<8x8xf32>
    %c393 = arith.constant 393 : index
    %2009 = memref.load %arg2[%c393] : memref<512xf32, #tpu.memory_space<smem>>
    %2010 = vector.broadcast %2009 : f32 to vector<8x8xf32>
    %2011 = arith.mulf %2010, %62 : vector<8x8xf32>
    %2012 = arith.addf %2008, %2011 : vector<8x8xf32>
    %c409 = arith.constant 409 : index
    %2013 = memref.load %arg2[%c409] : memref<512xf32, #tpu.memory_space<smem>>
    %2014 = vector.broadcast %2013 : f32 to vector<8x8xf32>
    %2015 = arith.mulf %2014, %64 : vector<8x8xf32>
    %2016 = arith.addf %2012, %2015 : vector<8x8xf32>
    %c425 = arith.constant 425 : index
    %2017 = memref.load %arg2[%c425] : memref<512xf32, #tpu.memory_space<smem>>
    %2018 = vector.broadcast %2017 : f32 to vector<8x8xf32>
    %2019 = arith.mulf %2018, %66 : vector<8x8xf32>
    %2020 = arith.addf %2016, %2019 : vector<8x8xf32>
    %c441 = arith.constant 441 : index
    %2021 = memref.load %arg2[%c441] : memref<512xf32, #tpu.memory_space<smem>>
    %2022 = vector.broadcast %2021 : f32 to vector<8x8xf32>
    %2023 = arith.mulf %2022, %68 : vector<8x8xf32>
    %2024 = arith.addf %2020, %2023 : vector<8x8xf32>
    %c395 = arith.constant 395 : index
    %2025 = memref.load %arg2[%c395] : memref<512xf32, #tpu.memory_space<smem>>
    %2026 = vector.broadcast %2025 : f32 to vector<8x8xf32>
    %2027 = arith.mulf %2026, %71 : vector<8x8xf32>
    %2028 = arith.addf %2024, %2027 : vector<8x8xf32>
    %c411 = arith.constant 411 : index
    %2029 = memref.load %arg2[%c411] : memref<512xf32, #tpu.memory_space<smem>>
    %2030 = vector.broadcast %2029 : f32 to vector<8x8xf32>
    %2031 = arith.mulf %2030, %73 : vector<8x8xf32>
    %2032 = arith.addf %2028, %2031 : vector<8x8xf32>
    %c427 = arith.constant 427 : index
    %2033 = memref.load %arg2[%c427] : memref<512xf32, #tpu.memory_space<smem>>
    %2034 = vector.broadcast %2033 : f32 to vector<8x8xf32>
    %2035 = arith.mulf %2034, %75 : vector<8x8xf32>
    %2036 = arith.addf %2032, %2035 : vector<8x8xf32>
    %c443 = arith.constant 443 : index
    %2037 = memref.load %arg2[%c443] : memref<512xf32, #tpu.memory_space<smem>>
    %2038 = vector.broadcast %2037 : f32 to vector<8x8xf32>
    %2039 = arith.mulf %2038, %77 : vector<8x8xf32>
    %2040 = arith.addf %2036, %2039 : vector<8x8xf32>
    %c388 = arith.constant 388 : index
    %2041 = memref.load %arg2[%c388] : memref<512xf32, #tpu.memory_space<smem>>
    %2042 = vector.broadcast %2041 : f32 to vector<8x8xf32>
    %2043 = arith.mulf %2042, %82 : vector<8x8xf32>
    %2044 = arith.addf %2040, %2043 : vector<8x8xf32>
    %c404 = arith.constant 404 : index
    %2045 = memref.load %arg2[%c404] : memref<512xf32, #tpu.memory_space<smem>>
    %2046 = vector.broadcast %2045 : f32 to vector<8x8xf32>
    %2047 = arith.mulf %2046, %84 : vector<8x8xf32>
    %2048 = arith.addf %2044, %2047 : vector<8x8xf32>
    %c420 = arith.constant 420 : index
    %2049 = memref.load %arg2[%c420] : memref<512xf32, #tpu.memory_space<smem>>
    %2050 = vector.broadcast %2049 : f32 to vector<8x8xf32>
    %2051 = arith.mulf %2050, %86 : vector<8x8xf32>
    %2052 = arith.addf %2048, %2051 : vector<8x8xf32>
    %c436 = arith.constant 436 : index
    %2053 = memref.load %arg2[%c436] : memref<512xf32, #tpu.memory_space<smem>>
    %2054 = vector.broadcast %2053 : f32 to vector<8x8xf32>
    %2055 = arith.mulf %2054, %88 : vector<8x8xf32>
    %2056 = arith.addf %2052, %2055 : vector<8x8xf32>
    %c390 = arith.constant 390 : index
    %2057 = memref.load %arg2[%c390] : memref<512xf32, #tpu.memory_space<smem>>
    %2058 = vector.broadcast %2057 : f32 to vector<8x8xf32>
    %2059 = arith.mulf %2058, %91 : vector<8x8xf32>
    %2060 = arith.addf %2056, %2059 : vector<8x8xf32>
    %c406 = arith.constant 406 : index
    %2061 = memref.load %arg2[%c406] : memref<512xf32, #tpu.memory_space<smem>>
    %2062 = vector.broadcast %2061 : f32 to vector<8x8xf32>
    %2063 = arith.mulf %2062, %93 : vector<8x8xf32>
    %2064 = arith.addf %2060, %2063 : vector<8x8xf32>
    %c422 = arith.constant 422 : index
    %2065 = memref.load %arg2[%c422] : memref<512xf32, #tpu.memory_space<smem>>
    %2066 = vector.broadcast %2065 : f32 to vector<8x8xf32>
    %2067 = arith.mulf %2066, %95 : vector<8x8xf32>
    %2068 = arith.addf %2064, %2067 : vector<8x8xf32>
    %c438 = arith.constant 438 : index
    %2069 = memref.load %arg2[%c438] : memref<512xf32, #tpu.memory_space<smem>>
    %2070 = vector.broadcast %2069 : f32 to vector<8x8xf32>
    %2071 = arith.mulf %2070, %97 : vector<8x8xf32>
    %2072 = arith.addf %2068, %2071 : vector<8x8xf32>
    %c396 = arith.constant 396 : index
    %2073 = memref.load %arg2[%c396] : memref<512xf32, #tpu.memory_space<smem>>
    %2074 = vector.broadcast %2073 : f32 to vector<8x8xf32>
    %2075 = arith.mulf %2074, %100 : vector<8x8xf32>
    %2076 = arith.addf %2072, %2075 : vector<8x8xf32>
    %c412 = arith.constant 412 : index
    %2077 = memref.load %arg2[%c412] : memref<512xf32, #tpu.memory_space<smem>>
    %2078 = vector.broadcast %2077 : f32 to vector<8x8xf32>
    %2079 = arith.mulf %2078, %102 : vector<8x8xf32>
    %2080 = arith.addf %2076, %2079 : vector<8x8xf32>
    %c428 = arith.constant 428 : index
    %2081 = memref.load %arg2[%c428] : memref<512xf32, #tpu.memory_space<smem>>
    %2082 = vector.broadcast %2081 : f32 to vector<8x8xf32>
    %2083 = arith.mulf %2082, %104 : vector<8x8xf32>
    %2084 = arith.addf %2080, %2083 : vector<8x8xf32>
    %c444 = arith.constant 444 : index
    %2085 = memref.load %arg2[%c444] : memref<512xf32, #tpu.memory_space<smem>>
    %2086 = vector.broadcast %2085 : f32 to vector<8x8xf32>
    %2087 = arith.mulf %2086, %106 : vector<8x8xf32>
    %2088 = arith.addf %2084, %2087 : vector<8x8xf32>
    %c398 = arith.constant 398 : index
    %2089 = memref.load %arg2[%c398] : memref<512xf32, #tpu.memory_space<smem>>
    %2090 = vector.broadcast %2089 : f32 to vector<8x8xf32>
    %2091 = arith.mulf %2090, %109 : vector<8x8xf32>
    %2092 = arith.addf %2088, %2091 : vector<8x8xf32>
    %c414 = arith.constant 414 : index
    %2093 = memref.load %arg2[%c414] : memref<512xf32, #tpu.memory_space<smem>>
    %2094 = vector.broadcast %2093 : f32 to vector<8x8xf32>
    %2095 = arith.mulf %2094, %111 : vector<8x8xf32>
    %2096 = arith.addf %2092, %2095 : vector<8x8xf32>
    %c430 = arith.constant 430 : index
    %2097 = memref.load %arg2[%c430] : memref<512xf32, #tpu.memory_space<smem>>
    %2098 = vector.broadcast %2097 : f32 to vector<8x8xf32>
    %2099 = arith.mulf %2098, %113 : vector<8x8xf32>
    %2100 = arith.addf %2096, %2099 : vector<8x8xf32>
    %c446 = arith.constant 446 : index
    %2101 = memref.load %arg2[%c446] : memref<512xf32, #tpu.memory_space<smem>>
    %2102 = vector.broadcast %2101 : f32 to vector<8x8xf32>
    %2103 = arith.mulf %2102, %115 : vector<8x8xf32>
    %2104 = arith.addf %2100, %2103 : vector<8x8xf32>
    %c389 = arith.constant 389 : index
    %2105 = memref.load %arg2[%c389] : memref<512xf32, #tpu.memory_space<smem>>
    %2106 = vector.broadcast %2105 : f32 to vector<8x8xf32>
    %2107 = arith.mulf %2106, %120 : vector<8x8xf32>
    %2108 = arith.addf %2104, %2107 : vector<8x8xf32>
    %c405 = arith.constant 405 : index
    %2109 = memref.load %arg2[%c405] : memref<512xf32, #tpu.memory_space<smem>>
    %2110 = vector.broadcast %2109 : f32 to vector<8x8xf32>
    %2111 = arith.mulf %2110, %122 : vector<8x8xf32>
    %2112 = arith.addf %2108, %2111 : vector<8x8xf32>
    %c421 = arith.constant 421 : index
    %2113 = memref.load %arg2[%c421] : memref<512xf32, #tpu.memory_space<smem>>
    %2114 = vector.broadcast %2113 : f32 to vector<8x8xf32>
    %2115 = arith.mulf %2114, %124 : vector<8x8xf32>
    %2116 = arith.addf %2112, %2115 : vector<8x8xf32>
    %c437 = arith.constant 437 : index
    %2117 = memref.load %arg2[%c437] : memref<512xf32, #tpu.memory_space<smem>>
    %2118 = vector.broadcast %2117 : f32 to vector<8x8xf32>
    %2119 = arith.mulf %2118, %126 : vector<8x8xf32>
    %2120 = arith.addf %2116, %2119 : vector<8x8xf32>
    %c391 = arith.constant 391 : index
    %2121 = memref.load %arg2[%c391] : memref<512xf32, #tpu.memory_space<smem>>
    %2122 = vector.broadcast %2121 : f32 to vector<8x8xf32>
    %2123 = arith.mulf %2122, %129 : vector<8x8xf32>
    %2124 = arith.addf %2120, %2123 : vector<8x8xf32>
    %c407 = arith.constant 407 : index
    %2125 = memref.load %arg2[%c407] : memref<512xf32, #tpu.memory_space<smem>>
    %2126 = vector.broadcast %2125 : f32 to vector<8x8xf32>
    %2127 = arith.mulf %2126, %131 : vector<8x8xf32>
    %2128 = arith.addf %2124, %2127 : vector<8x8xf32>
    %c423 = arith.constant 423 : index
    %2129 = memref.load %arg2[%c423] : memref<512xf32, #tpu.memory_space<smem>>
    %2130 = vector.broadcast %2129 : f32 to vector<8x8xf32>
    %2131 = arith.mulf %2130, %133 : vector<8x8xf32>
    %2132 = arith.addf %2128, %2131 : vector<8x8xf32>
    %c439 = arith.constant 439 : index
    %2133 = memref.load %arg2[%c439] : memref<512xf32, #tpu.memory_space<smem>>
    %2134 = vector.broadcast %2133 : f32 to vector<8x8xf32>
    %2135 = arith.mulf %2134, %135 : vector<8x8xf32>
    %2136 = arith.addf %2132, %2135 : vector<8x8xf32>
    %c397 = arith.constant 397 : index
    %2137 = memref.load %arg2[%c397] : memref<512xf32, #tpu.memory_space<smem>>
    %2138 = vector.broadcast %2137 : f32 to vector<8x8xf32>
    %2139 = arith.mulf %2138, %138 : vector<8x8xf32>
    %2140 = arith.addf %2136, %2139 : vector<8x8xf32>
    %c413 = arith.constant 413 : index
    %2141 = memref.load %arg2[%c413] : memref<512xf32, #tpu.memory_space<smem>>
    %2142 = vector.broadcast %2141 : f32 to vector<8x8xf32>
    %2143 = arith.mulf %2142, %140 : vector<8x8xf32>
    %2144 = arith.addf %2140, %2143 : vector<8x8xf32>
    %c429 = arith.constant 429 : index
    %2145 = memref.load %arg2[%c429] : memref<512xf32, #tpu.memory_space<smem>>
    %2146 = vector.broadcast %2145 : f32 to vector<8x8xf32>
    %2147 = arith.mulf %2146, %142 : vector<8x8xf32>
    %2148 = arith.addf %2144, %2147 : vector<8x8xf32>
    %c445 = arith.constant 445 : index
    %2149 = memref.load %arg2[%c445] : memref<512xf32, #tpu.memory_space<smem>>
    %2150 = vector.broadcast %2149 : f32 to vector<8x8xf32>
    %2151 = arith.mulf %2150, %144 : vector<8x8xf32>
    %2152 = arith.addf %2148, %2151 : vector<8x8xf32>
    %c399 = arith.constant 399 : index
    %2153 = memref.load %arg2[%c399] : memref<512xf32, #tpu.memory_space<smem>>
    %2154 = vector.broadcast %2153 : f32 to vector<8x8xf32>
    %2155 = arith.mulf %2154, %147 : vector<8x8xf32>
    %2156 = arith.addf %2152, %2155 : vector<8x8xf32>
    %c415 = arith.constant 415 : index
    %2157 = memref.load %arg2[%c415] : memref<512xf32, #tpu.memory_space<smem>>
    %2158 = vector.broadcast %2157 : f32 to vector<8x8xf32>
    %2159 = arith.mulf %2158, %149 : vector<8x8xf32>
    %2160 = arith.addf %2156, %2159 : vector<8x8xf32>
    %c431 = arith.constant 431 : index
    %2161 = memref.load %arg2[%c431] : memref<512xf32, #tpu.memory_space<smem>>
    %2162 = vector.broadcast %2161 : f32 to vector<8x8xf32>
    %2163 = arith.mulf %2162, %151 : vector<8x8xf32>
    %2164 = arith.addf %2160, %2163 : vector<8x8xf32>
    %c447 = arith.constant 447 : index
    %2165 = memref.load %arg2[%c447] : memref<512xf32, #tpu.memory_space<smem>>
    %2166 = vector.broadcast %2165 : f32 to vector<8x8xf32>
    %2167 = arith.mulf %2166, %153 : vector<8x8xf32>
    %2168 = arith.addf %2164, %2167 : vector<8x8xf32>
    %2169 = vector.shape_cast %2168 : vector<8x8xf32> to vector<1x8x8xf32>
    %cst_89 = arith.constant dense<0.000000e+00> : vector<1xf32>
    %2170 = vector.multi_reduction <add>, %2169, %cst_89 [1, 2] : vector<1x8x8xf32> to vector<1xf32>
    %2171 = vector.shape_cast %2170 : vector<1xf32> to vector<1x1x1xf32>
    %2172 = vector.extract %2171[0, 0, 0] : f32 from vector<1x1x1xf32>
    %2173 = vector.broadcast %2172 : f32 to vector<1x1xf32>
    %cst_90 = arith.constant 1.562500e-02 : f32
    %2174 = vector.broadcast %cst_90 : f32 to vector<1x1xf32>
    %2175 = arith.mulf %2173, %2174 : vector<1x1xf32>
    %2176 = vector.broadcast %2175 : vector<1x1xf32> to vector<8x8xf32>
    %2177 = arith.subf %2168, %2176 : vector<8x8xf32>
    %2178 = arith.mulf %2177, %2177 : vector<8x8xf32>
    %2179 = vector.shape_cast %2178 : vector<8x8xf32> to vector<1x8x8xf32>
    %cst_91 = arith.constant dense<0.000000e+00> : vector<1xf32>
    %2180 = vector.multi_reduction <add>, %2179, %cst_91 [1, 2] : vector<1x8x8xf32> to vector<1xf32>
    %2181 = vector.shape_cast %2180 : vector<1xf32> to vector<1x1x1xf32>
    %2182 = vector.extract %2181[0, 0, 0] : f32 from vector<1x1x1xf32>
    %2183 = vector.broadcast %2182 : f32 to vector<1x1xf32>
    %cst_92 = arith.constant 1.562500e-02 : f32
    %2184 = vector.broadcast %cst_92 : f32 to vector<1x1xf32>
    %2185 = arith.mulf %2183, %2184 : vector<1x1xf32>
    %cst_93 = arith.constant 9.99999974E-6 : f32
    %2186 = vector.broadcast %cst_93 : f32 to vector<1x1xf32>
    %2187 = arith.addf %2185, %2186 : vector<1x1xf32>
    %2188 = math.rsqrt %2187 : vector<1x1xf32>
    %c6_94 = arith.constant 6 : index
    %2189 = memref.load %arg3[%c6_94] : memref<8xf32, #tpu.memory_space<smem>>
    %2190 = vector.broadcast %2189 : f32 to vector<1x1xf32>
    %2191 = arith.mulf %2188, %2190 : vector<1x1xf32>
    %2192 = vector.broadcast %2191 : vector<1x1xf32> to vector<8x8xf32>
    %2193 = arith.mulf %2177, %2192 : vector<8x8xf32>
    %c6_95 = arith.constant 6 : index
    %2194 = memref.load %arg4[%c6_95] : memref<8xf32, #tpu.memory_space<smem>>
    %2195 = vector.broadcast %2194 : f32 to vector<8x8xf32>
    %2196 = arith.addf %2193, %2195 : vector<8x8xf32>
    %cst_96 = arith.constant 0.000000e+00 : f32
    %2197 = vector.broadcast %cst_96 : f32 to vector<8x8xf32>
    %2198 = arith.cmpf ogt, %2196, %2197 : vector<8x8xf32>
    %cst_97 = arith.constant 2.000000e-01 : f32
    %2199 = vector.broadcast %cst_97 : f32 to vector<8x8xf32>
    %2200 = arith.mulf %2199, %2196 : vector<8x8xf32>
    %2201 = arith.select %2198, %2196, %2200 : vector<8x8xi1>, vector<8x8xf32>
    %c0_98 = arith.constant 0 : index
    %c6_99 = arith.constant 6 : index
    %c0_100 = arith.constant 0 : index
    %c0_101 = arith.constant 0 : index
    %2202 = vector.load %arg5[%c0_98, %c6_99, %c0_100, %c0_101] : memref<1x8x8x8xf32, #tpu.memory_space<vmem>>, vector<1x1x8x8xf32>
    %2203 = vector.shape_cast %2202 : vector<1x1x8x8xf32> to vector<8x8xf32>
    %2204 = vector.shape_cast %2201 : vector<8x8xf32> to vector<1x1x8x8xf32>
    tpu.vector_store %arg5[%c0_98, %c6_99, %c0_100, %c0_101], %2204 {strides = array<i32>} : memref<1x8x8x8xf32, #tpu.memory_space<vmem>>, vector<1x1x8x8xf32>,
    %cst_102 = arith.constant 0.000000e+00 : f32
    %2205 = vector.broadcast %cst_102 : f32 to vector<8x8xf32>
    %c448 = arith.constant 448 : index
    %2206 = memref.load %arg2[%c448] : memref<512xf32, #tpu.memory_space<smem>>
    %2207 = vector.broadcast %2206 : f32 to vector<8x8xf32>
    %2208 = arith.mulf %2207, %6 : vector<8x8xf32>
    %2209 = arith.addf %2205, %2208 : vector<8x8xf32>
    %c464 = arith.constant 464 : index
    %2210 = memref.load %arg2[%c464] : memref<512xf32, #tpu.memory_space<smem>>
    %2211 = vector.broadcast %2210 : f32 to vector<8x8xf32>
    %2212 = arith.mulf %2211, %8 : vector<8x8xf32>
    %2213 = arith.addf %2209, %2212 : vector<8x8xf32>
    %c480 = arith.constant 480 : index
    %2214 = memref.load %arg2[%c480] : memref<512xf32, #tpu.memory_space<smem>>
    %2215 = vector.broadcast %2214 : f32 to vector<8x8xf32>
    %2216 = arith.mulf %2215, %10 : vector<8x8xf32>
    %2217 = arith.addf %2213, %2216 : vector<8x8xf32>
    %c496 = arith.constant 496 : index
    %2218 = memref.load %arg2[%c496] : memref<512xf32, #tpu.memory_space<smem>>
    %2219 = vector.broadcast %2218 : f32 to vector<8x8xf32>
    %2220 = arith.mulf %2219, %12 : vector<8x8xf32>
    %2221 = arith.addf %2217, %2220 : vector<8x8xf32>
    %c450 = arith.constant 450 : index
    %2222 = memref.load %arg2[%c450] : memref<512xf32, #tpu.memory_space<smem>>
    %2223 = vector.broadcast %2222 : f32 to vector<8x8xf32>
    %2224 = arith.mulf %2223, %15 : vector<8x8xf32>
    %2225 = arith.addf %2221, %2224 : vector<8x8xf32>
    %c466 = arith.constant 466 : index
    %2226 = memref.load %arg2[%c466] : memref<512xf32, #tpu.memory_space<smem>>
    %2227 = vector.broadcast %2226 : f32 to vector<8x8xf32>
    %2228 = arith.mulf %2227, %17 : vector<8x8xf32>
    %2229 = arith.addf %2225, %2228 : vector<8x8xf32>
    %c482 = arith.constant 482 : index
    %2230 = memref.load %arg2[%c482] : memref<512xf32, #tpu.memory_space<smem>>
    %2231 = vector.broadcast %2230 : f32 to vector<8x8xf32>
    %2232 = arith.mulf %2231, %19 : vector<8x8xf32>
    %2233 = arith.addf %2229, %2232 : vector<8x8xf32>
    %c498 = arith.constant 498 : index
    %2234 = memref.load %arg2[%c498] : memref<512xf32, #tpu.memory_space<smem>>
    %2235 = vector.broadcast %2234 : f32 to vector<8x8xf32>
    %2236 = arith.mulf %2235, %21 : vector<8x8xf32>
    %2237 = arith.addf %2233, %2236 : vector<8x8xf32>
    %c456 = arith.constant 456 : index
    %2238 = memref.load %arg2[%c456] : memref<512xf32, #tpu.memory_space<smem>>
    %2239 = vector.broadcast %2238 : f32 to vector<8x8xf32>
    %2240 = arith.mulf %2239, %24 : vector<8x8xf32>
    %2241 = arith.addf %2237, %2240 : vector<8x8xf32>
    %c472 = arith.constant 472 : index
    %2242 = memref.load %arg2[%c472] : memref<512xf32, #tpu.memory_space<smem>>
    %2243 = vector.broadcast %2242 : f32 to vector<8x8xf32>
    %2244 = arith.mulf %2243, %26 : vector<8x8xf32>
    %2245 = arith.addf %2241, %2244 : vector<8x8xf32>
    %c488 = arith.constant 488 : index
    %2246 = memref.load %arg2[%c488] : memref<512xf32, #tpu.memory_space<smem>>
    %2247 = vector.broadcast %2246 : f32 to vector<8x8xf32>
    %2248 = arith.mulf %2247, %28 : vector<8x8xf32>
    %2249 = arith.addf %2245, %2248 : vector<8x8xf32>
    %c504 = arith.constant 504 : index
    %2250 = memref.load %arg2[%c504] : memref<512xf32, #tpu.memory_space<smem>>
    %2251 = vector.broadcast %2250 : f32 to vector<8x8xf32>
    %2252 = arith.mulf %2251, %30 : vector<8x8xf32>
    %2253 = arith.addf %2249, %2252 : vector<8x8xf32>
    %c458 = arith.constant 458 : index
    %2254 = memref.load %arg2[%c458] : memref<512xf32, #tpu.memory_space<smem>>
    %2255 = vector.broadcast %2254 : f32 to vector<8x8xf32>
    %2256 = arith.mulf %2255, %33 : vector<8x8xf32>
    %2257 = arith.addf %2253, %2256 : vector<8x8xf32>
    %c474 = arith.constant 474 : index
    %2258 = memref.load %arg2[%c474] : memref<512xf32, #tpu.memory_space<smem>>
    %2259 = vector.broadcast %2258 : f32 to vector<8x8xf32>
    %2260 = arith.mulf %2259, %35 : vector<8x8xf32>
    %2261 = arith.addf %2257, %2260 : vector<8x8xf32>
    %c490 = arith.constant 490 : index
    %2262 = memref.load %arg2[%c490] : memref<512xf32, #tpu.memory_space<smem>>
    %2263 = vector.broadcast %2262 : f32 to vector<8x8xf32>
    %2264 = arith.mulf %2263, %37 : vector<8x8xf32>
    %2265 = arith.addf %2261, %2264 : vector<8x8xf32>
    %c506 = arith.constant 506 : index
    %2266 = memref.load %arg2[%c506] : memref<512xf32, #tpu.memory_space<smem>>
    %2267 = vector.broadcast %2266 : f32 to vector<8x8xf32>
    %2268 = arith.mulf %2267, %39 : vector<8x8xf32>
    %2269 = arith.addf %2265, %2268 : vector<8x8xf32>
    %c449 = arith.constant 449 : index
    %2270 = memref.load %arg2[%c449] : memref<512xf32, #tpu.memory_space<smem>>
    %2271 = vector.broadcast %2270 : f32 to vector<8x8xf32>
    %2272 = arith.mulf %2271, %44 : vector<8x8xf32>
    %2273 = arith.addf %2269, %2272 : vector<8x8xf32>
    %c465 = arith.constant 465 : index
    %2274 = memref.load %arg2[%c465] : memref<512xf32, #tpu.memory_space<smem>>
    %2275 = vector.broadcast %2274 : f32 to vector<8x8xf32>
    %2276 = arith.mulf %2275, %46 : vector<8x8xf32>
    %2277 = arith.addf %2273, %2276 : vector<8x8xf32>
    %c481 = arith.constant 481 : index
    %2278 = memref.load %arg2[%c481] : memref<512xf32, #tpu.memory_space<smem>>
    %2279 = vector.broadcast %2278 : f32 to vector<8x8xf32>
    %2280 = arith.mulf %2279, %48 : vector<8x8xf32>
    %2281 = arith.addf %2277, %2280 : vector<8x8xf32>
    %c497 = arith.constant 497 : index
    %2282 = memref.load %arg2[%c497] : memref<512xf32, #tpu.memory_space<smem>>
    %2283 = vector.broadcast %2282 : f32 to vector<8x8xf32>
    %2284 = arith.mulf %2283, %50 : vector<8x8xf32>
    %2285 = arith.addf %2281, %2284 : vector<8x8xf32>
    %c451 = arith.constant 451 : index
    %2286 = memref.load %arg2[%c451] : memref<512xf32, #tpu.memory_space<smem>>
    %2287 = vector.broadcast %2286 : f32 to vector<8x8xf32>
    %2288 = arith.mulf %2287, %53 : vector<8x8xf32>
    %2289 = arith.addf %2285, %2288 : vector<8x8xf32>
    %c467 = arith.constant 467 : index
    %2290 = memref.load %arg2[%c467] : memref<512xf32, #tpu.memory_space<smem>>
    %2291 = vector.broadcast %2290 : f32 to vector<8x8xf32>
    %2292 = arith.mulf %2291, %55 : vector<8x8xf32>
    %2293 = arith.addf %2289, %2292 : vector<8x8xf32>
    %c483 = arith.constant 483 : index
    %2294 = memref.load %arg2[%c483] : memref<512xf32, #tpu.memory_space<smem>>
    %2295 = vector.broadcast %2294 : f32 to vector<8x8xf32>
    %2296 = arith.mulf %2295, %57 : vector<8x8xf32>
    %2297 = arith.addf %2293, %2296 : vector<8x8xf32>
    %c499 = arith.constant 499 : index
    %2298 = memref.load %arg2[%c499] : memref<512xf32, #tpu.memory_space<smem>>
    %2299 = vector.broadcast %2298 : f32 to vector<8x8xf32>
    %2300 = arith.mulf %2299, %59 : vector<8x8xf32>
    %2301 = arith.addf %2297, %2300 : vector<8x8xf32>
    %c457 = arith.constant 457 : index
    %2302 = memref.load %arg2[%c457] : memref<512xf32, #tpu.memory_space<smem>>
    %2303 = vector.broadcast %2302 : f32 to vector<8x8xf32>
    %2304 = arith.mulf %2303, %62 : vector<8x8xf32>
    %2305 = arith.addf %2301, %2304 : vector<8x8xf32>
    %c473 = arith.constant 473 : index
    %2306 = memref.load %arg2[%c473] : memref<512xf32, #tpu.memory_space<smem>>
    %2307 = vector.broadcast %2306 : f32 to vector<8x8xf32>
    %2308 = arith.mulf %2307, %64 : vector<8x8xf32>
    %2309 = arith.addf %2305, %2308 : vector<8x8xf32>
    %c489 = arith.constant 489 : index
    %2310 = memref.load %arg2[%c489] : memref<512xf32, #tpu.memory_space<smem>>
    %2311 = vector.broadcast %2310 : f32 to vector<8x8xf32>
    %2312 = arith.mulf %2311, %66 : vector<8x8xf32>
    %2313 = arith.addf %2309, %2312 : vector<8x8xf32>
    %c505 = arith.constant 505 : index
    %2314 = memref.load %arg2[%c505] : memref<512xf32, #tpu.memory_space<smem>>
    %2315 = vector.broadcast %2314 : f32 to vector<8x8xf32>
    %2316 = arith.mulf %2315, %68 : vector<8x8xf32>
    %2317 = arith.addf %2313, %2316 : vector<8x8xf32>
    %c459 = arith.constant 459 : index
    %2318 = memref.load %arg2[%c459] : memref<512xf32, #tpu.memory_space<smem>>
    %2319 = vector.broadcast %2318 : f32 to vector<8x8xf32>
    %2320 = arith.mulf %2319, %71 : vector<8x8xf32>
    %2321 = arith.addf %2317, %2320 : vector<8x8xf32>
    %c475 = arith.constant 475 : index
    %2322 = memref.load %arg2[%c475] : memref<512xf32, #tpu.memory_space<smem>>
    %2323 = vector.broadcast %2322 : f32 to vector<8x8xf32>
    %2324 = arith.mulf %2323, %73 : vector<8x8xf32>
    %2325 = arith.addf %2321, %2324 : vector<8x8xf32>
    %c491 = arith.constant 491 : index
    %2326 = memref.load %arg2[%c491] : memref<512xf32, #tpu.memory_space<smem>>
    %2327 = vector.broadcast %2326 : f32 to vector<8x8xf32>
    %2328 = arith.mulf %2327, %75 : vector<8x8xf32>
    %2329 = arith.addf %2325, %2328 : vector<8x8xf32>
    %c507 = arith.constant 507 : index
    %2330 = memref.load %arg2[%c507] : memref<512xf32, #tpu.memory_space<smem>>
    %2331 = vector.broadcast %2330 : f32 to vector<8x8xf32>
    %2332 = arith.mulf %2331, %77 : vector<8x8xf32>
    %2333 = arith.addf %2329, %2332 : vector<8x8xf32>
    %c452 = arith.constant 452 : index
    %2334 = memref.load %arg2[%c452] : memref<512xf32, #tpu.memory_space<smem>>
    %2335 = vector.broadcast %2334 : f32 to vector<8x8xf32>
    %2336 = arith.mulf %2335, %82 : vector<8x8xf32>
    %2337 = arith.addf %2333, %2336 : vector<8x8xf32>
    %c468 = arith.constant 468 : index
    %2338 = memref.load %arg2[%c468] : memref<512xf32, #tpu.memory_space<smem>>
    %2339 = vector.broadcast %2338 : f32 to vector<8x8xf32>
    %2340 = arith.mulf %2339, %84 : vector<8x8xf32>
    %2341 = arith.addf %2337, %2340 : vector<8x8xf32>
    %c484 = arith.constant 484 : index
    %2342 = memref.load %arg2[%c484] : memref<512xf32, #tpu.memory_space<smem>>
    %2343 = vector.broadcast %2342 : f32 to vector<8x8xf32>
    %2344 = arith.mulf %2343, %86 : vector<8x8xf32>
    %2345 = arith.addf %2341, %2344 : vector<8x8xf32>
    %c500 = arith.constant 500 : index
    %2346 = memref.load %arg2[%c500] : memref<512xf32, #tpu.memory_space<smem>>
    %2347 = vector.broadcast %2346 : f32 to vector<8x8xf32>
    %2348 = arith.mulf %2347, %88 : vector<8x8xf32>
    %2349 = arith.addf %2345, %2348 : vector<8x8xf32>
    %c454 = arith.constant 454 : index
    %2350 = memref.load %arg2[%c454] : memref<512xf32, #tpu.memory_space<smem>>
    %2351 = vector.broadcast %2350 : f32 to vector<8x8xf32>
    %2352 = arith.mulf %2351, %91 : vector<8x8xf32>
    %2353 = arith.addf %2349, %2352 : vector<8x8xf32>
    %c470 = arith.constant 470 : index
    %2354 = memref.load %arg2[%c470] : memref<512xf32, #tpu.memory_space<smem>>
    %2355 = vector.broadcast %2354 : f32 to vector<8x8xf32>
    %2356 = arith.mulf %2355, %93 : vector<8x8xf32>
    %2357 = arith.addf %2353, %2356 : vector<8x8xf32>
    %c486 = arith.constant 486 : index
    %2358 = memref.load %arg2[%c486] : memref<512xf32, #tpu.memory_space<smem>>
    %2359 = vector.broadcast %2358 : f32 to vector<8x8xf32>
    %2360 = arith.mulf %2359, %95 : vector<8x8xf32>
    %2361 = arith.addf %2357, %2360 : vector<8x8xf32>
    %c502 = arith.constant 502 : index
    %2362 = memref.load %arg2[%c502] : memref<512xf32, #tpu.memory_space<smem>>
    %2363 = vector.broadcast %2362 : f32 to vector<8x8xf32>
    %2364 = arith.mulf %2363, %97 : vector<8x8xf32>
    %2365 = arith.addf %2361, %2364 : vector<8x8xf32>
    %c460 = arith.constant 460 : index
    %2366 = memref.load %arg2[%c460] : memref<512xf32, #tpu.memory_space<smem>>
    %2367 = vector.broadcast %2366 : f32 to vector<8x8xf32>
    %2368 = arith.mulf %2367, %100 : vector<8x8xf32>
    %2369 = arith.addf %2365, %2368 : vector<8x8xf32>
    %c476 = arith.constant 476 : index
    %2370 = memref.load %arg2[%c476] : memref<512xf32, #tpu.memory_space<smem>>
    %2371 = vector.broadcast %2370 : f32 to vector<8x8xf32>
    %2372 = arith.mulf %2371, %102 : vector<8x8xf32>
    %2373 = arith.addf %2369, %2372 : vector<8x8xf32>
    %c492 = arith.constant 492 : index
    %2374 = memref.load %arg2[%c492] : memref<512xf32, #tpu.memory_space<smem>>
    %2375 = vector.broadcast %2374 : f32 to vector<8x8xf32>
    %2376 = arith.mulf %2375, %104 : vector<8x8xf32>
    %2377 = arith.addf %2373, %2376 : vector<8x8xf32>
    %c508 = arith.constant 508 : index
    %2378 = memref.load %arg2[%c508] : memref<512xf32, #tpu.memory_space<smem>>
    %2379 = vector.broadcast %2378 : f32 to vector<8x8xf32>
    %2380 = arith.mulf %2379, %106 : vector<8x8xf32>
    %2381 = arith.addf %2377, %2380 : vector<8x8xf32>
    %c462 = arith.constant 462 : index
    %2382 = memref.load %arg2[%c462] : memref<512xf32, #tpu.memory_space<smem>>
    %2383 = vector.broadcast %2382 : f32 to vector<8x8xf32>
    %2384 = arith.mulf %2383, %109 : vector<8x8xf32>
    %2385 = arith.addf %2381, %2384 : vector<8x8xf32>
    %c478 = arith.constant 478 : index
    %2386 = memref.load %arg2[%c478] : memref<512xf32, #tpu.memory_space<smem>>
    %2387 = vector.broadcast %2386 : f32 to vector<8x8xf32>
    %2388 = arith.mulf %2387, %111 : vector<8x8xf32>
    %2389 = arith.addf %2385, %2388 : vector<8x8xf32>
    %c494 = arith.constant 494 : index
    %2390 = memref.load %arg2[%c494] : memref<512xf32, #tpu.memory_space<smem>>
    %2391 = vector.broadcast %2390 : f32 to vector<8x8xf32>
    %2392 = arith.mulf %2391, %113 : vector<8x8xf32>
    %2393 = arith.addf %2389, %2392 : vector<8x8xf32>
    %c510 = arith.constant 510 : index
    %2394 = memref.load %arg2[%c510] : memref<512xf32, #tpu.memory_space<smem>>
    %2395 = vector.broadcast %2394 : f32 to vector<8x8xf32>
    %2396 = arith.mulf %2395, %115 : vector<8x8xf32>
    %2397 = arith.addf %2393, %2396 : vector<8x8xf32>
    %c453 = arith.constant 453 : index
    %2398 = memref.load %arg2[%c453] : memref<512xf32, #tpu.memory_space<smem>>
    %2399 = vector.broadcast %2398 : f32 to vector<8x8xf32>
    %2400 = arith.mulf %2399, %120 : vector<8x8xf32>
    %2401 = arith.addf %2397, %2400 : vector<8x8xf32>
    %c469 = arith.constant 469 : index
    %2402 = memref.load %arg2[%c469] : memref<512xf32, #tpu.memory_space<smem>>
    %2403 = vector.broadcast %2402 : f32 to vector<8x8xf32>
    %2404 = arith.mulf %2403, %122 : vector<8x8xf32>
    %2405 = arith.addf %2401, %2404 : vector<8x8xf32>
    %c485 = arith.constant 485 : index
    %2406 = memref.load %arg2[%c485] : memref<512xf32, #tpu.memory_space<smem>>
    %2407 = vector.broadcast %2406 : f32 to vector<8x8xf32>
    %2408 = arith.mulf %2407, %124 : vector<8x8xf32>
    %2409 = arith.addf %2405, %2408 : vector<8x8xf32>
    %c501 = arith.constant 501 : index
    %2410 = memref.load %arg2[%c501] : memref<512xf32, #tpu.memory_space<smem>>
    %2411 = vector.broadcast %2410 : f32 to vector<8x8xf32>
    %2412 = arith.mulf %2411, %126 : vector<8x8xf32>
    %2413 = arith.addf %2409, %2412 : vector<8x8xf32>
    %c455 = arith.constant 455 : index
    %2414 = memref.load %arg2[%c455] : memref<512xf32, #tpu.memory_space<smem>>
    %2415 = vector.broadcast %2414 : f32 to vector<8x8xf32>
    %2416 = arith.mulf %2415, %129 : vector<8x8xf32>
    %2417 = arith.addf %2413, %2416 : vector<8x8xf32>
    %c471 = arith.constant 471 : index
    %2418 = memref.load %arg2[%c471] : memref<512xf32, #tpu.memory_space<smem>>
    %2419 = vector.broadcast %2418 : f32 to vector<8x8xf32>
    %2420 = arith.mulf %2419, %131 : vector<8x8xf32>
    %2421 = arith.addf %2417, %2420 : vector<8x8xf32>
    %c487 = arith.constant 487 : index
    %2422 = memref.load %arg2[%c487] : memref<512xf32, #tpu.memory_space<smem>>
    %2423 = vector.broadcast %2422 : f32 to vector<8x8xf32>
    %2424 = arith.mulf %2423, %133 : vector<8x8xf32>
    %2425 = arith.addf %2421, %2424 : vector<8x8xf32>
    %c503 = arith.constant 503 : index
    %2426 = memref.load %arg2[%c503] : memref<512xf32, #tpu.memory_space<smem>>
    %2427 = vector.broadcast %2426 : f32 to vector<8x8xf32>
    %2428 = arith.mulf %2427, %135 : vector<8x8xf32>
    %2429 = arith.addf %2425, %2428 : vector<8x8xf32>
    %c461 = arith.constant 461 : index
    %2430 = memref.load %arg2[%c461] : memref<512xf32, #tpu.memory_space<smem>>
    %2431 = vector.broadcast %2430 : f32 to vector<8x8xf32>
    %2432 = arith.mulf %2431, %138 : vector<8x8xf32>
    %2433 = arith.addf %2429, %2432 : vector<8x8xf32>
    %c477 = arith.constant 477 : index
    %2434 = memref.load %arg2[%c477] : memref<512xf32, #tpu.memory_space<smem>>
    %2435 = vector.broadcast %2434 : f32 to vector<8x8xf32>
    %2436 = arith.mulf %2435, %140 : vector<8x8xf32>
    %2437 = arith.addf %2433, %2436 : vector<8x8xf32>
    %c493 = arith.constant 493 : index
    %2438 = memref.load %arg2[%c493] : memref<512xf32, #tpu.memory_space<smem>>
    %2439 = vector.broadcast %2438 : f32 to vector<8x8xf32>
    %2440 = arith.mulf %2439, %142 : vector<8x8xf32>
    %2441 = arith.addf %2437, %2440 : vector<8x8xf32>
    %c509 = arith.constant 509 : index
    %2442 = memref.load %arg2[%c509] : memref<512xf32, #tpu.memory_space<smem>>
    %2443 = vector.broadcast %2442 : f32 to vector<8x8xf32>
    %2444 = arith.mulf %2443, %144 : vector<8x8xf32>
    %2445 = arith.addf %2441, %2444 : vector<8x8xf32>
    %c463 = arith.constant 463 : index
    %2446 = memref.load %arg2[%c463] : memref<512xf32, #tpu.memory_space<smem>>
    %2447 = vector.broadcast %2446 : f32 to vector<8x8xf32>
    %2448 = arith.mulf %2447, %147 : vector<8x8xf32>
    %2449 = arith.addf %2445, %2448 : vector<8x8xf32>
    %c479 = arith.constant 479 : index
    %2450 = memref.load %arg2[%c479] : memref<512xf32, #tpu.memory_space<smem>>
    %2451 = vector.broadcast %2450 : f32 to vector<8x8xf32>
    %2452 = arith.mulf %2451, %149 : vector<8x8xf32>
    %2453 = arith.addf %2449, %2452 : vector<8x8xf32>
    %c495 = arith.constant 495 : index
    %2454 = memref.load %arg2[%c495] : memref<512xf32, #tpu.memory_space<smem>>
    %2455 = vector.broadcast %2454 : f32 to vector<8x8xf32>
    %2456 = arith.mulf %2455, %151 : vector<8x8xf32>
    %2457 = arith.addf %2453, %2456 : vector<8x8xf32>
    %c511 = arith.constant 511 : index
    %2458 = memref.load %arg2[%c511] : memref<512xf32, #tpu.memory_space<smem>>
    %2459 = vector.broadcast %2458 : f32 to vector<8x8xf32>
    %2460 = arith.mulf %2459, %153 : vector<8x8xf32>
    %2461 = arith.addf %2457, %2460 : vector<8x8xf32>
    %2462 = vector.shape_cast %2461 : vector<8x8xf32> to vector<1x8x8xf32>
    %cst_103 = arith.constant dense<0.000000e+00> : vector<1xf32>
    %2463 = vector.multi_reduction <add>, %2462, %cst_103 [1, 2] : vector<1x8x8xf32> to vector<1xf32>
    %2464 = vector.shape_cast %2463 : vector<1xf32> to vector<1x1x1xf32>
    %2465 = vector.extract %2464[0, 0, 0] : f32 from vector<1x1x1xf32>
    %2466 = vector.broadcast %2465 : f32 to vector<1x1xf32>
    %cst_104 = arith.constant 1.562500e-02 : f32
    %2467 = vector.broadcast %cst_104 : f32 to vector<1x1xf32>
    %2468 = arith.mulf %2466, %2467 : vector<1x1xf32>
    %2469 = vector.broadcast %2468 : vector<1x1xf32> to vector<8x8xf32>
    %2470 = arith.subf %2461, %2469 : vector<8x8xf32>
    %2471 = arith.mulf %2470, %2470 : vector<8x8xf32>
    %2472 = vector.shape_cast %2471 : vector<8x8xf32> to vector<1x8x8xf32>
    %cst_105 = arith.constant dense<0.000000e+00> : vector<1xf32>
    %2473 = vector.multi_reduction <add>, %2472, %cst_105 [1, 2] : vector<1x8x8xf32> to vector<1xf32>
    %2474 = vector.shape_cast %2473 : vector<1xf32> to vector<1x1x1xf32>
    %2475 = vector.extract %2474[0, 0, 0] : f32 from vector<1x1x1xf32>
    %2476 = vector.broadcast %2475 : f32 to vector<1x1xf32>
    %cst_106 = arith.constant 1.562500e-02 : f32
    %2477 = vector.broadcast %cst_106 : f32 to vector<1x1xf32>
    %2478 = arith.mulf %2476, %2477 : vector<1x1xf32>
    %cst_107 = arith.constant 9.99999974E-6 : f32
    %2479 = vector.broadcast %cst_107 : f32 to vector<1x1xf32>
    %2480 = arith.addf %2478, %2479 : vector<1x1xf32>
    %2481 = math.rsqrt %2480 : vector<1x1xf32>
    %c7_108 = arith.constant 7 : index
    %2482 = memref.load %arg3[%c7_108] : memref<8xf32, #tpu.memory_space<smem>>
    %2483 = vector.broadcast %2482 : f32 to vector<1x1xf32>
    %2484 = arith.mulf %2481, %2483 : vector<1x1xf32>
    %2485 = vector.broadcast %2484 : vector<1x1xf32> to vector<8x8xf32>
    %2486 = arith.mulf %2470, %2485 : vector<8x8xf32>
    %c7_109 = arith.constant 7 : index
    %2487 = memref.load %arg4[%c7_109] : memref<8xf32, #tpu.memory_space<smem>>
    %2488 = vector.broadcast %2487 : f32 to vector<8x8xf32>
    %2489 = arith.addf %2486, %2488 : vector<8x8xf32>
    %cst_110 = arith.constant 0.000000e+00 : f32
    %2490 = vector.broadcast %cst_110 : f32 to vector<8x8xf32>
    %2491 = arith.cmpf ogt, %2489, %2490 : vector<8x8xf32>
    %cst_111 = arith.constant 2.000000e-01 : f32
    %2492 = vector.broadcast %cst_111 : f32 to vector<8x8xf32>
    %2493 = arith.mulf %2492, %2489 : vector<8x8xf32>
    %2494 = arith.select %2491, %2489, %2493 : vector<8x8xi1>, vector<8x8xf32>
    %c0_112 = arith.constant 0 : index
    %c7_113 = arith.constant 7 : index
    %c0_114 = arith.constant 0 : index
    %c0_115 = arith.constant 0 : index
    %2495 = vector.load %arg5[%c0_112, %c7_113, %c0_114, %c0_115] : memref<1x8x8x8xf32, #tpu.memory_space<vmem>>, vector<1x1x8x8xf32>
    %2496 = vector.shape_cast %2495 : vector<1x1x8x8xf32> to vector<8x8xf32>
    %2497 = vector.shape_cast %2494 : vector<8x8xf32> to vector<1x1x8x8xf32>
    tpu.vector_store %arg5[%c0_112, %c7_113, %c0_114, %c0_115], %2497 {strides = array<i32>} : memref<1x8x8x8xf32, #tpu.memory_space<vmem>>, vector<1x1x8x8xf32>,
    return
  }
  func.func @transform_0(%arg0: i32) -> (i32, i32, i32, i32, i32) {
    %c0_i32 = arith.constant 0 : i32
    %c0_i32_0 = arith.constant 0 : i32
    %c0_i32_1 = arith.constant 0 : i32
    %c0_i32_2 = arith.constant 0 : i32
    %c0_i32_3 = arith.constant 0 : i32
    return %arg0, %c0_i32, %c0_i32_0, %c0_i32_1, %c0_i32_2 : i32, i32, i32, i32, i32
  }
  func.func @transform_1(%arg0: i32) -> i32 {
    %c0_i32 = arith.constant 0 : i32
    %c0_i32_0 = arith.constant 0 : i32
    return %c0_i32 : i32
  }
  func.func @transform_2(%arg0: i32) -> i32 {
    %c0_i32 = arith.constant 0 : i32
    %c0_i32_0 = arith.constant 0 : i32
    return %c0_i32 : i32
  }
  func.func @transform_3(%arg0: i32) -> i32 {
    %c0_i32 = arith.constant 0 : i32
    %c0_i32_0 = arith.constant 0 : i32
    return %c0_i32 : i32
  }
  func.func @transform_4(%arg0: i32) -> (i32, i32, i32, i32) {
    %c0_i32 = arith.constant 0 : i32
    %c0_i32_0 = arith.constant 0 : i32
    %c0_i32_1 = arith.constant 0 : i32
    %c0_i32_2 = arith.constant 0 : i32
    return %arg0, %c0_i32, %c0_i32_0, %c0_i32_1 : i32, i32, i32, i32
  }
}

</mosaic_0001>

<llo_original>
// kernel: disc_block_forward.1
$region0: #{disc_block_forward.1}
  #allocation0 [shape = 'u32[]', space=smem, size = 0x4, offset = 0x4, fixed_abs, tag = 'smem constant byte address 0x4 - core index']
  #allocation1 [shape = 'u32[144,128]{1,0:T(1,128)}', space=vmem, size = 0x12000, scoped, tag = 'internal scratch']
  %s0 = inlined_call_operand.vmem [shape: f32[2,4,4,9,9], index: 0, kind: input, shape index: {}]
  %s1 = inlined_call_operand.vmem [shape: f32[512], index: 1, kind: input, shape index: {}]
  %s2 = inlined_call_operand.vmem [shape: f32[8], index: 2, kind: input, shape index: {}]
  %s3 = inlined_call_operand.vmem [shape: f32[8], index: 3, kind: input, shape index: {}]
  %s4 = inlined_call_operand.hbm [shape: f32[2,8,8,8], index: 4, kind: output, shape index: {}]
  %s5 = sld [smem:[#allocation0]]
  $region61: #{disc_block_forward.1} parent=0
    _
  %s7 = ssub.s32 1, %s5
  %s8 = scalar_select 0, %s7, %s5
  $region1: #{disc_block_forward.1} parent=0
    #allocation2 [shape = 'u8[2048]{0}', space=smem, size = 0x800, scoped, tag = 'input window, operand 1, single buffered']
    #allocation3 [shape = 's32[2]{0}', space=sflag, size = 0x8, scoped, tag = 'scoped memory for disc_block_forward.1']
    #allocation4 [shape = 's32[2]{0}', space=sflag, size = 0x8, scoped, tag = 'scoped memory for disc_block_forward.1']
    #allocation5 [shape = 'u8[512]{0}', space=smem, size = 0x200, scoped, tag = 'input window, operand 2, single buffered']
    #allocation6 [shape = 's32[1]{0}', space=sflag, size = 0x4, scoped, tag = 'scoped memory for disc_block_forward.1']
    #allocation7 [shape = 'u8[512]{0}', space=smem, size = 0x200, scoped, tag = 'input window, operand 3, single buffered']
    #allocation8 [shape = 'u8[65536]{0}', space=vmem, size = 0x10000, scoped, tag = 'output window, operand 0']
    %9 = vsyncpa [#allocation4], 0
    %10 = vsyncpa [#allocation6], 0
    %11 = vsyncpa [#allocation3], 0
    %s12 = scalar_lea.sflag [#allocation3], 1
    %13 = vsyncpa %s12, 0
    loop: start=0, step=1, limit=4
    $region2: #{disc_block_forward.1} parent=1 // loop_pre_header
      _
    $region3: #{disc_block_forward.1} parent=1 // loop_header
      %s15 = sphi 0, %s19
      %p16 = scmp.ge.s32.totalorder %s15, 4
      %s25 = sphi 0, %s27
      %s28 = sphi 0, %s25
      %s29 = sphi 0, %s28
      %s45 = sphi 0, %s29
      %s49 = sphi 0, %s49
      %s51 = sphi 0, %s49
      %s52 = sphi 0, %s51
      %s66 = sphi 0, %s52
      %s70 = sphi 0, %s70
      %s72 = sphi 0, %s70
      %s73 = sphi 0, %s72
      %s87 = sphi 0, %s73
      %s91 = sphi 0, %s91
      %s93 = sphi 0, %s91
      %s94 = sphi 0, %s93
      %s108 = sphi 0, %s94
      %s114 = sphi 0, %s116
      %s117 = sphi 0, %s114
      %s118 = sphi 0, %s117
      %s134 = sphi 0, %s118
    $region4: #{disc_block_forward.1} parent=1 // loop_header_branch
      %18 = sbr.rel (%p16) target = $region8
    $region5: #{disc_block_forward.1} parent=1 // loop_body
      %s20 = ssub.s32 %s15, 1
      %s21 = ssub.s32 %s15, 2
      %s22 = sadd.s32 %s15, 1
      %s23 = ssub.s32 %s15, %s22
      %p24 = scmp.eq.s32.totalorder %s23, 0
      %s26 = sadd.s32 %s25, 1
      %s27 = scalar_select %p24, %s25, %s26
      %p30 = pneg %p24
      %p31 = scmp.eq.s32.totalorder %s15, 1
      %p32 = por %p30, %p31
      %p33 = scmp.ne.s32.totalorder %s25, %s28
      %p34 = scmp.eq.s32.totalorder %s15, 0
      %p35 = por %p33, %p34
      %p36 = scmp.ne.s32.totalorder %s25, %s28
      %p37 = scmp.eq.s32.totalorder %s20, 1
      %p38 = por %p36, %p37
      %p39 = scmp.ne.s32.totalorder %s28, %s29
      %p40 = scmp.eq.s32.totalorder %s20, 0
      %p41 = por %p39, %p40
      %p42 = scmp.ne.s32.totalorder %s28, %s29
      %p43 = scmp.eq.s32.totalorder %s21, 1
      %p44 = por %p42, %p43
      %p46 = scmp.ne.s32.totalorder %s29, %s45
      %p47 = scmp.eq.s32.totalorder %s21, 0
      %p48 = por %p46, %p47
      %s50 = sadd.s32 %s49, 1
      %p53 = scmp.eq.s32.totalorder %s15, 1
      %p54 = scmp.ne.s32.totalorder %s49, %s51
      %p55 = scmp.eq.s32.totalorder %s15, 0
      %p56 = por %p54, %p55
      %p57 = scmp.ne.s32.totalorder %s49, %s51
      %p58 = scmp.eq.s32.totalorder %s20, 1
      %p59 = por %p57, %p58
      %p60 = scmp.ne.s32.totalorder %s51, %s52
      %p61 = scmp.eq.s32.totalorder %s20, 0
      %p62 = por %p60, %p61
      %p63 = scmp.ne.s32.totalorder %s51, %s52
      %p64 = scmp.eq.s32.totalorder %s21, 1
      %p65 = por %p63, %p64
      %p67 = scmp.ne.s32.totalorder %s52, %s66
      %p68 = scmp.eq.s32.totalorder %s21, 0
      %p69 = por %p67, %p68
      %s71 = sadd.s32 %s70, 1
      %p74 = scmp.eq.s32.totalorder %s15, 1
      %p75 = scmp.ne.s32.totalorder %s70, %s72
      %p76 = scmp.eq.s32.totalorder %s15, 0
      %p77 = por %p75, %p76
      %p78 = scmp.ne.s32.totalorder %s70, %s72
      %p79 = scmp.eq.s32.totalorder %s20, 1
      %p80 = por %p78, %p79
      %p81 = scmp.ne.s32.totalorder %s72, %s73
      %p82 = scmp.eq.s32.totalorder %s20, 0
      %p83 = por %p81, %p82
      %p84 = scmp.ne.s32.totalorder %s72, %s73
      %p85 = scmp.eq.s32.totalorder %s21, 1
      %p86 = por %p84, %p85
      %p88 = scmp.ne.s32.totalorder %s73, %s87
      %p89 = scmp.eq.s32.totalorder %s21, 0
      %p90 = por %p88, %p89
      %s92 = sadd.s32 %s91, 1
      %p95 = scmp.eq.s32.totalorder %s15, 1
      %p96 = scmp.ne.s32.totalorder %s91, %s93
      %p97 = scmp.eq.s32.totalorder %s15, 0
      %p98 = por %p96, %p97
      %p99 = scmp.ne.s32.totalorder %s91, %s93
      %p100 = scmp.eq.s32.totalorder %s20, 1
      %p101 = por %p99, %p100
      %p102 = scmp.ne.s32.totalorder %s93, %s94
      %p103 = scmp.eq.s32.totalorder %s20, 0
      %p104 = por %p102, %p103
      %p105 = scmp.ne.s32.totalorder %s93, %s94
      %p106 = scmp.eq.s32.totalorder %s21, 1
      %p107 = por %p105, %p106
      %p109 = scmp.ne.s32.totalorder %s94, %s108
      %p110 = scmp.eq.s32.totalorder %s21, 0
      %p111 = por %p109, %p110
      %s112 = ssub.s32 %s15, %s22
      %p113 = scmp.eq.s32.totalorder %s112, 0
      %s115 = sadd.s32 %s114, 1
      %s116 = scalar_select %p113, %s114, %s115
      %p119 = pneg %p113
      %p120 = scmp.eq.s32.totalorder %s15, 1
      %p121 = por %p119, %p120
      %p122 = scmp.ne.s32.totalorder %s114, %s117
      %p123 = scmp.eq.s32.totalorder %s15, 0
      %p124 = por %p122, %p123
      %p125 = scmp.ne.s32.totalorder %s114, %s117
      %p126 = scmp.eq.s32.totalorder %s20, 1
      %p127 = por %p125, %p126
      %p128 = scmp.ne.s32.totalorder %s117, %s118
      %p129 = scmp.eq.s32.totalorder %s20, 0
      %p130 = por %p128, %p129
      %p131 = scmp.ne.s32.totalorder %s117, %s118
      %p132 = scmp.eq.s32.totalorder %s21, 1
      %p133 = por %p131, %p132
      %p135 = scmp.ne.s32.totalorder %s118, %s134
      %p136 = scmp.eq.s32.totalorder %s21, 0
      %p137 = por %p135, %p136
      %p138 = scmp.le.s32.totalorder 1, %s15
      %p139 = scmp.lt.s32.totalorder %s15, 3
      %p140 = pnand %p138, %p139
      %p141 = pneg %p140
      // Predicated region
      $region9: #{disc_block_forward.1} parent=5 // pred_check
        _
      $region10: #{disc_block_forward.1} parent=5 // pred_check_branch
        %143 = sbr.rel (%p140) target = $region12
      $region11: #{disc_block_forward.1} parent=5 // pred_region
        %s144 = ssub.s32 %s15, 1
        // Predicated region
        $region13: #{disc_block_forward.1} parent=11 // pred_check
          %p145 = pneg %p62
        $region14: #{disc_block_forward.1} parent=11 // pred_check_branch
          %147 = sbr.rel (%p145) target = $region16
        $region15: #{disc_block_forward.1} parent=11 // pred_region
          %s149 = ssub.s32 64, 64
          %150 = vsyncadd [#allocation4], %s149
          %s152 = sshll.u32 %s1, 4
          %s153 = int_to_ptr.vmem [resolvable:$true] %s152
          %155 = dma.vmem_to_smem %s153, 64, [#allocation2], [#allocation4]
        $region16: #{disc_block_forward.1} parent=11 // pred_fallthru
          _
        // Predicated region
        $region17: #{disc_block_forward.1} parent=11 // pred_check
          %p156 = pneg %p83
        $region18: #{disc_block_forward.1} parent=11 // pred_check_branch
          %158 = sbr.rel (%p156) target = $region20
        $region19: #{disc_block_forward.1} parent=11 // pred_region
          %s160 = ssub.s32 16, 16
          %161 = vsyncadd [#allocation6], %s160
          %s163 = sshll.u32 %s2, 4
          %s164 = int_to_ptr.vmem [resolvable:$true] %s163
          %166 = dma.vmem_to_smem %s164, 16, [#allocation5], [#allocation6]
        $region20: #{disc_block_forward.1} parent=11 // pred_fallthru
          _
        // Predicated region
        $region21: #{disc_block_forward.1} parent=11 // pred_check
          %p167 = pneg %p104
        $region22: #{disc_block_forward.1} parent=11 // pred_check_branch
          %169 = sbr.rel (%p167) target = $region24
        $region23: #{disc_block_forward.1} parent=11 // pred_region
          %s171 = ssub.s32 16, 16
          %172 = vsyncadd [#allocation6], %s171
          %s174 = sshll.u32 %s3, 4
          %s175 = int_to_ptr.vmem [resolvable:$true] %s174
          %177 = dma.vmem_to_smem %s175, 16, [#allocation7], [#allocation6]
        $region24: #{disc_block_forward.1} parent=11 // pred_fallthru
          _
      $region12: #{disc_block_forward.1} parent=5 // pred_fallthru
        _
      %p178 = scmp.lt.s32.totalorder %s15, 2
      // Predicated region
      $region25: #{disc_block_forward.1} parent=5 // pred_check
        %p179 = pneg %p178
      $region26: #{disc_block_forward.1} parent=5 // pred_check_branch
        %181 = sbr.rel (%p179) target = $region28
      $region27: #{disc_block_forward.1} parent=5 // pred_region
        // Predicated region
        $region29: #{disc_block_forward.1} parent=27 // pred_check
          %p182 = pneg %p35
        $region30: #{disc_block_forward.1} parent=27 // pred_check_branch
          %184 = sbr.rel (%p182) target = $region32
        $region31: #{disc_block_forward.1} parent=27 // pred_region
          %p185 = scmp.lt.s32.totalorder %s15, 1
          %s186 = scalar_select %p185, %s15, 1
          %s187 = smul.addr %s186, 32
          %s188 = smul.addr %s187, 8
          %s189 = scalar_lea.vmem %s0, %s188
        $region32: #{disc_block_forward.1} parent=27 // pred_fallthru
          _
      $region28: #{disc_block_forward.1} parent=5 // pred_fallthru
        _
      %p190 = scmp.le.s32.totalorder 1, %s15
      %p191 = scmp.lt.s32.totalorder %s15, 3
      %p192 = pnand %p190, %p191
      %p193 = pneg %p192
      // Predicated region
      $region33: #{disc_block_forward.1} parent=5 // pred_check
        _
      $region34: #{disc_block_forward.1} parent=5 // pred_check_branch
        %195 = sbr.rel (%p192) target = $region36
      $region35: #{disc_block_forward.1} parent=5 // pred_region
        %s196 = ssub.s32 %s15, 1
        // Predicated region
        $region37: #{disc_block_forward.1} parent=35 // pred_check
          %p197 = pneg %p62
        $region38: #{disc_block_forward.1} parent=35 // pred_check_branch
          %199 = sbr.rel (%p197) target = $region40
        $region39: #{disc_block_forward.1} parent=35 // pred_region
          %200 = dma.done [#allocation4], 64
        $region40: #{disc_block_forward.1} parent=35 // pred_fallthru
          _
        // Predicated region
        $region41: #{disc_block_forward.1} parent=35 // pred_check
          %p201 = pneg %p83
        $region42: #{disc_block_forward.1} parent=35 // pred_check_branch
          %203 = sbr.rel (%p201) target = $region44
        $region43: #{disc_block_forward.1} parent=35 // pred_region
          %204 = dma.done [#allocation6], 16
        $region44: #{disc_block_forward.1} parent=35 // pred_fallthru
          _
        // Predicated region
        $region45: #{disc_block_forward.1} parent=35 // pred_check
          %p205 = pneg %p104
        $region46: #{disc_block_forward.1} parent=35 // pred_check_branch
          %207 = sbr.rel (%p205) target = $region48
        $region47: #{disc_block_forward.1} parent=35 // pred_region
          %208 = dma.done [#allocation6], 16
        $region48: #{disc_block_forward.1} parent=35 // pred_fallthru
          _
        %209 = sfence
        %p210 = scmp.lt.s32.totalorder %s20, 1
        %s211 = scalar_select %p210, %s20, 1
        %s212 = smul.addr %s211, 32
        %s213 = smul.addr %s212, 8
        %s214 = scalar_lea.vmem %s0, %s213
        %p215 = pneg %p41
        %p216 = pneg %p38
        %p217 = pneg %p62
        %p218 = pneg %p59
        %p219 = pneg %p83
        %p220 = pneg %p80
        %p221 = pneg %p104
        %p222 = pneg %p101
        %p223 = pneg %p130
        %p224 = pneg %p127
        %s225 = sand.u32 %s117, 1
        %s226 = scalar_lea.sflag [#allocation3], %s225
        %s227 = sand.u32 %s117, 1
        %s228 = smul.addr %s227, 64
        %s229 = scalar_lea.vmem [#allocation8], %s228
        %p230 = scmp.lt.s32.totalorder %s20, 1
        %s231 = scalar_select %p230, %s20, 1
        %s232 = smul.addr %s231, 32
        %s233 = smul.addr %s232, 8
        %s234 = scalar_lea.vmem %s0, %s233
        %v235 = vld [vmem:[%s234] sm:$0xff]
        %v236 = vld [vmem:[%s234 + $0x8] sm:$0x1]
        %v237 = vld [vmem:[%s234 + $0x10] sm:$0xff]
        %v238 = vld [vmem:[%s234 + $0x18] sm:$0x1]
        %v239 = vld [vmem:[%s234 + $0x20] sm:$0xff]
        %v240 = vld [vmem:[%s234 + $0x28] sm:$0x1]
        %v241 = vld [vmem:[%s234 + $0x30] sm:$0xff]
        %v242 = vld [vmem:[%s234 + $0x38] sm:$0x1]
        %v243 = vld [vmem:[%s234 + $0x40] sm:$0xff]
        %v244 = vld [vmem:[%s234 + $0x48] sm:$0x1]
        %v245 = vld [vmem:[%s234 + $0x50] sm:$0xff]
        %v246 = vld [vmem:[%s234 + $0x58] sm:$0x1]
        %v247 = vld [vmem:[%s234 + $0x60] sm:$0xff]
        %v248 = vld [vmem:[%s234 + $0x68] sm:$0x1]
        %v249 = vld [vmem:[%s234 + $0x70] sm:$0xff]
        %v250 = vld [vmem:[%s234 + $0x78] sm:$0x1]
        %v251 = vld [vmem:[%s234 + $0x80] sm:$0xff]
        %v252 = vld [vmem:[%s234 + $0x88] sm:$0x1]
        %v253 = vld [vmem:[%s234 + $0x90] sm:$0xff]
        %v254 = vld [vmem:[%s234 + $0x98] sm:$0x1]
        %v255 = vld [vmem:[%s234 + $0xa0] sm:$0xff]
        %v256 = vld [vmem:[%s234 + $0xa8] sm:$0x1]
        %v257 = vld [vmem:[%s234 + $0xb0] sm:$0xff]
        %v258 = vld [vmem:[%s234 + $0xb8] sm:$0x1]
        %v259 = vld [vmem:[%s234 + $0xc0] sm:$0xff]
        %v260 = vld [vmem:[%s234 + $0xc8] sm:$0x1]
        %v261 = vld [vmem:[%s234 + $0xd0] sm:$0xff]
        %v262 = vld [vmem:[%s234 + $0xd8] sm:$0x1]
        %v263 = vld [vmem:[%s234 + $0xe0] sm:$0xff]
        %v264 = vld [vmem:[%s234 + $0xe8] sm:$0x1]
        %v265 = vld [vmem:[%s234 + $0xf0] sm:$0xff]
        %v266 = vld [vmem:[%s234 + $0xf8] sm:$0x1]
        %s267 = sld [smem:[#allocation2]]
        %v268 = vstv %s267
        %v269 = vmul.f32 %v268, %v235
        %v270 = vadd.f32 %v269, 0.0
        %s271 = sld [smem:[#allocation2 + $0x10]]
        %v272 = vstv %s271
        %v273 = vmul.f32 %v272, %v237
        %v274 = vadd.f32 %v270, %v273
        %s275 = sld [smem:[#allocation2 + $0x20]]
        %v276 = vstv %s275
        %v277 = vmul.f32 %v276, %v239
        %v278 = vadd.f32 %v274, %v277
        %s279 = sld [smem:[#allocation2 + $0x30]]
        %v280 = vstv %s279
        %v281 = vmul.f32 %v280, %v241
        %v282 = vadd.f32 %v278, %v281
        %s283 = sld [smem:[#allocation2 + $0x2]]
        %v284 = vstv %s283
        %v285 = vmul.f32 %v284, %v235
        %287 = vrot.lane.b32.xlu0 %v285, 127
        %v288 = vpop.permute.xlu0 %287
        %v290 = vadd.f32 %v282, %v288
        %s291 = sld [smem:[#allocation2 + $0x12]]
        %v292 = vstv %s291
        %v293 = vmul.f32 %v292, %v237
        %295 = vrot.lane.b32.xlu0 %v293, 127
        %v296 = vpop.permute.xlu0 %295
        %v298 = vadd.f32 %v290, %v296
        %s299 = sld [smem:[#allocation2 + $0x22]]
        %v300 = vstv %s299
        %v301 = vmul.f32 %v300, %v239
        %303 = vrot.lane.b32.xlu0 %v301, 127
        %v304 = vpop.permute.xlu0 %303
        %v306 = vadd.f32 %v298, %v304
        %s307 = sld [smem:[#allocation2 + $0x32]]
        %v308 = vstv %s307
        %v309 = vmul.f32 %v308, %v241
        %311 = vrot.lane.b32.xlu0 %v309, 127
        %v312 = vpop.permute.xlu0 %311
        %v314 = vadd.f32 %v306, %v312
        %s315 = sld [smem:[#allocation2 + $0x8]]
        %v316 = vstv %s315
        %v317 = vmul.f32 %v316, %v235
        %v318 = vmul.f32 %v316, %v236
        %vm321 = vcmask 1046528
        %v322 = vrot.slane %v317, 1
        %v323 = vrot.slane %v318, 1
        %v324 = vsel %vm321, %v322, %v323
        %v326 = vadd.f32 %v314, %v324
        %s327 = sld [smem:[#allocation2 + $0x18]]
        %v328 = vstv %s327
        %v329 = vmul.f32 %v328, %v237
        %v330 = vmul.f32 %v328, %v238
        %v333 = vrot.slane %v329, 1
        %v334 = vrot.slane %v330, 1
        %v335 = vsel %vm321, %v333, %v334
        %v337 = vadd.f32 %v326, %v335
        %s338 = sld [smem:[#allocation2 + $0x28]]
        %v339 = vstv %s338
        %v340 = vmul.f32 %v339, %v239
        %v341 = vmul.f32 %v339, %v240
        %v344 = vrot.slane %v340, 1
        %v345 = vrot.slane %v341, 1
        %v346 = vsel %vm321, %v344, %v345
        %v348 = vadd.f32 %v337, %v346
        %s349 = sld [smem:[#allocation2 + $0x38]]
        %v350 = vstv %s349
        %v351 = vmul.f32 %v350, %v241
        %v352 = vmul.f32 %v350, %v242
        %v355 = vrot.slane %v351, 1
        %v356 = vrot.slane %v352, 1
        %v357 = vsel %vm321, %v355, %v356
        %v359 = vadd.f32 %v348, %v357
        %s360 = sld [smem:[#allocation2 + $0xa]]
        %v361 = vstv %s360
        %v362 = vmul.f32 %v361, %v235
        %v363 = vmul.f32 %v361, %v236
        %v366 = vrot.slane %v362, 1
        %v367 = vrot.slane %v363, 1
        %v368 = vsel %vm321, %v366, %v367
        %369 = vrot.lane.b32.xlu0 %v368, 127
        %v370 = vpop.permute.xlu0 %369
        %v372 = vadd.f32 %v359, %v370
        %s373 = sld [smem:[#allocation2 + $0x1a]]
        %v374 = vstv %s373
        %v375 = vmul.f32 %v374, %v237
        %v376 = vmul.f32 %v374, %v238
        %v379 = vrot.slane %v375, 1
        %v380 = vrot.slane %v376, 1
        %v381 = vsel %vm321, %v379, %v380
        %382 = vrot.lane.b32.xlu0 %v381, 127
        %v383 = vpop.permute.xlu0 %382
        %v385 = vadd.f32 %v372, %v383
        %s386 = sld [smem:[#allocation2 + $0x2a]]
        %v387 = vstv %s386
        %v388 = vmul.f32 %v387, %v239
        %v389 = vmul.f32 %v387, %v240
        %v392 = vrot.slane %v388, 1
        %v393 = vrot.slane %v389, 1
        %v394 = vsel %vm321, %v392, %v393
        %395 = vrot.lane.b32.xlu0 %v394, 127
        %v396 = vpop.permute.xlu0 %395
        %v398 = vadd.f32 %v385, %v396
        %s399 = sld [smem:[#allocation2 + $0x3a]]
        %v400 = vstv %s399
        %v401 = vmul.f32 %v400, %v241
        %v402 = vmul.f32 %v400, %v242
        %v405 = vrot.slane %v401, 1
        %v406 = vrot.slane %v402, 1
        %v407 = vsel %vm321, %v405, %v406
        %408 = vrot.lane.b32.xlu0 %v407, 127
        %v409 = vpop.permute.xlu0 %408
        %v411 = vadd.f32 %v398, %v409
        %s412 = sld [smem:[#allocation2 + $0x1]]
        %v413 = vstv %s412
        %v414 = vmul.f32 %v413, %v243
        %v415 = vadd.f32 %v411, %v414
        %s416 = sld [smem:[#allocation2 + $0x11]]
        %v417 = vstv %s416
        %v418 = vmul.f32 %v417, %v245
        %v419 = vadd.f32 %v415, %v418
        %s420 = sld [smem:[#allocation2 + $0x21]]
        %v421 = vstv %s420
        %v422 = vmul.f32 %v421, %v247
        %v423 = vadd.f32 %v419, %v422
        %s424 = sld [smem:[#allocation2 + $0x31]]
        %v425 = vstv %s424
        %v426 = vmul.f32 %v425, %v249
        %v427 = vadd.f32 %v423, %v426
        %s428 = sld [smem:[#allocation2 + $0x3]]
        %v429 = vstv %s428
        %v430 = vmul.f32 %v429, %v243
        %432 = vrot.lane.b32.xlu0 %v430, 127
        %v433 = vpop.permute.xlu0 %432
        %v435 = vadd.f32 %v427, %v433
        %s436 = sld [smem:[#allocation2 + $0x13]]
        %v437 = vstv %s436
        %v438 = vmul.f32 %v437, %v245
        %440 = vrot.lane.b32.xlu0 %v438, 127
        %v441 = vpop.permute.xlu0 %440
        %v443 = vadd.f32 %v435, %v441
        %s444 = sld [smem:[#allocation2 + $0x23]]
        %v445 = vstv %s444
        %v446 = vmul.f32 %v445, %v247
        %448 = vrot.lane.b32.xlu0 %v446, 127
        %v449 = vpop.permute.xlu0 %448
        %v451 = vadd.f32 %v443, %v449
        %s452 = sld [smem:[#allocation2 + $0x33]]
        %v453 = vstv %s452
        %v454 = vmul.f32 %v453, %v249
        %456 = vrot.lane.b32.xlu0 %v454, 127
        %v457 = vpop.permute.xlu0 %456
        %v459 = vadd.f32 %v451, %v457
        %s460 = sld [smem:[#allocation2 + $0x9]]
        %v461 = vstv %s460
        %v462 = vmul.f32 %v461, %v243
        %v463 = vmul.f32 %v461, %v244
        %v466 = vrot.slane %v462, 1
        %v467 = vrot.slane %v463, 1
        %v468 = vsel %vm321, %v466, %v467
        %v470 = vadd.f32 %v459, %v468
        %s471 = sld [smem:[#allocation2 + $0x19]]
        %v472 = vstv %s471
        %v473 = vmul.f32 %v472, %v245
        %v474 = vmul.f32 %v472, %v246
        %v477 = vrot.slane %v473, 1
        %v478 = vrot.slane %v474, 1
        %v479 = vsel %vm321, %v477, %v478
        %v481 = vadd.f32 %v470, %v479
        %s482 = sld [smem:[#allocation2 + $0x29]]
        %v483 = vstv %s482
        %v484 = vmul.f32 %v483, %v247
        %v485 = vmul.f32 %v483, %v248
        %v488 = vrot.slane %v484, 1
        %v489 = vrot.slane %v485, 1
        %v490 = vsel %vm321, %v488, %v489
        %v492 = vadd.f32 %v481, %v490
        %s493 = sld [smem:[#allocation2 + $0x39]]
        %v494 = vstv %s493
        %v495 = vmul.f32 %v494, %v249
        %v496 = vmul.f32 %v494, %v250
        %v499 = vrot.slane %v495, 1
        %v500 = vrot.slane %v496, 1
        %v501 = vsel %vm321, %v499, %v500
        %v503 = vadd.f32 %v492, %v501
        %s504 = sld [smem:[#allocation2 + $0xb]]
        %v505 = vstv %s504
        %v506 = vmul.f32 %v505, %v243
        %v507 = vmul.f32 %v505, %v244
        %v510 = vrot.slane %v506, 1
        %v511 = vrot.slane %v507, 1
        %v512 = vsel %vm321, %v510, %v511
        %513 = vrot.lane.b32.xlu0 %v512, 127
        %v514 = vpop.permute.xlu0 %513
        %v516 = vadd.f32 %v503, %v514
        %s517 = sld [smem:[#allocation2 + $0x1b]]
        %v518 = vstv %s517
        %v519 = vmul.f32 %v518, %v245
        %v520 = vmul.f32 %v518, %v246
        %v523 = vrot.slane %v519, 1
        %v524 = vrot.slane %v520, 1
        %v525 = vsel %vm321, %v523, %v524
        %526 = vrot.lane.b32.xlu0 %v525, 127
        %v527 = vpop.permute.xlu0 %526
        %v529 = vadd.f32 %v516, %v527
        %s530 = sld [smem:[#allocation2 + $0x2b]]
        %v531 = vstv %s530
        %v532 = vmul.f32 %v531, %v247
        %v533 = vmul.f32 %v531, %v248
        %v536 = vrot.slane %v532, 1
        %v537 = vrot.slane %v533, 1
        %v538 = vsel %vm321, %v536, %v537
        %539 = vrot.lane.b32.xlu0 %v538, 127
        %v540 = vpop.permute.xlu0 %539
        %v542 = vadd.f32 %v529, %v540
        %s543 = sld [smem:[#allocation2 + $0x3b]]
        %v544 = vstv %s543
        %v545 = vmul.f32 %v544, %v249
        %v546 = vmul.f32 %v544, %v250
        %v549 = vrot.slane %v545, 1
        %v550 = vrot.slane %v546, 1
        %v551 = vsel %vm321, %v549, %v550
        %552 = vrot.lane.b32.xlu0 %v551, 127
        %v553 = vpop.permute.xlu0 %552
        %v555 = vadd.f32 %v542, %v553
        %s556 = sld [smem:[#allocation2 + $0x4]]
        %v557 = vstv %s556
        %v558 = vmul.f32 %v557, %v251
        %v559 = vadd.f32 %v555, %v558
        %s560 = sld [smem:[#allocation2 + $0x14]]
        %v561 = vstv %s560
        %v562 = vmul.f32 %v561, %v253
        %v563 = vadd.f32 %v559, %v562
        %s564 = sld [smem:[#allocation2 + $0x24]]
        %v565 = vstv %s564
        %v566 = vmul.f32 %v565, %v255
        %v567 = vadd.f32 %v563, %v566
        %s568 = sld [smem:[#allocation2 + $0x34]]
        %v569 = vstv %s568
        %v570 = vmul.f32 %v569, %v257
        %v571 = vadd.f32 %v567, %v570
        %s572 = sld [smem:[#allocation2 + $0x6]]
        %v573 = vstv %s572
        %v574 = vmul.f32 %v573, %v251
        %576 = vrot.lane.b32.xlu0 %v574, 127
        %v577 = vpop.permute.xlu0 %576
        %v579 = vadd.f32 %v571, %v577
        %s580 = sld [smem:[#allocation2 + $0x16]]
        %v581 = vstv %s580
        %v582 = vmul.f32 %v581, %v253
        %584 = vrot.lane.b32.xlu0 %v582, 127
        %v585 = vpop.permute.xlu0 %584
        %v587 = vadd.f32 %v579, %v585
        %s588 = sld [smem:[#allocation2 + $0x26]]
        %v589 = vstv %s588
        %v590 = vmul.f32 %v589, %v255
        %592 = vrot.lane.b32.xlu0 %v590, 127
        %v593 = vpop.permute.xlu0 %592
        %v595 = vadd.f32 %v587, %v593
        %s596 = sld [smem:[#allocation2 + $0x36]]
        %v597 = vstv %s596
        %v598 = vmul.f32 %v597, %v257
        %600 = vrot.lane.b32.xlu0 %v598, 127
        %v601 = vpop.permute.xlu0 %600
        %v603 = vadd.f32 %v595, %v601
        %s604 = sld [smem:[#allocation2 + $0xc]]
        %v605 = vstv %s604
        %v606 = vmul.f32 %v605, %v251
        %v607 = vmul.f32 %v605, %v252
        %v610 = vrot.slane %v606, 1
        %v611 = vrot.slane %v607, 1
        %v612 = vsel %vm321, %v610, %v611
        %v614 = vadd.f32 %v603, %v612
        %s615 = sld [smem:[#allocation2 + $0x1c]]
        %v616 = vstv %s615
        %v617 = vmul.f32 %v616, %v253
        %v618 = vmul.f32 %v616, %v254
        %v621 = vrot.slane %v617, 1
        %v622 = vrot.slane %v618, 1
        %v623 = vsel %vm321, %v621, %v622
        %v625 = vadd.f32 %v614, %v623
        %s626 = sld [smem:[#allocation2 + $0x2c]]
        %v627 = vstv %s626
        %v628 = vmul.f32 %v627, %v255
        %v629 = vmul.f32 %v627, %v256
        %v632 = vrot.slane %v628, 1
        %v633 = vrot.slane %v629, 1
        %v634 = vsel %vm321, %v632, %v633
        %v636 = vadd.f32 %v625, %v634
        %s637 = sld [smem:[#allocation2 + $0x3c]]
        %v638 = vstv %s637
        %v639 = vmul.f32 %v638, %v257
        %v640 = vmul.f32 %v638, %v258
        %v643 = vrot.slane %v639, 1
        %v644 = vrot.slane %v640, 1
        %v645 = vsel %vm321, %v643, %v644
        %v647 = vadd.f32 %v636, %v645
        %s648 = sld [smem:[#allocation2 + $0xe]]
        %v649 = vstv %s648
        %v650 = vmul.f32 %v649, %v251
        %v651 = vmul.f32 %v649, %v252
        %v654 = vrot.slane %v650, 1
        %v655 = vrot.slane %v651, 1
        %v656 = vsel %vm321, %v654, %v655
        %657 = vrot.lane.b32.xlu0 %v656, 127
        %v658 = vpop.permute.xlu0 %657
        %v660 = vadd.f32 %v647, %v658
        %s661 = sld [smem:[#allocation2 + $0x1e]]
        %v662 = vstv %s661
        %v663 = vmul.f32 %v662, %v253
        %v664 = vmul.f32 %v662, %v254
        %v667 = vrot.slane %v663, 1
        %v668 = vrot.slane %v664, 1
        %v669 = vsel %vm321, %v667, %v668
        %670 = vrot.lane.b32.xlu0 %v669, 127
        %v671 = vpop.permute.xlu0 %670
        %v673 = vadd.f32 %v660, %v671
        %s674 = sld [smem:[#allocation2 + $0x2e]]
        %v675 = vstv %s674
        %v676 = vmul.f32 %v675, %v255
        %v677 = vmul.f32 %v675, %v256
        %v680 = vrot.slane %v676, 1
        %v681 = vrot.slane %v677, 1
        %v682 = vsel %vm321, %v680, %v681
        %683 = vrot.lane.b32.xlu0 %v682, 127
        %v684 = vpop.permute.xlu0 %683
        %v686 = vadd.f32 %v673, %v684
        %s687 = sld [smem:[#allocation2 + $0x3e]]
        %v688 = vstv %s687
        %v689 = vmul.f32 %v688, %v257
        %v690 = vmul.f32 %v688, %v258
        %v693 = vrot.slane %v689, 1
        %v694 = vrot.slane %v690, 1
        %v695 = vsel %vm321, %v693, %v694
        %696 = vrot.lane.b32.xlu0 %v695, 127
        %v697 = vpop.permute.xlu0 %696
        %v699 = vadd.f32 %v686, %v697
        %s700 = sld [smem:[#allocation2 + $0x5]]
        %v701 = vstv %s700
        %v702 = vmul.f32 %v701, %v259
        %v703 = vadd.f32 %v699, %v702
        %s704 = sld [smem:[#allocation2 + $0x15]]
        %v705 = vstv %s704
        %v706 = vmul.f32 %v705, %v261
        %v707 = vadd.f32 %v703, %v706
        %s708 = sld [smem:[#allocation2 + $0x25]]
        %v709 = vstv %s708
        %v710 = vmul.f32 %v709, %v263
        %v711 = vadd.f32 %v707, %v710
        %s712 = sld [smem:[#allocation2 + $0x35]]
        %v713 = vstv %s712
        %v714 = vmul.f32 %v713, %v265
        %v715 = vadd.f32 %v711, %v714
        %s716 = sld [smem:[#allocation2 + $0x7]]
        %v717 = vstv %s716
        %v718 = vmul.f32 %v717, %v259
        %720 = vrot.lane.b32.xlu0 %v718, 127
        %v721 = vpop.permute.xlu0 %720
        %v723 = vadd.f32 %v715, %v721
        %s724 = sld [smem:[#allocation2 + $0x17]]
        %v725 = vstv %s724
        %v726 = vmul.f32 %v725, %v261
        %728 = vrot.lane.b32.xlu0 %v726, 127
        %v729 = vpop.permute.xlu0 %728
        %v731 = vadd.f32 %v723, %v729
        %s732 = sld [smem:[#allocation2 + $0x27]]
        %v733 = vstv %s732
        %v734 = vmul.f32 %v733, %v263
        %736 = vrot.lane.b32.xlu0 %v734, 127
        %v737 = vpop.permute.xlu0 %736
        %v739 = vadd.f32 %v731, %v737
        %s740 = sld [smem:[#allocation2 + $0x37]]
        %v741 = vstv %s740
        %v742 = vmul.f32 %v741, %v265
        %744 = vrot.lane.b32.xlu0 %v742, 127
        %v745 = vpop.permute.xlu0 %744
        %v747 = vadd.f32 %v739, %v745
        %s748 = sld [smem:[#allocation2 + $0xd]]
        %v749 = vstv %s748
        %v750 = vmul.f32 %v749, %v259
        %v751 = vmul.f32 %v749, %v260
        %v754 = vrot.slane %v750, 1
        %v755 = vrot.slane %v751, 1
        %v756 = vsel %vm321, %v754, %v755
        %v758 = vadd.f32 %v747, %v756
        %s759 = sld [smem:[#allocation2 + $0x1d]]
        %v760 = vstv %s759
        %v761 = vmul.f32 %v760, %v261
        %v762 = vmul.f32 %v760, %v262
        %v765 = vrot.slane %v761, 1
        %v766 = vrot.slane %v762, 1
        %v767 = vsel %vm321, %v765, %v766
        %v769 = vadd.f32 %v758, %v767
        %s770 = sld [smem:[#allocation2 + $0x2d]]
        %v771 = vstv %s770
        %v772 = vmul.f32 %v771, %v263
        %v773 = vmul.f32 %v771, %v264
        %v776 = vrot.slane %v772, 1
        %v777 = vrot.slane %v773, 1
        %v778 = vsel %vm321, %v776, %v777
        %v780 = vadd.f32 %v769, %v778
        %s781 = sld [smem:[#allocation2 + $0x3d]]
        %v782 = vstv %s781
        %v783 = vmul.f32 %v782, %v265
        %v784 = vmul.f32 %v782, %v266
        %v787 = vrot.slane %v783, 1
        %v788 = vrot.slane %v784, 1
        %v789 = vsel %vm321, %v787, %v788
        %v791 = vadd.f32 %v780, %v789
        %s792 = sld [smem:[#allocation2 + $0xf]]
        %v793 = vstv %s792
        %v794 = vmul.f32 %v793, %v259
        %v795 = vmul.f32 %v793, %v260
        %v798 = vrot.slane %v794, 1
        %v799 = vrot.slane %v795, 1
        %v800 = vsel %vm321, %v798, %v799
        %801 = vrot.lane.b32.xlu0 %v800, 127
        %v802 = vpop.permute.xlu0 %801
        %v804 = vadd.f32 %v791, %v802
        %s805 = sld [smem:[#allocation2 + $0x1f]]
        %v806 = vstv %s805
        %v807 = vmul.f32 %v806, %v261
        %v808 = vmul.f32 %v806, %v262
        %v811 = vrot.slane %v807, 1
        %v812 = vrot.slane %v808, 1
        %v813 = vsel %vm321, %v811, %v812
        %814 = vrot.lane.b32.xlu0 %v813, 127
        %v815 = vpop.permute.xlu0 %814
        %v817 = vadd.f32 %v804, %v815
        %s818 = sld [smem:[#allocation2 + $0x2f]]
        %v819 = vstv %s818
        %v820 = vmul.f32 %v819, %v263
        %v821 = vmul.f32 %v819, %v264
        %v824 = vrot.slane %v820, 1
        %v825 = vrot.slane %v821, 1
        %v826 = vsel %vm321, %v824, %v825
        %827 = vrot.lane.b32.xlu0 %v826, 127
        %v828 = vpop.permute.xlu0 %827
        %v830 = vadd.f32 %v817, %v828
        %s831 = sld [smem:[#allocation2 + $0x3f]]
        %v832 = vstv %s831
        %v833 = vmul.f32 %v832, %v265
        %v834 = vmul.f32 %v832, %v266
        %v837 = vrot.slane %v833, 1
        %v838 = vrot.slane %v834, 1
        %v839 = vsel %vm321, %v837, %v838
        %840 = vrot.lane.b32.xlu0 %v839, 127
        %v841 = vpop.permute.xlu0 %840
        %v843 = vadd.f32 %v830, %v841
        %vm844 = vcmask 64512
        %v845 = vsel %vm844, %v843, 0.0
        %846 = vadd.xlane.f32.xlu0 %v845
        %v847 = vpop.xlane.xlu0 %846
        %v848 = vrot.slane %v847, 4
        %v849 = vadd.f32 %v847, %v848
        %v850 = vrot.slane %v849, 2
        %v851 = vadd.f32 %v849, %v850
        %v852 = vrot.slane %v851, 1
        %v853 = vadd.f32 %v851, %v852
        %s854 = vtos %v853
        %v855 = vstv %s854
        %v856 = vmul.f32 %v855, 0.015625
        %v857 = vsub.f32 %v843, %v856
        %v858 = vmul.f32 %v857, %v857
        %v859 = vsel %vm844, %v858, 0.0
        %860 = vadd.xlane.f32.xlu0 %v859
        %v861 = vpop.xlane.xlu0 %860
        %v862 = vrot.slane %v861, 4
        %v863 = vadd.f32 %v861, %v862
        %v864 = vrot.slane %v863, 2
        %v865 = vadd.f32 %v863, %v864
        %v866 = vrot.slane %v865, 1
        %v867 = vadd.f32 %v865, %v866
        %s868 = vtos %v867
        %v869 = vstv %s868
        %v870 = vmul.f32 %v869, 0.015625
        %v871 = vadd.f32 %v870, 1e-05
        %v872 = vrsqrt.pop %v871
        %s873 = sld [smem:[#allocation5]]
        %v874 = vstv %s873
        %v875 = vmul.f32 %v872, %v874
        %v876 = vmul.f32 %v857, %v875
        %s877 = sld [smem:[#allocation7]]
        %v878 = vstv %s877
        %v879 = vadd.f32 %v876, %v878
        %vm880 = vcmp.gt.f32.partialorder %v879, 0.0
        %v881 = vmul.f32 %v879, 0.2
        %v882 = vsel %vm880, %v879, %v881
        %883 = vst.msk [vmem:[%s229] sm:$0xff] %vm844, %v882
        %s884 = sld [smem:[#allocation2 + $0x40]]
        %v885 = vstv %s884
        %v886 = vmul.f32 %v885, %v235
        %v887 = vadd.f32 %v886, 0.0
        %s888 = sld [smem:[#allocation2 + $0x50]]
        %v889 = vstv %s888
        %v890 = vmul.f32 %v889, %v237
        %v891 = vadd.f32 %v887, %v890
        %s892 = sld [smem:[#allocation2 + $0x60]]
        %v893 = vstv %s892
        %v894 = vmul.f32 %v893, %v239
        %v895 = vadd.f32 %v891, %v894
        %s896 = sld [smem:[#allocation2 + $0x70]]
        %v897 = vstv %s896
        %v898 = vmul.f32 %v897, %v241
        %v899 = vadd.f32 %v895, %v898
        %s900 = sld [smem:[#allocation2 + $0x42]]
        %v901 = vstv %s900
        %v902 = vmul.f32 %v901, %v235
        %904 = vrot.lane.b32.xlu0 %v902, 127
        %v905 = vpop.permute.xlu0 %904
        %v907 = vadd.f32 %v899, %v905
        %s908 = sld [smem:[#allocation2 + $0x52]]
        %v909 = vstv %s908
        %v910 = vmul.f32 %v909, %v237
        %912 = vrot.lane.b32.xlu0 %v910, 127
        %v913 = vpop.permute.xlu0 %912
        %v915 = vadd.f32 %v907, %v913
        %s916 = sld [smem:[#allocation2 + $0x62]]
        %v917 = vstv %s916
        %v918 = vmul.f32 %v917, %v239
        %920 = vrot.lane.b32.xlu0 %v918, 127
        %v921 = vpop.permute.xlu0 %920
        %v923 = vadd.f32 %v915, %v921
        %s924 = sld [smem:[#allocation2 + $0x72]]
        %v925 = vstv %s924
        %v926 = vmul.f32 %v925, %v241
        %928 = vrot.lane.b32.xlu0 %v926, 127
        %v929 = vpop.permute.xlu0 %928
        %v931 = vadd.f32 %v923, %v929
        %s932 = sld [smem:[#allocation2 + $0x48]]
        %v933 = vstv %s932
        %v934 = vmul.f32 %v933, %v235
        %v935 = vmul.f32 %v933, %v236
        %v938 = vrot.slane %v934, 1
        %v939 = vrot.slane %v935, 1
        %v940 = vsel %vm321, %v938, %v939
        %v942 = vadd.f32 %v931, %v940
        %s943 = sld [smem:[#allocation2 + $0x58]]
        %v944 = vstv %s943
        %v945 = vmul.f32 %v944, %v237
        %v946 = vmul.f32 %v944, %v238
        %v949 = vrot.slane %v945, 1
        %v950 = vrot.slane %v946, 1
        %v951 = vsel %vm321, %v949, %v950
        %v953 = vadd.f32 %v942, %v951
        %s954 = sld [smem:[#allocation2 + $0x68]]
        %v955 = vstv %s954
        %v956 = vmul.f32 %v955, %v239
        %v957 = vmul.f32 %v955, %v240
        %v960 = vrot.slane %v956, 1
        %v961 = vrot.slane %v957, 1
        %v962 = vsel %vm321, %v960, %v961
        %v964 = vadd.f32 %v953, %v962
        %s965 = sld [smem:[#allocation2 + $0x78]]
        %v966 = vstv %s965
        %v967 = vmul.f32 %v966, %v241
        %v968 = vmul.f32 %v966, %v242
        %v971 = vrot.slane %v967, 1
        %v972 = vrot.slane %v968, 1
        %v973 = vsel %vm321, %v971, %v972
        %v975 = vadd.f32 %v964, %v973
        %s976 = sld [smem:[#allocation2 + $0x4a]]
        %v977 = vstv %s976
        %v978 = vmul.f32 %v977, %v235
        %v979 = vmul.f32 %v977, %v236
        %v982 = vrot.slane %v978, 1
        %v983 = vrot.slane %v979, 1
        %v984 = vsel %vm321, %v982, %v983
        %985 = vrot.lane.b32.xlu0 %v984, 127
        %v986 = vpop.permute.xlu0 %985
        %v988 = vadd.f32 %v975, %v986
        %s989 = sld [smem:[#allocation2 + $0x5a]]
        %v990 = vstv %s989
        %v991 = vmul.f32 %v990, %v237
        %v992 = vmul.f32 %v990, %v238
        %v995 = vrot.slane %v991, 1
        %v996 = vrot.slane %v992, 1
        %v997 = vsel %vm321, %v995, %v996
        %998 = vrot.lane.b32.xlu0 %v997, 127
        %v999 = vpop.permute.xlu0 %998
        %v1001 = vadd.f32 %v988, %v999
        %s1002 = sld [smem:[#allocation2 + $0x6a]]
        %v1003 = vstv %s1002
        %v1004 = vmul.f32 %v1003, %v239
        %v1005 = vmul.f32 %v1003, %v240
        %v1008 = vrot.slane %v1004, 1
        %v1009 = vrot.slane %v1005, 1
        %v1010 = vsel %vm321, %v1008, %v1009
        %1011 = vrot.lane.b32.xlu0 %v1010, 127
        %v1012 = vpop.permute.xlu0 %1011
        %v1014 = vadd.f32 %v1001, %v1012
        %s1015 = sld [smem:[#allocation2 + $0x7a]]
        %v1016 = vstv %s1015
        %v1017 = vmul.f32 %v1016, %v241
        %v1018 = vmul.f32 %v1016, %v242
        %v1021 = vrot.slane %v1017, 1
        %v1022 = vrot.slane %v1018, 1
        %v1023 = vsel %vm321, %v1021, %v1022
        %1024 = vrot.lane.b32.xlu0 %v1023, 127
        %v1025 = vpop.permute.xlu0 %1024
        %v1027 = vadd.f32 %v1014, %v1025
        %s1028 = sld [smem:[#allocation2 + $0x41]]
        %v1029 = vstv %s1028
        %v1030 = vmul.f32 %v1029, %v243
        %v1031 = vadd.f32 %v1027, %v1030
        %s1032 = sld [smem:[#allocation2 + $0x51]]
        %v1033 = vstv %s1032
        %v1034 = vmul.f32 %v1033, %v245
        %v1035 = vadd.f32 %v1031, %v1034
        %s1036 = sld [smem:[#allocation2 + $0x61]]
        %v1037 = vstv %s1036
        %v1038 = vmul.f32 %v1037, %v247
        %v1039 = vadd.f32 %v1035, %v1038
        %s1040 = sld [smem:[#allocation2 + $0x71]]
        %v1041 = vstv %s1040
        %v1042 = vmul.f32 %v1041, %v249
        %v1043 = vadd.f32 %v1039, %v1042
        %s1044 = sld [smem:[#allocation2 + $0x43]]
        %v1045 = vstv %s1044
        %v1046 = vmul.f32 %v1045, %v243
        %1048 = vrot.lane.b32.xlu0 %v1046, 127
        %v1049 = vpop.permute.xlu0 %1048
        %v1051 = vadd.f32 %v1043, %v1049
        %s1052 = sld [smem:[#allocation2 + $0x53]]
        %v1053 = vstv %s1052
        %v1054 = vmul.f32 %v1053, %v245
        %1056 = vrot.lane.b32.xlu0 %v1054, 127
        %v1057 = vpop.permute.xlu0 %1056
        %v1059 = vadd.f32 %v1051, %v1057
        %s1060 = sld [smem:[#allocation2 + $0x63]]
        %v1061 = vstv %s1060
        %v1062 = vmul.f32 %v1061, %v247
        %1064 = vrot.lane.b32.xlu0 %v1062, 127
        %v1065 = vpop.permute.xlu0 %1064
        %v1067 = vadd.f32 %v1059, %v1065
        %s1068 = sld [smem:[#allocation2 + $0x73]]
        %v1069 = vstv %s1068
        %v1070 = vmul.f32 %v1069, %v249
        %1072 = vrot.lane.b32.xlu0 %v1070, 127
        %v1073 = vpop.permute.xlu0 %1072
        %v1075 = vadd.f32 %v1067, %v1073
        %s1076 = sld [smem:[#allocation2 + $0x49]]
        %v1077 = vstv %s1076
        %v1078 = vmul.f32 %v1077, %v243
        %v1079 = vmul.f32 %v1077, %v244
        %v1082 = vrot.slane %v1078, 1
        %v1083 = vrot.slane %v1079, 1
        %v1084 = vsel %vm321, %v1082, %v1083
        %v1086 = vadd.f32 %v1075, %v1084
        %s1087 = sld [smem:[#allocation2 + $0x59]]
        %v1088 = vstv %s1087
        %v1089 = vmul.f32 %v1088, %v245
        %v1090 = vmul.f32 %v1088, %v246
        %v1093 = vrot.slane %v1089, 1
        %v1094 = vrot.slane %v1090, 1
        %v1095 = vsel %vm321, %v1093, %v1094
        %v1097 = vadd.f32 %v1086, %v1095
        %s1098 = sld [smem:[#allocation2 + $0x69]]
        %v1099 = vstv %s1098
        %v1100 = vmul.f32 %v1099, %v247
        %v1101 = vmul.f32 %v1099, %v248
        %v1104 = vrot.slane %v1100, 1
        %v1105 = vrot.slane %v1101, 1
        %v1106 = vsel %vm321, %v1104, %v1105
        %v1108 = vadd.f32 %v1097, %v1106
        %s1109 = sld [smem:[#allocation2 + $0x79]]
        %v1110 = vstv %s1109
        %v1111 = vmul.f32 %v1110, %v249
        %v1112 = vmul.f32 %v1110, %v250
        %v1115 = vrot.slane %v1111, 1
        %v1116 = vrot.slane %v1112, 1
        %v1117 = vsel %vm321, %v1115, %v1116
        %v1119 = vadd.f32 %v1108, %v1117
        %s1120 = sld [smem:[#allocation2 + $0x4b]]
        %v1121 = vstv %s1120
        %v1122 = vmul.f32 %v1121, %v243
        %v1123 = vmul.f32 %v1121, %v244
        %v1126 = vrot.slane %v1122, 1
        %v1127 = vrot.slane %v1123, 1
        %v1128 = vsel %vm321, %v1126, %v1127
        %1129 = vrot.lane.b32.xlu0 %v1128, 127
        %v1130 = vpop.permute.xlu0 %1129
        %v1132 = vadd.f32 %v1119, %v1130
        %s1133 = sld [smem:[#allocation2 + $0x5b]]
        %v1134 = vstv %s1133
        %v1135 = vmul.f32 %v1134, %v245
        %v1136 = vmul.f32 %v1134, %v246
        %v1139 = vrot.slane %v1135, 1
        %v1140 = vrot.slane %v1136, 1
        %v1141 = vsel %vm321, %v1139, %v1140
        %1142 = vrot.lane.b32.xlu0 %v1141, 127
        %v1143 = vpop.permute.xlu0 %1142
        %v1145 = vadd.f32 %v1132, %v1143
        %s1146 = sld [smem:[#allocation2 + $0x6b]]
        %v1147 = vstv %s1146
        %v1148 = vmul.f32 %v1147, %v247
        %v1149 = vmul.f32 %v1147, %v248
        %v1152 = vrot.slane %v1148, 1
        %v1153 = vrot.slane %v1149, 1
        %v1154 = vsel %vm321, %v1152, %v1153
        %1155 = vrot.lane.b32.xlu0 %v1154, 127
        %v1156 = vpop.permute.xlu0 %1155
        %v1158 = vadd.f32 %v1145, %v1156
        %s1159 = sld [smem:[#allocation2 + $0x7b]]
        %v1160 = vstv %s1159
        %v1161 = vmul.f32 %v1160, %v249
        %v1162 = vmul.f32 %v1160, %v250
        %v1165 = vrot.slane %v1161, 1
        %v1166 = vrot.slane %v1162, 1
        %v1167 = vsel %vm321, %v1165, %v1166
        %1168 = vrot.lane.b32.xlu0 %v1167, 127
        %v1169 = vpop.permute.xlu0 %1168
        %v1171 = vadd.f32 %v1158, %v1169
        %s1172 = sld [smem:[#allocation2 + $0x44]]
        %v1173 = vstv %s1172
        %v1174 = vmul.f32 %v1173, %v251
        %v1175 = vadd.f32 %v1171, %v1174
        %s1176 = sld [smem:[#allocation2 + $0x54]]
        %v1177 = vstv %s1176
        %v1178 = vmul.f32 %v1177, %v253
        %v1179 = vadd.f32 %v1175, %v1178
        %s1180 = sld [smem:[#allocation2 + $0x64]]
        %v1181 = vstv %s1180
        %v1182 = vmul.f32 %v1181, %v255
        %v1183 = vadd.f32 %v1179, %v1182
        %s1184 = sld [smem:[#allocation2 + $0x74]]
        %v1185 = vstv %s1184
        %v1186 = vmul.f32 %v1185, %v257
        %v1187 = vadd.f32 %v1183, %v1186
        %s1188 = sld [smem:[#allocation2 + $0x46]]
        %v1189 = vstv %s1188
        %v1190 = vmul.f32 %v1189, %v251
        %1192 = vrot.lane.b32.xlu0 %v1190, 127
        %v1193 = vpop.permute.xlu0 %1192
        %v1195 = vadd.f32 %v1187, %v1193
        %s1196 = sld [smem:[#allocation2 + $0x56]]
        %v1197 = vstv %s1196
        %v1198 = vmul.f32 %v1197, %v253
        %1200 = vrot.lane.b32.xlu0 %v1198, 127
        %v1201 = vpop.permute.xlu0 %1200
        %v1203 = vadd.f32 %v1195, %v1201
        %s1204 = sld [smem:[#allocation2 + $0x66]]
        %v1205 = vstv %s1204
        %v1206 = vmul.f32 %v1205, %v255
        %1208 = vrot.lane.b32.xlu0 %v1206, 127
        %v1209 = vpop.permute.xlu0 %1208
        %v1211 = vadd.f32 %v1203, %v1209
        %s1212 = sld [smem:[#allocation2 + $0x76]]
        %v1213 = vstv %s1212
        %v1214 = vmul.f32 %v1213, %v257
        %1216 = vrot.lane.b32.xlu0 %v1214, 127
        %v1217 = vpop.permute.xlu0 %1216
        %v1219 = vadd.f32 %v1211, %v1217
        %s1220 = sld [smem:[#allocation2 + $0x4c]]
        %v1221 = vstv %s1220
        %v1222 = vmul.f32 %v1221, %v251
        %v1223 = vmul.f32 %v1221, %v252
        %v1226 = vrot.slane %v1222, 1
        %v1227 = vrot.slane %v1223, 1
        %v1228 = vsel %vm321, %v1226, %v1227
        %v1230 = vadd.f32 %v1219, %v1228
        %s1231 = sld [smem:[#allocation2 + $0x5c]]
        %v1232 = vstv %s1231
        %v1233 = vmul.f32 %v1232, %v253
        %v1234 = vmul.f32 %v1232, %v254
        %v1237 = vrot.slane %v1233, 1
        %v1238 = vrot.slane %v1234, 1
        %v1239 = vsel %vm321, %v1237, %v1238
        %v1241 = vadd.f32 %v1230, %v1239
        %s1242 = sld [smem:[#allocation2 + $0x6c]]
        %v1243 = vstv %s1242
        %v1244 = vmul.f32 %v1243, %v255
        %v1245 = vmul.f32 %v1243, %v256
        %v1248 = vrot.slane %v1244, 1
        %v1249 = vrot.slane %v1245, 1
        %v1250 = vsel %vm321, %v1248, %v1249
        %v1252 = vadd.f32 %v1241, %v1250
        %s1253 = sld [smem:[#allocation2 + $0x7c]]
        %v1254 = vstv %s1253
        %v1255 = vmul.f32 %v1254, %v257
        %v1256 = vmul.f32 %v1254, %v258
        %v1259 = vrot.slane %v1255, 1
        %v1260 = vrot.slane %v1256, 1
        %v1261 = vsel %vm321, %v1259, %v1260
        %v1263 = vadd.f32 %v1252, %v1261
        %s1264 = sld [smem:[#allocation2 + $0x4e]]
        %v1265 = vstv %s1264
        %v1266 = vmul.f32 %v1265, %v251
        %v1267 = vmul.f32 %v1265, %v252
        %v1270 = vrot.slane %v1266, 1
        %v1271 = vrot.slane %v1267, 1
        %v1272 = vsel %vm321, %v1270, %v1271
        %1273 = vrot.lane.b32.xlu0 %v1272, 127
        %v1274 = vpop.permute.xlu0 %1273
        %v1276 = vadd.f32 %v1263, %v1274
        %s1277 = sld [smem:[#allocation2 + $0x5e]]
        %v1278 = vstv %s1277
        %v1279 = vmul.f32 %v1278, %v253
        %v1280 = vmul.f32 %v1278, %v254
        %v1283 = vrot.slane %v1279, 1
        %v1284 = vrot.slane %v1280, 1
        %v1285 = vsel %vm321, %v1283, %v1284
        %1286 = vrot.lane.b32.xlu0 %v1285, 127
        %v1287 = vpop.permute.xlu0 %1286
        %v1289 = vadd.f32 %v1276, %v1287
        %s1290 = sld [smem:[#allocation2 + $0x6e]]
        %v1291 = vstv %s1290
        %v1292 = vmul.f32 %v1291, %v255
        %v1293 = vmul.f32 %v1291, %v256
        %v1296 = vrot.slane %v1292, 1
        %v1297 = vrot.slane %v1293, 1
        %v1298 = vsel %vm321, %v1296, %v1297
        %1299 = vrot.lane.b32.xlu0 %v1298, 127
        %v1300 = vpop.permute.xlu0 %1299
        %v1302 = vadd.f32 %v1289, %v1300
        %s1303 = sld [smem:[#allocation2 + $0x7e]]
        %v1304 = vstv %s1303
        %v1305 = vmul.f32 %v1304, %v257
        %v1306 = vmul.f32 %v1304, %v258
        %v1309 = vrot.slane %v1305, 1
        %v1310 = vrot.slane %v1306, 1
        %v1311 = vsel %vm321, %v1309, %v1310
        %1312 = vrot.lane.b32.xlu0 %v1311, 127
        %v1313 = vpop.permute.xlu0 %1312
        %v1315 = vadd.f32 %v1302, %v1313
        %s1316 = sld [smem:[#allocation2 + $0x45]]
        %v1317 = vstv %s1316
        %v1318 = vmul.f32 %v1317, %v259
        %v1319 = vadd.f32 %v1315, %v1318
        %s1320 = sld [smem:[#allocation2 + $0x55]]
        %v1321 = vstv %s1320
        %v1322 = vmul.f32 %v1321, %v261
        %v1323 = vadd.f32 %v1319, %v1322
        %s1324 = sld [smem:[#allocation2 + $0x65]]
        %v1325 = vstv %s1324
        %v1326 = vmul.f32 %v1325, %v263
        %v1327 = vadd.f32 %v1323, %v1326
        %s1328 = sld [smem:[#allocation2 + $0x75]]
        %v1329 = vstv %s1328
        %v1330 = vmul.f32 %v1329, %v265
        %v1331 = vadd.f32 %v1327, %v1330
        %s1332 = sld [smem:[#allocation2 + $0x47]]
        %v1333 = vstv %s1332
        %v1334 = vmul.f32 %v1333, %v259
        %1336 = vrot.lane.b32.xlu0 %v1334, 127
        %v1337 = vpop.permute.xlu0 %1336
        %v1339 = vadd.f32 %v1331, %v1337
        %s1340 = sld [smem:[#allocation2 + $0x57]]
        %v1341 = vstv %s1340
        %v1342 = vmul.f32 %v1341, %v261
        %1344 = vrot.lane.b32.xlu0 %v1342, 127
        %v1345 = vpop.permute.xlu0 %1344
        %v1347 = vadd.f32 %v1339, %v1345
        %s1348 = sld [smem:[#allocation2 + $0x67]]
        %v1349 = vstv %s1348
        %v1350 = vmul.f32 %v1349, %v263
        %1352 = vrot.lane.b32.xlu0 %v1350, 127
        %v1353 = vpop.permute.xlu0 %1352
        %v1355 = vadd.f32 %v1347, %v1353
        %s1356 = sld [smem:[#allocation2 + $0x77]]
        %v1357 = vstv %s1356
        %v1358 = vmul.f32 %v1357, %v265
        %1360 = vrot.lane.b32.xlu0 %v1358, 127
        %v1361 = vpop.permute.xlu0 %1360
        %v1363 = vadd.f32 %v1355, %v1361
        %s1364 = sld [smem:[#allocation2 + $0x4d]]
        %v1365 = vstv %s1364
        %v1366 = vmul.f32 %v1365, %v259
        %v1367 = vmul.f32 %v1365, %v260
        %v1370 = vrot.slane %v1366, 1
        %v1371 = vrot.slane %v1367, 1
        %v1372 = vsel %vm321, %v1370, %v1371
        %v1374 = vadd.f32 %v1363, %v1372
        %s1375 = sld [smem:[#allocation2 + $0x5d]]
        %v1376 = vstv %s1375
        %v1377 = vmul.f32 %v1376, %v261
        %v1378 = vmul.f32 %v1376, %v262
        %v1381 = vrot.slane %v1377, 1
        %v1382 = vrot.slane %v1378, 1
        %v1383 = vsel %vm321, %v1381, %v1382
        %v1385 = vadd.f32 %v1374, %v1383
        %s1386 = sld [smem:[#allocation2 + $0x6d]]
        %v1387 = vstv %s1386
        %v1388 = vmul.f32 %v1387, %v263
        %v1389 = vmul.f32 %v1387, %v264
        %v1392 = vrot.slane %v1388, 1
        %v1393 = vrot.slane %v1389, 1
        %v1394 = vsel %vm321, %v1392, %v1393
        %v1396 = vadd.f32 %v1385, %v1394
        %s1397 = sld [smem:[#allocation2 + $0x7d]]
        %v1398 = vstv %s1397
        %v1399 = vmul.f32 %v1398, %v265
        %v1400 = vmul.f32 %v1398, %v266
        %v1403 = vrot.slane %v1399, 1
        %v1404 = vrot.slane %v1400, 1
        %v1405 = vsel %vm321, %v1403, %v1404
        %v1407 = vadd.f32 %v1396, %v1405
        %s1408 = sld [smem:[#allocation2 + $0x4f]]
        %v1409 = vstv %s1408
        %v1410 = vmul.f32 %v1409, %v259
        %v1411 = vmul.f32 %v1409, %v260
        %v1414 = vrot.slane %v1410, 1
        %v1415 = vrot.slane %v1411, 1
        %v1416 = vsel %vm321, %v1414, %v1415
        %1417 = vrot.lane.b32.xlu0 %v1416, 127
        %v1418 = vpop.permute.xlu0 %1417
        %v1420 = vadd.f32 %v1407, %v1418
        %s1421 = sld [smem:[#allocation2 + $0x5f]]
        %v1422 = vstv %s1421
        %v1423 = vmul.f32 %v1422, %v261
        %v1424 = vmul.f32 %v1422, %v262
        %v1427 = vrot.slane %v1423, 1
        %v1428 = vrot.slane %v1424, 1
        %v1429 = vsel %vm321, %v1427, %v1428
        %1430 = vrot.lane.b32.xlu0 %v1429, 127
        %v1431 = vpop.permute.xlu0 %1430
        %v1433 = vadd.f32 %v1420, %v1431
        %s1434 = sld [smem:[#allocation2 + $0x6f]]
        %v1435 = vstv %s1434
        %v1436 = vmul.f32 %v1435, %v263
        %v1437 = vmul.f32 %v1435, %v264
        %v1440 = vrot.slane %v1436, 1
        %v1441 = vrot.slane %v1437, 1
        %v1442 = vsel %vm321, %v1440, %v1441
        %1443 = vrot.lane.b32.xlu0 %v1442, 127
        %v1444 = vpop.permute.xlu0 %1443
        %v1446 = vadd.f32 %v1433, %v1444
        %s1447 = sld [smem:[#allocation2 + $0x7f]]
        %v1448 = vstv %s1447
        %v1449 = vmul.f32 %v1448, %v265
        %v1450 = vmul.f32 %v1448, %v266
        %v1453 = vrot.slane %v1449, 1
        %v1454 = vrot.slane %v1450, 1
        %v1455 = vsel %vm321, %v1453, %v1454
        %1456 = vrot.lane.b32.xlu0 %v1455, 127
        %v1457 = vpop.permute.xlu0 %1456
        %v1459 = vadd.f32 %v1446, %v1457
        %v1460 = vsel %vm844, %v1459, 0.0
        %1461 = vadd.xlane.f32.xlu0 %v1460
        %v1462 = vpop.xlane.xlu0 %1461
        %v1463 = vrot.slane %v1462, 4
        %v1464 = vadd.f32 %v1462, %v1463
        %v1465 = vrot.slane %v1464, 2
        %v1466 = vadd.f32 %v1464, %v1465
        %v1467 = vrot.slane %v1466, 1
        %v1468 = vadd.f32 %v1466, %v1467
        %s1469 = vtos %v1468
        %v1470 = vstv %s1469
        %v1471 = vmul.f32 %v1470, 0.015625
        %v1472 = vsub.f32 %v1459, %v1471
        %v1473 = vmul.f32 %v1472, %v1472
        %v1474 = vsel %vm844, %v1473, 0.0
        %1475 = vadd.xlane.f32.xlu0 %v1474
        %v1476 = vpop.xlane.xlu0 %1475
        %v1477 = vrot.slane %v1476, 4
        %v1478 = vadd.f32 %v1476, %v1477
        %v1479 = vrot.slane %v1478, 2
        %v1480 = vadd.f32 %v1478, %v1479
        %v1481 = vrot.slane %v1480, 1
        %v1482 = vadd.f32 %v1480, %v1481
        %s1483 = vtos %v1482
        %v1484 = vstv %s1483
        %v1485 = vmul.f32 %v1484, 0.015625
        %v1486 = vadd.f32 %v1485, 1e-05
        %v1487 = vrsqrt.pop %v1486
        %s1488 = sld [smem:[#allocation5 + $0x1]]
        %v1489 = vstv %s1488
        %v1490 = vmul.f32 %v1487, %v1489
        %v1491 = vmul.f32 %v1472, %v1490
        %s1492 = sld [smem:[#allocation7 + $0x1]]
        %v1493 = vstv %s1492
        %v1494 = vadd.f32 %v1491, %v1493
        %vm1495 = vcmp.gt.f32.partialorder %v1494, 0.0
        %v1496 = vmul.f32 %v1494, 0.2
        %v1497 = vsel %vm1495, %v1494, %v1496
        %s1498 = scalar_lea.vmem %s229, 8 [#allocation8]
        %1499 = vst.msk [vmem:[%s1498] sm:$0xff] %vm844, %v1497
        %s1500 = sld [smem:[#allocation2 + $0x80]]
        %v1501 = vstv %s1500
        %v1502 = vmul.f32 %v1501, %v235
        %v1503 = vadd.f32 %v1502, 0.0
        %s1504 = sld [smem:[#allocation2 + $0x90]]
        %v1505 = vstv %s1504
        %v1506 = vmul.f32 %v1505, %v237
        %v1507 = vadd.f32 %v1503, %v1506
        %s1508 = sld [smem:[#allocation2 + $0xa0]]
        %v1509 = vstv %s1508
        %v1510 = vmul.f32 %v1509, %v239
        %v1511 = vadd.f32 %v1507, %v1510
        %s1512 = sld [smem:[#allocation2 + $0xb0]]
        %v1513 = vstv %s1512
        %v1514 = vmul.f32 %v1513, %v241
        %v1515 = vadd.f32 %v1511, %v1514
        %s1516 = sld [smem:[#allocation2 + $0x82]]
        %v1517 = vstv %s1516
        %v1518 = vmul.f32 %v1517, %v235
        %1520 = vrot.lane.b32.xlu0 %v1518, 127
        %v1521 = vpop.permute.xlu0 %1520
        %v1523 = vadd.f32 %v1515, %v1521
        %s1524 = sld [smem:[#allocation2 + $0x92]]
        %v1525 = vstv %s1524
        %v1526 = vmul.f32 %v1525, %v237
        %1528 = vrot.lane.b32.xlu0 %v1526, 127
        %v1529 = vpop.permute.xlu0 %1528
        %v1531 = vadd.f32 %v1523, %v1529
        %s1532 = sld [smem:[#allocation2 + $0xa2]]
        %v1533 = vstv %s1532
        %v1534 = vmul.f32 %v1533, %v239
        %1536 = vrot.lane.b32.xlu0 %v1534, 127
        %v1537 = vpop.permute.xlu0 %1536
        %v1539 = vadd.f32 %v1531, %v1537
        %s1540 = sld [smem:[#allocation2 + $0xb2]]
        %v1541 = vstv %s1540
        %v1542 = vmul.f32 %v1541, %v241
        %1544 = vrot.lane.b32.xlu0 %v1542, 127
        %v1545 = vpop.permute.xlu0 %1544
        %v1547 = vadd.f32 %v1539, %v1545
        %s1548 = sld [smem:[#allocation2 + $0x88]]
        %v1549 = vstv %s1548
        %v1550 = vmul.f32 %v1549, %v235
        %v1551 = vmul.f32 %v1549, %v236
        %v1554 = vrot.slane %v1550, 1
        %v1555 = vrot.slane %v1551, 1
        %v1556 = vsel %vm321, %v1554, %v1555
        %v1558 = vadd.f32 %v1547, %v1556
        %s1559 = sld [smem:[#allocation2 + $0x98]]
        %v1560 = vstv %s1559
        %v1561 = vmul.f32 %v1560, %v237
        %v1562 = vmul.f32 %v1560, %v238
        %v1565 = vrot.slane %v1561, 1
        %v1566 = vrot.slane %v1562, 1
        %v1567 = vsel %vm321, %v1565, %v1566
        %v1569 = vadd.f32 %v1558, %v1567
        %s1570 = sld [smem:[#allocation2 + $0xa8]]
        %v1571 = vstv %s1570
        %v1572 = vmul.f32 %v1571, %v239
        %v1573 = vmul.f32 %v1571, %v240
        %v1576 = vrot.slane %v1572, 1
        %v1577 = vrot.slane %v1573, 1
        %v1578 = vsel %vm321, %v1576, %v1577
        %v1580 = vadd.f32 %v1569, %v1578
        %s1581 = sld [smem:[#allocation2 + $0xb8]]
        %v1582 = vstv %s1581
        %v1583 = vmul.f32 %v1582, %v241
        %v1584 = vmul.f32 %v1582, %v242
        %v1587 = vrot.slane %v1583, 1
        %v1588 = vrot.slane %v1584, 1
        %v1589 = vsel %vm321, %v1587, %v1588
        %v1591 = vadd.f32 %v1580, %v1589
        %s1592 = sld [smem:[#allocation2 + $0x8a]]
        %v1593 = vstv %s1592
        %v1594 = vmul.f32 %v1593, %v235
        %v1595 = vmul.f32 %v1593, %v236
        %v1598 = vrot.slane %v1594, 1
        %v1599 = vrot.slane %v1595, 1
        %v1600 = vsel %vm321, %v1598, %v1599
        %1601 = vrot.lane.b32.xlu0 %v1600, 127
        %v1602 = vpop.permute.xlu0 %1601
        %v1604 = vadd.f32 %v1591, %v1602
        %s1605 = sld [smem:[#allocation2 + $0x9a]]
        %v1606 = vstv %s1605
        %v1607 = vmul.f32 %v1606, %v237
        %v1608 = vmul.f32 %v1606, %v238
        %v1611 = vrot.slane %v1607, 1
        %v1612 = vrot.slane %v1608, 1
        %v1613 = vsel %vm321, %v1611, %v1612
        %1614 = vrot.lane.b32.xlu0 %v1613, 127
        %v1615 = vpop.permute.xlu0 %1614
        %v1617 = vadd.f32 %v1604, %v1615
        %s1618 = sld [smem:[#allocation2 + $0xaa]]
        %v1619 = vstv %s1618
        %v1620 = vmul.f32 %v1619, %v239
        %v1621 = vmul.f32 %v1619, %v240
        %v1624 = vrot.slane %v1620, 1
        %v1625 = vrot.slane %v1621, 1
        %v1626 = vsel %vm321, %v1624, %v1625
        %1627 = vrot.lane.b32.xlu0 %v1626, 127
        %v1628 = vpop.permute.xlu0 %1627
        %v1630 = vadd.f32 %v1617, %v1628
        %s1631 = sld [smem:[#allocation2 + $0xba]]
        %v1632 = vstv %s1631
        %v1633 = vmul.f32 %v1632, %v241
        %v1634 = vmul.f32 %v1632, %v242
        %v1637 = vrot.slane %v1633, 1
        %v1638 = vrot.slane %v1634, 1
        %v1639 = vsel %vm321, %v1637, %v1638
        %1640 = vrot.lane.b32.xlu0 %v1639, 127
        %v1641 = vpop.permute.xlu0 %1640
        %v1643 = vadd.f32 %v1630, %v1641
        %s1644 = sld [smem:[#allocation2 + $0x81]]
        %v1645 = vstv %s1644
        %v1646 = vmul.f32 %v1645, %v243
        %v1647 = vadd.f32 %v1643, %v1646
        %s1648 = sld [smem:[#allocation2 + $0x91]]
        %v1649 = vstv %s1648
        %v1650 = vmul.f32 %v1649, %v245
        %v1651 = vadd.f32 %v1647, %v1650
        %s1652 = sld [smem:[#allocation2 + $0xa1]]
        %v1653 = vstv %s1652
        %v1654 = vmul.f32 %v1653, %v247
        %v1655 = vadd.f32 %v1651, %v1654
        %s1656 = sld [smem:[#allocation2 + $0xb1]]
        %v1657 = vstv %s1656
        %v1658 = vmul.f32 %v1657, %v249
        %v1659 = vadd.f32 %v1655, %v1658
        %s1660 = sld [smem:[#allocation2 + $0x83]]
        %v1661 = vstv %s1660
        %v1662 = vmul.f32 %v1661, %v243
        %1664 = vrot.lane.b32.xlu0 %v1662, 127
        %v1665 = vpop.permute.xlu0 %1664
        %v1667 = vadd.f32 %v1659, %v1665
        %s1668 = sld [smem:[#allocation2 + $0x93]]
        %v1669 = vstv %s1668
        %v1670 = vmul.f32 %v1669, %v245
        %1672 = vrot.lane.b32.xlu0 %v1670, 127
        %v1673 = vpop.permute.xlu0 %1672
        %v1675 = vadd.f32 %v1667, %v1673
        %s1676 = sld [smem:[#allocation2 + $0xa3]]
        %v1677 = vstv %s1676
        %v1678 = vmul.f32 %v1677, %v247
        %1680 = vrot.lane.b32.xlu0 %v1678, 127
        %v1681 = vpop.permute.xlu0 %1680
        %v1683 = vadd.f32 %v1675, %v1681
        %s1684 = sld [smem:[#allocation2 + $0xb3]]
        %v1685 = vstv %s1684
        %v1686 = vmul.f32 %v1685, %v249
        %1688 = vrot.lane.b32.xlu0 %v1686, 127
        %v1689 = vpop.permute.xlu0 %1688
        %v1691 = vadd.f32 %v1683, %v1689
        %s1692 = sld [smem:[#allocation2 + $0x89]]
        %v1693 = vstv %s1692
        %v1694 = vmul.f32 %v1693, %v243
        %v1695 = vmul.f32 %v1693, %v244
        %v1698 = vrot.slane %v1694, 1
        %v1699 = vrot.slane %v1695, 1
        %v1700 = vsel %vm321, %v1698, %v1699
        %v1702 = vadd.f32 %v1691, %v1700
        %s1703 = sld [smem:[#allocation2 + $0x99]]
        %v1704 = vstv %s1703
        %v1705 = vmul.f32 %v1704, %v245
        %v1706 = vmul.f32 %v1704, %v246
        %v1709 = vrot.slane %v1705, 1
        %v1710 = vrot.slane %v1706, 1
        %v1711 = vsel %vm321, %v1709, %v1710
        %v1713 = vadd.f32 %v1702, %v1711
        %s1714 = sld [smem:[#allocation2 + $0xa9]]
        %v1715 = vstv %s1714
        %v1716 = vmul.f32 %v1715, %v247
        %v1717 = vmul.f32 %v1715, %v248
        %v1720 = vrot.slane %v1716, 1
        %v1721 = vrot.slane %v1717, 1
        %v1722 = vsel %vm321, %v1720, %v1721
        %v1724 = vadd.f32 %v1713, %v1722
        %s1725 = sld [smem:[#allocation2 + $0xb9]]
        %v1726 = vstv %s1725
        %v1727 = vmul.f32 %v1726, %v249
        %v1728 = vmul.f32 %v1726, %v250
        %v1731 = vrot.slane %v1727, 1
        %v1732 = vrot.slane %v1728, 1
        %v1733 = vsel %vm321, %v1731, %v1732
        %v1735 = vadd.f32 %v1724, %v1733
        %s1736 = sld [smem:[#allocation2 + $0x8b]]
        %v1737 = vstv %s1736
        %v1738 = vmul.f32 %v1737, %v243
        %v1739 = vmul.f32 %v1737, %v244
        %v1742 = vrot.slane %v1738, 1
        %v1743 = vrot.slane %v1739, 1
        %v1744 = vsel %vm321, %v1742, %v1743
        %1745 = vrot.lane.b32.xlu0 %v1744, 127
        %v1746 = vpop.permute.xlu0 %1745
        %v1748 = vadd.f32 %v1735, %v1746
        %s1749 = sld [smem:[#allocation2 + $0x9b]]
        %v1750 = vstv %s1749
        %v1751 = vmul.f32 %v1750, %v245
        %v1752 = vmul.f32 %v1750, %v246
        %v1755 = vrot.slane %v1751, 1
        %v1756 = vrot.slane %v1752, 1
        %v1757 = vsel %vm321, %v1755, %v1756
        %1758 = vrot.lane.b32.xlu0 %v1757, 127
        %v1759 = vpop.permute.xlu0 %1758
        %v1761 = vadd.f32 %v1748, %v1759
        %s1762 = sld [smem:[#allocation2 + $0xab]]
        %v1763 = vstv %s1762
        %v1764 = vmul.f32 %v1763, %v247
        %v1765 = vmul.f32 %v1763, %v248
        %v1768 = vrot.slane %v1764, 1
        %v1769 = vrot.slane %v1765, 1
        %v1770 = vsel %vm321, %v1768, %v1769
        %1771 = vrot.lane.b32.xlu0 %v1770, 127
        %v1772 = vpop.permute.xlu0 %1771
        %v1774 = vadd.f32 %v1761, %v1772
        %s1775 = sld [smem:[#allocation2 + $0xbb]]
        %v1776 = vstv %s1775
        %v1777 = vmul.f32 %v1776, %v249
        %v1778 = vmul.f32 %v1776, %v250
        %v1781 = vrot.slane %v1777, 1
        %v1782 = vrot.slane %v1778, 1
        %v1783 = vsel %vm321, %v1781, %v1782
        %1784 = vrot.lane.b32.xlu0 %v1783, 127
        %v1785 = vpop.permute.xlu0 %1784
        %v1787 = vadd.f32 %v1774, %v1785
        %s1788 = sld [smem:[#allocation2 + $0x84]]
        %v1789 = vstv %s1788
        %v1790 = vmul.f32 %v1789, %v251
        %v1791 = vadd.f32 %v1787, %v1790
        %s1792 = sld [smem:[#allocation2 + $0x94]]
        %v1793 = vstv %s1792
        %v1794 = vmul.f32 %v1793, %v253
        %v1795 = vadd.f32 %v1791, %v1794
        %s1796 = sld [smem:[#allocation2 + $0xa4]]
        %v1797 = vstv %s1796
        %v1798 = vmul.f32 %v1797, %v255
        %v1799 = vadd.f32 %v1795, %v1798
        %s1800 = sld [smem:[#allocation2 + $0xb4]]
        %v1801 = vstv %s1800
        %v1802 = vmul.f32 %v1801, %v257
        %v1803 = vadd.f32 %v1799, %v1802
        %s1804 = sld [smem:[#allocation2 + $0x86]]
        %v1805 = vstv %s1804
        %v1806 = vmul.f32 %v1805, %v251
        %1808 = vrot.lane.b32.xlu0 %v1806, 127
        %v1809 = vpop.permute.xlu0 %1808
        %v1811 = vadd.f32 %v1803, %v1809
        %s1812 = sld [smem:[#allocation2 + $0x96]]
        %v1813 = vstv %s1812
        %v1814 = vmul.f32 %v1813, %v253
        %1816 = vrot.lane.b32.xlu0 %v1814, 127
        %v1817 = vpop.permute.xlu0 %1816
        %v1819 = vadd.f32 %v1811, %v1817
        %s1820 = sld [smem:[#allocation2 + $0xa6]]
        %v1821 = vstv %s1820
        %v1822 = vmul.f32 %v1821, %v255
        %1824 = vrot.lane.b32.xlu0 %v1822, 127
        %v1825 = vpop.permute.xlu0 %1824
        %v1827 = vadd.f32 %v1819, %v1825
        %s1828 = sld [smem:[#allocation2 + $0xb6]]
        %v1829 = vstv %s1828
        %v1830 = vmul.f32 %v1829, %v257
        %1832 = vrot.lane.b32.xlu0 %v1830, 127
        %v1833 = vpop.permute.xlu0 %1832
        %v1835 = vadd.f32 %v1827, %v1833
        %s1836 = sld [smem:[#allocation2 + $0x8c]]
        %v1837 = vstv %s1836
        %v1838 = vmul.f32 %v1837, %v251
        %v1839 = vmul.f32 %v1837, %v252
        %v1842 = vrot.slane %v1838, 1
        %v1843 = vrot.slane %v1839, 1
        %v1844 = vsel %vm321, %v1842, %v1843
        %v1846 = vadd.f32 %v1835, %v1844
        %s1847 = sld [smem:[#allocation2 + $0x9c]]
        %v1848 = vstv %s1847
        %v1849 = vmul.f32 %v1848, %v253
        %v1850 = vmul.f32 %v1848, %v254
        %v1853 = vrot.slane %v1849, 1
        %v1854 = vrot.slane %v1850, 1
        %v1855 = vsel %vm321, %v1853, %v1854
        %v1857 = vadd.f32 %v1846, %v1855
        %s1858 = sld [smem:[#allocation2 + $0xac]]
        %v1859 = vstv %s1858
        %v1860 = vmul.f32 %v1859, %v255
        %v1861 = vmul.f32 %v1859, %v256
        %v1864 = vrot.slane %v1860, 1
        %v1865 = vrot.slane %v1861, 1
        %v1866 = vsel %vm321, %v1864, %v1865
        %v1868 = vadd.f32 %v1857, %v1866
        %s1869 = sld [smem:[#allocation2 + $0xbc]]
        %v1870 = vstv %s1869
        %v1871 = vmul.f32 %v1870, %v257
        %v1872 = vmul.f32 %v1870, %v258
        %v1875 = vrot.slane %v1871, 1
        %v1876 = vrot.slane %v1872, 1
        %v1877 = vsel %vm321, %v1875, %v1876
        %v1879 = vadd.f32 %v1868, %v1877
        %s1880 = sld [smem:[#allocation2 + $0x8e]]
        %v1881 = vstv %s1880
        %v1882 = vmul.f32 %v1881, %v251
        %v1883 = vmul.f32 %v1881, %v252
        %v1886 = vrot.slane %v1882, 1
        %v1887 = vrot.slane %v1883, 1
        %v1888 = vsel %vm321, %v1886, %v1887
        %1889 = vrot.lane.b32.xlu0 %v1888, 127
        %v1890 = vpop.permute.xlu0 %1889
        %v1892 = vadd.f32 %v1879, %v1890
        %s1893 = sld [smem:[#allocation2 + $0x9e]]
        %v1894 = vstv %s1893
        %v1895 = vmul.f32 %v1894, %v253
        %v1896 = vmul.f32 %v1894, %v254
        %v1899 = vrot.slane %v1895, 1
        %v1900 = vrot.slane %v1896, 1
        %v1901 = vsel %vm321, %v1899, %v1900
        %1902 = vrot.lane.b32.xlu0 %v1901, 127
        %v1903 = vpop.permute.xlu0 %1902
        %v1905 = vadd.f32 %v1892, %v1903
        %s1906 = sld [smem:[#allocation2 + $0xae]]
        %v1907 = vstv %s1906
        %v1908 = vmul.f32 %v1907, %v255
        %v1909 = vmul.f32 %v1907, %v256
        %v1912 = vrot.slane %v1908, 1
        %v1913 = vrot.slane %v1909, 1
        %v1914 = vsel %vm321, %v1912, %v1913
        %1915 = vrot.lane.b32.xlu0 %v1914, 127
        %v1916 = vpop.permute.xlu0 %1915
        %v1918 = vadd.f32 %v1905, %v1916
        %s1919 = sld [smem:[#allocation2 + $0xbe]]
        %v1920 = vstv %s1919
        %v1921 = vmul.f32 %v1920, %v257
        %v1922 = vmul.f32 %v1920, %v258
        %v1925 = vrot.slane %v1921, 1
        %v1926 = vrot.slane %v1922, 1
        %v1927 = vsel %vm321, %v1925, %v1926
        %1928 = vrot.lane.b32.xlu0 %v1927, 127
        %v1929 = vpop.permute.xlu0 %1928
        %v1931 = vadd.f32 %v1918, %v1929
        %s1932 = sld [smem:[#allocation2 + $0x85]]
        %v1933 = vstv %s1932
        %v1934 = vmul.f32 %v1933, %v259
        %v1935 = vadd.f32 %v1931, %v1934
        %s1936 = sld [smem:[#allocation2 + $0x95]]
        %v1937 = vstv %s1936
        %v1938 = vmul.f32 %v1937, %v261
        %v1939 = vadd.f32 %v1935, %v1938
        %s1940 = sld [smem:[#allocation2 + $0xa5]]
        %v1941 = vstv %s1940
        %v1942 = vmul.f32 %v1941, %v263
        %v1943 = vadd.f32 %v1939, %v1942
        %s1944 = sld [smem:[#allocation2 + $0xb5]]
        %v1945 = vstv %s1944
        %v1946 = vmul.f32 %v1945, %v265
        %v1947 = vadd.f32 %v1943, %v1946
        %s1948 = sld [smem:[#allocation2 + $0x87]]
        %v1949 = vstv %s1948
        %v1950 = vmul.f32 %v1949, %v259
        %1952 = vrot.lane.b32.xlu0 %v1950, 127
        %v1953 = vpop.permute.xlu0 %1952
        %v1955 = vadd.f32 %v1947, %v1953
        %s1956 = sld [smem:[#allocation2 + $0x97]]
        %v1957 = vstv %s1956
        %v1958 = vmul.f32 %v1957, %v261
        %1960 = vrot.lane.b32.xlu0 %v1958, 127
        %v1961 = vpop.permute.xlu0 %1960
        %v1963 = vadd.f32 %v1955, %v1961
        %s1964 = sld [smem:[#allocation2 + $0xa7]]
        %v1965 = vstv %s1964
        %v1966 = vmul.f32 %v1965, %v263
        %1968 = vrot.lane.b32.xlu0 %v1966, 127
        %v1969 = vpop.permute.xlu0 %1968
        %v1971 = vadd.f32 %v1963, %v1969
        %s1972 = sld [smem:[#allocation2 + $0xb7]]
        %v1973 = vstv %s1972
        %v1974 = vmul.f32 %v1973, %v265
        %1976 = vrot.lane.b32.xlu0 %v1974, 127
        %v1977 = vpop.permute.xlu0 %1976
        %v1979 = vadd.f32 %v1971, %v1977
        %s1980 = sld [smem:[#allocation2 + $0x8d]]
        %v1981 = vstv %s1980
        %v1982 = vmul.f32 %v1981, %v259
        %v1983 = vmul.f32 %v1981, %v260
        %v1986 = vrot.slane %v1982, 1
        %v1987 = vrot.slane %v1983, 1
        %v1988 = vsel %vm321, %v1986, %v1987
        %v1990 = vadd.f32 %v1979, %v1988
        %s1991 = sld [smem:[#allocation2 + $0x9d]]
        %v1992 = vstv %s1991
        %v1993 = vmul.f32 %v1992, %v261
        %v1994 = vmul.f32 %v1992, %v262
        %v1997 = vrot.slane %v1993, 1
        %v1998 = vrot.slane %v1994, 1
        %v1999 = vsel %vm321, %v1997, %v1998
        %v2001 = vadd.f32 %v1990, %v1999
        %s2002 = sld [smem:[#allocation2 + $0xad]]
        %v2003 = vstv %s2002
        %v2004 = vmul.f32 %v2003, %v263
        %v2005 = vmul.f32 %v2003, %v264
        %v2008 = vrot.slane %v2004, 1
        %v2009 = vrot.slane %v2005, 1
        %v2010 = vsel %vm321, %v2008, %v2009
        %v2012 = vadd.f32 %v2001, %v2010
        %s2013 = sld [smem:[#allocation2 + $0xbd]]
        %v2014 = vstv %s2013
        %v2015 = vmul.f32 %v2014, %v265
        %v2016 = vmul.f32 %v2014, %v266
        %v2019 = vrot.slane %v2015, 1
        %v2020 = vrot.slane %v2016, 1
        %v2021 = vsel %vm321, %v2019, %v2020
        %v2023 = vadd.f32 %v2012, %v2021
        %s2024 = sld [smem:[#allocation2 + $0x8f]]
        %v2025 = vstv %s2024
        %v2026 = vmul.f32 %v2025, %v259
        %v2027 = vmul.f32 %v2025, %v260
        %v2030 = vrot.slane %v2026, 1
        %v2031 = vrot.slane %v2027, 1
        %v2032 = vsel %vm321, %v2030, %v2031
        %2033 = vrot.lane.b32.xlu0 %v2032, 127
        %v2034 = vpop.permute.xlu0 %2033
        %v2036 = vadd.f32 %v2023, %v2034
        %s2037 = sld [smem:[#allocation2 + $0x9f]]
        %v2038 = vstv %s2037
        %v2039 = vmul.f32 %v2038, %v261
        %v2040 = vmul.f32 %v2038, %v262
        %v2043 = vrot.slane %v2039, 1
        %v2044 = vrot.slane %v2040, 1
        %v2045 = vsel %vm321, %v2043, %v2044
        %2046 = vrot.lane.b32.xlu0 %v2045, 127
        %v2047 = vpop.permute.xlu0 %2046
        %v2049 = vadd.f32 %v2036, %v2047
        %s2050 = sld [smem:[#allocation2 + $0xaf]]
        %v2051 = vstv %s2050
        %v2052 = vmul.f32 %v2051, %v263
        %v2053 = vmul.f32 %v2051, %v264
        %v2056 = vrot.slane %v2052, 1
        %v2057 = vrot.slane %v2053, 1
        %v2058 = vsel %vm321, %v2056, %v2057
        %2059 = vrot.lane.b32.xlu0 %v2058, 127
        %v2060 = vpop.permute.xlu0 %2059
        %v2062 = vadd.f32 %v2049, %v2060
        %s2063 = sld [smem:[#allocation2 + $0xbf]]
        %v2064 = vstv %s2063
        %v2065 = vmul.f32 %v2064, %v265
        %v2066 = vmul.f32 %v2064, %v266
        %v2069 = vrot.slane %v2065, 1
        %v2070 = vrot.slane %v2066, 1
        %v2071 = vsel %vm321, %v2069, %v2070
        %2072 = vrot.lane.b32.xlu0 %v2071, 127
        %v2073 = vpop.permute.xlu0 %2072
        %v2075 = vadd.f32 %v2062, %v2073
        %v2076 = vsel %vm844, %v2075, 0.0
        %2077 = vadd.xlane.f32.xlu0 %v2076
        %v2078 = vpop.xlane.xlu0 %2077
        %v2079 = vrot.slane %v2078, 4
        %v2080 = vadd.f32 %v2078, %v2079
        %v2081 = vrot.slane %v2080, 2
        %v2082 = vadd.f32 %v2080, %v2081
        %v2083 = vrot.slane %v2082, 1
        %v2084 = vadd.f32 %v2082, %v2083
        %s2085 = vtos %v2084
        %v2086 = vstv %s2085
        %v2087 = vmul.f32 %v2086, 0.015625
        %v2088 = vsub.f32 %v2075, %v2087
        %v2089 = vmul.f32 %v2088, %v2088
        %v2090 = vsel %vm844, %v2089, 0.0
        %2091 = vadd.xlane.f32.xlu0 %v2090
        %v2092 = vpop.xlane.xlu0 %2091
        %v2093 = vrot.slane %v2092, 4
        %v2094 = vadd.f32 %v2092, %v2093
        %v2095 = vrot.slane %v2094, 2
        %v2096 = vadd.f32 %v2094, %v2095
        %v2097 = vrot.slane %v2096, 1
        %v2098 = vadd.f32 %v2096, %v2097
        %s2099 = vtos %v2098
        %v2100 = vstv %s2099
        %v2101 = vmul.f32 %v2100, 0.015625
        %v2102 = vadd.f32 %v2101, 1e-05
        %v2103 = vrsqrt.pop %v2102
        %s2104 = sld [smem:[#allocation5 + $0x2]]
        %v2105 = vstv %s2104
        %v2106 = vmul.f32 %v2103, %v2105
        %v2107 = vmul.f32 %v2088, %v2106
        %s2108 = sld [smem:[#allocation7 + $0x2]]
        %v2109 = vstv %s2108
        %v2110 = vadd.f32 %v2107, %v2109
        %vm2111 = vcmp.gt.f32.partialorder %v2110, 0.0
        %v2112 = vmul.f32 %v2110, 0.2
        %v2113 = vsel %vm2111, %v2110, %v2112
        %s2114 = scalar_lea.vmem %s229, 16 [#allocation8]
        %2115 = vst.msk [vmem:[%s2114] sm:$0xff] %vm844, %v2113
        %s2116 = sld [smem:[#allocation2 + $0xc0]]
        %v2117 = vstv %s2116
        %v2118 = vmul.f32 %v2117, %v235
        %v2119 = vadd.f32 %v2118, 0.0
        %s2120 = sld [smem:[#allocation2 + $0xd0]]
        %v2121 = vstv %s2120
        %v2122 = vmul.f32 %v2121, %v237
        %v2123 = vadd.f32 %v2119, %v2122
        %s2124 = sld [smem:[#allocation2 + $0xe0]]
        %v2125 = vstv %s2124
        %v2126 = vmul.f32 %v2125, %v239
        %v2127 = vadd.f32 %v2123, %v2126
        %s2128 = sld [smem:[#allocation2 + $0xf0]]
        %v2129 = vstv %s2128
        %v2130 = vmul.f32 %v2129, %v241
        %v2131 = vadd.f32 %v2127, %v2130
        %s2132 = sld [smem:[#allocation2 + $0xc2]]
        %v2133 = vstv %s2132
        %v2134 = vmul.f32 %v2133, %v235
        %2136 = vrot.lane.b32.xlu0 %v2134, 127
        %v2137 = vpop.permute.xlu0 %2136
        %v2139 = vadd.f32 %v2131, %v2137
        %s2140 = sld [smem:[#allocation2 + $0xd2]]
        %v2141 = vstv %s2140
        %v2142 = vmul.f32 %v2141, %v237
        %2144 = vrot.lane.b32.xlu0 %v2142, 127
        %v2145 = vpop.permute.xlu0 %2144
        %v2147 = vadd.f32 %v2139, %v2145
        %s2148 = sld [smem:[#allocation2 + $0xe2]]
        %v2149 = vstv %s2148
        %v2150 = vmul.f32 %v2149, %v239
        %2152 = vrot.lane.b32.xlu0 %v2150, 127
        %v2153 = vpop.permute.xlu0 %2152
        %v2155 = vadd.f32 %v2147, %v2153
        %s2156 = sld [smem:[#allocation2 + $0xf2]]
        %v2157 = vstv %s2156
        %v2158 = vmul.f32 %v2157, %v241
        %2160 = vrot.lane.b32.xlu0 %v2158, 127
        %v2161 = vpop.permute.xlu0 %2160
        %v2163 = vadd.f32 %v2155, %v2161
        %s2164 = sld [smem:[#allocation2 + $0xc8]]
        %v2165 = vstv %s2164
        %v2166 = vmul.f32 %v2165, %v235
        %v2167 = vmul.f32 %v2165, %v236
        %v2170 = vrot.slane %v2166, 1
        %v2171 = vrot.slane %v2167, 1
        %v2172 = vsel %vm321, %v2170, %v2171
        %v2174 = vadd.f32 %v2163, %v2172
        %s2175 = sld [smem:[#allocation2 + $0xd8]]
        %v2176 = vstv %s2175
        %v2177 = vmul.f32 %v2176, %v237
        %v2178 = vmul.f32 %v2176, %v238
        %v2181 = vrot.slane %v2177, 1
        %v2182 = vrot.slane %v2178, 1
        %v2183 = vsel %vm321, %v2181, %v2182
        %v2185 = vadd.f32 %v2174, %v2183
        %s2186 = sld [smem:[#allocation2 + $0xe8]]
        %v2187 = vstv %s2186
        %v2188 = vmul.f32 %v2187, %v239
        %v2189 = vmul.f32 %v2187, %v240
        %v2192 = vrot.slane %v2188, 1
        %v2193 = vrot.slane %v2189, 1
        %v2194 = vsel %vm321, %v2192, %v2193
        %v2196 = vadd.f32 %v2185, %v2194
        %s2197 = sld [smem:[#allocation2 + $0xf8]]
        %v2198 = vstv %s2197
        %v2199 = vmul.f32 %v2198, %v241
        %v2200 = vmul.f32 %v2198, %v242
        %v2203 = vrot.slane %v2199, 1
        %v2204 = vrot.slane %v2200, 1
        %v2205 = vsel %vm321, %v2203, %v2204
        %v2207 = vadd.f32 %v2196, %v2205
        %s2208 = sld [smem:[#allocation2 + $0xca]]
        %v2209 = vstv %s2208
        %v2210 = vmul.f32 %v2209, %v235
        %v2211 = vmul.f32 %v2209, %v236
        %v2214 = vrot.slane %v2210, 1
        %v2215 = vrot.slane %v2211, 1
        %v2216 = vsel %vm321, %v2214, %v2215
        %2217 = vrot.lane.b32.xlu0 %v2216, 127
        %v2218 = vpop.permute.xlu0 %2217
        %v2220 = vadd.f32 %v2207, %v2218
        %s2221 = sld [smem:[#allocation2 + $0xda]]
        %v2222 = vstv %s2221
        %v2223 = vmul.f32 %v2222, %v237
        %v2224 = vmul.f32 %v2222, %v238
        %v2227 = vrot.slane %v2223, 1
        %v2228 = vrot.slane %v2224, 1
        %v2229 = vsel %vm321, %v2227, %v2228
        %2230 = vrot.lane.b32.xlu0 %v2229, 127
        %v2231 = vpop.permute.xlu0 %2230
        %v2233 = vadd.f32 %v2220, %v2231
        %s2234 = sld [smem:[#allocation2 + $0xea]]
        %v2235 = vstv %s2234
        %v2236 = vmul.f32 %v2235, %v239
        %v2237 = vmul.f32 %v2235, %v240
        %v2240 = vrot.slane %v2236, 1
        %v2241 = vrot.slane %v2237, 1
        %v2242 = vsel %vm321, %v2240, %v2241
        %2243 = vrot.lane.b32.xlu0 %v2242, 127
        %v2244 = vpop.permute.xlu0 %2243
        %v2246 = vadd.f32 %v2233, %v2244
        %s2247 = sld [smem:[#allocation2 + $0xfa]]
        %v2248 = vstv %s2247
        %v2249 = vmul.f32 %v2248, %v241
        %v2250 = vmul.f32 %v2248, %v242
        %v2253 = vrot.slane %v2249, 1
        %v2254 = vrot.slane %v2250, 1
        %v2255 = vsel %vm321, %v2253, %v2254
        %2256 = vrot.lane.b32.xlu0 %v2255, 127
        %v2257 = vpop.permute.xlu0 %2256
        %v2259 = vadd.f32 %v2246, %v2257
        %s2260 = sld [smem:[#allocation2 + $0xc1]]
        %v2261 = vstv %s2260
        %v2262 = vmul.f32 %v2261, %v243
        %v2263 = vadd.f32 %v2259, %v2262
        %s2264 = sld [smem:[#allocation2 + $0xd1]]
        %v2265 = vstv %s2264
        %v2266 = vmul.f32 %v2265, %v245
        %v2267 = vadd.f32 %v2263, %v2266
        %s2268 = sld [smem:[#allocation2 + $0xe1]]
        %v2269 = vstv %s2268
        %v2270 = vmul.f32 %v2269, %v247
        %v2271 = vadd.f32 %v2267, %v2270
        %s2272 = sld [smem:[#allocation2 + $0xf1]]
        %v2273 = vstv %s2272
        %v2274 = vmul.f32 %v2273, %v249
        %v2275 = vadd.f32 %v2271, %v2274
        %s2276 = sld [smem:[#allocation2 + $0xc3]]
        %v2277 = vstv %s2276
        %v2278 = vmul.f32 %v2277, %v243
        %2280 = vrot.lane.b32.xlu0 %v2278, 127
        %v2281 = vpop.permute.xlu0 %2280
        %v2283 = vadd.f32 %v2275, %v2281
        %s2284 = sld [smem:[#allocation2 + $0xd3]]
        %v2285 = vstv %s2284
        %v2286 = vmul.f32 %v2285, %v245
        %2288 = vrot.lane.b32.xlu0 %v2286, 127
        %v2289 = vpop.permute.xlu0 %2288
        %v2291 = vadd.f32 %v2283, %v2289
        %s2292 = sld [smem:[#allocation2 + $0xe3]]
        %v2293 = vstv %s2292
        %v2294 = vmul.f32 %v2293, %v247
        %2296 = vrot.lane.b32.xlu0 %v2294, 127
        %v2297 = vpop.permute.xlu0 %2296
        %v2299 = vadd.f32 %v2291, %v2297
        %s2300 = sld [smem:[#allocation2 + $0xf3]]
        %v2301 = vstv %s2300
        %v2302 = vmul.f32 %v2301, %v249
        %2304 = vrot.lane.b32.xlu0 %v2302, 127
        %v2305 = vpop.permute.xlu0 %2304
        %v2307 = vadd.f32 %v2299, %v2305
        %s2308 = sld [smem:[#allocation2 + $0xc9]]
        %v2309 = vstv %s2308
        %v2310 = vmul.f32 %v2309, %v243
        %v2311 = vmul.f32 %v2309, %v244
        %v2314 = vrot.slane %v2310, 1
        %v2315 = vrot.slane %v2311, 1
        %v2316 = vsel %vm321, %v2314, %v2315
        %v2318 = vadd.f32 %v2307, %v2316
        %s2319 = sld [smem:[#allocation2 + $0xd9]]
        %v2320 = vstv %s2319
        %v2321 = vmul.f32 %v2320, %v245
        %v2322 = vmul.f32 %v2320, %v246
        %v2325 = vrot.slane %v2321, 1
        %v2326 = vrot.slane %v2322, 1
        %v2327 = vsel %vm321, %v2325, %v2326
        %v2329 = vadd.f32 %v2318, %v2327
        %s2330 = sld [smem:[#allocation2 + $0xe9]]
        %v2331 = vstv %s2330
        %v2332 = vmul.f32 %v2331, %v247
        %v2333 = vmul.f32 %v2331, %v248
        %v2336 = vrot.slane %v2332, 1
        %v2337 = vrot.slane %v2333, 1
        %v2338 = vsel %vm321, %v2336, %v2337
        %v2340 = vadd.f32 %v2329, %v2338
        %s2341 = sld [smem:[#allocation2 + $0xf9]]
        %v2342 = vstv %s2341
        %v2343 = vmul.f32 %v2342, %v249
        %v2344 = vmul.f32 %v2342, %v250
        %v2347 = vrot.slane %v2343, 1
        %v2348 = vrot.slane %v2344, 1
        %v2349 = vsel %vm321, %v2347, %v2348
        %v2351 = vadd.f32 %v2340, %v2349
        %s2352 = sld [smem:[#allocation2 + $0xcb]]
        %v2353 = vstv %s2352
        %v2354 = vmul.f32 %v2353, %v243
        %v2355 = vmul.f32 %v2353, %v244
        %v2358 = vrot.slane %v2354, 1
        %v2359 = vrot.slane %v2355, 1
        %v2360 = vsel %vm321, %v2358, %v2359
        %2361 = vrot.lane.b32.xlu0 %v2360, 127
        %v2362 = vpop.permute.xlu0 %2361
        %v2364 = vadd.f32 %v2351, %v2362
        %s2365 = sld [smem:[#allocation2 + $0xdb]]
        %v2366 = vstv %s2365
        %v2367 = vmul.f32 %v2366, %v245
        %v2368 = vmul.f32 %v2366, %v246
        %v2371 = vrot.slane %v2367, 1
        %v2372 = vrot.slane %v2368, 1
        %v2373 = vsel %vm321, %v2371, %v2372
        %2374 = vrot.lane.b32.xlu0 %v2373, 127
        %v2375 = vpop.permute.xlu0 %2374
        %v2377 = vadd.f32 %v2364, %v2375
        %s2378 = sld [smem:[#allocation2 + $0xeb]]
        %v2379 = vstv %s2378
        %v2380 = vmul.f32 %v2379, %v247
        %v2381 = vmul.f32 %v2379, %v248
        %v2384 = vrot.slane %v2380, 1
        %v2385 = vrot.slane %v2381, 1
        %v2386 = vsel %vm321, %v2384, %v2385
        %2387 = vrot.lane.b32.xlu0 %v2386, 127
        %v2388 = vpop.permute.xlu0 %2387
        %v2390 = vadd.f32 %v2377, %v2388
        %s2391 = sld [smem:[#allocation2 + $0xfb]]
        %v2392 = vstv %s2391
        %v2393 = vmul.f32 %v2392, %v249
        %v2394 = vmul.f32 %v2392, %v250
        %v2397 = vrot.slane %v2393, 1
        %v2398 = vrot.slane %v2394, 1
        %v2399 = vsel %vm321, %v2397, %v2398
        %2400 = vrot.lane.b32.xlu0 %v2399, 127
        %v2401 = vpop.permute.xlu0 %2400
        %v2403 = vadd.f32 %v2390, %v2401
        %s2404 = sld [smem:[#allocation2 + $0xc4]]
        %v2405 = vstv %s2404
        %v2406 = vmul.f32 %v2405, %v251
        %v2407 = vadd.f32 %v2403, %v2406
        %s2408 = sld [smem:[#allocation2 + $0xd4]]
        %v2409 = vstv %s2408
        %v2410 = vmul.f32 %v2409, %v253
        %v2411 = vadd.f32 %v2407, %v2410
        %s2412 = sld [smem:[#allocation2 + $0xe4]]
        %v2413 = vstv %s2412
        %v2414 = vmul.f32 %v2413, %v255
        %v2415 = vadd.f32 %v2411, %v2414
        %s2416 = sld [smem:[#allocation2 + $0xf4]]
        %v2417 = vstv %s2416
        %v2418 = vmul.f32 %v2417, %v257
        %v2419 = vadd.f32 %v2415, %v2418
        %s2420 = sld [smem:[#allocation2 + $0xc6]]
        %v2421 = vstv %s2420
        %v2422 = vmul.f32 %v2421, %v251
        %2424 = vrot.lane.b32.xlu0 %v2422, 127
        %v2425 = vpop.permute.xlu0 %2424
        %v2427 = vadd.f32 %v2419, %v2425
        %s2428 = sld [smem:[#allocation2 + $0xd6]]
        %v2429 = vstv %s2428
        %v2430 = vmul.f32 %v2429, %v253
        %2432 = vrot.lane.b32.xlu0 %v2430, 127
        %v2433 = vpop.permute.xlu0 %2432
        %v2435 = vadd.f32 %v2427, %v2433
        %s2436 = sld [smem:[#allocation2 + $0xe6]]
        %v2437 = vstv %s2436
        %v2438 = vmul.f32 %v2437, %v255
        %2440 = vrot.lane.b32.xlu0 %v2438, 127
        %v2441 = vpop.permute.xlu0 %2440
        %v2443 = vadd.f32 %v2435, %v2441
        %s2444 = sld [smem:[#allocation2 + $0xf6]]
        %v2445 = vstv %s2444
        %v2446 = vmul.f32 %v2445, %v257
        %2448 = vrot.lane.b32.xlu0 %v2446, 127
        %v2449 = vpop.permute.xlu0 %2448
        %v2451 = vadd.f32 %v2443, %v2449
        %s2452 = sld [smem:[#allocation2 + $0xcc]]
        %v2453 = vstv %s2452
        %v2454 = vmul.f32 %v2453, %v251
        %v2455 = vmul.f32 %v2453, %v252
        %v2458 = vrot.slane %v2454, 1
        %v2459 = vrot.slane %v2455, 1
        %v2460 = vsel %vm321, %v2458, %v2459
        %v2462 = vadd.f32 %v2451, %v2460
        %s2463 = sld [smem:[#allocation2 + $0xdc]]
        %v2464 = vstv %s2463
        %v2465 = vmul.f32 %v2464, %v253
        %v2466 = vmul.f32 %v2464, %v254
        %v2469 = vrot.slane %v2465, 1
        %v2470 = vrot.slane %v2466, 1
        %v2471 = vsel %vm321, %v2469, %v2470
        %v2473 = vadd.f32 %v2462, %v2471
        %s2474 = sld [smem:[#allocation2 + $0xec]]
        %v2475 = vstv %s2474
        %v2476 = vmul.f32 %v2475, %v255
        %v2477 = vmul.f32 %v2475, %v256
        %v2480 = vrot.slane %v2476, 1
        %v2481 = vrot.slane %v2477, 1
        %v2482 = vsel %vm321, %v2480, %v2481
        %v2484 = vadd.f32 %v2473, %v2482
        %s2485 = sld [smem:[#allocation2 + $0xfc]]
        %v2486 = vstv %s2485
        %v2487 = vmul.f32 %v2486, %v257
        %v2488 = vmul.f32 %v2486, %v258
        %v2491 = vrot.slane %v2487, 1
        %v2492 = vrot.slane %v2488, 1
        %v2493 = vsel %vm321, %v2491, %v2492
        %v2495 = vadd.f32 %v2484, %v2493
        %s2496 = sld [smem:[#allocation2 + $0xce]]
        %v2497 = vstv %s2496
        %v2498 = vmul.f32 %v2497, %v251
        %v2499 = vmul.f32 %v2497, %v252
        %v2502 = vrot.slane %v2498, 1
        %v2503 = vrot.slane %v2499, 1
        %v2504 = vsel %vm321, %v2502, %v2503
        %2505 = vrot.lane.b32.xlu0 %v2504, 127
        %v2506 = vpop.permute.xlu0 %2505
        %v2508 = vadd.f32 %v2495, %v2506
        %s2509 = sld [smem:[#allocation2 + $0xde]]
        %v2510 = vstv %s2509
        %v2511 = vmul.f32 %v2510, %v253
        %v2512 = vmul.f32 %v2510, %v254
        %v2515 = vrot.slane %v2511, 1
        %v2516 = vrot.slane %v2512, 1
        %v2517 = vsel %vm321, %v2515, %v2516
        %2518 = vrot.lane.b32.xlu0 %v2517, 127
        %v2519 = vpop.permute.xlu0 %2518
        %v2521 = vadd.f32 %v2508, %v2519
        %s2522 = sld [smem:[#allocation2 + $0xee]]
        %v2523 = vstv %s2522
        %v2524 = vmul.f32 %v2523, %v255
        %v2525 = vmul.f32 %v2523, %v256
        %v2528 = vrot.slane %v2524, 1
        %v2529 = vrot.slane %v2525, 1
        %v2530 = vsel %vm321, %v2528, %v2529
        %2531 = vrot.lane.b32.xlu0 %v2530, 127
        %v2532 = vpop.permute.xlu0 %2531
        %v2534 = vadd.f32 %v2521, %v2532
        %s2535 = sld [smem:[#allocation2 + $0xfe]]
        %v2536 = vstv %s2535
        %v2537 = vmul.f32 %v2536, %v257
        %v2538 = vmul.f32 %v2536, %v258
        %v2541 = vrot.slane %v2537, 1
        %v2542 = vrot.slane %v2538, 1
        %v2543 = vsel %vm321, %v2541, %v2542
        %2544 = vrot.lane.b32.xlu0 %v2543, 127
        %v2545 = vpop.permute.xlu0 %2544
        %v2547 = vadd.f32 %v2534, %v2545
        %s2548 = sld [smem:[#allocation2 + $0xc5]]
        %v2549 = vstv %s2548
        %v2550 = vmul.f32 %v2549, %v259
        %v2551 = vadd.f32 %v2547, %v2550
        %s2552 = sld [smem:[#allocation2 + $0xd5]]
        %v2553 = vstv %s2552
        %v2554 = vmul.f32 %v2553, %v261
        %v2555 = vadd.f32 %v2551, %v2554
        %s2556 = sld [smem:[#allocation2 + $0xe5]]
        %v2557 = vstv %s2556
        %v2558 = vmul.f32 %v2557, %v263
        %v2559 = vadd.f32 %v2555, %v2558
        %s2560 = sld [smem:[#allocation2 + $0xf5]]
        %v2561 = vstv %s2560
        %v2562 = vmul.f32 %v2561, %v265
        %v2563 = vadd.f32 %v2559, %v2562
        %s2564 = sld [smem:[#allocation2 + $0xc7]]
        %v2565 = vstv %s2564
        %v2566 = vmul.f32 %v2565, %v259
        %2568 = vrot.lane.b32.xlu0 %v2566, 127
        %v2569 = vpop.permute.xlu0 %2568
        %v2571 = vadd.f32 %v2563, %v2569
        %s2572 = sld [smem:[#allocation2 + $0xd7]]
        %v2573 = vstv %s2572
        %v2574 = vmul.f32 %v2573, %v261
        %2576 = vrot.lane.b32.xlu0 %v2574, 127
        %v2577 = vpop.permute.xlu0 %2576
        %v2579 = vadd.f32 %v2571, %v2577
        %s2580 = sld [smem:[#allocation2 + $0xe7]]
        %v2581 = vstv %s2580
        %v2582 = vmul.f32 %v2581, %v263
        %2584 = vrot.lane.b32.xlu0 %v2582, 127
        %v2585 = vpop.permute.xlu0 %2584
        %v2587 = vadd.f32 %v2579, %v2585
        %s2588 = sld [smem:[#allocation2 + $0xf7]]
        %v2589 = vstv %s2588
        %v2590 = vmul.f32 %v2589, %v265
        %2592 = vrot.lane.b32.xlu0 %v2590, 127
        %v2593 = vpop.permute.xlu0 %2592
        %v2595 = vadd.f32 %v2587, %v2593
        %s2596 = sld [smem:[#allocation2 + $0xcd]]
        %v2597 = vstv %s2596
        %v2598 = vmul.f32 %v2597, %v259
        %v2599 = vmul.f32 %v2597, %v260
        %v2602 = vrot.slane %v2598, 1
        %v2603 = vrot.slane %v2599, 1
        %v2604 = vsel %vm321, %v2602, %v2603
        %v2606 = vadd.f32 %v2595, %v2604
        %s2607 = sld [smem:[#allocation2 + $0xdd]]
        %v2608 = vstv %s2607
        %v2609 = vmul.f32 %v2608, %v261
        %v2610 = vmul.f32 %v2608, %v262
        %v2613 = vrot.slane %v2609, 1
        %v2614 = vrot.slane %v2610, 1
        %v2615 = vsel %vm321, %v2613, %v2614
        %v2617 = vadd.f32 %v2606, %v2615
        %s2618 = sld [smem:[#allocation2 + $0xed]]
        %v2619 = vstv %s2618
        %v2620 = vmul.f32 %v2619, %v263
        %v2621 = vmul.f32 %v2619, %v264
        %v2624 = vrot.slane %v2620, 1
        %v2625 = vrot.slane %v2621, 1
        %v2626 = vsel %vm321, %v2624, %v2625
        %v2628 = vadd.f32 %v2617, %v2626
        %s2629 = sld [smem:[#allocation2 + $0xfd]]
        %v2630 = vstv %s2629
        %v2631 = vmul.f32 %v2630, %v265
        %v2632 = vmul.f32 %v2630, %v266
        %v2635 = vrot.slane %v2631, 1
        %v2636 = vrot.slane %v2632, 1
        %v2637 = vsel %vm321, %v2635, %v2636
        %v2639 = vadd.f32 %v2628, %v2637
        %s2640 = sld [smem:[#allocation2 + $0xcf]]
        %v2641 = vstv %s2640
        %v2642 = vmul.f32 %v2641, %v259
        %v2643 = vmul.f32 %v2641, %v260
        %v2646 = vrot.slane %v2642, 1
        %v2647 = vrot.slane %v2643, 1
        %v2648 = vsel %vm321, %v2646, %v2647
        %2649 = vrot.lane.b32.xlu0 %v2648, 127
        %v2650 = vpop.permute.xlu0 %2649
        %v2652 = vadd.f32 %v2639, %v2650
        %s2653 = sld [smem:[#allocation2 + $0xdf]]
        %v2654 = vstv %s2653
        %v2655 = vmul.f32 %v2654, %v261
        %v2656 = vmul.f32 %v2654, %v262
        %v2659 = vrot.slane %v2655, 1
        %v2660 = vrot.slane %v2656, 1
        %v2661 = vsel %vm321, %v2659, %v2660
        %2662 = vrot.lane.b32.xlu0 %v2661, 127
        %v2663 = vpop.permute.xlu0 %2662
        %v2665 = vadd.f32 %v2652, %v2663
        %s2666 = sld [smem:[#allocation2 + $0xef]]
        %v2667 = vstv %s2666
        %v2668 = vmul.f32 %v2667, %v263
        %v2669 = vmul.f32 %v2667, %v264
        %v2672 = vrot.slane %v2668, 1
        %v2673 = vrot.slane %v2669, 1
        %v2674 = vsel %vm321, %v2672, %v2673
        %2675 = vrot.lane.b32.xlu0 %v2674, 127
        %v2676 = vpop.permute.xlu0 %2675
        %v2678 = vadd.f32 %v2665, %v2676
        %s2679 = sld [smem:[#allocation2 + $0xff]]
        %v2680 = vstv %s2679
        %v2681 = vmul.f32 %v2680, %v265
        %v2682 = vmul.f32 %v2680, %v266
        %v2685 = vrot.slane %v2681, 1
        %v2686 = vrot.slane %v2682, 1
        %v2687 = vsel %vm321, %v2685, %v2686
        %2688 = vrot.lane.b32.xlu0 %v2687, 127
        %v2689 = vpop.permute.xlu0 %2688
        %v2691 = vadd.f32 %v2678, %v2689
        %v2692 = vsel %vm844, %v2691, 0.0
        %2693 = vadd.xlane.f32.xlu0 %v2692
        %v2694 = vpop.xlane.xlu0 %2693
        %v2695 = vrot.slane %v2694, 4
        %v2696 = vadd.f32 %v2694, %v2695
        %v2697 = vrot.slane %v2696, 2
        %v2698 = vadd.f32 %v2696, %v2697
        %v2699 = vrot.slane %v2698, 1
        %v2700 = vadd.f32 %v2698, %v2699
        %s2701 = vtos %v2700
        %v2702 = vstv %s2701
        %v2703 = vmul.f32 %v2702, 0.015625
        %v2704 = vsub.f32 %v2691, %v2703
        %v2705 = vmul.f32 %v2704, %v2704
        %v2706 = vsel %vm844, %v2705, 0.0
        %2707 = vadd.xlane.f32.xlu0 %v2706
        %v2708 = vpop.xlane.xlu0 %2707
        %v2709 = vrot.slane %v2708, 4
        %v2710 = vadd.f32 %v2708, %v2709
        %v2711 = vrot.slane %v2710, 2
        %v2712 = vadd.f32 %v2710, %v2711
        %v2713 = vrot.slane %v2712, 1
        %v2714 = vadd.f32 %v2712, %v2713
        %s2715 = vtos %v2714
        %v2716 = vstv %s2715
        %v2717 = vmul.f32 %v2716, 0.015625
        %v2718 = vadd.f32 %v2717, 1e-05
        %v2719 = vrsqrt.pop %v2718
        %s2720 = sld [smem:[#allocation5 + $0x3]]
        %v2721 = vstv %s2720
        %v2722 = vmul.f32 %v2719, %v2721
        %v2723 = vmul.f32 %v2704, %v2722
        %s2724 = sld [smem:[#allocation7 + $0x3]]
        %v2725 = vstv %s2724
        %v2726 = vadd.f32 %v2723, %v2725
        %vm2727 = vcmp.gt.f32.partialorder %v2726, 0.0
        %v2728 = vmul.f32 %v2726, 0.2
        %v2729 = vsel %vm2727, %v2726, %v2728
        %s2730 = scalar_lea.vmem %s229, 24 [#allocation8]
        %2731 = vst.msk [vmem:[%s2730] sm:$0xff] %vm844, %v2729
        %s2732 = sld [smem:[#allocation2 + $0x100]]
        %v2733 = vstv %s2732
        %v2734 = vmul.f32 %v2733, %v235
        %v2735 = vadd.f32 %v2734, 0.0
        %s2736 = sld [smem:[#allocation2 + $0x110]]
        %v2737 = vstv %s2736
        %v2738 = vmul.f32 %v2737, %v237
        %v2739 = vadd.f32 %v2735, %v2738
        %s2740 = sld [smem:[#allocation2 + $0x120]]
        %v2741 = vstv %s2740
        %v2742 = vmul.f32 %v2741, %v239
        %v2743 = vadd.f32 %v2739, %v2742
        %s2744 = sld [smem:[#allocation2 + $0x130]]
        %v2745 = vstv %s2744
        %v2746 = vmul.f32 %v2745, %v241
        %v2747 = vadd.f32 %v2743, %v2746
        %s2748 = sld [smem:[#allocation2 + $0x102]]
        %v2749 = vstv %s2748
        %v2750 = vmul.f32 %v2749, %v235
        %2752 = vrot.lane.b32.xlu0 %v2750, 127
        %v2753 = vpop.permute.xlu0 %2752
        %v2755 = vadd.f32 %v2747, %v2753
        %s2756 = sld [smem:[#allocation2 + $0x112]]
        %v2757 = vstv %s2756
        %v2758 = vmul.f32 %v2757, %v237
        %2760 = vrot.lane.b32.xlu0 %v2758, 127
        %v2761 = vpop.permute.xlu0 %2760
        %v2763 = vadd.f32 %v2755, %v2761
        %s2764 = sld [smem:[#allocation2 + $0x122]]
        %v2765 = vstv %s2764
        %v2766 = vmul.f32 %v2765, %v239
        %2768 = vrot.lane.b32.xlu0 %v2766, 127
        %v2769 = vpop.permute.xlu0 %2768
        %v2771 = vadd.f32 %v2763, %v2769
        %s2772 = sld [smem:[#allocation2 + $0x132]]
        %v2773 = vstv %s2772
        %v2774 = vmul.f32 %v2773, %v241
        %2776 = vrot.lane.b32.xlu0 %v2774, 127
        %v2777 = vpop.permute.xlu0 %2776
        %v2779 = vadd.f32 %v2771, %v2777
        %s2780 = sld [smem:[#allocation2 + $0x108]]
        %v2781 = vstv %s2780
        %v2782 = vmul.f32 %v2781, %v235
        %v2783 = vmul.f32 %v2781, %v236
        %v2786 = vrot.slane %v2782, 1
        %v2787 = vrot.slane %v2783, 1
        %v2788 = vsel %vm321, %v2786, %v2787
        %v2790 = vadd.f32 %v2779, %v2788
        %s2791 = sld [smem:[#allocation2 + $0x118]]
        %v2792 = vstv %s2791
        %v2793 = vmul.f32 %v2792, %v237
        %v2794 = vmul.f32 %v2792, %v238
        %v2797 = vrot.slane %v2793, 1
        %v2798 = vrot.slane %v2794, 1
        %v2799 = vsel %vm321, %v2797, %v2798
        %v2801 = vadd.f32 %v2790, %v2799
        %s2802 = sld [smem:[#allocation2 + $0x128]]
        %v2803 = vstv %s2802
        %v2804 = vmul.f32 %v2803, %v239
        %v2805 = vmul.f32 %v2803, %v240
        %v2808 = vrot.slane %v2804, 1
        %v2809 = vrot.slane %v2805, 1
        %v2810 = vsel %vm321, %v2808, %v2809
        %v2812 = vadd.f32 %v2801, %v2810
        %s2813 = sld [smem:[#allocation2 + $0x138]]
        %v2814 = vstv %s2813
        %v2815 = vmul.f32 %v2814, %v241
        %v2816 = vmul.f32 %v2814, %v242
        %v2819 = vrot.slane %v2815, 1
        %v2820 = vrot.slane %v2816, 1
        %v2821 = vsel %vm321, %v2819, %v2820
        %v2823 = vadd.f32 %v2812, %v2821
        %s2824 = sld [smem:[#allocation2 + $0x10a]]
        %v2825 = vstv %s2824
        %v2826 = vmul.f32 %v2825, %v235
        %v2827 = vmul.f32 %v2825, %v236
        %v2830 = vrot.slane %v2826, 1
        %v2831 = vrot.slane %v2827, 1
        %v2832 = vsel %vm321, %v2830, %v2831
        %2833 = vrot.lane.b32.xlu0 %v2832, 127
        %v2834 = vpop.permute.xlu0 %2833
        %v2836 = vadd.f32 %v2823, %v2834
        %s2837 = sld [smem:[#allocation2 + $0x11a]]
        %v2838 = vstv %s2837
        %v2839 = vmul.f32 %v2838, %v237
        %v2840 = vmul.f32 %v2838, %v238
        %v2843 = vrot.slane %v2839, 1
        %v2844 = vrot.slane %v2840, 1
        %v2845 = vsel %vm321, %v2843, %v2844
        %2846 = vrot.lane.b32.xlu0 %v2845, 127
        %v2847 = vpop.permute.xlu0 %2846
        %v2849 = vadd.f32 %v2836, %v2847
        %s2850 = sld [smem:[#allocation2 + $0x12a]]
        %v2851 = vstv %s2850
        %v2852 = vmul.f32 %v2851, %v239
        %v2853 = vmul.f32 %v2851, %v240
        %v2856 = vrot.slane %v2852, 1
        %v2857 = vrot.slane %v2853, 1
        %v2858 = vsel %vm321, %v2856, %v2857
        %2859 = vrot.lane.b32.xlu0 %v2858, 127
        %v2860 = vpop.permute.xlu0 %2859
        %v2862 = vadd.f32 %v2849, %v2860
        %s2863 = sld [smem:[#allocation2 + $0x13a]]
        %v2864 = vstv %s2863
        %v2865 = vmul.f32 %v2864, %v241
        %v2866 = vmul.f32 %v2864, %v242
        %v2869 = vrot.slane %v2865, 1
        %v2870 = vrot.slane %v2866, 1
        %v2871 = vsel %vm321, %v2869, %v2870
        %2872 = vrot.lane.b32.xlu0 %v2871, 127
        %v2873 = vpop.permute.xlu0 %2872
        %v2875 = vadd.f32 %v2862, %v2873
        %s2876 = sld [smem:[#allocation2 + $0x101]]
        %v2877 = vstv %s2876
        %v2878 = vmul.f32 %v2877, %v243
        %v2879 = vadd.f32 %v2875, %v2878
        %s2880 = sld [smem:[#allocation2 + $0x111]]
        %v2881 = vstv %s2880
        %v2882 = vmul.f32 %v2881, %v245
        %v2883 = vadd.f32 %v2879, %v2882
        %s2884 = sld [smem:[#allocation2 + $0x121]]
        %v2885 = vstv %s2884
        %v2886 = vmul.f32 %v2885, %v247
        %v2887 = vadd.f32 %v2883, %v2886
        %s2888 = sld [smem:[#allocation2 + $0x131]]
        %v2889 = vstv %s2888
        %v2890 = vmul.f32 %v2889, %v249
        %v2891 = vadd.f32 %v2887, %v2890
        %s2892 = sld [smem:[#allocation2 + $0x103]]
        %v2893 = vstv %s2892
        %v2894 = vmul.f32 %v2893, %v243
        %2896 = vrot.lane.b32.xlu0 %v2894, 127
        %v2897 = vpop.permute.xlu0 %2896
        %v2899 = vadd.f32 %v2891, %v2897
        %s2900 = sld [smem:[#allocation2 + $0x113]]
        %v2901 = vstv %s2900
        %v2902 = vmul.f32 %v2901, %v245
        %2904 = vrot.lane.b32.xlu0 %v2902, 127
        %v2905 = vpop.permute.xlu0 %2904
        %v2907 = vadd.f32 %v2899, %v2905
        %s2908 = sld [smem:[#allocation2 + $0x123]]
        %v2909 = vstv %s2908
        %v2910 = vmul.f32 %v2909, %v247
        %2912 = vrot.lane.b32.xlu0 %v2910, 127
        %v2913 = vpop.permute.xlu0 %2912
        %v2915 = vadd.f32 %v2907, %v2913
        %s2916 = sld [smem:[#allocation2 + $0x133]]
        %v2917 = vstv %s2916
        %v2918 = vmul.f32 %v2917, %v249
        %2920 = vrot.lane.b32.xlu0 %v2918, 127
        %v2921 = vpop.permute.xlu0 %2920
        %v2923 = vadd.f32 %v2915, %v2921
        %s2924 = sld [smem:[#allocation2 + $0x109]]
        %v2925 = vstv %s2924
        %v2926 = vmul.f32 %v2925, %v243
        %v2927 = vmul.f32 %v2925, %v244
        %v2930 = vrot.slane %v2926, 1
        %v2931 = vrot.slane %v2927, 1
        %v2932 = vsel %vm321, %v2930, %v2931
        %v2934 = vadd.f32 %v2923, %v2932
        %s2935 = sld [smem:[#allocation2 + $0x119]]
        %v2936 = vstv %s2935
        %v2937 = vmul.f32 %v2936, %v245
        %v2938 = vmul.f32 %v2936, %v246
        %v2941 = vrot.slane %v2937, 1
        %v2942 = vrot.slane %v2938, 1
        %v2943 = vsel %vm321, %v2941, %v2942
        %v2945 = vadd.f32 %v2934, %v2943
        %s2946 = sld [smem:[#allocation2 + $0x129]]
        %v2947 = vstv %s2946
        %v2948 = vmul.f32 %v2947, %v247
        %v2949 = vmul.f32 %v2947, %v248
        %v2952 = vrot.slane %v2948, 1
        %v2953 = vrot.slane %v2949, 1
        %v2954 = vsel %vm321, %v2952, %v2953
        %v2956 = vadd.f32 %v2945, %v2954
        %s2957 = sld [smem:[#allocation2 + $0x139]]
        %v2958 = vstv %s2957
        %v2959 = vmul.f32 %v2958, %v249
        %v2960 = vmul.f32 %v2958, %v250
        %v2963 = vrot.slane %v2959, 1
        %v2964 = vrot.slane %v2960, 1
        %v2965 = vsel %vm321, %v2963, %v2964
        %v2967 = vadd.f32 %v2956, %v2965
        %s2968 = sld [smem:[#allocation2 + $0x10b]]
        %v2969 = vstv %s2968
        %v2970 = vmul.f32 %v2969, %v243
        %v2971 = vmul.f32 %v2969, %v244
        %v2974 = vrot.slane %v2970, 1
        %v2975 = vrot.slane %v2971, 1
        %v2976 = vsel %vm321, %v2974, %v2975
        %2977 = vrot.lane.b32.xlu0 %v2976, 127
        %v2978 = vpop.permute.xlu0 %2977
        %v2980 = vadd.f32 %v2967, %v2978
        %s2981 = sld [smem:[#allocation2 + $0x11b]]
        %v2982 = vstv %s2981
        %v2983 = vmul.f32 %v2982, %v245
        %v2984 = vmul.f32 %v2982, %v246
        %v2987 = vrot.slane %v2983, 1
        %v2988 = vrot.slane %v2984, 1
        %v2989 = vsel %vm321, %v2987, %v2988
        %2990 = vrot.lane.b32.xlu0 %v2989, 127
        %v2991 = vpop.permute.xlu0 %2990
        %v2993 = vadd.f32 %v2980, %v2991
        %s2994 = sld [smem:[#allocation2 + $0x12b]]
        %v2995 = vstv %s2994
        %v2996 = vmul.f32 %v2995, %v247
        %v2997 = vmul.f32 %v2995, %v248
        %v3000 = vrot.slane %v2996, 1
        %v3001 = vrot.slane %v2997, 1
        %v3002 = vsel %vm321, %v3000, %v3001
        %3003 = vrot.lane.b32.xlu0 %v3002, 127
        %v3004 = vpop.permute.xlu0 %3003
        %v3006 = vadd.f32 %v2993, %v3004
        %s3007 = sld [smem:[#allocation2 + $0x13b]]
        %v3008 = vstv %s3007
        %v3009 = vmul.f32 %v3008, %v249
        %v3010 = vmul.f32 %v3008, %v250
        %v3013 = vrot.slane %v3009, 1
        %v3014 = vrot.slane %v3010, 1
        %v3015 = vsel %vm321, %v3013, %v3014
        %3016 = vrot.lane.b32.xlu0 %v3015, 127
        %v3017 = vpop.permute.xlu0 %3016
        %v3019 = vadd.f32 %v3006, %v3017
        %s3020 = sld [smem:[#allocation2 + $0x104]]
        %v3021 = vstv %s3020
        %v3022 = vmul.f32 %v3021, %v251
        %v3023 = vadd.f32 %v3019, %v3022
        %s3024 = sld [smem:[#allocation2 + $0x114]]
        %v3025 = vstv %s3024
        %v3026 = vmul.f32 %v3025, %v253
        %v3027 = vadd.f32 %v3023, %v3026
        %s3028 = sld [smem:[#allocation2 + $0x124]]
        %v3029 = vstv %s3028
        %v3030 = vmul.f32 %v3029, %v255
        %v3031 = vadd.f32 %v3027, %v3030
        %s3032 = sld [smem:[#allocation2 + $0x134]]
        %v3033 = vstv %s3032
        %v3034 = vmul.f32 %v3033, %v257
        %v3035 = vadd.f32 %v3031, %v3034
        %s3036 = sld [smem:[#allocation2 + $0x106]]
        %v3037 = vstv %s3036
        %v3038 = vmul.f32 %v3037, %v251
        %3040 = vrot.lane.b32.xlu0 %v3038, 127
        %v3041 = vpop.permute.xlu0 %3040
        %v3043 = vadd.f32 %v3035, %v3041
        %s3044 = sld [smem:[#allocation2 + $0x116]]
        %v3045 = vstv %s3044
        %v3046 = vmul.f32 %v3045, %v253
        %3048 = vrot.lane.b32.xlu0 %v3046, 127
        %v3049 = vpop.permute.xlu0 %3048
        %v3051 = vadd.f32 %v3043, %v3049
        %s3052 = sld [smem:[#allocation2 + $0x126]]
        %v3053 = vstv %s3052
        %v3054 = vmul.f32 %v3053, %v255
        %3056 = vrot.lane.b32.xlu0 %v3054, 127
        %v3057 = vpop.permute.xlu0 %3056
        %v3059 = vadd.f32 %v3051, %v3057
        %s3060 = sld [smem:[#allocation2 + $0x136]]
        %v3061 = vstv %s3060
        %v3062 = vmul.f32 %v3061, %v257
        %3064 = vrot.lane.b32.xlu0 %v3062, 127
        %v3065 = vpop.permute.xlu0 %3064
        %v3067 = vadd.f32 %v3059, %v3065
        %s3068 = sld [smem:[#allocation2 + $0x10c]]
        %v3069 = vstv %s3068
        %v3070 = vmul.f32 %v3069, %v251
        %v3071 = vmul.f32 %v3069, %v252
        %v3074 = vrot.slane %v3070, 1
        %v3075 = vrot.slane %v3071, 1
        %v3076 = vsel %vm321, %v3074, %v3075
        %v3078 = vadd.f32 %v3067, %v3076
        %s3079 = sld [smem:[#allocation2 + $0x11c]]
        %v3080 = vstv %s3079
        %v3081 = vmul.f32 %v3080, %v253
        %v3082 = vmul.f32 %v3080, %v254
        %v3085 = vrot.slane %v3081, 1
        %v3086 = vrot.slane %v3082, 1
        %v3087 = vsel %vm321, %v3085, %v3086
        %v3089 = vadd.f32 %v3078, %v3087
        %s3090 = sld [smem:[#allocation2 + $0x12c]]
        %v3091 = vstv %s3090
        %v3092 = vmul.f32 %v3091, %v255
        %v3093 = vmul.f32 %v3091, %v256
        %v3096 = vrot.slane %v3092, 1
        %v3097 = vrot.slane %v3093, 1
        %v3098 = vsel %vm321, %v3096, %v3097
        %v3100 = vadd.f32 %v3089, %v3098
        %s3101 = sld [smem:[#allocation2 + $0x13c]]
        %v3102 = vstv %s3101
        %v3103 = vmul.f32 %v3102, %v257
        %v3104 = vmul.f32 %v3102, %v258
        %v3107 = vrot.slane %v3103, 1
        %v3108 = vrot.slane %v3104, 1
        %v3109 = vsel %vm321, %v3107, %v3108
        %v3111 = vadd.f32 %v3100, %v3109
        %s3112 = sld [smem:[#allocation2 + $0x10e]]
        %v3113 = vstv %s3112
        %v3114 = vmul.f32 %v3113, %v251
        %v3115 = vmul.f32 %v3113, %v252
        %v3118 = vrot.slane %v3114, 1
        %v3119 = vrot.slane %v3115, 1
        %v3120 = vsel %vm321, %v3118, %v3119
        %3121 = vrot.lane.b32.xlu0 %v3120, 127
        %v3122 = vpop.permute.xlu0 %3121
        %v3124 = vadd.f32 %v3111, %v3122
        %s3125 = sld [smem:[#allocation2 + $0x11e]]
        %v3126 = vstv %s3125
        %v3127 = vmul.f32 %v3126, %v253
        %v3128 = vmul.f32 %v3126, %v254
        %v3131 = vrot.slane %v3127, 1
        %v3132 = vrot.slane %v3128, 1
        %v3133 = vsel %vm321, %v3131, %v3132
        %3134 = vrot.lane.b32.xlu0 %v3133, 127
        %v3135 = vpop.permute.xlu0 %3134
        %v3137 = vadd.f32 %v3124, %v3135
        %s3138 = sld [smem:[#allocation2 + $0x12e]]
        %v3139 = vstv %s3138
        %v3140 = vmul.f32 %v3139, %v255
        %v3141 = vmul.f32 %v3139, %v256
        %v3144 = vrot.slane %v3140, 1
        %v3145 = vrot.slane %v3141, 1
        %v3146 = vsel %vm321, %v3144, %v3145
        %3147 = vrot.lane.b32.xlu0 %v3146, 127
        %v3148 = vpop.permute.xlu0 %3147
        %v3150 = vadd.f32 %v3137, %v3148
        %s3151 = sld [smem:[#allocation2 + $0x13e]]
        %v3152 = vstv %s3151
        %v3153 = vmul.f32 %v3152, %v257
        %v3154 = vmul.f32 %v3152, %v258
        %v3157 = vrot.slane %v3153, 1
        %v3158 = vrot.slane %v3154, 1
        %v3159 = vsel %vm321, %v3157, %v3158
        %3160 = vrot.lane.b32.xlu0 %v3159, 127
        %v3161 = vpop.permute.xlu0 %3160
        %v3163 = vadd.f32 %v3150, %v3161
        %s3164 = sld [smem:[#allocation2 + $0x105]]
        %v3165 = vstv %s3164
        %v3166 = vmul.f32 %v3165, %v259
        %v3167 = vadd.f32 %v3163, %v3166
        %s3168 = sld [smem:[#allocation2 + $0x115]]
        %v3169 = vstv %s3168
        %v3170 = vmul.f32 %v3169, %v261
        %v3171 = vadd.f32 %v3167, %v3170
        %s3172 = sld [smem:[#allocation2 + $0x125]]
        %v3173 = vstv %s3172
        %v3174 = vmul.f32 %v3173, %v263
        %v3175 = vadd.f32 %v3171, %v3174
        %s3176 = sld [smem:[#allocation2 + $0x135]]
        %v3177 = vstv %s3176
        %v3178 = vmul.f32 %v3177, %v265
        %v3179 = vadd.f32 %v3175, %v3178
        %s3180 = sld [smem:[#allocation2 + $0x107]]
        %v3181 = vstv %s3180
        %v3182 = vmul.f32 %v3181, %v259
        %3184 = vrot.lane.b32.xlu0 %v3182, 127
        %v3185 = vpop.permute.xlu0 %3184
        %v3187 = vadd.f32 %v3179, %v3185
        %s3188 = sld [smem:[#allocation2 + $0x117]]
        %v3189 = vstv %s3188
        %v3190 = vmul.f32 %v3189, %v261
        %3192 = vrot.lane.b32.xlu0 %v3190, 127
        %v3193 = vpop.permute.xlu0 %3192
        %v3195 = vadd.f32 %v3187, %v3193
        %s3196 = sld [smem:[#allocation2 + $0x127]]
        %v3197 = vstv %s3196
        %v3198 = vmul.f32 %v3197, %v263
        %3200 = vrot.lane.b32.xlu0 %v3198, 127
        %v3201 = vpop.permute.xlu0 %3200
        %v3203 = vadd.f32 %v3195, %v3201
        %s3204 = sld [smem:[#allocation2 + $0x137]]
        %v3205 = vstv %s3204
        %v3206 = vmul.f32 %v3205, %v265
        %3208 = vrot.lane.b32.xlu0 %v3206, 127
        %v3209 = vpop.permute.xlu0 %3208
        %v3211 = vadd.f32 %v3203, %v3209
        %s3212 = sld [smem:[#allocation2 + $0x10d]]
        %v3213 = vstv %s3212
        %v3214 = vmul.f32 %v3213, %v259
        %v3215 = vmul.f32 %v3213, %v260
        %v3218 = vrot.slane %v3214, 1
        %v3219 = vrot.slane %v3215, 1
        %v3220 = vsel %vm321, %v3218, %v3219
        %v3222 = vadd.f32 %v3211, %v3220
        %s3223 = sld [smem:[#allocation2 + $0x11d]]
        %v3224 = vstv %s3223
        %v3225 = vmul.f32 %v3224, %v261
        %v3226 = vmul.f32 %v3224, %v262
        %v3229 = vrot.slane %v3225, 1
        %v3230 = vrot.slane %v3226, 1
        %v3231 = vsel %vm321, %v3229, %v3230
        %v3233 = vadd.f32 %v3222, %v3231
        %s3234 = sld [smem:[#allocation2 + $0x12d]]
        %v3235 = vstv %s3234
        %v3236 = vmul.f32 %v3235, %v263
        %v3237 = vmul.f32 %v3235, %v264
        %v3240 = vrot.slane %v3236, 1
        %v3241 = vrot.slane %v3237, 1
        %v3242 = vsel %vm321, %v3240, %v3241
        %v3244 = vadd.f32 %v3233, %v3242
        %s3245 = sld [smem:[#allocation2 + $0x13d]]
        %v3246 = vstv %s3245
        %v3247 = vmul.f32 %v3246, %v265
        %v3248 = vmul.f32 %v3246, %v266
        %v3251 = vrot.slane %v3247, 1
        %v3252 = vrot.slane %v3248, 1
        %v3253 = vsel %vm321, %v3251, %v3252
        %v3255 = vadd.f32 %v3244, %v3253
        %s3256 = sld [smem:[#allocation2 + $0x10f]]
        %v3257 = vstv %s3256
        %v3258 = vmul.f32 %v3257, %v259
        %v3259 = vmul.f32 %v3257, %v260
        %v3262 = vrot.slane %v3258, 1
        %v3263 = vrot.slane %v3259, 1
        %v3264 = vsel %vm321, %v3262, %v3263
        %3265 = vrot.lane.b32.xlu0 %v3264, 127
        %v3266 = vpop.permute.xlu0 %3265
        %v3268 = vadd.f32 %v3255, %v3266
        %s3269 = sld [smem:[#allocation2 + $0x11f]]
        %v3270 = vstv %s3269
        %v3271 = vmul.f32 %v3270, %v261
        %v3272 = vmul.f32 %v3270, %v262
        %v3275 = vrot.slane %v3271, 1
        %v3276 = vrot.slane %v3272, 1
        %v3277 = vsel %vm321, %v3275, %v3276
        %3278 = vrot.lane.b32.xlu0 %v3277, 127
        %v3279 = vpop.permute.xlu0 %3278
        %v3281 = vadd.f32 %v3268, %v3279
        %s3282 = sld [smem:[#allocation2 + $0x12f]]
        %v3283 = vstv %s3282
        %v3284 = vmul.f32 %v3283, %v263
        %v3285 = vmul.f32 %v3283, %v264
        %v3288 = vrot.slane %v3284, 1
        %v3289 = vrot.slane %v3285, 1
        %v3290 = vsel %vm321, %v3288, %v3289
        %3291 = vrot.lane.b32.xlu0 %v3290, 127
        %v3292 = vpop.permute.xlu0 %3291
        %v3294 = vadd.f32 %v3281, %v3292
        %s3295 = sld [smem:[#allocation2 + $0x13f]]
        %v3296 = vstv %s3295
        %v3297 = vmul.f32 %v3296, %v265
        %v3298 = vmul.f32 %v3296, %v266
        %v3301 = vrot.slane %v3297, 1
        %v3302 = vrot.slane %v3298, 1
        %v3303 = vsel %vm321, %v3301, %v3302
        %3304 = vrot.lane.b32.xlu0 %v3303, 127
        %v3305 = vpop.permute.xlu0 %3304
        %v3307 = vadd.f32 %v3294, %v3305
        %v3308 = vsel %vm844, %v3307, 0.0
        %3309 = vadd.xlane.f32.xlu0 %v3308
        %v3310 = vpop.xlane.xlu0 %3309
        %v3311 = vrot.slane %v3310, 4
        %v3312 = vadd.f32 %v3310, %v3311
        %v3313 = vrot.slane %v3312, 2
        %v3314 = vadd.f32 %v3312, %v3313
        %v3315 = vrot.slane %v3314, 1
        %v3316 = vadd.f32 %v3314, %v3315
        %s3317 = vtos %v3316
        %v3318 = vstv %s3317
        %v3319 = vmul.f32 %v3318, 0.015625
        %v3320 = vsub.f32 %v3307, %v3319
        %v3321 = vmul.f32 %v3320, %v3320
        %v3322 = vsel %vm844, %v3321, 0.0
        %3323 = vadd.xlane.f32.xlu0 %v3322
        %v3324 = vpop.xlane.xlu0 %3323
        %v3325 = vrot.slane %v3324, 4
        %v3326 = vadd.f32 %v3324, %v3325
        %v3327 = vrot.slane %v3326, 2
        %v3328 = vadd.f32 %v3326, %v3327
        %v3329 = vrot.slane %v3328, 1
        %v3330 = vadd.f32 %v3328, %v3329
        %s3331 = vtos %v3330
        %v3332 = vstv %s3331
        %v3333 = vmul.f32 %v3332, 0.015625
        %v3334 = vadd.f32 %v3333, 1e-05
        %v3335 = vrsqrt.pop %v3334
        %s3336 = sld [smem:[#allocation5 + $0x4]]
        %v3337 = vstv %s3336
        %v3338 = vmul.f32 %v3335, %v3337
        %v3339 = vmul.f32 %v3320, %v3338
        %s3340 = sld [smem:[#allocation7 + $0x4]]
        %v3341 = vstv %s3340
        %v3342 = vadd.f32 %v3339, %v3341
        %vm3343 = vcmp.gt.f32.partialorder %v3342, 0.0
        %v3344 = vmul.f32 %v3342, 0.2
        %v3345 = vsel %vm3343, %v3342, %v3344
        %s3346 = scalar_lea.vmem %s229, 32 [#allocation8]
        %3347 = vst.msk [vmem:[%s3346] sm:$0xff] %vm844, %v3345
        %s3348 = sld [smem:[#allocation2 + $0x140]]
        %v3349 = vstv %s3348
        %v3350 = vmul.f32 %v3349, %v235
        %v3351 = vadd.f32 %v3350, 0.0
        %s3352 = sld [smem:[#allocation2 + $0x150]]
        %v3353 = vstv %s3352
        %v3354 = vmul.f32 %v3353, %v237
        %v3355 = vadd.f32 %v3351, %v3354
        %s3356 = sld [smem:[#allocation2 + $0x160]]
        %v3357 = vstv %s3356
        %v3358 = vmul.f32 %v3357, %v239
        %v3359 = vadd.f32 %v3355, %v3358
        %s3360 = sld [smem:[#allocation2 + $0x170]]
        %v3361 = vstv %s3360
        %v3362 = vmul.f32 %v3361, %v241
        %v3363 = vadd.f32 %v3359, %v3362
        %s3364 = sld [smem:[#allocation2 + $0x142]]
        %v3365 = vstv %s3364
        %v3366 = vmul.f32 %v3365, %v235
        %3368 = vrot.lane.b32.xlu0 %v3366, 127
        %v3369 = vpop.permute.xlu0 %3368
        %v3371 = vadd.f32 %v3363, %v3369
        %s3372 = sld [smem:[#allocation2 + $0x152]]
        %v3373 = vstv %s3372
        %v3374 = vmul.f32 %v3373, %v237
        %3376 = vrot.lane.b32.xlu0 %v3374, 127
        %v3377 = vpop.permute.xlu0 %3376
        %v3379 = vadd.f32 %v3371, %v3377
        %s3380 = sld [smem:[#allocation2 + $0x162]]
        %v3381 = vstv %s3380
        %v3382 = vmul.f32 %v3381, %v239
        %3384 = vrot.lane.b32.xlu0 %v3382, 127
        %v3385 = vpop.permute.xlu0 %3384
        %v3387 = vadd.f32 %v3379, %v3385
        %s3388 = sld [smem:[#allocation2 + $0x172]]
        %v3389 = vstv %s3388
        %v3390 = vmul.f32 %v3389, %v241
        %3392 = vrot.lane.b32.xlu0 %v3390, 127
        %v3393 = vpop.permute.xlu0 %3392
        %v3395 = vadd.f32 %v3387, %v3393
        %s3396 = sld [smem:[#allocation2 + $0x148]]
        %v3397 = vstv %s3396
        %v3398 = vmul.f32 %v3397, %v235
        %v3399 = vmul.f32 %v3397, %v236
        %v3402 = vrot.slane %v3398, 1
        %v3403 = vrot.slane %v3399, 1
        %v3404 = vsel %vm321, %v3402, %v3403
        %v3406 = vadd.f32 %v3395, %v3404
        %s3407 = sld [smem:[#allocation2 + $0x158]]
        %v3408 = vstv %s3407
        %v3409 = vmul.f32 %v3408, %v237
        %v3410 = vmul.f32 %v3408, %v238
        %v3413 = vrot.slane %v3409, 1
        %v3414 = vrot.slane %v3410, 1
        %v3415 = vsel %vm321, %v3413, %v3414
        %v3417 = vadd.f32 %v3406, %v3415
        %s3418 = sld [smem:[#allocation2 + $0x168]]
        %v3419 = vstv %s3418
        %v3420 = vmul.f32 %v3419, %v239
        %v3421 = vmul.f32 %v3419, %v240
        %v3424 = vrot.slane %v3420, 1
        %v3425 = vrot.slane %v3421, 1
        %v3426 = vsel %vm321, %v3424, %v3425
        %v3428 = vadd.f32 %v3417, %v3426
        %s3429 = sld [smem:[#allocation2 + $0x178]]
        %v3430 = vstv %s3429
        %v3431 = vmul.f32 %v3430, %v241
        %v3432 = vmul.f32 %v3430, %v242
        %v3435 = vrot.slane %v3431, 1
        %v3436 = vrot.slane %v3432, 1
        %v3437 = vsel %vm321, %v3435, %v3436
        %v3439 = vadd.f32 %v3428, %v3437
        %s3440 = sld [smem:[#allocation2 + $0x14a]]
        %v3441 = vstv %s3440
        %v3442 = vmul.f32 %v3441, %v235
        %v3443 = vmul.f32 %v3441, %v236
        %v3446 = vrot.slane %v3442, 1
        %v3447 = vrot.slane %v3443, 1
        %v3448 = vsel %vm321, %v3446, %v3447
        %3449 = vrot.lane.b32.xlu0 %v3448, 127
        %v3450 = vpop.permute.xlu0 %3449
        %v3452 = vadd.f32 %v3439, %v3450
        %s3453 = sld [smem:[#allocation2 + $0x15a]]
        %v3454 = vstv %s3453
        %v3455 = vmul.f32 %v3454, %v237
        %v3456 = vmul.f32 %v3454, %v238
        %v3459 = vrot.slane %v3455, 1
        %v3460 = vrot.slane %v3456, 1
        %v3461 = vsel %vm321, %v3459, %v3460
        %3462 = vrot.lane.b32.xlu0 %v3461, 127
        %v3463 = vpop.permute.xlu0 %3462
        %v3465 = vadd.f32 %v3452, %v3463
        %s3466 = sld [smem:[#allocation2 + $0x16a]]
        %v3467 = vstv %s3466
        %v3468 = vmul.f32 %v3467, %v239
        %v3469 = vmul.f32 %v3467, %v240
        %v3472 = vrot.slane %v3468, 1
        %v3473 = vrot.slane %v3469, 1
        %v3474 = vsel %vm321, %v3472, %v3473
        %3475 = vrot.lane.b32.xlu0 %v3474, 127
        %v3476 = vpop.permute.xlu0 %3475
        %v3478 = vadd.f32 %v3465, %v3476
        %s3479 = sld [smem:[#allocation2 + $0x17a]]
        %v3480 = vstv %s3479
        %v3481 = vmul.f32 %v3480, %v241
        %v3482 = vmul.f32 %v3480, %v242
        %v3485 = vrot.slane %v3481, 1
        %v3486 = vrot.slane %v3482, 1
        %v3487 = vsel %vm321, %v3485, %v3486
        %3488 = vrot.lane.b32.xlu0 %v3487, 127
        %v3489 = vpop.permute.xlu0 %3488
        %v3491 = vadd.f32 %v3478, %v3489
        %s3492 = sld [smem:[#allocation2 + $0x141]]
        %v3493 = vstv %s3492
        %v3494 = vmul.f32 %v3493, %v243
        %v3495 = vadd.f32 %v3491, %v3494
        %s3496 = sld [smem:[#allocation2 + $0x151]]
        %v3497 = vstv %s3496
        %v3498 = vmul.f32 %v3497, %v245
        %v3499 = vadd.f32 %v3495, %v3498
        %s3500 = sld [smem:[#allocation2 + $0x161]]
        %v3501 = vstv %s3500
        %v3502 = vmul.f32 %v3501, %v247
        %v3503 = vadd.f32 %v3499, %v3502
        %s3504 = sld [smem:[#allocation2 + $0x171]]
        %v3505 = vstv %s3504
        %v3506 = vmul.f32 %v3505, %v249
        %v3507 = vadd.f32 %v3503, %v3506
        %s3508 = sld [smem:[#allocation2 + $0x143]]
        %v3509 = vstv %s3508
        %v3510 = vmul.f32 %v3509, %v243
        %3512 = vrot.lane.b32.xlu0 %v3510, 127
        %v3513 = vpop.permute.xlu0 %3512
        %v3515 = vadd.f32 %v3507, %v3513
        %s3516 = sld [smem:[#allocation2 + $0x153]]
        %v3517 = vstv %s3516
        %v3518 = vmul.f32 %v3517, %v245
        %3520 = vrot.lane.b32.xlu0 %v3518, 127
        %v3521 = vpop.permute.xlu0 %3520
        %v3523 = vadd.f32 %v3515, %v3521
        %s3524 = sld [smem:[#allocation2 + $0x163]]
        %v3525 = vstv %s3524
        %v3526 = vmul.f32 %v3525, %v247
        %3528 = vrot.lane.b32.xlu0 %v3526, 127
        %v3529 = vpop.permute.xlu0 %3528
        %v3531 = vadd.f32 %v3523, %v3529
        %s3532 = sld [smem:[#allocation2 + $0x173]]
        %v3533 = vstv %s3532
        %v3534 = vmul.f32 %v3533, %v249
        %3536 = vrot.lane.b32.xlu0 %v3534, 127
        %v3537 = vpop.permute.xlu0 %3536
        %v3539 = vadd.f32 %v3531, %v3537
        %s3540 = sld [smem:[#allocation2 + $0x149]]
        %v3541 = vstv %s3540
        %v3542 = vmul.f32 %v3541, %v243
        %v3543 = vmul.f32 %v3541, %v244
        %v3546 = vrot.slane %v3542, 1
        %v3547 = vrot.slane %v3543, 1
        %v3548 = vsel %vm321, %v3546, %v3547
        %v3550 = vadd.f32 %v3539, %v3548
        %s3551 = sld [smem:[#allocation2 + $0x159]]
        %v3552 = vstv %s3551
        %v3553 = vmul.f32 %v3552, %v245
        %v3554 = vmul.f32 %v3552, %v246
        %v3557 = vrot.slane %v3553, 1
        %v3558 = vrot.slane %v3554, 1
        %v3559 = vsel %vm321, %v3557, %v3558
        %v3561 = vadd.f32 %v3550, %v3559
        %s3562 = sld [smem:[#allocation2 + $0x169]]
        %v3563 = vstv %s3562
        %v3564 = vmul.f32 %v3563, %v247
        %v3565 = vmul.f32 %v3563, %v248
        %v3568 = vrot.slane %v3564, 1
        %v3569 = vrot.slane %v3565, 1
        %v3570 = vsel %vm321, %v3568, %v3569
        %v3572 = vadd.f32 %v3561, %v3570
        %s3573 = sld [smem:[#allocation2 + $0x179]]
        %v3574 = vstv %s3573
        %v3575 = vmul.f32 %v3574, %v249
        %v3576 = vmul.f32 %v3574, %v250
        %v3579 = vrot.slane %v3575, 1
        %v3580 = vrot.slane %v3576, 1
        %v3581 = vsel %vm321, %v3579, %v3580
        %v3583 = vadd.f32 %v3572, %v3581
        %s3584 = sld [smem:[#allocation2 + $0x14b]]
        %v3585 = vstv %s3584
        %v3586 = vmul.f32 %v3585, %v243
        %v3587 = vmul.f32 %v3585, %v244
        %v3590 = vrot.slane %v3586, 1
        %v3591 = vrot.slane %v3587, 1
        %v3592 = vsel %vm321, %v3590, %v3591
        %3593 = vrot.lane.b32.xlu0 %v3592, 127
        %v3594 = vpop.permute.xlu0 %3593
        %v3596 = vadd.f32 %v3583, %v3594
        %s3597 = sld [smem:[#allocation2 + $0x15b]]
        %v3598 = vstv %s3597
        %v3599 = vmul.f32 %v3598, %v245
        %v3600 = vmul.f32 %v3598, %v246
        %v3603 = vrot.slane %v3599, 1
        %v3604 = vrot.slane %v3600, 1
        %v3605 = vsel %vm321, %v3603, %v3604
        %3606 = vrot.lane.b32.xlu0 %v3605, 127
        %v3607 = vpop.permute.xlu0 %3606
        %v3609 = vadd.f32 %v3596, %v3607
        %s3610 = sld [smem:[#allocation2 + $0x16b]]
        %v3611 = vstv %s3610
        %v3612 = vmul.f32 %v3611, %v247
        %v3613 = vmul.f32 %v3611, %v248
        %v3616 = vrot.slane %v3612, 1
        %v3617 = vrot.slane %v3613, 1
        %v3618 = vsel %vm321, %v3616, %v3617
        %3619 = vrot.lane.b32.xlu0 %v3618, 127
        %v3620 = vpop.permute.xlu0 %3619
        %v3622 = vadd.f32 %v3609, %v3620
        %s3623 = sld [smem:[#allocation2 + $0x17b]]
        %v3624 = vstv %s3623
        %v3625 = vmul.f32 %v3624, %v249
        %v3626 = vmul.f32 %v3624, %v250
        %v3629 = vrot.slane %v3625, 1
        %v3630 = vrot.slane %v3626, 1
        %v3631 = vsel %vm321, %v3629, %v3630
        %3632 = vrot.lane.b32.xlu0 %v3631, 127
        %v3633 = vpop.permute.xlu0 %3632
        %v3635 = vadd.f32 %v3622, %v3633
        %s3636 = sld [smem:[#allocation2 + $0x144]]
        %v3637 = vstv %s3636
        %v3638 = vmul.f32 %v3637, %v251
        %v3639 = vadd.f32 %v3635, %v3638
        %s3640 = sld [smem:[#allocation2 + $0x154]]
        %v3641 = vstv %s3640
        %v3642 = vmul.f32 %v3641, %v253
        %v3643 = vadd.f32 %v3639, %v3642
        %s3644 = sld [smem:[#allocation2 + $0x164]]
        %v3645 = vstv %s3644
        %v3646 = vmul.f32 %v3645, %v255
        %v3647 = vadd.f32 %v3643, %v3646
        %s3648 = sld [smem:[#allocation2 + $0x174]]
        %v3649 = vstv %s3648
        %v3650 = vmul.f32 %v3649, %v257
        %v3651 = vadd.f32 %v3647, %v3650
        %s3652 = sld [smem:[#allocation2 + $0x146]]
        %v3653 = vstv %s3652
        %v3654 = vmul.f32 %v3653, %v251
        %3656 = vrot.lane.b32.xlu0 %v3654, 127
        %v3657 = vpop.permute.xlu0 %3656
        %v3659 = vadd.f32 %v3651, %v3657
        %s3660 = sld [smem:[#allocation2 + $0x156]]
        %v3661 = vstv %s3660
        %v3662 = vmul.f32 %v3661, %v253
        %3664 = vrot.lane.b32.xlu0 %v3662, 127
        %v3665 = vpop.permute.xlu0 %3664
        %v3667 = vadd.f32 %v3659, %v3665
        %s3668 = sld [smem:[#allocation2 + $0x166]]
        %v3669 = vstv %s3668
        %v3670 = vmul.f32 %v3669, %v255
        %3672 = vrot.lane.b32.xlu0 %v3670, 127
        %v3673 = vpop.permute.xlu0 %3672
        %v3675 = vadd.f32 %v3667, %v3673
        %s3676 = sld [smem:[#allocation2 + $0x176]]
        %v3677 = vstv %s3676
        %v3678 = vmul.f32 %v3677, %v257
        %3680 = vrot.lane.b32.xlu0 %v3678, 127
        %v3681 = vpop.permute.xlu0 %3680
        %v3683 = vadd.f32 %v3675, %v3681
        %s3684 = sld [smem:[#allocation2 + $0x14c]]
        %v3685 = vstv %s3684
        %v3686 = vmul.f32 %v3685, %v251
        %v3687 = vmul.f32 %v3685, %v252
        %v3690 = vrot.slane %v3686, 1
        %v3691 = vrot.slane %v3687, 1
        %v3692 = vsel %vm321, %v3690, %v3691
        %v3694 = vadd.f32 %v3683, %v3692
        %s3695 = sld [smem:[#allocation2 + $0x15c]]
        %v3696 = vstv %s3695
        %v3697 = vmul.f32 %v3696, %v253
        %v3698 = vmul.f32 %v3696, %v254
        %v3701 = vrot.slane %v3697, 1
        %v3702 = vrot.slane %v3698, 1
        %v3703 = vsel %vm321, %v3701, %v3702
        %v3705 = vadd.f32 %v3694, %v3703
        %s3706 = sld [smem:[#allocation2 + $0x16c]]
        %v3707 = vstv %s3706
        %v3708 = vmul.f32 %v3707, %v255
        %v3709 = vmul.f32 %v3707, %v256
        %v3712 = vrot.slane %v3708, 1
        %v3713 = vrot.slane %v3709, 1
        %v3714 = vsel %vm321, %v3712, %v3713
        %v3716 = vadd.f32 %v3705, %v3714
        %s3717 = sld [smem:[#allocation2 + $0x17c]]
        %v3718 = vstv %s3717
        %v3719 = vmul.f32 %v3718, %v257
        %v3720 = vmul.f32 %v3718, %v258
        %v3723 = vrot.slane %v3719, 1
        %v3724 = vrot.slane %v3720, 1
        %v3725 = vsel %vm321, %v3723, %v3724
        %v3727 = vadd.f32 %v3716, %v3725
        %s3728 = sld [smem:[#allocation2 + $0x14e]]
        %v3729 = vstv %s3728
        %v3730 = vmul.f32 %v3729, %v251
        %v3731 = vmul.f32 %v3729, %v252
        %v3734 = vrot.slane %v3730, 1
        %v3735 = vrot.slane %v3731, 1
        %v3736 = vsel %vm321, %v3734, %v3735
        %3737 = vrot.lane.b32.xlu0 %v3736, 127
        %v3738 = vpop.permute.xlu0 %3737
        %v3740 = vadd.f32 %v3727, %v3738
        %s3741 = sld [smem:[#allocation2 + $0x15e]]
        %v3742 = vstv %s3741
        %v3743 = vmul.f32 %v3742, %v253
        %v3744 = vmul.f32 %v3742, %v254
        %v3747 = vrot.slane %v3743, 1
        %v3748 = vrot.slane %v3744, 1
        %v3749 = vsel %vm321, %v3747, %v3748
        %3750 = vrot.lane.b32.xlu0 %v3749, 127
        %v3751 = vpop.permute.xlu0 %3750
        %v3753 = vadd.f32 %v3740, %v3751
        %s3754 = sld [smem:[#allocation2 + $0x16e]]
        %v3755 = vstv %s3754
        %v3756 = vmul.f32 %v3755, %v255
        %v3757 = vmul.f32 %v3755, %v256
        %v3760 = vrot.slane %v3756, 1
        %v3761 = vrot.slane %v3757, 1
        %v3762 = vsel %vm321, %v3760, %v3761
        %3763 = vrot.lane.b32.xlu0 %v3762, 127
        %v3764 = vpop.permute.xlu0 %3763
        %v3766 = vadd.f32 %v3753, %v3764
        %s3767 = sld [smem:[#allocation2 + $0x17e]]
        %v3768 = vstv %s3767
        %v3769 = vmul.f32 %v3768, %v257
        %v3770 = vmul.f32 %v3768, %v258
        %v3773 = vrot.slane %v3769, 1
        %v3774 = vrot.slane %v3770, 1
        %v3775 = vsel %vm321, %v3773, %v3774
        %3776 = vrot.lane.b32.xlu0 %v3775, 127
        %v3777 = vpop.permute.xlu0 %3776
        %v3779 = vadd.f32 %v3766, %v3777
        %s3780 = sld [smem:[#allocation2 + $0x145]]
        %v3781 = vstv %s3780
        %v3782 = vmul.f32 %v3781, %v259
        %v3783 = vadd.f32 %v3779, %v3782
        %s3784 = sld [smem:[#allocation2 + $0x155]]
        %v3785 = vstv %s3784
        %v3786 = vmul.f32 %v3785, %v261
        %v3787 = vadd.f32 %v3783, %v3786
        %s3788 = sld [smem:[#allocation2 + $0x165]]
        %v3789 = vstv %s3788
        %v3790 = vmul.f32 %v3789, %v263
        %v3791 = vadd.f32 %v3787, %v3790
        %s3792 = sld [smem:[#allocation2 + $0x175]]
        %v3793 = vstv %s3792
        %v3794 = vmul.f32 %v3793, %v265
        %v3795 = vadd.f32 %v3791, %v3794
        %s3796 = sld [smem:[#allocation2 + $0x147]]
        %v3797 = vstv %s3796
        %v3798 = vmul.f32 %v3797, %v259
        %3800 = vrot.lane.b32.xlu0 %v3798, 127
        %v3801 = vpop.permute.xlu0 %3800
        %v3803 = vadd.f32 %v3795, %v3801
        %s3804 = sld [smem:[#allocation2 + $0x157]]
        %v3805 = vstv %s3804
        %v3806 = vmul.f32 %v3805, %v261
        %3808 = vrot.lane.b32.xlu0 %v3806, 127
        %v3809 = vpop.permute.xlu0 %3808
        %v3811 = vadd.f32 %v3803, %v3809
        %s3812 = sld [smem:[#allocation2 + $0x167]]
        %v3813 = vstv %s3812
        %v3814 = vmul.f32 %v3813, %v263
        %3816 = vrot.lane.b32.xlu0 %v3814, 127
        %v3817 = vpop.permute.xlu0 %3816
        %v3819 = vadd.f32 %v3811, %v3817
        %s3820 = sld [smem:[#allocation2 + $0x177]]
        %v3821 = vstv %s3820
        %v3822 = vmul.f32 %v3821, %v265
        %3824 = vrot.lane.b32.xlu0 %v3822, 127
        %v3825 = vpop.permute.xlu0 %3824
        %v3827 = vadd.f32 %v3819, %v3825
        %s3828 = sld [smem:[#allocation2 + $0x14d]]
        %v3829 = vstv %s3828
        %v3830 = vmul.f32 %v3829, %v259
        %v3831 = vmul.f32 %v3829, %v260
        %v3834 = vrot.slane %v3830, 1
        %v3835 = vrot.slane %v3831, 1
        %v3836 = vsel %vm321, %v3834, %v3835
        %v3838 = vadd.f32 %v3827, %v3836
        %s3839 = sld [smem:[#allocation2 + $0x15d]]
        %v3840 = vstv %s3839
        %v3841 = vmul.f32 %v3840, %v261
        %v3842 = vmul.f32 %v3840, %v262
        %v3845 = vrot.slane %v3841, 1
        %v3846 = vrot.slane %v3842, 1
        %v3847 = vsel %vm321, %v3845, %v3846
        %v3849 = vadd.f32 %v3838, %v3847
        %s3850 = sld [smem:[#allocation2 + $0x16d]]
        %v3851 = vstv %s3850
        %v3852 = vmul.f32 %v3851, %v263
        %v3853 = vmul.f32 %v3851, %v264
        %v3856 = vrot.slane %v3852, 1
        %v3857 = vrot.slane %v3853, 1
        %v3858 = vsel %vm321, %v3856, %v3857
        %v3860 = vadd.f32 %v3849, %v3858
        %s3861 = sld [smem:[#allocation2 + $0x17d]]
        %v3862 = vstv %s3861
        %v3863 = vmul.f32 %v3862, %v265
        %v3864 = vmul.f32 %v3862, %v266
        %v3867 = vrot.slane %v3863, 1
        %v3868 = vrot.slane %v3864, 1
        %v3869 = vsel %vm321, %v3867, %v3868
        %v3871 = vadd.f32 %v3860, %v3869
        %s3872 = sld [smem:[#allocation2 + $0x14f]]
        %v3873 = vstv %s3872
        %v3874 = vmul.f32 %v3873, %v259
        %v3875 = vmul.f32 %v3873, %v260
        %v3878 = vrot.slane %v3874, 1
        %v3879 = vrot.slane %v3875, 1
        %v3880 = vsel %vm321, %v3878, %v3879
        %3881 = vrot.lane.b32.xlu0 %v3880, 127
        %v3882 = vpop.permute.xlu0 %3881
        %v3884 = vadd.f32 %v3871, %v3882
        %s3885 = sld [smem:[#allocation2 + $0x15f]]
        %v3886 = vstv %s3885
        %v3887 = vmul.f32 %v3886, %v261
        %v3888 = vmul.f32 %v3886, %v262
        %v3891 = vrot.slane %v3887, 1
        %v3892 = vrot.slane %v3888, 1
        %v3893 = vsel %vm321, %v3891, %v3892
        %3894 = vrot.lane.b32.xlu0 %v3893, 127
        %v3895 = vpop.permute.xlu0 %3894
        %v3897 = vadd.f32 %v3884, %v3895
        %s3898 = sld [smem:[#allocation2 + $0x16f]]
        %v3899 = vstv %s3898
        %v3900 = vmul.f32 %v3899, %v263
        %v3901 = vmul.f32 %v3899, %v264
        %v3904 = vrot.slane %v3900, 1
        %v3905 = vrot.slane %v3901, 1
        %v3906 = vsel %vm321, %v3904, %v3905
        %3907 = vrot.lane.b32.xlu0 %v3906, 127
        %v3908 = vpop.permute.xlu0 %3907
        %v3910 = vadd.f32 %v3897, %v3908
        %s3911 = sld [smem:[#allocation2 + $0x17f]]
        %v3912 = vstv %s3911
        %v3913 = vmul.f32 %v3912, %v265
        %v3914 = vmul.f32 %v3912, %v266
        %v3917 = vrot.slane %v3913, 1
        %v3918 = vrot.slane %v3914, 1
        %v3919 = vsel %vm321, %v3917, %v3918
        %3920 = vrot.lane.b32.xlu0 %v3919, 127
        %v3921 = vpop.permute.xlu0 %3920
        %v3923 = vadd.f32 %v3910, %v3921
        %v3924 = vsel %vm844, %v3923, 0.0
        %3925 = vadd.xlane.f32.xlu0 %v3924
        %v3926 = vpop.xlane.xlu0 %3925
        %v3927 = vrot.slane %v3926, 4
        %v3928 = vadd.f32 %v3926, %v3927
        %v3929 = vrot.slane %v3928, 2
        %v3930 = vadd.f32 %v3928, %v3929
        %v3931 = vrot.slane %v3930, 1
        %v3932 = vadd.f32 %v3930, %v3931
        %s3933 = vtos %v3932
        %v3934 = vstv %s3933
        %v3935 = vmul.f32 %v3934, 0.015625
        %v3936 = vsub.f32 %v3923, %v3935
        %v3937 = vmul.f32 %v3936, %v3936
        %v3938 = vsel %vm844, %v3937, 0.0
        %3939 = vadd.xlane.f32.xlu0 %v3938
        %v3940 = vpop.xlane.xlu0 %3939
        %v3941 = vrot.slane %v3940, 4
        %v3942 = vadd.f32 %v3940, %v3941
        %v3943 = vrot.slane %v3942, 2
        %v3944 = vadd.f32 %v3942, %v3943
        %v3945 = vrot.slane %v3944, 1
        %v3946 = vadd.f32 %v3944, %v3945
        %s3947 = vtos %v3946
        %v3948 = vstv %s3947
        %v3949 = vmul.f32 %v3948, 0.015625
        %v3950 = vadd.f32 %v3949, 1e-05
        %v3951 = vrsqrt.pop %v3950
        %s3952 = sld [smem:[#allocation5 + $0x5]]
        %v3953 = vstv %s3952
        %v3954 = vmul.f32 %v3951, %v3953
        %v3955 = vmul.f32 %v3936, %v3954
        %s3956 = sld [smem:[#allocation7 + $0x5]]
        %v3957 = vstv %s3956
        %v3958 = vadd.f32 %v3955, %v3957
        %vm3959 = vcmp.gt.f32.partialorder %v3958, 0.0
        %v3960 = vmul.f32 %v3958, 0.2
        %v3961 = vsel %vm3959, %v3958, %v3960
        %s3962 = scalar_lea.vmem %s229, 40 [#allocation8]
        %3963 = vst.msk [vmem:[%s3962] sm:$0xff] %vm844, %v3961
        %s3964 = sld [smem:[#allocation2 + $0x180]]
        %v3965 = vstv %s3964
        %v3966 = vmul.f32 %v3965, %v235
        %v3967 = vadd.f32 %v3966, 0.0
        %s3968 = sld [smem:[#allocation2 + $0x190]]
        %v3969 = vstv %s3968
        %v3970 = vmul.f32 %v3969, %v237
        %v3971 = vadd.f32 %v3967, %v3970
        %s3972 = sld [smem:[#allocation2 + $0x1a0]]
        %v3973 = vstv %s3972
        %v3974 = vmul.f32 %v3973, %v239
        %v3975 = vadd.f32 %v3971, %v3974
        %s3976 = sld [smem:[#allocation2 + $0x1b0]]
        %v3977 = vstv %s3976
        %v3978 = vmul.f32 %v3977, %v241
        %v3979 = vadd.f32 %v3975, %v3978
        %s3980 = sld [smem:[#allocation2 + $0x182]]
        %v3981 = vstv %s3980
        %v3982 = vmul.f32 %v3981, %v235
        %3984 = vrot.lane.b32.xlu0 %v3982, 127
        %v3985 = vpop.permute.xlu0 %3984
        %v3987 = vadd.f32 %v3979, %v3985
        %s3988 = sld [smem:[#allocation2 + $0x192]]
        %v3989 = vstv %s3988
        %v3990 = vmul.f32 %v3989, %v237
        %3992 = vrot.lane.b32.xlu0 %v3990, 127
        %v3993 = vpop.permute.xlu0 %3992
        %v3995 = vadd.f32 %v3987, %v3993
        %s3996 = sld [smem:[#allocation2 + $0x1a2]]
        %v3997 = vstv %s3996
        %v3998 = vmul.f32 %v3997, %v239
        %4000 = vrot.lane.b32.xlu0 %v3998, 127
        %v4001 = vpop.permute.xlu0 %4000
        %v4003 = vadd.f32 %v3995, %v4001
        %s4004 = sld [smem:[#allocation2 + $0x1b2]]
        %v4005 = vstv %s4004
        %v4006 = vmul.f32 %v4005, %v241
        %4008 = vrot.lane.b32.xlu0 %v4006, 127
        %v4009 = vpop.permute.xlu0 %4008
        %v4011 = vadd.f32 %v4003, %v4009
        %s4012 = sld [smem:[#allocation2 + $0x188]]
        %v4013 = vstv %s4012
        %v4014 = vmul.f32 %v4013, %v235
        %v4015 = vmul.f32 %v4013, %v236
        %v4018 = vrot.slane %v4014, 1
        %v4019 = vrot.slane %v4015, 1
        %v4020 = vsel %vm321, %v4018, %v4019
        %v4022 = vadd.f32 %v4011, %v4020
        %s4023 = sld [smem:[#allocation2 + $0x198]]
        %v4024 = vstv %s4023
        %v4025 = vmul.f32 %v4024, %v237
        %v4026 = vmul.f32 %v4024, %v238
        %v4029 = vrot.slane %v4025, 1
        %v4030 = vrot.slane %v4026, 1
        %v4031 = vsel %vm321, %v4029, %v4030
        %v4033 = vadd.f32 %v4022, %v4031
        %s4034 = sld [smem:[#allocation2 + $0x1a8]]
        %v4035 = vstv %s4034
        %v4036 = vmul.f32 %v4035, %v239
        %v4037 = vmul.f32 %v4035, %v240
        %v4040 = vrot.slane %v4036, 1
        %v4041 = vrot.slane %v4037, 1
        %v4042 = vsel %vm321, %v4040, %v4041
        %v4044 = vadd.f32 %v4033, %v4042
        %s4045 = sld [smem:[#allocation2 + $0x1b8]]
        %v4046 = vstv %s4045
        %v4047 = vmul.f32 %v4046, %v241
        %v4048 = vmul.f32 %v4046, %v242
        %v4051 = vrot.slane %v4047, 1
        %v4052 = vrot.slane %v4048, 1
        %v4053 = vsel %vm321, %v4051, %v4052
        %v4055 = vadd.f32 %v4044, %v4053
        %s4056 = sld [smem:[#allocation2 + $0x18a]]
        %v4057 = vstv %s4056
        %v4058 = vmul.f32 %v4057, %v235
        %v4059 = vmul.f32 %v4057, %v236
        %v4062 = vrot.slane %v4058, 1
        %v4063 = vrot.slane %v4059, 1
        %v4064 = vsel %vm321, %v4062, %v4063
        %4065 = vrot.lane.b32.xlu0 %v4064, 127
        %v4066 = vpop.permute.xlu0 %4065
        %v4068 = vadd.f32 %v4055, %v4066
        %s4069 = sld [smem:[#allocation2 + $0x19a]]
        %v4070 = vstv %s4069
        %v4071 = vmul.f32 %v4070, %v237
        %v4072 = vmul.f32 %v4070, %v238
        %v4075 = vrot.slane %v4071, 1
        %v4076 = vrot.slane %v4072, 1
        %v4077 = vsel %vm321, %v4075, %v4076
        %4078 = vrot.lane.b32.xlu0 %v4077, 127
        %v4079 = vpop.permute.xlu0 %4078
        %v4081 = vadd.f32 %v4068, %v4079
        %s4082 = sld [smem:[#allocation2 + $0x1aa]]
        %v4083 = vstv %s4082
        %v4084 = vmul.f32 %v4083, %v239
        %v4085 = vmul.f32 %v4083, %v240
        %v4088 = vrot.slane %v4084, 1
        %v4089 = vrot.slane %v4085, 1
        %v4090 = vsel %vm321, %v4088, %v4089
        %4091 = vrot.lane.b32.xlu0 %v4090, 127
        %v4092 = vpop.permute.xlu0 %4091
        %v4094 = vadd.f32 %v4081, %v4092
        %s4095 = sld [smem:[#allocation2 + $0x1ba]]
        %v4096 = vstv %s4095
        %v4097 = vmul.f32 %v4096, %v241
        %v4098 = vmul.f32 %v4096, %v242
        %v4101 = vrot.slane %v4097, 1
        %v4102 = vrot.slane %v4098, 1
        %v4103 = vsel %vm321, %v4101, %v4102
        %4104 = vrot.lane.b32.xlu0 %v4103, 127
        %v4105 = vpop.permute.xlu0 %4104
        %v4107 = vadd.f32 %v4094, %v4105
        %s4108 = sld [smem:[#allocation2 + $0x181]]
        %v4109 = vstv %s4108
        %v4110 = vmul.f32 %v4109, %v243
        %v4111 = vadd.f32 %v4107, %v4110
        %s4112 = sld [smem:[#allocation2 + $0x191]]
        %v4113 = vstv %s4112
        %v4114 = vmul.f32 %v4113, %v245
        %v4115 = vadd.f32 %v4111, %v4114
        %s4116 = sld [smem:[#allocation2 + $0x1a1]]
        %v4117 = vstv %s4116
        %v4118 = vmul.f32 %v4117, %v247
        %v4119 = vadd.f32 %v4115, %v4118
        %s4120 = sld [smem:[#allocation2 + $0x1b1]]
        %v4121 = vstv %s4120
        %v4122 = vmul.f32 %v4121, %v249
        %v4123 = vadd.f32 %v4119, %v4122
        %s4124 = sld [smem:[#allocation2 + $0x183]]
        %v4125 = vstv %s4124
        %v4126 = vmul.f32 %v4125, %v243
        %4128 = vrot.lane.b32.xlu0 %v4126, 127
        %v4129 = vpop.permute.xlu0 %4128
        %v4131 = vadd.f32 %v4123, %v4129
        %s4132 = sld [smem:[#allocation2 + $0x193]]
        %v4133 = vstv %s4132
        %v4134 = vmul.f32 %v4133, %v245
        %4136 = vrot.lane.b32.xlu0 %v4134, 127
        %v4137 = vpop.permute.xlu0 %4136
        %v4139 = vadd.f32 %v4131, %v4137
        %s4140 = sld [smem:[#allocation2 + $0x1a3]]
        %v4141 = vstv %s4140
        %v4142 = vmul.f32 %v4141, %v247
        %4144 = vrot.lane.b32.xlu0 %v4142, 127
        %v4145 = vpop.permute.xlu0 %4144
        %v4147 = vadd.f32 %v4139, %v4145
        %s4148 = sld [smem:[#allocation2 + $0x1b3]]
        %v4149 = vstv %s4148
        %v4150 = vmul.f32 %v4149, %v249
        %4152 = vrot.lane.b32.xlu0 %v4150, 127
        %v4153 = vpop.permute.xlu0 %4152
        %v4155 = vadd.f32 %v4147, %v4153
        %s4156 = sld [smem:[#allocation2 + $0x189]]
        %v4157 = vstv %s4156
        %v4158 = vmul.f32 %v4157, %v243
        %v4159 = vmul.f32 %v4157, %v244
        %v4162 = vrot.slane %v4158, 1
        %v4163 = vrot.slane %v4159, 1
        %v4164 = vsel %vm321, %v4162, %v4163
        %v4166 = vadd.f32 %v4155, %v4164
        %s4167 = sld [smem:[#allocation2 + $0x199]]
        %v4168 = vstv %s4167
        %v4169 = vmul.f32 %v4168, %v245
        %v4170 = vmul.f32 %v4168, %v246
        %v4173 = vrot.slane %v4169, 1
        %v4174 = vrot.slane %v4170, 1
        %v4175 = vsel %vm321, %v4173, %v4174
        %v4177 = vadd.f32 %v4166, %v4175
        %s4178 = sld [smem:[#allocation2 + $0x1a9]]
        %v4179 = vstv %s4178
        %v4180 = vmul.f32 %v4179, %v247
        %v4181 = vmul.f32 %v4179, %v248
        %v4184 = vrot.slane %v4180, 1
        %v4185 = vrot.slane %v4181, 1
        %v4186 = vsel %vm321, %v4184, %v4185
        %v4188 = vadd.f32 %v4177, %v4186
        %s4189 = sld [smem:[#allocation2 + $0x1b9]]
        %v4190 = vstv %s4189
        %v4191 = vmul.f32 %v4190, %v249
        %v4192 = vmul.f32 %v4190, %v250
        %v4195 = vrot.slane %v4191, 1
        %v4196 = vrot.slane %v4192, 1
        %v4197 = vsel %vm321, %v4195, %v4196
        %v4199 = vadd.f32 %v4188, %v4197
        %s4200 = sld [smem:[#allocation2 + $0x18b]]
        %v4201 = vstv %s4200
        %v4202 = vmul.f32 %v4201, %v243
        %v4203 = vmul.f32 %v4201, %v244
        %v4206 = vrot.slane %v4202, 1
        %v4207 = vrot.slane %v4203, 1
        %v4208 = vsel %vm321, %v4206, %v4207
        %4209 = vrot.lane.b32.xlu0 %v4208, 127
        %v4210 = vpop.permute.xlu0 %4209
        %v4212 = vadd.f32 %v4199, %v4210
        %s4213 = sld [smem:[#allocation2 + $0x19b]]
        %v4214 = vstv %s4213
        %v4215 = vmul.f32 %v4214, %v245
        %v4216 = vmul.f32 %v4214, %v246
        %v4219 = vrot.slane %v4215, 1
        %v4220 = vrot.slane %v4216, 1
        %v4221 = vsel %vm321, %v4219, %v4220
        %4222 = vrot.lane.b32.xlu0 %v4221, 127
        %v4223 = vpop.permute.xlu0 %4222
        %v4225 = vadd.f32 %v4212, %v4223
        %s4226 = sld [smem:[#allocation2 + $0x1ab]]
        %v4227 = vstv %s4226
        %v4228 = vmul.f32 %v4227, %v247
        %v4229 = vmul.f32 %v4227, %v248
        %v4232 = vrot.slane %v4228, 1
        %v4233 = vrot.slane %v4229, 1
        %v4234 = vsel %vm321, %v4232, %v4233
        %4235 = vrot.lane.b32.xlu0 %v4234, 127
        %v4236 = vpop.permute.xlu0 %4235
        %v4238 = vadd.f32 %v4225, %v4236
        %s4239 = sld [smem:[#allocation2 + $0x1bb]]
        %v4240 = vstv %s4239
        %v4241 = vmul.f32 %v4240, %v249
        %v4242 = vmul.f32 %v4240, %v250
        %v4245 = vrot.slane %v4241, 1
        %v4246 = vrot.slane %v4242, 1
        %v4247 = vsel %vm321, %v4245, %v4246
        %4248 = vrot.lane.b32.xlu0 %v4247, 127
        %v4249 = vpop.permute.xlu0 %4248
        %v4251 = vadd.f32 %v4238, %v4249
        %s4252 = sld [smem:[#allocation2 + $0x184]]
        %v4253 = vstv %s4252
        %v4254 = vmul.f32 %v4253, %v251
        %v4255 = vadd.f32 %v4251, %v4254
        %s4256 = sld [smem:[#allocation2 + $0x194]]
        %v4257 = vstv %s4256
        %v4258 = vmul.f32 %v4257, %v253
        %v4259 = vadd.f32 %v4255, %v4258
        %s4260 = sld [smem:[#allocation2 + $0x1a4]]
        %v4261 = vstv %s4260
        %v4262 = vmul.f32 %v4261, %v255
        %v4263 = vadd.f32 %v4259, %v4262
        %s4264 = sld [smem:[#allocation2 + $0x1b4]]
        %v4265 = vstv %s4264
        %v4266 = vmul.f32 %v4265, %v257
        %v4267 = vadd.f32 %v4263, %v4266
        %s4268 = sld [smem:[#allocation2 + $0x186]]
        %v4269 = vstv %s4268
        %v4270 = vmul.f32 %v4269, %v251
        %4272 = vrot.lane.b32.xlu0 %v4270, 127
        %v4273 = vpop.permute.xlu0 %4272
        %v4275 = vadd.f32 %v4267, %v4273
        %s4276 = sld [smem:[#allocation2 + $0x196]]
        %v4277 = vstv %s4276
        %v4278 = vmul.f32 %v4277, %v253
        %4280 = vrot.lane.b32.xlu0 %v4278, 127
        %v4281 = vpop.permute.xlu0 %4280
        %v4283 = vadd.f32 %v4275, %v4281
        %s4284 = sld [smem:[#allocation2 + $0x1a6]]
        %v4285 = vstv %s4284
        %v4286 = vmul.f32 %v4285, %v255
        %4288 = vrot.lane.b32.xlu0 %v4286, 127
        %v4289 = vpop.permute.xlu0 %4288
        %v4291 = vadd.f32 %v4283, %v4289
        %s4292 = sld [smem:[#allocation2 + $0x1b6]]
        %v4293 = vstv %s4292
        %v4294 = vmul.f32 %v4293, %v257
        %4296 = vrot.lane.b32.xlu0 %v4294, 127
        %v4297 = vpop.permute.xlu0 %4296
        %v4299 = vadd.f32 %v4291, %v4297
        %s4300 = sld [smem:[#allocation2 + $0x18c]]
        %v4301 = vstv %s4300
        %v4302 = vmul.f32 %v4301, %v251
        %v4303 = vmul.f32 %v4301, %v252
        %v4306 = vrot.slane %v4302, 1
        %v4307 = vrot.slane %v4303, 1
        %v4308 = vsel %vm321, %v4306, %v4307
        %v4310 = vadd.f32 %v4299, %v4308
        %s4311 = sld [smem:[#allocation2 + $0x19c]]
        %v4312 = vstv %s4311
        %v4313 = vmul.f32 %v4312, %v253
        %v4314 = vmul.f32 %v4312, %v254
        %v4317 = vrot.slane %v4313, 1
        %v4318 = vrot.slane %v4314, 1
        %v4319 = vsel %vm321, %v4317, %v4318
        %v4321 = vadd.f32 %v4310, %v4319
        %s4322 = sld [smem:[#allocation2 + $0x1ac]]
        %v4323 = vstv %s4322
        %v4324 = vmul.f32 %v4323, %v255
        %v4325 = vmul.f32 %v4323, %v256
        %v4328 = vrot.slane %v4324, 1
        %v4329 = vrot.slane %v4325, 1
        %v4330 = vsel %vm321, %v4328, %v4329
        %v4332 = vadd.f32 %v4321, %v4330
        %s4333 = sld [smem:[#allocation2 + $0x1bc]]
        %v4334 = vstv %s4333
        %v4335 = vmul.f32 %v4334, %v257
        %v4336 = vmul.f32 %v4334, %v258
        %v4339 = vrot.slane %v4335, 1
        %v4340 = vrot.slane %v4336, 1
        %v4341 = vsel %vm321, %v4339, %v4340
        %v4343 = vadd.f32 %v4332, %v4341
        %s4344 = sld [smem:[#allocation2 + $0x18e]]
        %v4345 = vstv %s4344
        %v4346 = vmul.f32 %v4345, %v251
        %v4347 = vmul.f32 %v4345, %v252
        %v4350 = vrot.slane %v4346, 1
        %v4351 = vrot.slane %v4347, 1
        %v4352 = vsel %vm321, %v4350, %v4351
        %4353 = vrot.lane.b32.xlu0 %v4352, 127
        %v4354 = vpop.permute.xlu0 %4353
        %v4356 = vadd.f32 %v4343, %v4354
        %s4357 = sld [smem:[#allocation2 + $0x19e]]
        %v4358 = vstv %s4357
        %v4359 = vmul.f32 %v4358, %v253
        %v4360 = vmul.f32 %v4358, %v254
        %v4363 = vrot.slane %v4359, 1
        %v4364 = vrot.slane %v4360, 1
        %v4365 = vsel %vm321, %v4363, %v4364
        %4366 = vrot.lane.b32.xlu0 %v4365, 127
        %v4367 = vpop.permute.xlu0 %4366
        %v4369 = vadd.f32 %v4356, %v4367
        %s4370 = sld [smem:[#allocation2 + $0x1ae]]
        %v4371 = vstv %s4370
        %v4372 = vmul.f32 %v4371, %v255
        %v4373 = vmul.f32 %v4371, %v256
        %v4376 = vrot.slane %v4372, 1
        %v4377 = vrot.slane %v4373, 1
        %v4378 = vsel %vm321, %v4376, %v4377
        %4379 = vrot.lane.b32.xlu0 %v4378, 127
        %v4380 = vpop.permute.xlu0 %4379
        %v4382 = vadd.f32 %v4369, %v4380
        %s4383 = sld [smem:[#allocation2 + $0x1be]]
        %v4384 = vstv %s4383
        %v4385 = vmul.f32 %v4384, %v257
        %v4386 = vmul.f32 %v4384, %v258
        %v4389 = vrot.slane %v4385, 1
        %v4390 = vrot.slane %v4386, 1
        %v4391 = vsel %vm321, %v4389, %v4390
        %4392 = vrot.lane.b32.xlu0 %v4391, 127
        %v4393 = vpop.permute.xlu0 %4392
        %v4395 = vadd.f32 %v4382, %v4393
        %s4396 = sld [smem:[#allocation2 + $0x185]]
        %v4397 = vstv %s4396
        %v4398 = vmul.f32 %v4397, %v259
        %v4399 = vadd.f32 %v4395, %v4398
        %s4400 = sld [smem:[#allocation2 + $0x195]]
        %v4401 = vstv %s4400
        %v4402 = vmul.f32 %v4401, %v261
        %v4403 = vadd.f32 %v4399, %v4402
        %s4404 = sld [smem:[#allocation2 + $0x1a5]]
        %v4405 = vstv %s4404
        %v4406 = vmul.f32 %v4405, %v263
        %v4407 = vadd.f32 %v4403, %v4406
        %s4408 = sld [smem:[#allocation2 + $0x1b5]]
        %v4409 = vstv %s4408
        %v4410 = vmul.f32 %v4409, %v265
        %v4411 = vadd.f32 %v4407, %v4410
        %s4412 = sld [smem:[#allocation2 + $0x187]]
        %v4413 = vstv %s4412
        %v4414 = vmul.f32 %v4413, %v259
        %4416 = vrot.lane.b32.xlu0 %v4414, 127
        %v4417 = vpop.permute.xlu0 %4416
        %v4419 = vadd.f32 %v4411, %v4417
        %s4420 = sld [smem:[#allocation2 + $0x197]]
        %v4421 = vstv %s4420
        %v4422 = vmul.f32 %v4421, %v261
        %4424 = vrot.lane.b32.xlu0 %v4422, 127
        %v4425 = vpop.permute.xlu0 %4424
        %v4427 = vadd.f32 %v4419, %v4425
        %s4428 = sld [smem:[#allocation2 + $0x1a7]]
        %v4429 = vstv %s4428
        %v4430 = vmul.f32 %v4429, %v263
        %4432 = vrot.lane.b32.xlu0 %v4430, 127
        %v4433 = vpop.permute.xlu0 %4432
        %v4435 = vadd.f32 %v4427, %v4433
        %s4436 = sld [smem:[#allocation2 + $0x1b7]]
        %v4437 = vstv %s4436
        %v4438 = vmul.f32 %v4437, %v265
        %4440 = vrot.lane.b32.xlu0 %v4438, 127
        %v4441 = vpop.permute.xlu0 %4440
        %v4443 = vadd.f32 %v4435, %v4441
        %s4444 = sld [smem:[#allocation2 + $0x18d]]
        %v4445 = vstv %s4444
        %v4446 = vmul.f32 %v4445, %v259
        %v4447 = vmul.f32 %v4445, %v260
        %v4450 = vrot.slane %v4446, 1
        %v4451 = vrot.slane %v4447, 1
        %v4452 = vsel %vm321, %v4450, %v4451
        %v4454 = vadd.f32 %v4443, %v4452
        %s4455 = sld [smem:[#allocation2 + $0x19d]]
        %v4456 = vstv %s4455
        %v4457 = vmul.f32 %v4456, %v261
        %v4458 = vmul.f32 %v4456, %v262
        %v4461 = vrot.slane %v4457, 1
        %v4462 = vrot.slane %v4458, 1
        %v4463 = vsel %vm321, %v4461, %v4462
        %v4465 = vadd.f32 %v4454, %v4463
        %s4466 = sld [smem:[#allocation2 + $0x1ad]]
        %v4467 = vstv %s4466
        %v4468 = vmul.f32 %v4467, %v263
        %v4469 = vmul.f32 %v4467, %v264
        %v4472 = vrot.slane %v4468, 1
        %v4473 = vrot.slane %v4469, 1
        %v4474 = vsel %vm321, %v4472, %v4473
        %v4476 = vadd.f32 %v4465, %v4474
        %s4477 = sld [smem:[#allocation2 + $0x1bd]]
        %v4478 = vstv %s4477
        %v4479 = vmul.f32 %v4478, %v265
        %v4480 = vmul.f32 %v4478, %v266
        %v4483 = vrot.slane %v4479, 1
        %v4484 = vrot.slane %v4480, 1
        %v4485 = vsel %vm321, %v4483, %v4484
        %v4487 = vadd.f32 %v4476, %v4485
        %s4488 = sld [smem:[#allocation2 + $0x18f]]
        %v4489 = vstv %s4488
        %v4490 = vmul.f32 %v4489, %v259
        %v4491 = vmul.f32 %v4489, %v260
        %v4494 = vrot.slane %v4490, 1
        %v4495 = vrot.slane %v4491, 1
        %v4496 = vsel %vm321, %v4494, %v4495
        %4497 = vrot.lane.b32.xlu0 %v4496, 127
        %v4498 = vpop.permute.xlu0 %4497
        %v4500 = vadd.f32 %v4487, %v4498
        %s4501 = sld [smem:[#allocation2 + $0x19f]]
        %v4502 = vstv %s4501
        %v4503 = vmul.f32 %v4502, %v261
        %v4504 = vmul.f32 %v4502, %v262
        %v4507 = vrot.slane %v4503, 1
        %v4508 = vrot.slane %v4504, 1
        %v4509 = vsel %vm321, %v4507, %v4508
        %4510 = vrot.lane.b32.xlu0 %v4509, 127
        %v4511 = vpop.permute.xlu0 %4510
        %v4513 = vadd.f32 %v4500, %v4511
        %s4514 = sld [smem:[#allocation2 + $0x1af]]
        %v4515 = vstv %s4514
        %v4516 = vmul.f32 %v4515, %v263
        %v4517 = vmul.f32 %v4515, %v264
        %v4520 = vrot.slane %v4516, 1
        %v4521 = vrot.slane %v4517, 1
        %v4522 = vsel %vm321, %v4520, %v4521
        %4523 = vrot.lane.b32.xlu0 %v4522, 127
        %v4524 = vpop.permute.xlu0 %4523
        %v4526 = vadd.f32 %v4513, %v4524
        %s4527 = sld [smem:[#allocation2 + $0x1bf]]
        %v4528 = vstv %s4527
        %v4529 = vmul.f32 %v4528, %v265
        %v4530 = vmul.f32 %v4528, %v266
        %v4533 = vrot.slane %v4529, 1
        %v4534 = vrot.slane %v4530, 1
        %v4535 = vsel %vm321, %v4533, %v4534
        %4536 = vrot.lane.b32.xlu0 %v4535, 127
        %v4537 = vpop.permute.xlu0 %4536
        %v4539 = vadd.f32 %v4526, %v4537
        %v4540 = vsel %vm844, %v4539, 0.0
        %4541 = vadd.xlane.f32.xlu0 %v4540
        %v4542 = vpop.xlane.xlu0 %4541
        %v4543 = vrot.slane %v4542, 4
        %v4544 = vadd.f32 %v4542, %v4543
        %v4545 = vrot.slane %v4544, 2
        %v4546 = vadd.f32 %v4544, %v4545
        %v4547 = vrot.slane %v4546, 1
        %v4548 = vadd.f32 %v4546, %v4547
        %s4549 = vtos %v4548
        %v4550 = vstv %s4549
        %v4551 = vmul.f32 %v4550, 0.015625
        %v4552 = vsub.f32 %v4539, %v4551
        %v4553 = vmul.f32 %v4552, %v4552
        %v4554 = vsel %vm844, %v4553, 0.0
        %4555 = vadd.xlane.f32.xlu0 %v4554
        %v4556 = vpop.xlane.xlu0 %4555
        %v4557 = vrot.slane %v4556, 4
        %v4558 = vadd.f32 %v4556, %v4557
        %v4559 = vrot.slane %v4558, 2
        %v4560 = vadd.f32 %v4558, %v4559
        %v4561 = vrot.slane %v4560, 1
        %v4562 = vadd.f32 %v4560, %v4561
        %s4563 = vtos %v4562
        %v4564 = vstv %s4563
        %v4565 = vmul.f32 %v4564, 0.015625
        %v4566 = vadd.f32 %v4565, 1e-05
        %v4567 = vrsqrt.pop %v4566
        %s4568 = sld [smem:[#allocation5 + $0x6]]
        %v4569 = vstv %s4568
        %v4570 = vmul.f32 %v4567, %v4569
        %v4571 = vmul.f32 %v4552, %v4570
        %s4572 = sld [smem:[#allocation7 + $0x6]]
        %v4573 = vstv %s4572
        %v4574 = vadd.f32 %v4571, %v4573
        %vm4575 = vcmp.gt.f32.partialorder %v4574, 0.0
        %v4576 = vmul.f32 %v4574, 0.2
        %v4577 = vsel %vm4575, %v4574, %v4576
        %s4578 = scalar_lea.vmem %s229, 48 [#allocation8]
        %4579 = vst.msk [vmem:[%s4578] sm:$0xff] %vm844, %v4577
        %s4580 = sld [smem:[#allocation2 + $0x1c0]]
        %v4581 = vstv %s4580
        %v4582 = vmul.f32 %v4581, %v235
        %v4583 = vadd.f32 %v4582, 0.0
        %s4584 = sld [smem:[#allocation2 + $0x1d0]]
        %v4585 = vstv %s4584
        %v4586 = vmul.f32 %v4585, %v237
        %v4587 = vadd.f32 %v4583, %v4586
        %s4588 = sld [smem:[#allocation2 + $0x1e0]]
        %v4589 = vstv %s4588
        %v4590 = vmul.f32 %v4589, %v239
        %v4591 = vadd.f32 %v4587, %v4590
        %s4592 = sld [smem:[#allocation2 + $0x1f0]]
        %v4593 = vstv %s4592
        %v4594 = vmul.f32 %v4593, %v241
        %v4595 = vadd.f32 %v4591, %v4594
        %s4596 = sld [smem:[#allocation2 + $0x1c2]]
        %v4597 = vstv %s4596
        %v4598 = vmul.f32 %v4597, %v235
        %4600 = vrot.lane.b32.xlu0 %v4598, 127
        %v4601 = vpop.permute.xlu0 %4600
        %v4603 = vadd.f32 %v4595, %v4601
        %s4604 = sld [smem:[#allocation2 + $0x1d2]]
        %v4605 = vstv %s4604
        %v4606 = vmul.f32 %v4605, %v237
        %4608 = vrot.lane.b32.xlu0 %v4606, 127
        %v4609 = vpop.permute.xlu0 %4608
        %v4611 = vadd.f32 %v4603, %v4609
        %s4612 = sld [smem:[#allocation2 + $0x1e2]]
        %v4613 = vstv %s4612
        %v4614 = vmul.f32 %v4613, %v239
        %4616 = vrot.lane.b32.xlu0 %v4614, 127
        %v4617 = vpop.permute.xlu0 %4616
        %v4619 = vadd.f32 %v4611, %v4617
        %s4620 = sld [smem:[#allocation2 + $0x1f2]]
        %v4621 = vstv %s4620
        %v4622 = vmul.f32 %v4621, %v241
        %4624 = vrot.lane.b32.xlu0 %v4622, 127
        %v4625 = vpop.permute.xlu0 %4624
        %v4627 = vadd.f32 %v4619, %v4625
        %s4628 = sld [smem:[#allocation2 + $0x1c8]]
        %v4629 = vstv %s4628
        %v4630 = vmul.f32 %v4629, %v235
        %v4631 = vmul.f32 %v4629, %v236
        %v4634 = vrot.slane %v4630, 1
        %v4635 = vrot.slane %v4631, 1
        %v4636 = vsel %vm321, %v4634, %v4635
        %v4638 = vadd.f32 %v4627, %v4636
        %s4639 = sld [smem:[#allocation2 + $0x1d8]]
        %v4640 = vstv %s4639
        %v4641 = vmul.f32 %v4640, %v237
        %v4642 = vmul.f32 %v4640, %v238
        %v4645 = vrot.slane %v4641, 1
        %v4646 = vrot.slane %v4642, 1
        %v4647 = vsel %vm321, %v4645, %v4646
        %v4649 = vadd.f32 %v4638, %v4647
        %s4650 = sld [smem:[#allocation2 + $0x1e8]]
        %v4651 = vstv %s4650
        %v4652 = vmul.f32 %v4651, %v239
        %v4653 = vmul.f32 %v4651, %v240
        %v4656 = vrot.slane %v4652, 1
        %v4657 = vrot.slane %v4653, 1
        %v4658 = vsel %vm321, %v4656, %v4657
        %v4660 = vadd.f32 %v4649, %v4658
        %s4661 = sld [smem:[#allocation2 + $0x1f8]]
        %v4662 = vstv %s4661
        %v4663 = vmul.f32 %v4662, %v241
        %v4664 = vmul.f32 %v4662, %v242
        %v4667 = vrot.slane %v4663, 1
        %v4668 = vrot.slane %v4664, 1
        %v4669 = vsel %vm321, %v4667, %v4668
        %v4671 = vadd.f32 %v4660, %v4669
        %s4672 = sld [smem:[#allocation2 + $0x1ca]]
        %v4673 = vstv %s4672
        %v4674 = vmul.f32 %v4673, %v235
        %v4675 = vmul.f32 %v4673, %v236
        %v4678 = vrot.slane %v4674, 1
        %v4679 = vrot.slane %v4675, 1
        %v4680 = vsel %vm321, %v4678, %v4679
        %4681 = vrot.lane.b32.xlu0 %v4680, 127
        %v4682 = vpop.permute.xlu0 %4681
        %v4684 = vadd.f32 %v4671, %v4682
        %s4685 = sld [smem:[#allocation2 + $0x1da]]
        %v4686 = vstv %s4685
        %v4687 = vmul.f32 %v4686, %v237
        %v4688 = vmul.f32 %v4686, %v238
        %v4691 = vrot.slane %v4687, 1
        %v4692 = vrot.slane %v4688, 1
        %v4693 = vsel %vm321, %v4691, %v4692
        %4694 = vrot.lane.b32.xlu0 %v4693, 127
        %v4695 = vpop.permute.xlu0 %4694
        %v4697 = vadd.f32 %v4684, %v4695
        %s4698 = sld [smem:[#allocation2 + $0x1ea]]
        %v4699 = vstv %s4698
        %v4700 = vmul.f32 %v4699, %v239
        %v4701 = vmul.f32 %v4699, %v240
        %v4704 = vrot.slane %v4700, 1
        %v4705 = vrot.slane %v4701, 1
        %v4706 = vsel %vm321, %v4704, %v4705
        %4707 = vrot.lane.b32.xlu0 %v4706, 127
        %v4708 = vpop.permute.xlu0 %4707
        %v4710 = vadd.f32 %v4697, %v4708
        %s4711 = sld [smem:[#allocation2 + $0x1fa]]
        %v4712 = vstv %s4711
        %v4713 = vmul.f32 %v4712, %v241
        %v4714 = vmul.f32 %v4712, %v242
        %v4717 = vrot.slane %v4713, 1
        %v4718 = vrot.slane %v4714, 1
        %v4719 = vsel %vm321, %v4717, %v4718
        %4720 = vrot.lane.b32.xlu0 %v4719, 127
        %v4721 = vpop.permute.xlu0 %4720
        %v4723 = vadd.f32 %v4710, %v4721
        %s4724 = sld [smem:[#allocation2 + $0x1c1]]
        %v4725 = vstv %s4724
        %v4726 = vmul.f32 %v4725, %v243
        %v4727 = vadd.f32 %v4723, %v4726
        %s4728 = sld [smem:[#allocation2 + $0x1d1]]
        %v4729 = vstv %s4728
        %v4730 = vmul.f32 %v4729, %v245
        %v4731 = vadd.f32 %v4727, %v4730
        %s4732 = sld [smem:[#allocation2 + $0x1e1]]
        %v4733 = vstv %s4732
        %v4734 = vmul.f32 %v4733, %v247
        %v4735 = vadd.f32 %v4731, %v4734
        %s4736 = sld [smem:[#allocation2 + $0x1f1]]
        %v4737 = vstv %s4736
        %v4738 = vmul.f32 %v4737, %v249
        %v4739 = vadd.f32 %v4735, %v4738
        %s4740 = sld [smem:[#allocation2 + $0x1c3]]
        %v4741 = vstv %s4740
        %v4742 = vmul.f32 %v4741, %v243
        %4744 = vrot.lane.b32.xlu0 %v4742, 127
        %v4745 = vpop.permute.xlu0 %4744
        %v4747 = vadd.f32 %v4739, %v4745
        %s4748 = sld [smem:[#allocation2 + $0x1d3]]
        %v4749 = vstv %s4748
        %v4750 = vmul.f32 %v4749, %v245
        %4752 = vrot.lane.b32.xlu0 %v4750, 127
        %v4753 = vpop.permute.xlu0 %4752
        %v4755 = vadd.f32 %v4747, %v4753
        %s4756 = sld [smem:[#allocation2 + $0x1e3]]
        %v4757 = vstv %s4756
        %v4758 = vmul.f32 %v4757, %v247
        %4760 = vrot.lane.b32.xlu0 %v4758, 127
        %v4761 = vpop.permute.xlu0 %4760
        %v4763 = vadd.f32 %v4755, %v4761
        %s4764 = sld [smem:[#allocation2 + $0x1f3]]
        %v4765 = vstv %s4764
        %v4766 = vmul.f32 %v4765, %v249
        %4768 = vrot.lane.b32.xlu0 %v4766, 127
        %v4769 = vpop.permute.xlu0 %4768
        %v4771 = vadd.f32 %v4763, %v4769
        %s4772 = sld [smem:[#allocation2 + $0x1c9]]
        %v4773 = vstv %s4772
        %v4774 = vmul.f32 %v4773, %v243
        %v4775 = vmul.f32 %v4773, %v244
        %v4778 = vrot.slane %v4774, 1
        %v4779 = vrot.slane %v4775, 1
        %v4780 = vsel %vm321, %v4778, %v4779
        %v4782 = vadd.f32 %v4771, %v4780
        %s4783 = sld [smem:[#allocation2 + $0x1d9]]
        %v4784 = vstv %s4783
        %v4785 = vmul.f32 %v4784, %v245
        %v4786 = vmul.f32 %v4784, %v246
        %v4789 = vrot.slane %v4785, 1
        %v4790 = vrot.slane %v4786, 1
        %v4791 = vsel %vm321, %v4789, %v4790
        %v4793 = vadd.f32 %v4782, %v4791
        %s4794 = sld [smem:[#allocation2 + $0x1e9]]
        %v4795 = vstv %s4794
        %v4796 = vmul.f32 %v4795, %v247
        %v4797 = vmul.f32 %v4795, %v248
        %v4800 = vrot.slane %v4796, 1
        %v4801 = vrot.slane %v4797, 1
        %v4802 = vsel %vm321, %v4800, %v4801
        %v4804 = vadd.f32 %v4793, %v4802
        %s4805 = sld [smem:[#allocation2 + $0x1f9]]
        %v4806 = vstv %s4805
        %v4807 = vmul.f32 %v4806, %v249
        %v4808 = vmul.f32 %v4806, %v250
        %v4811 = vrot.slane %v4807, 1
        %v4812 = vrot.slane %v4808, 1
        %v4813 = vsel %vm321, %v4811, %v4812
        %v4815 = vadd.f32 %v4804, %v4813
        %s4816 = sld [smem:[#allocation2 + $0x1cb]]
        %v4817 = vstv %s4816
        %v4818 = vmul.f32 %v4817, %v243
        %v4819 = vmul.f32 %v4817, %v244
        %v4822 = vrot.slane %v4818, 1
        %v4823 = vrot.slane %v4819, 1
        %v4824 = vsel %vm321, %v4822, %v4823
        %4825 = vrot.lane.b32.xlu0 %v4824, 127
        %v4826 = vpop.permute.xlu0 %4825
        %v4828 = vadd.f32 %v4815, %v4826
        %s4829 = sld [smem:[#allocation2 + $0x1db]]
        %v4830 = vstv %s4829
        %v4831 = vmul.f32 %v4830, %v245
        %v4832 = vmul.f32 %v4830, %v246
        %v4835 = vrot.slane %v4831, 1
        %v4836 = vrot.slane %v4832, 1
        %v4837 = vsel %vm321, %v4835, %v4836
        %4838 = vrot.lane.b32.xlu0 %v4837, 127
        %v4839 = vpop.permute.xlu0 %4838
        %v4841 = vadd.f32 %v4828, %v4839
        %s4842 = sld [smem:[#allocation2 + $0x1eb]]
        %v4843 = vstv %s4842
        %v4844 = vmul.f32 %v4843, %v247
        %v4845 = vmul.f32 %v4843, %v248
        %v4848 = vrot.slane %v4844, 1
        %v4849 = vrot.slane %v4845, 1
        %v4850 = vsel %vm321, %v4848, %v4849
        %4851 = vrot.lane.b32.xlu0 %v4850, 127
        %v4852 = vpop.permute.xlu0 %4851
        %v4854 = vadd.f32 %v4841, %v4852
        %s4855 = sld [smem:[#allocation2 + $0x1fb]]
        %v4856 = vstv %s4855
        %v4857 = vmul.f32 %v4856, %v249
        %v4858 = vmul.f32 %v4856, %v250
        %v4861 = vrot.slane %v4857, 1
        %v4862 = vrot.slane %v4858, 1
        %v4863 = vsel %vm321, %v4861, %v4862
        %4864 = vrot.lane.b32.xlu0 %v4863, 127
        %v4865 = vpop.permute.xlu0 %4864
        %v4867 = vadd.f32 %v4854, %v4865
        %s4868 = sld [smem:[#allocation2 + $0x1c4]]
        %v4869 = vstv %s4868
        %v4870 = vmul.f32 %v4869, %v251
        %v4871 = vadd.f32 %v4867, %v4870
        %s4872 = sld [smem:[#allocation2 + $0x1d4]]
        %v4873 = vstv %s4872
        %v4874 = vmul.f32 %v4873, %v253
        %v4875 = vadd.f32 %v4871, %v4874
        %s4876 = sld [smem:[#allocation2 + $0x1e4]]
        %v4877 = vstv %s4876
        %v4878 = vmul.f32 %v4877, %v255
        %v4879 = vadd.f32 %v4875, %v4878
        %s4880 = sld [smem:[#allocation2 + $0x1f4]]
        %v4881 = vstv %s4880
        %v4882 = vmul.f32 %v4881, %v257
        %v4883 = vadd.f32 %v4879, %v4882
        %s4884 = sld [smem:[#allocation2 + $0x1c6]]
        %v4885 = vstv %s4884
        %v4886 = vmul.f32 %v4885, %v251
        %4888 = vrot.lane.b32.xlu0 %v4886, 127
        %v4889 = vpop.permute.xlu0 %4888
        %v4891 = vadd.f32 %v4883, %v4889
        %s4892 = sld [smem:[#allocation2 + $0x1d6]]
        %v4893 = vstv %s4892
        %v4894 = vmul.f32 %v4893, %v253
        %4896 = vrot.lane.b32.xlu0 %v4894, 127
        %v4897 = vpop.permute.xlu0 %4896
        %v4899 = vadd.f32 %v4891, %v4897
        %s4900 = sld [smem:[#allocation2 + $0x1e6]]
        %v4901 = vstv %s4900
        %v4902 = vmul.f32 %v4901, %v255
        %4904 = vrot.lane.b32.xlu0 %v4902, 127
        %v4905 = vpop.permute.xlu0 %4904
        %v4907 = vadd.f32 %v4899, %v4905
        %s4908 = sld [smem:[#allocation2 + $0x1f6]]
        %v4909 = vstv %s4908
        %v4910 = vmul.f32 %v4909, %v257
        %4912 = vrot.lane.b32.xlu0 %v4910, 127
        %v4913 = vpop.permute.xlu0 %4912
        %v4915 = vadd.f32 %v4907, %v4913
        %s4916 = sld [smem:[#allocation2 + $0x1cc]]
        %v4917 = vstv %s4916
        %v4918 = vmul.f32 %v4917, %v251
        %v4919 = vmul.f32 %v4917, %v252
        %v4922 = vrot.slane %v4918, 1
        %v4923 = vrot.slane %v4919, 1
        %v4924 = vsel %vm321, %v4922, %v4923
        %v4926 = vadd.f32 %v4915, %v4924
        %s4927 = sld [smem:[#allocation2 + $0x1dc]]
        %v4928 = vstv %s4927
        %v4929 = vmul.f32 %v4928, %v253
        %v4930 = vmul.f32 %v4928, %v254
        %v4933 = vrot.slane %v4929, 1
        %v4934 = vrot.slane %v4930, 1
        %v4935 = vsel %vm321, %v4933, %v4934
        %v4937 = vadd.f32 %v4926, %v4935
        %s4938 = sld [smem:[#allocation2 + $0x1ec]]
        %v4939 = vstv %s4938
        %v4940 = vmul.f32 %v4939, %v255
        %v4941 = vmul.f32 %v4939, %v256
        %v4944 = vrot.slane %v4940, 1
        %v4945 = vrot.slane %v4941, 1
        %v4946 = vsel %vm321, %v4944, %v4945
        %v4948 = vadd.f32 %v4937, %v4946
        %s4949 = sld [smem:[#allocation2 + $0x1fc]]
        %v4950 = vstv %s4949
        %v4951 = vmul.f32 %v4950, %v257
        %v4952 = vmul.f32 %v4950, %v258
        %v4955 = vrot.slane %v4951, 1
        %v4956 = vrot.slane %v4952, 1
        %v4957 = vsel %vm321, %v4955, %v4956
        %v4959 = vadd.f32 %v4948, %v4957
        %s4960 = sld [smem:[#allocation2 + $0x1ce]]
        %v4961 = vstv %s4960
        %v4962 = vmul.f32 %v4961, %v251
        %v4963 = vmul.f32 %v4961, %v252
        %v4966 = vrot.slane %v4962, 1
        %v4967 = vrot.slane %v4963, 1
        %v4968 = vsel %vm321, %v4966, %v4967
        %4969 = vrot.lane.b32.xlu0 %v4968, 127
        %v4970 = vpop.permute.xlu0 %4969
        %v4972 = vadd.f32 %v4959, %v4970
        %s4973 = sld [smem:[#allocation2 + $0x1de]]
        %v4974 = vstv %s4973
        %v4975 = vmul.f32 %v4974, %v253
        %v4976 = vmul.f32 %v4974, %v254
        %v4979 = vrot.slane %v4975, 1
        %v4980 = vrot.slane %v4976, 1
        %v4981 = vsel %vm321, %v4979, %v4980
        %4982 = vrot.lane.b32.xlu0 %v4981, 127
        %v4983 = vpop.permute.xlu0 %4982
        %v4985 = vadd.f32 %v4972, %v4983
        %s4986 = sld [smem:[#allocation2 + $0x1ee]]
        %v4987 = vstv %s4986
        %v4988 = vmul.f32 %v4987, %v255
        %v4989 = vmul.f32 %v4987, %v256
        %v4992 = vrot.slane %v4988, 1
        %v4993 = vrot.slane %v4989, 1
        %v4994 = vsel %vm321, %v4992, %v4993
        %4995 = vrot.lane.b32.xlu0 %v4994, 127
        %v4996 = vpop.permute.xlu0 %4995
        %v4998 = vadd.f32 %v4985, %v4996
        %s4999 = sld [smem:[#allocation2 + $0x1fe]]
        %v5000 = vstv %s4999
        %v5001 = vmul.f32 %v5000, %v257
        %v5002 = vmul.f32 %v5000, %v258
        %v5005 = vrot.slane %v5001, 1
        %v5006 = vrot.slane %v5002, 1
        %v5007 = vsel %vm321, %v5005, %v5006
        %5008 = vrot.lane.b32.xlu0 %v5007, 127
        %v5009 = vpop.permute.xlu0 %5008
        %v5011 = vadd.f32 %v4998, %v5009
        %s5012 = sld [smem:[#allocation2 + $0x1c5]]
        %v5013 = vstv %s5012
        %v5014 = vmul.f32 %v5013, %v259
        %v5015 = vadd.f32 %v5011, %v5014
        %s5016 = sld [smem:[#allocation2 + $0x1d5]]
        %v5017 = vstv %s5016
        %v5018 = vmul.f32 %v5017, %v261
        %v5019 = vadd.f32 %v5015, %v5018
        %s5020 = sld [smem:[#allocation2 + $0x1e5]]
        %v5021 = vstv %s5020
        %v5022 = vmul.f32 %v5021, %v263
        %v5023 = vadd.f32 %v5019, %v5022
        %s5024 = sld [smem:[#allocation2 + $0x1f5]]
        %v5025 = vstv %s5024
        %v5026 = vmul.f32 %v5025, %v265
        %v5027 = vadd.f32 %v5023, %v5026
        %s5028 = sld [smem:[#allocation2 + $0x1c7]]
        %v5029 = vstv %s5028
        %v5030 = vmul.f32 %v5029, %v259
        %5032 = vrot.lane.b32.xlu0 %v5030, 127
        %v5033 = vpop.permute.xlu0 %5032
        %v5035 = vadd.f32 %v5027, %v5033
        %s5036 = sld [smem:[#allocation2 + $0x1d7]]
        %v5037 = vstv %s5036
        %v5038 = vmul.f32 %v5037, %v261
        %5040 = vrot.lane.b32.xlu0 %v5038, 127
        %v5041 = vpop.permute.xlu0 %5040
        %v5043 = vadd.f32 %v5035, %v5041
        %s5044 = sld [smem:[#allocation2 + $0x1e7]]
        %v5045 = vstv %s5044
        %v5046 = vmul.f32 %v5045, %v263
        %5048 = vrot.lane.b32.xlu0 %v5046, 127
        %v5049 = vpop.permute.xlu0 %5048
        %v5051 = vadd.f32 %v5043, %v5049
        %s5052 = sld [smem:[#allocation2 + $0x1f7]]
        %v5053 = vstv %s5052
        %v5054 = vmul.f32 %v5053, %v265
        %5056 = vrot.lane.b32.xlu0 %v5054, 127
        %v5057 = vpop.permute.xlu0 %5056
        %v5059 = vadd.f32 %v5051, %v5057
        %s5060 = sld [smem:[#allocation2 + $0x1cd]]
        %v5061 = vstv %s5060
        %v5062 = vmul.f32 %v5061, %v259
        %v5063 = vmul.f32 %v5061, %v260
        %v5066 = vrot.slane %v5062, 1
        %v5067 = vrot.slane %v5063, 1
        %v5068 = vsel %vm321, %v5066, %v5067
        %v5070 = vadd.f32 %v5059, %v5068
        %s5071 = sld [smem:[#allocation2 + $0x1dd]]
        %v5072 = vstv %s5071
        %v5073 = vmul.f32 %v5072, %v261
        %v5074 = vmul.f32 %v5072, %v262
        %v5077 = vrot.slane %v5073, 1
        %v5078 = vrot.slane %v5074, 1
        %v5079 = vsel %vm321, %v5077, %v5078
        %v5081 = vadd.f32 %v5070, %v5079
        %s5082 = sld [smem:[#allocation2 + $0x1ed]]
        %v5083 = vstv %s5082
        %v5084 = vmul.f32 %v5083, %v263
        %v5085 = vmul.f32 %v5083, %v264
        %v5088 = vrot.slane %v5084, 1
        %v5089 = vrot.slane %v5085, 1
        %v5090 = vsel %vm321, %v5088, %v5089
        %v5092 = vadd.f32 %v5081, %v5090
        %s5093 = sld [smem:[#allocation2 + $0x1fd]]
        %v5094 = vstv %s5093
        %v5095 = vmul.f32 %v5094, %v265
        %v5096 = vmul.f32 %v5094, %v266
        %v5099 = vrot.slane %v5095, 1
        %v5100 = vrot.slane %v5096, 1
        %v5101 = vsel %vm321, %v5099, %v5100
        %v5103 = vadd.f32 %v5092, %v5101
        %s5104 = sld [smem:[#allocation2 + $0x1cf]]
        %v5105 = vstv %s5104
        %v5106 = vmul.f32 %v5105, %v259
        %v5107 = vmul.f32 %v5105, %v260
        %v5110 = vrot.slane %v5106, 1
        %v5111 = vrot.slane %v5107, 1
        %v5112 = vsel %vm321, %v5110, %v5111
        %5113 = vrot.lane.b32.xlu0 %v5112, 127
        %v5114 = vpop.permute.xlu0 %5113
        %v5116 = vadd.f32 %v5103, %v5114
        %s5117 = sld [smem:[#allocation2 + $0x1df]]
        %v5118 = vstv %s5117
        %v5119 = vmul.f32 %v5118, %v261
        %v5120 = vmul.f32 %v5118, %v262
        %v5123 = vrot.slane %v5119, 1
        %v5124 = vrot.slane %v5120, 1
        %v5125 = vsel %vm321, %v5123, %v5124
        %5126 = vrot.lane.b32.xlu0 %v5125, 127
        %v5127 = vpop.permute.xlu0 %5126
        %v5129 = vadd.f32 %v5116, %v5127
        %s5130 = sld [smem:[#allocation2 + $0x1ef]]
        %v5131 = vstv %s5130
        %v5132 = vmul.f32 %v5131, %v263
        %v5133 = vmul.f32 %v5131, %v264
        %v5136 = vrot.slane %v5132, 1
        %v5137 = vrot.slane %v5133, 1
        %v5138 = vsel %vm321, %v5136, %v5137
        %5139 = vrot.lane.b32.xlu0 %v5138, 127
        %v5140 = vpop.permute.xlu0 %5139
        %v5142 = vadd.f32 %v5129, %v5140
        %s5143 = sld [smem:[#allocation2 + $0x1ff]]
        %v5144 = vstv %s5143
        %v5145 = vmul.f32 %v5144, %v265
        %v5146 = vmul.f32 %v5144, %v266
        %v5149 = vrot.slane %v5145, 1
        %v5150 = vrot.slane %v5146, 1
        %v5151 = vsel %vm321, %v5149, %v5150
        %5152 = vrot.lane.b32.xlu0 %v5151, 127
        %v5153 = vpop.permute.xlu0 %5152
        %v5155 = vadd.f32 %v5142, %v5153
        %v5156 = vsel %vm844, %v5155, 0.0
        %5157 = vadd.xlane.f32.xlu0 %v5156
        %v5158 = vpop.xlane.xlu0 %5157
        %v5159 = vrot.slane %v5158, 4
        %v5160 = vadd.f32 %v5158, %v5159
        %v5161 = vrot.slane %v5160, 2
        %v5162 = vadd.f32 %v5160, %v5161
        %v5163 = vrot.slane %v5162, 1
        %v5164 = vadd.f32 %v5162, %v5163
        %s5165 = vtos %v5164
        %v5166 = vstv %s5165
        %v5167 = vmul.f32 %v5166, 0.015625
        %v5168 = vsub.f32 %v5155, %v5167
        %v5169 = vmul.f32 %v5168, %v5168
        %v5170 = vsel %vm844, %v5169, 0.0
        %5171 = vadd.xlane.f32.xlu0 %v5170
        %v5172 = vpop.xlane.xlu0 %5171
        %v5173 = vrot.slane %v5172, 4
        %v5174 = vadd.f32 %v5172, %v5173
        %v5175 = vrot.slane %v5174, 2
        %v5176 = vadd.f32 %v5174, %v5175
        %v5177 = vrot.slane %v5176, 1
        %v5178 = vadd.f32 %v5176, %v5177
        %s5179 = vtos %v5178
        %v5180 = vstv %s5179
        %v5181 = vmul.f32 %v5180, 0.015625
        %v5182 = vadd.f32 %v5181, 1e-05
        %v5183 = vrsqrt.pop %v5182
        %s5184 = sld [smem:[#allocation5 + $0x7]]
        %v5185 = vstv %s5184
        %v5186 = vmul.f32 %v5183, %v5185
        %v5187 = vmul.f32 %v5168, %v5186
        %s5188 = sld [smem:[#allocation7 + $0x7]]
        %v5189 = vstv %s5188
        %v5190 = vadd.f32 %v5187, %v5189
        %vm5191 = vcmp.gt.f32.partialorder %v5190, 0.0
        %v5192 = vmul.f32 %v5190, 0.2
        %v5193 = vsel %vm5191, %v5190, %v5192
        %s5194 = scalar_lea.vmem %s229, 56 [#allocation8]
        %5195 = vst.msk [vmem:[%s5194] sm:$0xff] %vm844, %v5193
        %s5196 = sand.u32 %s117, 1
        %s5197 = scalar_lea.sflag [#allocation3], %s5196
        %s5198 = sand.u32 %s117, 1
        %s5199 = smul.addr %s5198, 64
        %s5200 = scalar_lea.vmem [#allocation8], %s5199
        // Predicated region
        $region49: #{disc_block_forward.1} parent=35 // pred_check
          %p5201 = pneg %p127
        $region50: #{disc_block_forward.1} parent=35 // pred_check_branch
          %5203 = sbr.rel (%p5201) target = $region52
        $region51: #{disc_block_forward.1} parent=35 // pred_region
          %s5205 = ssub.s32 1024, 1024
          %5206 = vsyncadd %s5197, %s5205
          %s5207 = smul.addr %s20, 8
          %s5208 = smul.addr %s5207, 128
          %s5209 = scalar_lea.hbm %s4, %s5208
          %s5210 = sshll.u32 %s5200, 4
          %s5211 = int_to_ptr.vmem [resolvable:$true] %s5210
          %5216 = dma.vmem_to_hbm [thread:$0]  %s5211, 1024, %s5209, %s5197, 128, 128, 8
        $region52: #{disc_block_forward.1} parent=35 // pred_fallthru
          _
      $region36: #{disc_block_forward.1} parent=5 // pred_fallthru
        _
      %p5217 = scmp.le.s32.totalorder 2, %s15
      // Predicated region
      $region53: #{disc_block_forward.1} parent=5 // pred_check
        %p5218 = pneg %p5217
      $region54: #{disc_block_forward.1} parent=5 // pred_check_branch
        %5220 = sbr.rel (%p5218) target = $region56
      $region55: #{disc_block_forward.1} parent=5 // pred_region
        %s5221 = ssub.s32 %s15, 2
        // Predicated region
        $region57: #{disc_block_forward.1} parent=55 // pred_check
          %p5222 = pneg %p133
        $region58: #{disc_block_forward.1} parent=55 // pred_check_branch
          %5224 = sbr.rel (%p5222) target = $region60
        $region59: #{disc_block_forward.1} parent=55 // pred_region
          %s5225 = sand.u32 %s118, 1
          %s5226 = scalar_lea.sflag [#allocation3], %s5225
          %s5227 = sand.u32 %s118, 1
          %s5228 = smul.addr %s5227, 64
          %s5229 = scalar_lea.vmem [#allocation8], %s5228
          %5230 = dma.done %s5226, 1024
        $region60: #{disc_block_forward.1} parent=55 // pred_fallthru
          _
      $region56: #{disc_block_forward.1} parent=5 // pred_fallthru
        _
    $region6: #{disc_block_forward.1} parent=1 // loop_footer
      %s19 = sadd.s32 1, %s15
    $region7: #{disc_block_forward.1} parent=1 // loop_footer_branch
      %14 = sbr.rel target = $region3
    $region8: #{disc_block_forward.1} parent=1 // loop_exit
      _
    %5231 = vsyncpa [#allocation3], 1
    %s5232 = scalar_lea.sflag [#allocation3], 1
    %5233 = vsyncpa %s5232, 1
    %5234 = vsyncpa [#allocation4], 1
    %s5235 = scalar_lea.sflag [#allocation4], 1
    %5236 = vsyncpa %s5235, 1
    %5237 = vsyncpa [#allocation6], 1

</llo_original>
